<compile_context>
chip_gen: v7x
topology: tpu7x:2x2x1
jax: 0.10.0
libtpu: 0.0.40
codegen_flags: <defaults>
</compile_context>

<pallas_src>
import functools

import jax
import jax.numpy as jnp
from jax.experimental import pallas as pl
from jax.experimental.pallas import tpu as pltpu


EPS = 1e-5  # torch.nn.GroupNorm default


def _resblock_kernel(x_ref, w1_ref, w2_ref, seg_ref, segt_ref,
                     grp_ref, grpt_ref, p_ref, o_ref,
                     *, inv_group_n, conv_dtype):
    f32 = jnp.float32
    x = x_ref[...]                       # (C, Nb) storage dtype
    seg = seg_ref[...]                   # (Nb, bt) one-hot: lane -> local batch
    segt = segt_ref[...]                 # (bt, Nb)
    grp = grp_ref[...]                   # (G, C)   one-hot: channel -> group
    grpt = grpt_ref[...]                 # (C, G)
    p = p_ref[...].astype(f32)           # (C, 4) = [g1_w, g1_b, g2_w, g2_b]

    def group_norm(h, gamma, beta):
        # h: (C, Nb) f32.  Reductions and lane-broadcasts run on the (otherwise
        # idle) MXU; stats stay f32; rsqrt goes to the free EUP slot.
        s = jnp.dot(h, seg, preferred_element_type=f32)            # (C, bt)
        ss = jnp.dot(h * h, seg, preferred_element_type=f32)       # (C, bt)
        sg = jnp.dot(grp, s, preferred_element_type=f32)           # (G, bt)
        ssg = jnp.dot(grp, ss, preferred_element_type=f32)         # (G, bt)
        mean_g = sg * inv_group_n
        var_g = ssg * inv_group_n - mean_g * mean_g                # E[x^2]-E[x]^2
        var_g = jnp.maximum(var_g, 0.0)                            # clamp cancellation
        inv_g = jax.lax.rsqrt(var_g + EPS)                         # EUP rsqrt
        mean_c = jnp.dot(grpt, mean_g, preferred_element_type=f32)  # (C, bt)
        inv_c = jnp.dot(grpt, inv_g, preferred_element_type=f32)    # (C, bt)
        scale = inv_c * gamma                                      # (C, bt)
        shift = beta - mean_c * scale                              # (C, bt)
        scale_f = jnp.dot(scale, segt, preferred_element_type=f32)  # (C, Nb)
        shift_f = jnp.dot(shift, segt, preferred_element_type=f32)  # (C, Nb)
        return h * scale_f + shift_f                               # one fused pass

    cd = conv_dtype
    w1 = w1_ref[...].astype(cd)
    w2 = w2_ref[...].astype(cd)

    # conv1 (1x1, no bias): single (C, C) @ (C, bt*L) MXU call for the tile.
    h = jnp.dot(w1, x.astype(cd), preferred_element_type=f32)
    h = group_norm(h, p[:, 0:1], p[:, 1:2])
    h = jnp.maximum(h, 0.0)

    # conv2 (1x1, no bias): again one fused MXU call.
    h = jnp.dot(w2, h.astype(cd), preferred_element_type=f32)
    h = group_norm(h, p[:, 2:3], p[:, 3:4])

    # residual + ReLU; one lane-dense store of the whole (C, bt*L) block.
    h = h + x.astype(f32)
    o_ref[...] = jnp.maximum(h, 0.0).astype(o_ref.dtype)


def _tpu_vmem_capacity():
    try:
        return int(pltpu.get_tpu_info().vmem_capacity_bytes)
    except Exception:
        return 128 << 20  # conservative single-TensorCore default (v5e/v6e)


def _pick_batch_tile(B, C, L, itemsize, max_block_bytes, prefer_multi_step):
    """Largest batch tile bt (dividing B) whose (C, bt*L) block plus segment
    matrices fit the budget.  On two-TensorCore parts an even number of >=2
    grid steps is preferred; on single-core parts a single step is allowed."""
    def fits(bt):
        nb = bt * L
        if (nb % 128 != 0) and bt != B:        # lane-tiling constraint
            return False
        blk = C * nb * itemsize                # storage-dtype data block
        segs = 2 * nb * bt * 4                 # seg + segT (f32)
        return blk <= max_block_bytes and segs <= max_block_bytes

    cands = [bt for bt in range(1, B + 1) if B % bt == 0]
    good = [bt for bt in cands if fits(bt)]
    if not good:
        legal = [bt for bt in cands if (bt * L) % 128 == 0 or bt == B]
        return min(legal)                      # correctness over peak perf
    if prefer_multi_step and B > 1:
        even = [bt for bt in good if (B // bt) >= 2 and (B // bt) % 2 == 0]
        multi = [bt for bt in good if (B // bt) >= 2]
        if even:
            return max(even)
        if multi:
            return max(multi)
    return max(good)


def optimized_res_block(x, w1, w2, g1w, g1b, g2w, g2b, *, groups=8,
                        conv_dtype=jnp.bfloat16,
                        max_block_bytes=None, vmem_limit_bytes=None):
    """Fused Conv1d(k=1) -> GN -> ReLU -> Conv1d(k=1) -> GN -> +x -> ReLU.

    x: (B, C, L).  w1/w2: (C, C) (or (C, C, 1)).  g*: (C,).
    conv_dtype: operand dtype fed to the MXU (bf16-native default; pass
    jnp.float32 for full-precision convs).  GroupNorm math is always f32.
    """
    B, C, L = x.shape
    G = min(groups, C)
    assert C % G == 0, "channels must be divisible by the group count"
    gsz = C // G

    w1 = jnp.asarray(w1).reshape(C, C)
    w2 = jnp.asarray(w2).reshape(C, C)
    params = jnp.stack([g1w, g1b, g2w, g2b], axis=1).astype(jnp.float32)  # (C,4)

    itemsize = jnp.dtype(x.dtype).itemsize
    vmem_cap = _tpu_vmem_capacity()
    two_cores = vmem_cap <= (64 << 20)          # v7x-like: 64 MiB VMEM, 2 TCs
    if max_block_bytes is None:
        max_block_bytes = (3 << 20) if two_cores else (8 << 20)

    bt = _pick_batch_tile(B, C, L, itemsize, max_block_bytes, two_cores)
    Nb = bt * L
    N = B * L
    grid = (B // bt,)

    # (B, C, L) -> (C, B*L): one-time XLA relayout outside the kernel.
    x2 = jnp.transpose(x, (1, 0, 2)).reshape(C, N)

    # Constant one-hot matrices (lane -> local sample, channel -> group).
    lane = jnp.arange(Nb)
    seg = (lane[:, None] // L == jnp.arange(bt)[None, :]).astype(jnp.float32)
    segt = seg.T
    ch = jnp.arange(C)
    grp = (ch[None, :] // gsz == jnp.arange(G)[:, None]).astype(jnp.float32)
    grpt = grp.T

    if vmem_limit_bytes is None:
        const_bytes = 4 * (2 * C * C + 2 * Nb * bt + 2 * G * C + 4 * C)
        need = (4 * C * Nb * itemsize           # double-buffered in + out blocks
                + 2 * const_bytes               # double-buffered constants
                + 4 * C * Nb * 4                # f32 live intermediates
                + (4 << 20))                    # slack
        vmem_limit_bytes = min(int(vmem_cap * 3 // 4), max(need, 48 << 20))

    kernel = functools.partial(_resblock_kernel,
                               inv_group_n=1.0 / float(gsz * L),
                               conv_dtype=conv_dtype)

    full = lambda i: (0, 0)
    # NOTE: w1/w2, the one-hot matrices and the packed affine params have
    # constant index maps; at these sizes the VMEM cost of default
    # double-buffering them is negligible, so no pipeline_mode override.
    out2 = pl.pallas_call(
        kernel,
        out_shape=jax.ShapeDtypeStruct((C, N), x.dtype),
        grid_spec=pltpu.PrefetchScalarGridSpec(
            num_scalar_prefetch=0,
            grid=grid,
            in_specs=[
                pl.BlockSpec((C, Nb), lambda i: (0, i)),   # x batch tile
                pl.BlockSpec((C, C), full),                # conv1 weight
                pl.BlockSpec((C, C), full),                # conv2 weight
                pl.BlockSpec((Nb, bt), full),              # segment one-hot
                pl.BlockSpec((bt, Nb), full),              # segment one-hot^T
                pl.BlockSpec((G, C), full),                # group one-hot
                pl.BlockSpec((C, G), full),                # group one-hot^T
                pl.BlockSpec((C, 4), full),                # packed GN affine
            ],
            out_specs=pl.BlockSpec((C, Nb), lambda i: (0, i)),
        ),
        compiler_params=pltpu.CompilerParams(
            dimension_semantics=("parallel",),
            vmem_limit_bytes=int(vmem_limit_bytes),
        ),
    )(x2, w1, w2, seg, segt, grp, grpt, params)

    return out2.reshape(C, B, L).transpose(1, 0, 2)


def _reference(x, w1, w2, g1w, g1b, g2w, g2b, groups=8):
    """Plain-JAX f32 reference matching the PyTorch forward."""
    B, C, L = x.shape
    G = min(groups, C)

    def gn(h, gamma, beta):
        hg = h.reshape(B, G, C // G, L)
        mean = hg.mean(axis=(2, 3), keepdims=True)
        var = ((hg - mean) ** 2).mean(axis=(2, 3), keepdims=True)
        hn = ((hg - mean) / jnp.sqrt(var + EPS)).reshape(B, C, L)
        return hn * gamma.reshape(1, C, 1) + beta.reshape(1, C, 1)

    h = jnp.einsum("oc,bcl->bol", w1, x)
    h = jax.nn.relu(gn(h, g1w, g1b))
    h = jnp.einsum("oc,bcl->bol", w2, h)
    return jax.nn.relu(gn(h, g2w, g2b) + x)


if __name__ == "__main__":
    B, C, L, groups = 8, 16, 256, 8

    key = jax.random.PRNGKey(0)
    kx, k1, k2, k3, k4, k5, k6 = jax.random.split(key, 7)

    x = jax.random.normal(kx, (B, C, L), dtype=jnp.float32)
    # Conv1d(C, C, 1, bias=False) weights: (C_out, C_in) after squeezing k=1.
    w1 = jax.random.normal(k1, (C, C), dtype=jnp.float32) * (1.0 / jnp.sqrt(C))
    w2 = jax.random.normal(k2, (C, C), dtype=jnp.float32) * (1.0 / jnp.sqrt(C))
    # GroupNorm affine params (perturbed so the affine path is exercised).
    g1w = 1.0 + 0.1 * jax.random.normal(k3, (C,), dtype=jnp.float32)
    g1b = 0.1 * jax.random.normal(k4, (C,), dtype=jnp.float32)
    g2w = 1.0 + 0.1 * jax.random.normal(k5, (C,), dtype=jnp.float32)
    g2b = 0.1 * jax.random.normal(k6, (C,), dtype=jnp.float32)

    ref = _reference(x, w1, w2, g1w, g1b, g2w, g2b, groups=groups)

    # 1) f32 storage, f32 MXU operands: algorithmic-correctness check.
    out = optimized_res_block(x, w1, w2, g1w, g1b, g2w, g2b, groups=groups,
                              conv_dtype=jnp.float32)
    out = jax.block_until_ready(out)
    assert out.shape == (B, C, L)
    assert jnp.max(jnp.abs(out - ref)) < 5e-2

    # 2) f32 storage, bf16 MXU operands (default; bf16-input-level accuracy).
    out_fast = optimized_res_block(x, w1, w2, g1w, g1b, g2w, g2b, groups=groups)
    out_fast = jax.block_until_ready(out_fast)
    assert out_fast.shape == (B, C, L)
    assert jnp.max(jnp.abs(out_fast - ref)) < 0.3

    # 3) bf16 storage (halves HBM traffic); GroupNorm math stays f32 in-kernel.
    xb, w1b, w2b = [a.astype(jnp.bfloat16) for a in (x, w1, w2)]
    outb = optimized_res_block(xb, w1b, w2b, g1w, g1b, g2w, g2b, groups=groups)
    outb = jax.block_until_ready(outb)
    assert outb.dtype == jnp.bfloat16
    assert outb.shape == (B, C, L)
    assert jnp.max(jnp.abs(outb.astype(jnp.float32) - ref)) < 0.35

    print("KERNEL_OK")
</pallas_src>

<mosaic_0001>
module attributes {stable_mosaic.version = 11 : i64} {
  func.func @_resblock_kernel(%arg0: i32, %arg1: memref<16x2048xf32, #tpu.memory_space<vmem>>, %arg2: memref<16x16xf32, #tpu.memory_space<vmem>>, %arg3: memref<16x16xf32, #tpu.memory_space<vmem>>, %arg4: memref<2048x8xf32, #tpu.memory_space<vmem>>, %arg5: memref<8x2048xf32, #tpu.memory_space<vmem>>, %arg6: memref<8x16xf32, #tpu.memory_space<vmem>>, %arg7: memref<16x8xf32, #tpu.memory_space<vmem>>, %arg8: memref<16x4xf32, #tpu.memory_space<vmem>>, %arg9: memref<16x2048xf32, #tpu.memory_space<vmem>>) attributes {dimension_semantics = [#tpu.dimension_semantics<parallel>], iteration_bounds = array<i64: 1>, scalar_prefetch = 0 : i64, scratch_operands = 0 : i64, tpu.core_type = #tpu.core_type<tc>, window_params = [{transform_indices = @transform_0, window_bounds = array<i64: 16, 2048>}, {pipeline_mode = #tpu.pipeline_mode<synchronous>, transform_indices = @transform_1, window_bounds = array<i64: 16, 16>}, {pipeline_mode = #tpu.pipeline_mode<synchronous>, transform_indices = @transform_2, window_bounds = array<i64: 16, 16>}, {pipeline_mode = #tpu.pipeline_mode<synchronous>, transform_indices = @transform_3, window_bounds = array<i64: 2048, 8>}, {pipeline_mode = #tpu.pipeline_mode<synchronous>, transform_indices = @transform_4, window_bounds = array<i64: 8, 2048>}, {pipeline_mode = #tpu.pipeline_mode<synchronous>, transform_indices = @transform_5, window_bounds = array<i64: 8, 16>}, {pipeline_mode = #tpu.pipeline_mode<synchronous>, transform_indices = @transform_6, window_bounds = array<i64: 16, 8>}, {pipeline_mode = #tpu.pipeline_mode<synchronous>, transform_indices = @transform_7, window_bounds = array<i64: 16, 4>}, {transform_indices = @transform_8, window_bounds = array<i64: 16, 2048>}]} {
    %c0 = arith.constant 0 : index
    %c0_0 = arith.constant 0 : index
    %0 = vector.load %arg1[%c0, %c0_0] : memref<16x2048xf32, #tpu.memory_space<vmem>>, vector<16x2048xf32>
    %c0_1 = arith.constant 0 : index
    %c0_2 = arith.constant 0 : index
    %1 = vector.load %arg4[%c0_1, %c0_2] : memref<2048x8xf32, #tpu.memory_space<vmem>>, vector<2048x8xf32>
    %c0_3 = arith.constant 0 : index
    %c0_4 = arith.constant 0 : index
    %2 = vector.load %arg5[%c0_3, %c0_4] : memref<8x2048xf32, #tpu.memory_space<vmem>>, vector<8x2048xf32>
    %c0_5 = arith.constant 0 : index
    %c0_6 = arith.constant 0 : index
    %3 = vector.load %arg6[%c0_5, %c0_6] : memref<8x16xf32, #tpu.memory_space<vmem>>, vector<8x16xf32>
    %c0_7 = arith.constant 0 : index
    %c0_8 = arith.constant 0 : index
    %4 = vector.load %arg7[%c0_7, %c0_8] : memref<16x8xf32, #tpu.memory_space<vmem>>, vector<16x8xf32>
    %c0_9 = arith.constant 0 : index
    %c0_10 = arith.constant 0 : index
    %5 = vector.load %arg8[%c0_9, %c0_10] : memref<16x4xf32, #tpu.memory_space<vmem>>, vector<16x4xf32>
    %c0_11 = arith.constant 0 : index
    %c0_12 = arith.constant 0 : index
    %6 = vector.load %arg2[%c0_11, %c0_12] : memref<16x16xf32, #tpu.memory_space<vmem>>, vector<16x16xf32>
    %c0_13 = arith.constant 0 : index
    %c0_14 = arith.constant 0 : index
    %7 = vector.load %arg3[%c0_13, %c0_14] : memref<16x16xf32, #tpu.memory_space<vmem>>, vector<16x16xf32>
    %cst = arith.constant dense<0.000000e+00> : vector<16x2048xf32>
    %8 = tpu.matmul %6, %0, %cst {dimension_numbers = #tpu.dot_dimension_numbers<[1], [0], [0], [1], [0, 0, 1, 1], [], []>} : vector<16x16xf32>, vector<16x2048xf32>, vector<16x2048xf32> -> vector<16x2048xf32>
    %9 = vector.extract_strided_slice %5 {offsets = [0, 0], sizes = [16, 1], strides = [1, 1]} : vector<16x4xf32> to vector<16x1xf32>
    %10 = vector.extract_strided_slice %5 {offsets = [0, 1], sizes = [16, 1], strides = [1, 1]} : vector<16x4xf32> to vector<16x1xf32>
    %cst_15 = arith.constant dense<0.000000e+00> : vector<16x8xf32>
    %11 = tpu.matmul %8, %1, %cst_15 {dimension_numbers = #tpu.dot_dimension_numbers<[1], [0], [0], [1], [0, 0, 1, 1], [], []>} : vector<16x2048xf32>, vector<2048x8xf32>, vector<16x8xf32> -> vector<16x8xf32>
    %12 = arith.mulf %8, %8 : vector<16x2048xf32>
    %cst_16 = arith.constant dense<0.000000e+00> : vector<16x8xf32>
    %13 = tpu.matmul %12, %1, %cst_16 {dimension_numbers = #tpu.dot_dimension_numbers<[1], [0], [0], [1], [0, 0, 1, 1], [], []>} : vector<16x2048xf32>, vector<2048x8xf32>, vector<16x8xf32> -> vector<16x8xf32>
    %cst_17 = arith.constant dense<0.000000e+00> : vector<8x8xf32>
    %14 = tpu.matmul %3, %11, %cst_17 {dimension_numbers = #tpu.dot_dimension_numbers<[1], [0], [0], [1], [0, 0, 1, 1], [], []>} : vector<8x16xf32>, vector<16x8xf32>, vector<8x8xf32> -> vector<8x8xf32>
    %cst_18 = arith.constant dense<0.000000e+00> : vector<8x8xf32>
    %15 = tpu.matmul %3, %13, %cst_18 {dimension_numbers = #tpu.dot_dimension_numbers<[1], [0], [0], [1], [0, 0, 1, 1], [], []>} : vector<8x16xf32>, vector<16x8xf32>, vector<8x8xf32> -> vector<8x8xf32>
    %cst_19 = arith.constant 0.001953125 : f32
    %16 = vector.broadcast %cst_19 : f32 to vector<8x8xf32>
    %17 = arith.mulf %14, %16 : vector<8x8xf32>
    %cst_20 = arith.constant 0.001953125 : f32
    %18 = vector.broadcast %cst_20 : f32 to vector<8x8xf32>
    %19 = arith.mulf %15, %18 : vector<8x8xf32>
    %20 = arith.mulf %17, %17 : vector<8x8xf32>
    %21 = arith.subf %19, %20 : vector<8x8xf32>
    %cst_21 = arith.constant 0.000000e+00 : f32
    %22 = vector.broadcast %cst_21 : f32 to vector<8x8xf32>
    %23 = arith.maximumf %21, %22 : vector<8x8xf32>
    %cst_22 = arith.constant 9.99999974E-6 : f32
    %24 = vector.broadcast %cst_22 : f32 to vector<8x8xf32>
    %25 = arith.addf %23, %24 : vector<8x8xf32>
    %26 = math.rsqrt %25 : vector<8x8xf32>
    %cst_23 = arith.constant dense<0.000000e+00> : vector<16x8xf32>
    %27 = tpu.matmul %4, %17, %cst_23 {dimension_numbers = #tpu.dot_dimension_numbers<[1], [0], [0], [1], [0, 0, 1, 1], [], []>} : vector<16x8xf32>, vector<8x8xf32>, vector<16x8xf32> -> vector<16x8xf32>
    %cst_24 = arith.constant dense<0.000000e+00> : vector<16x8xf32>
    %28 = tpu.matmul %4, %26, %cst_24 {dimension_numbers = #tpu.dot_dimension_numbers<[1], [0], [0], [1], [0, 0, 1, 1], [], []>} : vector<16x8xf32>, vector<8x8xf32>, vector<16x8xf32> -> vector<16x8xf32>
    %29 = vector.broadcast %9 : vector<16x1xf32> to vector<16x8xf32>
    %30 = arith.mulf %28, %29 : vector<16x8xf32>
    %31 = arith.mulf %27, %30 : vector<16x8xf32>
    %32 = vector.broadcast %10 : vector<16x1xf32> to vector<16x8xf32>
    %33 = arith.subf %32, %31 : vector<16x8xf32>
    %cst_25 = arith.constant dense<0.000000e+00> : vector<16x2048xf32>
    %34 = tpu.matmul %30, %2, %cst_25 {dimension_numbers = #tpu.dot_dimension_numbers<[1], [0], [0], [1], [0, 0, 1, 1], [], []>} : vector<16x8xf32>, vector<8x2048xf32>, vector<16x2048xf32> -> vector<16x2048xf32>
    %cst_26 = arith.constant dense<0.000000e+00> : vector<16x2048xf32>
    %35 = tpu.matmul %33, %2, %cst_26 {dimension_numbers = #tpu.dot_dimension_numbers<[1], [0], [0], [1], [0, 0, 1, 1], [], []>} : vector<16x8xf32>, vector<8x2048xf32>, vector<16x2048xf32> -> vector<16x2048xf32>
    %36 = arith.mulf %8, %34 : vector<16x2048xf32>
    %37 = arith.addf %36, %35 : vector<16x2048xf32>
    %cst_27 = arith.constant 0.000000e+00 : f32
    %38 = vector.broadcast %cst_27 : f32 to vector<16x2048xf32>
    %39 = arith.maximumf %37, %38 : vector<16x2048xf32>
    %cst_28 = arith.constant dense<0.000000e+00> : vector<16x2048xf32>
    %40 = tpu.matmul %7, %39, %cst_28 {dimension_numbers = #tpu.dot_dimension_numbers<[1], [0], [0], [1], [0, 0, 1, 1], [], []>} : vector<16x16xf32>, vector<16x2048xf32>, vector<16x2048xf32> -> vector<16x2048xf32>
    %41 = vector.extract_strided_slice %5 {offsets = [0, 2], sizes = [16, 1], strides = [1, 1]} : vector<16x4xf32> to vector<16x1xf32>
    %42 = vector.extract_strided_slice %5 {offsets = [0, 3], sizes = [16, 1], strides = [1, 1]} : vector<16x4xf32> to vector<16x1xf32>
    %cst_29 = arith.constant dense<0.000000e+00> : vector<16x8xf32>
    %43 = tpu.matmul %40, %1, %cst_29 {dimension_numbers = #tpu.dot_dimension_numbers<[1], [0], [0], [1], [0, 0, 1, 1], [], []>} : vector<16x2048xf32>, vector<2048x8xf32>, vector<16x8xf32> -> vector<16x8xf32>
    %44 = arith.mulf %40, %40 : vector<16x2048xf32>
    %cst_30 = arith.constant dense<0.000000e+00> : vector<16x8xf32>
    %45 = tpu.matmul %44, %1, %cst_30 {dimension_numbers = #tpu.dot_dimension_numbers<[1], [0], [0], [1], [0, 0, 1, 1], [], []>} : vector<16x2048xf32>, vector<2048x8xf32>, vector<16x8xf32> -> vector<16x8xf32>
    %cst_31 = arith.constant dense<0.000000e+00> : vector<8x8xf32>
    %46 = tpu.matmul %3, %43, %cst_31 {dimension_numbers = #tpu.dot_dimension_numbers<[1], [0], [0], [1], [0, 0, 1, 1], [], []>} : vector<8x16xf32>, vector<16x8xf32>, vector<8x8xf32> -> vector<8x8xf32>
    %cst_32 = arith.constant dense<0.000000e+00> : vector<8x8xf32>
    %47 = tpu.matmul %3, %45, %cst_32 {dimension_numbers = #tpu.dot_dimension_numbers<[1], [0], [0], [1], [0, 0, 1, 1], [], []>} : vector<8x16xf32>, vector<16x8xf32>, vector<8x8xf32> -> vector<8x8xf32>
    %cst_33 = arith.constant 0.001953125 : f32
    %48 = vector.broadcast %cst_33 : f32 to vector<8x8xf32>
    %49 = arith.mulf %46, %48 : vector<8x8xf32>
    %cst_34 = arith.constant 0.001953125 : f32
    %50 = vector.broadcast %cst_34 : f32 to vector<8x8xf32>
    %51 = arith.mulf %47, %50 : vector<8x8xf32>
    %52 = arith.mulf %49, %49 : vector<8x8xf32>
    %53 = arith.subf %51, %52 : vector<8x8xf32>
    %cst_35 = arith.constant 0.000000e+00 : f32
    %54 = vector.broadcast %cst_35 : f32 to vector<8x8xf32>
    %55 = arith.maximumf %53, %54 : vector<8x8xf32>
    %cst_36 = arith.constant 9.99999974E-6 : f32
    %56 = vector.broadcast %cst_36 : f32 to vector<8x8xf32>
    %57 = arith.addf %55, %56 : vector<8x8xf32>
    %58 = math.rsqrt %57 : vector<8x8xf32>
    %cst_37 = arith.constant dense<0.000000e+00> : vector<16x8xf32>
    %59 = tpu.matmul %4, %49, %cst_37 {dimension_numbers = #tpu.dot_dimension_numbers<[1], [0], [0], [1], [0, 0, 1, 1], [], []>} : vector<16x8xf32>, vector<8x8xf32>, vector<16x8xf32> -> vector<16x8xf32>
    %cst_38 = arith.constant dense<0.000000e+00> : vector<16x8xf32>
    %60 = tpu.matmul %4, %58, %cst_38 {dimension_numbers = #tpu.dot_dimension_numbers<[1], [0], [0], [1], [0, 0, 1, 1], [], []>} : vector<16x8xf32>, vector<8x8xf32>, vector<16x8xf32> -> vector<16x8xf32>
    %61 = vector.broadcast %41 : vector<16x1xf32> to vector<16x8xf32>
    %62 = arith.mulf %60, %61 : vector<16x8xf32>
    %63 = arith.mulf %59, %62 : vector<16x8xf32>
    %64 = vector.broadcast %42 : vector<16x1xf32> to vector<16x8xf32>
    %65 = arith.subf %64, %63 : vector<16x8xf32>
    %cst_39 = arith.constant dense<0.000000e+00> : vector<16x2048xf32>
    %66 = tpu.matmul %62, %2, %cst_39 {dimension_numbers = #tpu.dot_dimension_numbers<[1], [0], [0], [1], [0, 0, 1, 1], [], []>} : vector<16x8xf32>, vector<8x2048xf32>, vector<16x2048xf32> -> vector<16x2048xf32>
    %cst_40 = arith.constant dense<0.000000e+00> : vector<16x2048xf32>
    %67 = tpu.matmul %65, %2, %cst_40 {dimension_numbers = #tpu.dot_dimension_numbers<[1], [0], [0], [1], [0, 0, 1, 1], [], []>} : vector<16x8xf32>, vector<8x2048xf32>, vector<16x2048xf32> -> vector<16x2048xf32>
    %68 = arith.mulf %40, %66 : vector<16x2048xf32>
    %69 = arith.addf %68, %67 : vector<16x2048xf32>
    %70 = arith.addf %69, %0 : vector<16x2048xf32>
    %cst_41 = arith.constant 0.000000e+00 : f32
    %71 = vector.broadcast %cst_41 : f32 to vector<16x2048xf32>
    %72 = arith.maximumf %70, %71 : vector<16x2048xf32>
    %c0_42 = arith.constant 0 : index
    %c0_43 = arith.constant 0 : index
    %73 = vector.load %arg9[%c0_42, %c0_43] : memref<16x2048xf32, #tpu.memory_space<vmem>>, vector<16x2048xf32>
    tpu.vector_store %arg9[%c0_42, %c0_43], %72 {strides = array<i32>} : memref<16x2048xf32, #tpu.memory_space<vmem>>, vector<16x2048xf32>,
    return
  }
  func.func @transform_0(%arg0: i32) -> (i32, i32) {
    %c0_i32 = arith.constant 0 : i32
    %c0_i32_0 = arith.constant 0 : i32
    return %c0_i32, %arg0 : i32, i32
  }
  func.func @transform_1(%arg0: i32) -> (i32, i32) {
    %c0_i32 = arith.constant 0 : i32
    %c0_i32_0 = arith.constant 0 : i32
    %c0_i32_1 = arith.constant 0 : i32
    return %c0_i32, %c0_i32_0 : i32, i32
  }
  func.func @transform_2(%arg0: i32) -> (i32, i32) {
    %c0_i32 = arith.constant 0 : i32
    %c0_i32_0 = arith.constant 0 : i32
    %c0_i32_1 = arith.constant 0 : i32
    return %c0_i32, %c0_i32_0 : i32, i32
  }
  func.func @transform_3(%arg0: i32) -> (i32, i32) {
    %c0_i32 = arith.constant 0 : i32
    %c0_i32_0 = arith.constant 0 : i32
    %c0_i32_1 = arith.constant 0 : i32
    return %c0_i32, %c0_i32_0 : i32, i32
  }
  func.func @transform_4(%arg0: i32) -> (i32, i32) {
    %c0_i32 = arith.constant 0 : i32
    %c0_i32_0 = arith.constant 0 : i32
    %c0_i32_1 = arith.constant 0 : i32
    return %c0_i32, %c0_i32_0 : i32, i32
  }
  func.func @transform_5(%arg0: i32) -> (i32, i32) {
    %c0_i32 = arith.constant 0 : i32
    %c0_i32_0 = arith.constant 0 : i32
    %c0_i32_1 = arith.constant 0 : i32
    return %c0_i32, %c0_i32_0 : i32, i32
  }
  func.func @transform_6(%arg0: i32) -> (i32, i32) {
    %c0_i32 = arith.constant 0 : i32
    %c0_i32_0 = arith.constant 0 : i32
    %c0_i32_1 = arith.constant 0 : i32
    return %c0_i32, %c0_i32_0 : i32, i32
  }
  func.func @transform_7(%arg0: i32) -> (i32, i32) {
    %c0_i32 = arith.constant 0 : i32
    %c0_i32_0 = arith.constant 0 : i32
    %c0_i32_1 = arith.constant 0 : i32
    return %c0_i32, %c0_i32_0 : i32, i32
  }
  func.func @transform_8(%arg0: i32) -> (i32, i32) {
    %c0_i32 = arith.constant 0 : i32
    %c0_i32_0 = arith.constant 0 : i32
    return %c0_i32, %arg0 : i32, i32
  }
}

</mosaic_0001>

<llo_original>
// kernel: tpu_custom_call.1
$region0: #{tpu_custom_call.1}
  #allocation0 [shape = 'u32[]', space=smem, size = 0x4, offset = 0x4, fixed_abs, tag = 'smem constant byte address 0x4 - core index']
  #allocation1 [shape = 'u32[144,128]{1,0:T(1,128)}', space=vmem, size = 0x12000, scoped, tag = 'internal scratch']
  %s0 = inlined_call_operand.vmem [shape: f32[16,2048], index: 0, kind: input, shape index: {}]
  %s1 = inlined_call_operand.vmem [shape: f32[16,16], index: 1, kind: input, shape index: {}]
  %s2 = inlined_call_operand.vmem [shape: f32[16,16], index: 2, kind: input, shape index: {}]
  %s3 = inlined_call_operand.vmem [shape: f32[2048,8], index: 3, kind: input, shape index: {}]
  %s4 = inlined_call_operand.vmem [shape: f32[8,2048], index: 4, kind: input, shape index: {}]
  %s5 = inlined_call_operand.vmem [shape: f32[8,16], index: 5, kind: input, shape index: {}]
  %s6 = inlined_call_operand.vmem [shape: f32[16,8], index: 6, kind: input, shape index: {}]
  %s7 = inlined_call_operand.vmem [shape: f32[16,4], index: 7, kind: input, shape index: {}]
  %s8 = inlined_call_operand.hbm [shape: f32[16,2048], index: 8, kind: output, shape index: {}]
  %s9 = sld [smem:[#allocation0]]
  $region42: #{tpu_custom_call.1} parent=0
    _
  %s11 = ssub.s32 1, %s9
  %s12 = scalar_select 0, %s11, %s9
  $region1: #{tpu_custom_call.1} parent=0
    #allocation2 [shape = 'u8[131072]{0}', space=vmem, size = 0x20000, scoped, tag = 'output window, operand 0, single buffered']
    #allocation3 [shape = 's32[1]{0}', space=sflag, size = 0x4, scoped, tag = 'scoped memory for tpu_custom_call.1']
    %13 = vsyncpa [#allocation3], 0
    // Predicated region
    $region2: #{tpu_custom_call.1} parent=1 // pred_check
      _
    $region3: #{tpu_custom_call.1} parent=1 // pred_check_branch
      %15 = sbr.rel (0) target = $region5
    $region4: #{tpu_custom_call.1} parent=1 // pred_region
      _
    $region5: #{tpu_custom_call.1} parent=1 // pred_fallthru
      _
    // Predicated region
    $region6: #{tpu_custom_call.1} parent=1 // pred_check
      _
    $region7: #{tpu_custom_call.1} parent=1 // pred_check_branch
      %17 = sbr.rel (0) target = $region9
    $region8: #{tpu_custom_call.1} parent=1 // pred_region
      _
    $region9: #{tpu_custom_call.1} parent=1 // pred_fallthru
      _
    // Predicated region
    $region10: #{tpu_custom_call.1} parent=1 // pred_check
      _
    $region11: #{tpu_custom_call.1} parent=1 // pred_check_branch
      %19 = sbr.rel (0) target = $region13
    $region12: #{tpu_custom_call.1} parent=1 // pred_region
      _
    $region13: #{tpu_custom_call.1} parent=1 // pred_fallthru
      _
    // Predicated region
    $region14: #{tpu_custom_call.1} parent=1 // pred_check
      _
    $region15: #{tpu_custom_call.1} parent=1 // pred_check_branch
      %21 = sbr.rel (0) target = $region17
    $region16: #{tpu_custom_call.1} parent=1 // pred_region
      _
    $region17: #{tpu_custom_call.1} parent=1 // pred_fallthru
      _
    // Predicated region
    $region18: #{tpu_custom_call.1} parent=1 // pred_check
      _
    $region19: #{tpu_custom_call.1} parent=1 // pred_check_branch
      %23 = sbr.rel (0) target = $region21
    $region20: #{tpu_custom_call.1} parent=1 // pred_region
      _
    $region21: #{tpu_custom_call.1} parent=1 // pred_fallthru
      _
    // Predicated region
    $region22: #{tpu_custom_call.1} parent=1 // pred_check
      _
    $region23: #{tpu_custom_call.1} parent=1 // pred_check_branch
      %25 = sbr.rel (0) target = $region25
    $region24: #{tpu_custom_call.1} parent=1 // pred_region
      _
    $region25: #{tpu_custom_call.1} parent=1 // pred_fallthru
      _
    // Predicated region
    $region26: #{tpu_custom_call.1} parent=1 // pred_check
      _
    $region27: #{tpu_custom_call.1} parent=1 // pred_check_branch
      %27 = sbr.rel (0) target = $region29
    $region28: #{tpu_custom_call.1} parent=1 // pred_region
      _
    $region29: #{tpu_custom_call.1} parent=1 // pred_fallthru
      _
    // Predicated region
    $region30: #{tpu_custom_call.1} parent=1 // pred_check
      _
    $region31: #{tpu_custom_call.1} parent=1 // pred_check_branch
      %29 = sbr.rel (0) target = $region33
    $region32: #{tpu_custom_call.1} parent=1 // pred_region
      _
    $region33: #{tpu_custom_call.1} parent=1 // pred_fallthru
      _
    %v30 = vld [vmem:[%s0] sm:$0xff]
    %v31 = vld [vmem:[%s0 + $0x8] sm:$0xff]
    %v32 = vld [vmem:[%s0 + $0x10] sm:$0xff]
    %v33 = vld [vmem:[%s0 + $0x18] sm:$0xff]
    %v34 = vld [vmem:[%s0 + $0x20] sm:$0xff]
    %v35 = vld [vmem:[%s0 + $0x28] sm:$0xff]
    %v36 = vld [vmem:[%s0 + $0x30] sm:$0xff]
    %v37 = vld [vmem:[%s0 + $0x38] sm:$0xff]
    %v38 = vld [vmem:[%s0 + $0x40] sm:$0xff]
    %v39 = vld [vmem:[%s0 + $0x48] sm:$0xff]
    %v40 = vld [vmem:[%s0 + $0x50] sm:$0xff]
    %v41 = vld [vmem:[%s0 + $0x58] sm:$0xff]
    %v42 = vld [vmem:[%s0 + $0x60] sm:$0xff]
    %v43 = vld [vmem:[%s0 + $0x68] sm:$0xff]
    %v44 = vld [vmem:[%s0 + $0x70] sm:$0xff]
    %v45 = vld [vmem:[%s0 + $0x78] sm:$0xff]
    %v46 = vld [vmem:[%s0 + $0x80] sm:$0xff]
    %v47 = vld [vmem:[%s0 + $0x88] sm:$0xff]
    %v48 = vld [vmem:[%s0 + $0x90] sm:$0xff]
    %v49 = vld [vmem:[%s0 + $0x98] sm:$0xff]
    %v50 = vld [vmem:[%s0 + $0xa0] sm:$0xff]
    %v51 = vld [vmem:[%s0 + $0xa8] sm:$0xff]
    %v52 = vld [vmem:[%s0 + $0xb0] sm:$0xff]
    %v53 = vld [vmem:[%s0 + $0xb8] sm:$0xff]
    %v54 = vld [vmem:[%s0 + $0xc0] sm:$0xff]
    %v55 = vld [vmem:[%s0 + $0xc8] sm:$0xff]
    %v56 = vld [vmem:[%s0 + $0xd0] sm:$0xff]
    %v57 = vld [vmem:[%s0 + $0xd8] sm:$0xff]
    %v58 = vld [vmem:[%s0 + $0xe0] sm:$0xff]
    %v59 = vld [vmem:[%s0 + $0xe8] sm:$0xff]
    %v60 = vld [vmem:[%s0 + $0xf0] sm:$0xff]
    %v61 = vld [vmem:[%s0 + $0xf8] sm:$0xff]
    %v62 = vld [vmem:[%s3] sm:$0xff]
    %v63 = vld [vmem:[%s3 + $0x8] sm:$0xff]
    %v64 = vld [vmem:[%s3 + $0x10] sm:$0xff]
    %v65 = vld [vmem:[%s3 + $0x18] sm:$0xff]
    %v66 = vld [vmem:[%s3 + $0x20] sm:$0xff]
    %v67 = vld [vmem:[%s3 + $0x28] sm:$0xff]
    %v68 = vld [vmem:[%s3 + $0x30] sm:$0xff]
    %v69 = vld [vmem:[%s3 + $0x38] sm:$0xff]
    %v70 = vld [vmem:[%s3 + $0x40] sm:$0xff]
    %v71 = vld [vmem:[%s3 + $0x48] sm:$0xff]
    %v72 = vld [vmem:[%s3 + $0x50] sm:$0xff]
    %v73 = vld [vmem:[%s3 + $0x58] sm:$0xff]
    %v74 = vld [vmem:[%s3 + $0x60] sm:$0xff]
    %v75 = vld [vmem:[%s3 + $0x68] sm:$0xff]
    %v76 = vld [vmem:[%s3 + $0x70] sm:$0xff]
    %v77 = vld [vmem:[%s3 + $0x78] sm:$0xff]
    %v78 = vld [vmem:[%s3 + $0x80] sm:$0xff]
    %v79 = vld [vmem:[%s3 + $0x88] sm:$0xff]
    %v80 = vld [vmem:[%s3 + $0x90] sm:$0xff]
    %v81 = vld [vmem:[%s3 + $0x98] sm:$0xff]
    %v82 = vld [vmem:[%s3 + $0xa0] sm:$0xff]
    %v83 = vld [vmem:[%s3 + $0xa8] sm:$0xff]
    %v84 = vld [vmem:[%s3 + $0xb0] sm:$0xff]
    %v85 = vld [vmem:[%s3 + $0xb8] sm:$0xff]
    %v86 = vld [vmem:[%s3 + $0xc0] sm:$0xff]
    %v87 = vld [vmem:[%s3 + $0xc8] sm:$0xff]
    %v88 = vld [vmem:[%s3 + $0xd0] sm:$0xff]
    %v89 = vld [vmem:[%s3 + $0xd8] sm:$0xff]
    %v90 = vld [vmem:[%s3 + $0xe0] sm:$0xff]
    %v91 = vld [vmem:[%s3 + $0xe8] sm:$0xff]
    %v92 = vld [vmem:[%s3 + $0xf0] sm:$0xff]
    %v93 = vld [vmem:[%s3 + $0xf8] sm:$0xff]
    %v94 = vld [vmem:[%s3 + $0x100] sm:$0xff]
    %v95 = vld [vmem:[%s3 + $0x108] sm:$0xff]
    %v96 = vld [vmem:[%s3 + $0x110] sm:$0xff]
    %v97 = vld [vmem:[%s3 + $0x118] sm:$0xff]
    %v98 = vld [vmem:[%s3 + $0x120] sm:$0xff]
    %v99 = vld [vmem:[%s3 + $0x128] sm:$0xff]
    %v100 = vld [vmem:[%s3 + $0x130] sm:$0xff]
    %v101 = vld [vmem:[%s3 + $0x138] sm:$0xff]
    %v102 = vld [vmem:[%s3 + $0x140] sm:$0xff]
    %v103 = vld [vmem:[%s3 + $0x148] sm:$0xff]
    %v104 = vld [vmem:[%s3 + $0x150] sm:$0xff]
    %v105 = vld [vmem:[%s3 + $0x158] sm:$0xff]
    %v106 = vld [vmem:[%s3 + $0x160] sm:$0xff]
    %v107 = vld [vmem:[%s3 + $0x168] sm:$0xff]
    %v108 = vld [vmem:[%s3 + $0x170] sm:$0xff]
    %v109 = vld [vmem:[%s3 + $0x178] sm:$0xff]
    %v110 = vld [vmem:[%s3 + $0x180] sm:$0xff]
    %v111 = vld [vmem:[%s3 + $0x188] sm:$0xff]
    %v112 = vld [vmem:[%s3 + $0x190] sm:$0xff]
    %v113 = vld [vmem:[%s3 + $0x198] sm:$0xff]
    %v114 = vld [vmem:[%s3 + $0x1a0] sm:$0xff]
    %v115 = vld [vmem:[%s3 + $0x1a8] sm:$0xff]
    %v116 = vld [vmem:[%s3 + $0x1b0] sm:$0xff]
    %v117 = vld [vmem:[%s3 + $0x1b8] sm:$0xff]
    %v118 = vld [vmem:[%s3 + $0x1c0] sm:$0xff]
    %v119 = vld [vmem:[%s3 + $0x1c8] sm:$0xff]
    %v120 = vld [vmem:[%s3 + $0x1d0] sm:$0xff]
    %v121 = vld [vmem:[%s3 + $0x1d8] sm:$0xff]
    %v122 = vld [vmem:[%s3 + $0x1e0] sm:$0xff]
    %v123 = vld [vmem:[%s3 + $0x1e8] sm:$0xff]
    %v124 = vld [vmem:[%s3 + $0x1f0] sm:$0xff]
    %v125 = vld [vmem:[%s3 + $0x1f8] sm:$0xff]
    %v126 = vld [vmem:[%s3 + $0x200] sm:$0xff]
    %v127 = vld [vmem:[%s3 + $0x208] sm:$0xff]
    %v128 = vld [vmem:[%s3 + $0x210] sm:$0xff]
    %v129 = vld [vmem:[%s3 + $0x218] sm:$0xff]
    %v130 = vld [vmem:[%s3 + $0x220] sm:$0xff]
    %v131 = vld [vmem:[%s3 + $0x228] sm:$0xff]
    %v132 = vld [vmem:[%s3 + $0x230] sm:$0xff]
    %v133 = vld [vmem:[%s3 + $0x238] sm:$0xff]
    %v134 = vld [vmem:[%s3 + $0x240] sm:$0xff]
    %v135 = vld [vmem:[%s3 + $0x248] sm:$0xff]
    %v136 = vld [vmem:[%s3 + $0x250] sm:$0xff]
    %v137 = vld [vmem:[%s3 + $0x258] sm:$0xff]
    %v138 = vld [vmem:[%s3 + $0x260] sm:$0xff]
    %v139 = vld [vmem:[%s3 + $0x268] sm:$0xff]
    %v140 = vld [vmem:[%s3 + $0x270] sm:$0xff]
    %v141 = vld [vmem:[%s3 + $0x278] sm:$0xff]
    %v142 = vld [vmem:[%s3 + $0x280] sm:$0xff]
    %v143 = vld [vmem:[%s3 + $0x288] sm:$0xff]
    %v144 = vld [vmem:[%s3 + $0x290] sm:$0xff]
    %v145 = vld [vmem:[%s3 + $0x298] sm:$0xff]
    %v146 = vld [vmem:[%s3 + $0x2a0] sm:$0xff]
    %v147 = vld [vmem:[%s3 + $0x2a8] sm:$0xff]
    %v148 = vld [vmem:[%s3 + $0x2b0] sm:$0xff]
    %v149 = vld [vmem:[%s3 + $0x2b8] sm:$0xff]
    %v150 = vld [vmem:[%s3 + $0x2c0] sm:$0xff]
    %v151 = vld [vmem:[%s3 + $0x2c8] sm:$0xff]
    %v152 = vld [vmem:[%s3 + $0x2d0] sm:$0xff]
    %v153 = vld [vmem:[%s3 + $0x2d8] sm:$0xff]
    %v154 = vld [vmem:[%s3 + $0x2e0] sm:$0xff]
    %v155 = vld [vmem:[%s3 + $0x2e8] sm:$0xff]
    %v156 = vld [vmem:[%s3 + $0x2f0] sm:$0xff]
    %v157 = vld [vmem:[%s3 + $0x2f8] sm:$0xff]
    %v158 = vld [vmem:[%s3 + $0x300] sm:$0xff]
    %v159 = vld [vmem:[%s3 + $0x308] sm:$0xff]
    %v160 = vld [vmem:[%s3 + $0x310] sm:$0xff]
    %v161 = vld [vmem:[%s3 + $0x318] sm:$0xff]
    %v162 = vld [vmem:[%s3 + $0x320] sm:$0xff]
    %v163 = vld [vmem:[%s3 + $0x328] sm:$0xff]
    %v164 = vld [vmem:[%s3 + $0x330] sm:$0xff]
    %v165 = vld [vmem:[%s3 + $0x338] sm:$0xff]
    %v166 = vld [vmem:[%s3 + $0x340] sm:$0xff]
    %v167 = vld [vmem:[%s3 + $0x348] sm:$0xff]
    %v168 = vld [vmem:[%s3 + $0x350] sm:$0xff]
    %v169 = vld [vmem:[%s3 + $0x358] sm:$0xff]
    %v170 = vld [vmem:[%s3 + $0x360] sm:$0xff]
    %v171 = vld [vmem:[%s3 + $0x368] sm:$0xff]
    %v172 = vld [vmem:[%s3 + $0x370] sm:$0xff]
    %v173 = vld [vmem:[%s3 + $0x378] sm:$0xff]
    %v174 = vld [vmem:[%s3 + $0x380] sm:$0xff]
    %v175 = vld [vmem:[%s3 + $0x388] sm:$0xff]
    %v176 = vld [vmem:[%s3 + $0x390] sm:$0xff]
    %v177 = vld [vmem:[%s3 + $0x398] sm:$0xff]
    %v178 = vld [vmem:[%s3 + $0x3a0] sm:$0xff]
    %v179 = vld [vmem:[%s3 + $0x3a8] sm:$0xff]
    %v180 = vld [vmem:[%s3 + $0x3b0] sm:$0xff]
    %v181 = vld [vmem:[%s3 + $0x3b8] sm:$0xff]
    %v182 = vld [vmem:[%s3 + $0x3c0] sm:$0xff]
    %v183 = vld [vmem:[%s3 + $0x3c8] sm:$0xff]
    %v184 = vld [vmem:[%s3 + $0x3d0] sm:$0xff]
    %v185 = vld [vmem:[%s3 + $0x3d8] sm:$0xff]
    %v186 = vld [vmem:[%s3 + $0x3e0] sm:$0xff]
    %v187 = vld [vmem:[%s3 + $0x3e8] sm:$0xff]
    %v188 = vld [vmem:[%s3 + $0x3f0] sm:$0xff]
    %v189 = vld [vmem:[%s3 + $0x3f8] sm:$0xff]
    %v190 = vld [vmem:[%s3 + $0x400] sm:$0xff]
    %v191 = vld [vmem:[%s3 + $0x408] sm:$0xff]
    %v192 = vld [vmem:[%s3 + $0x410] sm:$0xff]
    %v193 = vld [vmem:[%s3 + $0x418] sm:$0xff]
    %v194 = vld [vmem:[%s3 + $0x420] sm:$0xff]
    %v195 = vld [vmem:[%s3 + $0x428] sm:$0xff]
    %v196 = vld [vmem:[%s3 + $0x430] sm:$0xff]
    %v197 = vld [vmem:[%s3 + $0x438] sm:$0xff]
    %v198 = vld [vmem:[%s3 + $0x440] sm:$0xff]
    %v199 = vld [vmem:[%s3 + $0x448] sm:$0xff]
    %v200 = vld [vmem:[%s3 + $0x450] sm:$0xff]
    %v201 = vld [vmem:[%s3 + $0x458] sm:$0xff]
    %v202 = vld [vmem:[%s3 + $0x460] sm:$0xff]
    %v203 = vld [vmem:[%s3 + $0x468] sm:$0xff]
    %v204 = vld [vmem:[%s3 + $0x470] sm:$0xff]
    %v205 = vld [vmem:[%s3 + $0x478] sm:$0xff]
    %v206 = vld [vmem:[%s3 + $0x480] sm:$0xff]
    %v207 = vld [vmem:[%s3 + $0x488] sm:$0xff]
    %v208 = vld [vmem:[%s3 + $0x490] sm:$0xff]
    %v209 = vld [vmem:[%s3 + $0x498] sm:$0xff]
    %v210 = vld [vmem:[%s3 + $0x4a0] sm:$0xff]
    %v211 = vld [vmem:[%s3 + $0x4a8] sm:$0xff]
    %v212 = vld [vmem:[%s3 + $0x4b0] sm:$0xff]
    %v213 = vld [vmem:[%s3 + $0x4b8] sm:$0xff]
    %v214 = vld [vmem:[%s3 + $0x4c0] sm:$0xff]
    %v215 = vld [vmem:[%s3 + $0x4c8] sm:$0xff]
    %v216 = vld [vmem:[%s3 + $0x4d0] sm:$0xff]
    %v217 = vld [vmem:[%s3 + $0x4d8] sm:$0xff]
    %v218 = vld [vmem:[%s3 + $0x4e0] sm:$0xff]
    %v219 = vld [vmem:[%s3 + $0x4e8] sm:$0xff]
    %v220 = vld [vmem:[%s3 + $0x4f0] sm:$0xff]
    %v221 = vld [vmem:[%s3 + $0x4f8] sm:$0xff]
    %v222 = vld [vmem:[%s3 + $0x500] sm:$0xff]
    %v223 = vld [vmem:[%s3 + $0x508] sm:$0xff]
    %v224 = vld [vmem:[%s3 + $0x510] sm:$0xff]
    %v225 = vld [vmem:[%s3 + $0x518] sm:$0xff]
    %v226 = vld [vmem:[%s3 + $0x520] sm:$0xff]
    %v227 = vld [vmem:[%s3 + $0x528] sm:$0xff]
    %v228 = vld [vmem:[%s3 + $0x530] sm:$0xff]
    %v229 = vld [vmem:[%s3 + $0x538] sm:$0xff]
    %v230 = vld [vmem:[%s3 + $0x540] sm:$0xff]
    %v231 = vld [vmem:[%s3 + $0x548] sm:$0xff]
    %v232 = vld [vmem:[%s3 + $0x550] sm:$0xff]
    %v233 = vld [vmem:[%s3 + $0x558] sm:$0xff]
    %v234 = vld [vmem:[%s3 + $0x560] sm:$0xff]
    %v235 = vld [vmem:[%s3 + $0x568] sm:$0xff]
    %v236 = vld [vmem:[%s3 + $0x570] sm:$0xff]
    %v237 = vld [vmem:[%s3 + $0x578] sm:$0xff]
    %v238 = vld [vmem:[%s3 + $0x580] sm:$0xff]
    %v239 = vld [vmem:[%s3 + $0x588] sm:$0xff]
    %v240 = vld [vmem:[%s3 + $0x590] sm:$0xff]
    %v241 = vld [vmem:[%s3 + $0x598] sm:$0xff]
    %v242 = vld [vmem:[%s3 + $0x5a0] sm:$0xff]
    %v243 = vld [vmem:[%s3 + $0x5a8] sm:$0xff]
    %v244 = vld [vmem:[%s3 + $0x5b0] sm:$0xff]
    %v245 = vld [vmem:[%s3 + $0x5b8] sm:$0xff]
    %v246 = vld [vmem:[%s3 + $0x5c0] sm:$0xff]
    %v247 = vld [vmem:[%s3 + $0x5c8] sm:$0xff]
    %v248 = vld [vmem:[%s3 + $0x5d0] sm:$0xff]
    %v249 = vld [vmem:[%s3 + $0x5d8] sm:$0xff]
    %v250 = vld [vmem:[%s3 + $0x5e0] sm:$0xff]
    %v251 = vld [vmem:[%s3 + $0x5e8] sm:$0xff]
    %v252 = vld [vmem:[%s3 + $0x5f0] sm:$0xff]
    %v253 = vld [vmem:[%s3 + $0x5f8] sm:$0xff]
    %v254 = vld [vmem:[%s3 + $0x600] sm:$0xff]
    %v255 = vld [vmem:[%s3 + $0x608] sm:$0xff]
    %v256 = vld [vmem:[%s3 + $0x610] sm:$0xff]
    %v257 = vld [vmem:[%s3 + $0x618] sm:$0xff]
    %v258 = vld [vmem:[%s3 + $0x620] sm:$0xff]
    %v259 = vld [vmem:[%s3 + $0x628] sm:$0xff]
    %v260 = vld [vmem:[%s3 + $0x630] sm:$0xff]
    %v261 = vld [vmem:[%s3 + $0x638] sm:$0xff]
    %v262 = vld [vmem:[%s3 + $0x640] sm:$0xff]
    %v263 = vld [vmem:[%s3 + $0x648] sm:$0xff]
    %v264 = vld [vmem:[%s3 + $0x650] sm:$0xff]
    %v265 = vld [vmem:[%s3 + $0x658] sm:$0xff]
    %v266 = vld [vmem:[%s3 + $0x660] sm:$0xff]
    %v267 = vld [vmem:[%s3 + $0x668] sm:$0xff]
    %v268 = vld [vmem:[%s3 + $0x670] sm:$0xff]
    %v269 = vld [vmem:[%s3 + $0x678] sm:$0xff]
    %v270 = vld [vmem:[%s3 + $0x680] sm:$0xff]
    %v271 = vld [vmem:[%s3 + $0x688] sm:$0xff]
    %v272 = vld [vmem:[%s3 + $0x690] sm:$0xff]
    %v273 = vld [vmem:[%s3 + $0x698] sm:$0xff]
    %v274 = vld [vmem:[%s3 + $0x6a0] sm:$0xff]
    %v275 = vld [vmem:[%s3 + $0x6a8] sm:$0xff]
    %v276 = vld [vmem:[%s3 + $0x6b0] sm:$0xff]
    %v277 = vld [vmem:[%s3 + $0x6b8] sm:$0xff]
    %v278 = vld [vmem:[%s3 + $0x6c0] sm:$0xff]
    %v279 = vld [vmem:[%s3 + $0x6c8] sm:$0xff]
    %v280 = vld [vmem:[%s3 + $0x6d0] sm:$0xff]
    %v281 = vld [vmem:[%s3 + $0x6d8] sm:$0xff]
    %v282 = vld [vmem:[%s3 + $0x6e0] sm:$0xff]
    %v283 = vld [vmem:[%s3 + $0x6e8] sm:$0xff]
    %v284 = vld [vmem:[%s3 + $0x6f0] sm:$0xff]
    %v285 = vld [vmem:[%s3 + $0x6f8] sm:$0xff]
    %v286 = vld [vmem:[%s3 + $0x700] sm:$0xff]
    %v287 = vld [vmem:[%s3 + $0x708] sm:$0xff]
    %v288 = vld [vmem:[%s3 + $0x710] sm:$0xff]
    %v289 = vld [vmem:[%s3 + $0x718] sm:$0xff]
    %v290 = vld [vmem:[%s3 + $0x720] sm:$0xff]
    %v291 = vld [vmem:[%s3 + $0x728] sm:$0xff]
    %v292 = vld [vmem:[%s3 + $0x730] sm:$0xff]
    %v293 = vld [vmem:[%s3 + $0x738] sm:$0xff]
    %v294 = vld [vmem:[%s3 + $0x740] sm:$0xff]
    %v295 = vld [vmem:[%s3 + $0x748] sm:$0xff]
    %v296 = vld [vmem:[%s3 + $0x750] sm:$0xff]
    %v297 = vld [vmem:[%s3 + $0x758] sm:$0xff]
    %v298 = vld [vmem:[%s3 + $0x760] sm:$0xff]
    %v299 = vld [vmem:[%s3 + $0x768] sm:$0xff]
    %v300 = vld [vmem:[%s3 + $0x770] sm:$0xff]
    %v301 = vld [vmem:[%s3 + $0x778] sm:$0xff]
    %v302 = vld [vmem:[%s3 + $0x780] sm:$0xff]
    %v303 = vld [vmem:[%s3 + $0x788] sm:$0xff]
    %v304 = vld [vmem:[%s3 + $0x790] sm:$0xff]
    %v305 = vld [vmem:[%s3 + $0x798] sm:$0xff]
    %v306 = vld [vmem:[%s3 + $0x7a0] sm:$0xff]
    %v307 = vld [vmem:[%s3 + $0x7a8] sm:$0xff]
    %v308 = vld [vmem:[%s3 + $0x7b0] sm:$0xff]
    %v309 = vld [vmem:[%s3 + $0x7b8] sm:$0xff]
    %v310 = vld [vmem:[%s3 + $0x7c0] sm:$0xff]
    %v311 = vld [vmem:[%s3 + $0x7c8] sm:$0xff]
    %v312 = vld [vmem:[%s3 + $0x7d0] sm:$0xff]
    %v313 = vld [vmem:[%s3 + $0x7d8] sm:$0xff]
    %v314 = vld [vmem:[%s3 + $0x7e0] sm:$0xff]
    %v315 = vld [vmem:[%s3 + $0x7e8] sm:$0xff]
    %v316 = vld [vmem:[%s3 + $0x7f0] sm:$0xff]
    %v317 = vld [vmem:[%s3 + $0x7f8] sm:$0xff]
    %v318 = vld [vmem:[%s4] sm:$0xff]
    %v319 = vld [vmem:[%s4 + $0x8] sm:$0xff]
    %v320 = vld [vmem:[%s4 + $0x10] sm:$0xff]
    %v321 = vld [vmem:[%s4 + $0x18] sm:$0xff]
    %v322 = vld [vmem:[%s4 + $0x20] sm:$0xff]
    %v323 = vld [vmem:[%s4 + $0x28] sm:$0xff]
    %v324 = vld [vmem:[%s4 + $0x30] sm:$0xff]
    %v325 = vld [vmem:[%s4 + $0x38] sm:$0xff]
    %v326 = vld [vmem:[%s4 + $0x40] sm:$0xff]
    %v327 = vld [vmem:[%s4 + $0x48] sm:$0xff]
    %v328 = vld [vmem:[%s4 + $0x50] sm:$0xff]
    %v329 = vld [vmem:[%s4 + $0x58] sm:$0xff]
    %v330 = vld [vmem:[%s4 + $0x60] sm:$0xff]
    %v331 = vld [vmem:[%s4 + $0x68] sm:$0xff]
    %v332 = vld [vmem:[%s4 + $0x70] sm:$0xff]
    %v333 = vld [vmem:[%s4 + $0x78] sm:$0xff]
    %v334 = vld [vmem:[%s5] sm:$0xff]
    %v335 = vld [vmem:[%s6] sm:$0xff]
    %v336 = vld [vmem:[%s6 + $0x8] sm:$0xff]
    %v337 = vld [vmem:[%s7] sm:$0xff]
    %v338 = vld [vmem:[%s7 + $0x8] sm:$0xff]
    %v339 = vld [vmem:[%s1] sm:$0xff]
    %v340 = vld [vmem:[%s1 + $0x8] sm:$0xff]
    %v341 = vld [vmem:[%s2] sm:$0xff]
    %v342 = vld [vmem:[%s2 + $0x8] sm:$0xff]
    %vm343 = vcmask 130048
    %v345 = vsel %vm343, %v339, 0
    %v348 = vsel %vm343, %v340, 0
    %350 = vmatprep.subr.mxu0 %v31
    %351 = vmatpush1.msra.mxu0 %v30
    %352 = vmatprep.subr.mxu0 %v47
    %353 = vmatpush1.msra.mxu0 %v46
    %354 = vmatprep.subr.mxu0 0.0
    %355 = vmatpush1.msra.mxu0 0.0
    %356 = vmatprep.subr.mxu0 0.0
    %357 = vmatpush1.msra.mxu0 0.0
    %358 = vmatprep.subr.mxu0 0.0
    %359 = vmatpush1.msra.mxu0 0.0
    %360 = vmatprep.subr.mxu0 0.0
    %361 = vmatpush1.msra.mxu0 0.0
    %362 = vmatprep.subr.mxu0 0.0
    %363 = vmatpush1.msra.mxu0 0.0
    %364 = vmatprep.subr.mxu0 0.0
    %365 = vmatpush1.msra.mxu0 0.0
    %366 = vmatprep.subr.mxu0 0.0
    %367 = vmatpush1.msra.mxu0 0.0
    %368 = vmatprep.subr.mxu0 0.0
    %369 = vmatpush1.msra.mxu0 0.0
    %370 = vmatprep.subr.mxu0 0.0
    %371 = vmatpush1.msra.mxu0 0.0
    %372 = vmatprep.subr.mxu0 0.0
    %373 = vmatpush1.msra.mxu0 0.0
    %374 = vmatprep.subr.mxu0 0.0
    %375 = vmatpush1.msra.mxu0 0.0
    %376 = vmatprep.subr.mxu0 0.0
    %377 = vmatpush1.msra.mxu0 0.0
    %378 = vmatprep.subr.mxu0 0.0
    %379 = vmatpush1.msra.mxu0 0.0
    %380 = vmatprep.subr.mxu0 0.0
    %381 = vmatpush1.msra.mxu0 0.0
    %382 = vmatprep.subr.mxu0 0.0
    %383 = vmatpush1.msra.mxu0 0.0
    %384 = vmatprep.subr.mxu0 0.0
    %385 = vmatpush1.msra.mxu0 0.0
    %386 = vmatprep.subr.mxu0 0.0
    %387 = vmatpush1.msra.mxu0 0.0
    %388 = vmatprep.subr.mxu0 0.0
    %389 = vmatpush1.msra.mxu0 0.0
    %390 = vmatprep.subr.mxu0 0.0
    %391 = vmatpush1.msra.mxu0 0.0
    %392 = vmatprep.subr.mxu0 0.0
    %393 = vmatpush1.msra.mxu0 0.0
    %394 = vmatprep.subr.mxu0 0.0
    %395 = vmatpush1.msra.mxu0 0.0
    %396 = vmatprep.subr.mxu0 0.0
    %397 = vmatpush1.msra.mxu0 0.0
    %398 = vmatprep.subr.mxu0 0.0
    %399 = vmatpush1.msra.mxu0 0.0
    %400 = vmatprep.subr.mxu0 0.0
    %401 = vmatpush1.msra.mxu0 0.0
    %402 = vmatprep.subr.mxu0 0.0
    %403 = vmatpush1.msra.mxu0 0.0
    %404 = vmatprep.subr.mxu0 0.0
    %405 = vmatpush1.msra.mxu0 0.0
    %406 = vmatprep.subr.mxu0 0.0
    %407 = vmatpush1.msra.mxu0 0.0
    %408 = vmatprep.subr.mxu0 0.0
    %409 = vmatpush1.msra.mxu0 0.0
    %410 = vmatprep.subr.mxu0 0.0
    %411 = vmatpush1.msra.mxu0 0.0
    %412 = vmatprep.subr.mxu0 0.0
    %413 = vmatpush1.msra.mxu0 0.0
    %414 = vmatprep.mubr.f32.mxu0 0.0
    %415 = vmatmul.mubr.f32.gmra.mrb[0].mxu0 %v345
    %v416 = vpop.f32.mrb[0].mxu0
    %v417 = vadd.f32 0.0, %v416
    %v418 = vpop.f32.mrb[0].mxu0
    %v419 = vadd.f32 0.0, %v418
    %420 = vmatprep.mubr.f32.mxu0 0.0
    %421 = vmatmul.mubr.f32.gmra.mrb[0].mxu0 %v348
    %v422 = vpop.f32.mrb[0].mxu0
    %v423 = vadd.f32 0.0, %v422
    %v424 = vpop.f32.mrb[0].mxu0
    %v425 = vadd.f32 0.0, %v424
    %426 = vdwg.mxu0
    %427 = vmatprep.subr.mxu0 %v33
    %428 = vmatpush1.msra.mxu0 %v32
    %429 = vmatprep.subr.mxu0 %v49
    %430 = vmatpush1.msra.mxu0 %v48
    %431 = vmatprep.subr.mxu0 0.0
    %432 = vmatpush1.msra.mxu0 0.0
    %433 = vmatprep.subr.mxu0 0.0
    %434 = vmatpush1.msra.mxu0 0.0
    %435 = vmatprep.subr.mxu0 0.0
    %436 = vmatpush1.msra.mxu0 0.0
    %437 = vmatprep.subr.mxu0 0.0
    %438 = vmatpush1.msra.mxu0 0.0
    %439 = vmatprep.subr.mxu0 0.0
    %440 = vmatpush1.msra.mxu0 0.0
    %441 = vmatprep.subr.mxu0 0.0
    %442 = vmatpush1.msra.mxu0 0.0
    %443 = vmatprep.subr.mxu0 0.0
    %444 = vmatpush1.msra.mxu0 0.0
    %445 = vmatprep.subr.mxu0 0.0
    %446 = vmatpush1.msra.mxu0 0.0
    %447 = vmatprep.subr.mxu0 0.0
    %448 = vmatpush1.msra.mxu0 0.0
    %449 = vmatprep.subr.mxu0 0.0
    %450 = vmatpush1.msra.mxu0 0.0
    %451 = vmatprep.subr.mxu0 0.0
    %452 = vmatpush1.msra.mxu0 0.0
    %453 = vmatprep.subr.mxu0 0.0
    %454 = vmatpush1.msra.mxu0 0.0
    %455 = vmatprep.subr.mxu0 0.0
    %456 = vmatpush1.msra.mxu0 0.0
    %457 = vmatprep.subr.mxu0 0.0
    %458 = vmatpush1.msra.mxu0 0.0
    %459 = vmatprep.subr.mxu0 0.0
    %460 = vmatpush1.msra.mxu0 0.0
    %461 = vmatprep.subr.mxu0 0.0
    %462 = vmatpush1.msra.mxu0 0.0
    %463 = vmatprep.subr.mxu0 0.0
    %464 = vmatpush1.msra.mxu0 0.0
    %465 = vmatprep.subr.mxu0 0.0
    %466 = vmatpush1.msra.mxu0 0.0
    %467 = vmatprep.subr.mxu0 0.0
    %468 = vmatpush1.msra.mxu0 0.0
    %469 = vmatprep.subr.mxu0 0.0
    %470 = vmatpush1.msra.mxu0 0.0
    %471 = vmatprep.subr.mxu0 0.0
    %472 = vmatpush1.msra.mxu0 0.0
    %473 = vmatprep.subr.mxu0 0.0
    %474 = vmatpush1.msra.mxu0 0.0
    %475 = vmatprep.subr.mxu0 0.0
    %476 = vmatpush1.msra.mxu0 0.0
    %477 = vmatprep.subr.mxu0 0.0
    %478 = vmatpush1.msra.mxu0 0.0
    %479 = vmatprep.subr.mxu0 0.0
    %480 = vmatpush1.msra.mxu0 0.0
    %481 = vmatprep.subr.mxu0 0.0
    %482 = vmatpush1.msra.mxu0 0.0
    %483 = vmatprep.subr.mxu0 0.0
    %484 = vmatpush1.msra.mxu0 0.0
    %485 = vmatprep.subr.mxu0 0.0
    %486 = vmatpush1.msra.mxu0 0.0
    %487 = vmatprep.subr.mxu0 0.0
    %488 = vmatpush1.msra.mxu0 0.0
    %489 = vmatprep.subr.mxu0 0.0
    %490 = vmatpush1.msra.mxu0 0.0
    %491 = vmatprep.mubr.f32.mxu0 0.0
    %492 = vmatmul.mubr.f32.gmra.mrb[0].mxu0 %v345
    %v493 = vpop.f32.mrb[0].mxu0
    %v494 = vadd.f32 0.0, %v493
    %v495 = vpop.f32.mrb[0].mxu0
    %v496 = vadd.f32 0.0, %v495
    %497 = vmatprep.mubr.f32.mxu0 0.0
    %498 = vmatmul.mubr.f32.gmra.mrb[0].mxu0 %v348
    %v499 = vpop.f32.mrb[0].mxu0
    %v500 = vadd.f32 0.0, %v499
    %v501 = vpop.f32.mrb[0].mxu0
    %v502 = vadd.f32 0.0, %v501
    %503 = vdwg.mxu0
    %504 = vmatprep.subr.mxu0 %v35
    %505 = vmatpush1.msra.mxu0 %v34
    %506 = vmatprep.subr.mxu0 %v51
    %507 = vmatpush1.msra.mxu0 %v50
    %508 = vmatprep.subr.mxu0 0.0
    %509 = vmatpush1.msra.mxu0 0.0
    %510 = vmatprep.subr.mxu0 0.0
    %511 = vmatpush1.msra.mxu0 0.0
    %512 = vmatprep.subr.mxu0 0.0
    %513 = vmatpush1.msra.mxu0 0.0
    %514 = vmatprep.subr.mxu0 0.0
    %515 = vmatpush1.msra.mxu0 0.0
    %516 = vmatprep.subr.mxu0 0.0
    %517 = vmatpush1.msra.mxu0 0.0
    %518 = vmatprep.subr.mxu0 0.0
    %519 = vmatpush1.msra.mxu0 0.0
    %520 = vmatprep.subr.mxu0 0.0
    %521 = vmatpush1.msra.mxu0 0.0
    %522 = vmatprep.subr.mxu0 0.0
    %523 = vmatpush1.msra.mxu0 0.0
    %524 = vmatprep.subr.mxu0 0.0
    %525 = vmatpush1.msra.mxu0 0.0
    %526 = vmatprep.subr.mxu0 0.0
    %527 = vmatpush1.msra.mxu0 0.0
    %528 = vmatprep.subr.mxu0 0.0
    %529 = vmatpush1.msra.mxu0 0.0
    %530 = vmatprep.subr.mxu0 0.0
    %531 = vmatpush1.msra.mxu0 0.0
    %532 = vmatprep.subr.mxu0 0.0
    %533 = vmatpush1.msra.mxu0 0.0
    %534 = vmatprep.subr.mxu0 0.0
    %535 = vmatpush1.msra.mxu0 0.0
    %536 = vmatprep.subr.mxu0 0.0
    %537 = vmatpush1.msra.mxu0 0.0
    %538 = vmatprep.subr.mxu0 0.0
    %539 = vmatpush1.msra.mxu0 0.0
    %540 = vmatprep.subr.mxu0 0.0
    %541 = vmatpush1.msra.mxu0 0.0
    %542 = vmatprep.subr.mxu0 0.0
    %543 = vmatpush1.msra.mxu0 0.0
    %544 = vmatprep.subr.mxu0 0.0
    %545 = vmatpush1.msra.mxu0 0.0
    %546 = vmatprep.subr.mxu0 0.0
    %547 = vmatpush1.msra.mxu0 0.0
    %548 = vmatprep.subr.mxu0 0.0
    %549 = vmatpush1.msra.mxu0 0.0
    %550 = vmatprep.subr.mxu0 0.0
    %551 = vmatpush1.msra.mxu0 0.0
    %552 = vmatprep.subr.mxu0 0.0
    %553 = vmatpush1.msra.mxu0 0.0
    %554 = vmatprep.subr.mxu0 0.0
    %555 = vmatpush1.msra.mxu0 0.0
    %556 = vmatprep.subr.mxu0 0.0
    %557 = vmatpush1.msra.mxu0 0.0
    %558 = vmatprep.subr.mxu0 0.0
    %559 = vmatpush1.msra.mxu0 0.0
    %560 = vmatprep.subr.mxu0 0.0
    %561 = vmatpush1.msra.mxu0 0.0
    %562 = vmatprep.subr.mxu0 0.0
    %563 = vmatpush1.msra.mxu0 0.0
    %564 = vmatprep.subr.mxu0 0.0
    %565 = vmatpush1.msra.mxu0 0.0
    %566 = vmatprep.subr.mxu0 0.0
    %567 = vmatpush1.msra.mxu0 0.0
    %568 = vmatprep.mubr.f32.mxu0 0.0
    %569 = vmatmul.mubr.f32.gmra.mrb[0].mxu0 %v345
    %v570 = vpop.f32.mrb[0].mxu0
    %v571 = vadd.f32 0.0, %v570
    %v572 = vpop.f32.mrb[0].mxu0
    %v573 = vadd.f32 0.0, %v572
    %574 = vmatprep.mubr.f32.mxu0 0.0
    %575 = vmatmul.mubr.f32.gmra.mrb[0].mxu0 %v348
    %v576 = vpop.f32.mrb[0].mxu0
    %v577 = vadd.f32 0.0, %v576
    %v578 = vpop.f32.mrb[0].mxu0
    %v579 = vadd.f32 0.0, %v578
    %580 = vdwg.mxu0
    %581 = vmatprep.subr.mxu0 %v37
    %582 = vmatpush1.msra.mxu0 %v36
    %583 = vmatprep.subr.mxu0 %v53
    %584 = vmatpush1.msra.mxu0 %v52
    %585 = vmatprep.subr.mxu0 0.0
    %586 = vmatpush1.msra.mxu0 0.0
    %587 = vmatprep.subr.mxu0 0.0
    %588 = vmatpush1.msra.mxu0 0.0
    %589 = vmatprep.subr.mxu0 0.0
    %590 = vmatpush1.msra.mxu0 0.0
    %591 = vmatprep.subr.mxu0 0.0
    %592 = vmatpush1.msra.mxu0 0.0
    %593 = vmatprep.subr.mxu0 0.0
    %594 = vmatpush1.msra.mxu0 0.0
    %595 = vmatprep.subr.mxu0 0.0
    %596 = vmatpush1.msra.mxu0 0.0
    %597 = vmatprep.subr.mxu0 0.0
    %598 = vmatpush1.msra.mxu0 0.0
    %599 = vmatprep.subr.mxu0 0.0
    %600 = vmatpush1.msra.mxu0 0.0
    %601 = vmatprep.subr.mxu0 0.0
    %602 = vmatpush1.msra.mxu0 0.0
    %603 = vmatprep.subr.mxu0 0.0
    %604 = vmatpush1.msra.mxu0 0.0
    %605 = vmatprep.subr.mxu0 0.0
    %606 = vmatpush1.msra.mxu0 0.0
    %607 = vmatprep.subr.mxu0 0.0
    %608 = vmatpush1.msra.mxu0 0.0
    %609 = vmatprep.subr.mxu0 0.0
    %610 = vmatpush1.msra.mxu0 0.0
    %611 = vmatprep.subr.mxu0 0.0
    %612 = vmatpush1.msra.mxu0 0.0
    %613 = vmatprep.subr.mxu0 0.0
    %614 = vmatpush1.msra.mxu0 0.0
    %615 = vmatprep.subr.mxu0 0.0
    %616 = vmatpush1.msra.mxu0 0.0
    %617 = vmatprep.subr.mxu0 0.0
    %618 = vmatpush1.msra.mxu0 0.0
    %619 = vmatprep.subr.mxu0 0.0
    %620 = vmatpush1.msra.mxu0 0.0
    %621 = vmatprep.subr.mxu0 0.0
    %622 = vmatpush1.msra.mxu0 0.0
    %623 = vmatprep.subr.mxu0 0.0
    %624 = vmatpush1.msra.mxu0 0.0
    %625 = vmatprep.subr.mxu0 0.0
    %626 = vmatpush1.msra.mxu0 0.0
    %627 = vmatprep.subr.mxu0 0.0
    %628 = vmatpush1.msra.mxu0 0.0
    %629 = vmatprep.subr.mxu0 0.0
    %630 = vmatpush1.msra.mxu0 0.0
    %631 = vmatprep.subr.mxu0 0.0
    %632 = vmatpush1.msra.mxu0 0.0
    %633 = vmatprep.subr.mxu0 0.0
    %634 = vmatpush1.msra.mxu0 0.0
    %635 = vmatprep.subr.mxu0 0.0
    %636 = vmatpush1.msra.mxu0 0.0
    %637 = vmatprep.subr.mxu0 0.0
    %638 = vmatpush1.msra.mxu0 0.0
    %639 = vmatprep.subr.mxu0 0.0
    %640 = vmatpush1.msra.mxu0 0.0
    %641 = vmatprep.subr.mxu0 0.0
    %642 = vmatpush1.msra.mxu0 0.0
    %643 = vmatprep.subr.mxu0 0.0
    %644 = vmatpush1.msra.mxu0 0.0
    %645 = vmatprep.mubr.f32.mxu0 0.0
    %646 = vmatmul.mubr.f32.gmra.mrb[0].mxu0 %v345
    %v647 = vpop.f32.mrb[0].mxu0
    %v648 = vadd.f32 0.0, %v647
    %v649 = vpop.f32.mrb[0].mxu0
    %v650 = vadd.f32 0.0, %v649
    %651 = vmatprep.mubr.f32.mxu0 0.0
    %652 = vmatmul.mubr.f32.gmra.mrb[0].mxu0 %v348
    %v653 = vpop.f32.mrb[0].mxu0
    %v654 = vadd.f32 0.0, %v653
    %v655 = vpop.f32.mrb[0].mxu0
    %v656 = vadd.f32 0.0, %v655
    %657 = vdwg.mxu0
    %658 = vmatprep.subr.mxu0 %v39
    %659 = vmatpush1.msra.mxu0 %v38
    %660 = vmatprep.subr.mxu0 %v55
    %661 = vmatpush1.msra.mxu0 %v54
    %662 = vmatprep.subr.mxu0 0.0
    %663 = vmatpush1.msra.mxu0 0.0
    %664 = vmatprep.subr.mxu0 0.0
    %665 = vmatpush1.msra.mxu0 0.0
    %666 = vmatprep.subr.mxu0 0.0
    %667 = vmatpush1.msra.mxu0 0.0
    %668 = vmatprep.subr.mxu0 0.0
    %669 = vmatpush1.msra.mxu0 0.0
    %670 = vmatprep.subr.mxu0 0.0
    %671 = vmatpush1.msra.mxu0 0.0
    %672 = vmatprep.subr.mxu0 0.0
    %673 = vmatpush1.msra.mxu0 0.0
    %674 = vmatprep.subr.mxu0 0.0
    %675 = vmatpush1.msra.mxu0 0.0
    %676 = vmatprep.subr.mxu0 0.0
    %677 = vmatpush1.msra.mxu0 0.0
    %678 = vmatprep.subr.mxu0 0.0
    %679 = vmatpush1.msra.mxu0 0.0
    %680 = vmatprep.subr.mxu0 0.0
    %681 = vmatpush1.msra.mxu0 0.0
    %682 = vmatprep.subr.mxu0 0.0
    %683 = vmatpush1.msra.mxu0 0.0
    %684 = vmatprep.subr.mxu0 0.0
    %685 = vmatpush1.msra.mxu0 0.0
    %686 = vmatprep.subr.mxu0 0.0
    %687 = vmatpush1.msra.mxu0 0.0
    %688 = vmatprep.subr.mxu0 0.0
    %689 = vmatpush1.msra.mxu0 0.0
    %690 = vmatprep.subr.mxu0 0.0
    %691 = vmatpush1.msra.mxu0 0.0
    %692 = vmatprep.subr.mxu0 0.0
    %693 = vmatpush1.msra.mxu0 0.0
    %694 = vmatprep.subr.mxu0 0.0
    %695 = vmatpush1.msra.mxu0 0.0
    %696 = vmatprep.subr.mxu0 0.0
    %697 = vmatpush1.msra.mxu0 0.0
    %698 = vmatprep.subr.mxu0 0.0
    %699 = vmatpush1.msra.mxu0 0.0
    %700 = vmatprep.subr.mxu0 0.0
    %701 = vmatpush1.msra.mxu0 0.0
    %702 = vmatprep.subr.mxu0 0.0
    %703 = vmatpush1.msra.mxu0 0.0
    %704 = vmatprep.subr.mxu0 0.0
    %705 = vmatpush1.msra.mxu0 0.0
    %706 = vmatprep.subr.mxu0 0.0
    %707 = vmatpush1.msra.mxu0 0.0
    %708 = vmatprep.subr.mxu0 0.0
    %709 = vmatpush1.msra.mxu0 0.0
    %710 = vmatprep.subr.mxu0 0.0
    %711 = vmatpush1.msra.mxu0 0.0
    %712 = vmatprep.subr.mxu0 0.0
    %713 = vmatpush1.msra.mxu0 0.0
    %714 = vmatprep.subr.mxu0 0.0
    %715 = vmatpush1.msra.mxu0 0.0
    %716 = vmatprep.subr.mxu0 0.0
    %717 = vmatpush1.msra.mxu0 0.0
    %718 = vmatprep.subr.mxu0 0.0
    %719 = vmatpush1.msra.mxu0 0.0
    %720 = vmatprep.subr.mxu0 0.0
    %721 = vmatpush1.msra.mxu0 0.0
    %722 = vmatprep.mubr.f32.mxu0 0.0
    %723 = vmatmul.mubr.f32.gmra.mrb[0].mxu0 %v345
    %v724 = vpop.f32.mrb[0].mxu0
    %v725 = vadd.f32 0.0, %v724
    %v726 = vpop.f32.mrb[0].mxu0
    %v727 = vadd.f32 0.0, %v726
    %728 = vmatprep.mubr.f32.mxu0 0.0
    %729 = vmatmul.mubr.f32.gmra.mrb[0].mxu0 %v348
    %v730 = vpop.f32.mrb[0].mxu0
    %v731 = vadd.f32 0.0, %v730
    %v732 = vpop.f32.mrb[0].mxu0
    %v733 = vadd.f32 0.0, %v732
    %734 = vdwg.mxu0
    %735 = vmatprep.subr.mxu0 %v41
    %736 = vmatpush1.msra.mxu0 %v40
    %737 = vmatprep.subr.mxu0 %v57
    %738 = vmatpush1.msra.mxu0 %v56
    %739 = vmatprep.subr.mxu0 0.0
    %740 = vmatpush1.msra.mxu0 0.0
    %741 = vmatprep.subr.mxu0 0.0
    %742 = vmatpush1.msra.mxu0 0.0
    %743 = vmatprep.subr.mxu0 0.0
    %744 = vmatpush1.msra.mxu0 0.0
    %745 = vmatprep.subr.mxu0 0.0
    %746 = vmatpush1.msra.mxu0 0.0
    %747 = vmatprep.subr.mxu0 0.0
    %748 = vmatpush1.msra.mxu0 0.0
    %749 = vmatprep.subr.mxu0 0.0
    %750 = vmatpush1.msra.mxu0 0.0
    %751 = vmatprep.subr.mxu0 0.0
    %752 = vmatpush1.msra.mxu0 0.0
    %753 = vmatprep.subr.mxu0 0.0
    %754 = vmatpush1.msra.mxu0 0.0
    %755 = vmatprep.subr.mxu0 0.0
    %756 = vmatpush1.msra.mxu0 0.0
    %757 = vmatprep.subr.mxu0 0.0
    %758 = vmatpush1.msra.mxu0 0.0
    %759 = vmatprep.subr.mxu0 0.0
    %760 = vmatpush1.msra.mxu0 0.0
    %761 = vmatprep.subr.mxu0 0.0
    %762 = vmatpush1.msra.mxu0 0.0
    %763 = vmatprep.subr.mxu0 0.0
    %764 = vmatpush1.msra.mxu0 0.0
    %765 = vmatprep.subr.mxu0 0.0
    %766 = vmatpush1.msra.mxu0 0.0
    %767 = vmatprep.subr.mxu0 0.0
    %768 = vmatpush1.msra.mxu0 0.0
    %769 = vmatprep.subr.mxu0 0.0
    %770 = vmatpush1.msra.mxu0 0.0
    %771 = vmatprep.subr.mxu0 0.0
    %772 = vmatpush1.msra.mxu0 0.0
    %773 = vmatprep.subr.mxu0 0.0
    %774 = vmatpush1.msra.mxu0 0.0
    %775 = vmatprep.subr.mxu0 0.0
    %776 = vmatpush1.msra.mxu0 0.0
    %777 = vmatprep.subr.mxu0 0.0
    %778 = vmatpush1.msra.mxu0 0.0
    %779 = vmatprep.subr.mxu0 0.0
    %780 = vmatpush1.msra.mxu0 0.0
    %781 = vmatprep.subr.mxu0 0.0
    %782 = vmatpush1.msra.mxu0 0.0
    %783 = vmatprep.subr.mxu0 0.0
    %784 = vmatpush1.msra.mxu0 0.0
    %785 = vmatprep.subr.mxu0 0.0
    %786 = vmatpush1.msra.mxu0 0.0
    %787 = vmatprep.subr.mxu0 0.0
    %788 = vmatpush1.msra.mxu0 0.0
    %789 = vmatprep.subr.mxu0 0.0
    %790 = vmatpush1.msra.mxu0 0.0
    %791 = vmatprep.subr.mxu0 0.0
    %792 = vmatpush1.msra.mxu0 0.0
    %793 = vmatprep.subr.mxu0 0.0
    %794 = vmatpush1.msra.mxu0 0.0
    %795 = vmatprep.subr.mxu0 0.0
    %796 = vmatpush1.msra.mxu0 0.0
    %797 = vmatprep.subr.mxu0 0.0
    %798 = vmatpush1.msra.mxu0 0.0
    %799 = vmatprep.mubr.f32.mxu0 0.0
    %800 = vmatmul.mubr.f32.gmra.mrb[0].mxu0 %v345
    %v801 = vpop.f32.mrb[0].mxu0
    %v802 = vadd.f32 0.0, %v801
    %v803 = vpop.f32.mrb[0].mxu0
    %v804 = vadd.f32 0.0, %v803
    %805 = vmatprep.mubr.f32.mxu0 0.0
    %806 = vmatmul.mubr.f32.gmra.mrb[0].mxu0 %v348
    %v807 = vpop.f32.mrb[0].mxu0
    %v808 = vadd.f32 0.0, %v807
    %v809 = vpop.f32.mrb[0].mxu0
    %v810 = vadd.f32 0.0, %v809
    %811 = vdwg.mxu0
    %812 = vmatprep.subr.mxu0 %v43
    %813 = vmatpush1.msra.mxu0 %v42
    %814 = vmatprep.subr.mxu0 %v59
    %815 = vmatpush1.msra.mxu0 %v58
    %816 = vmatprep.subr.mxu0 0.0
    %817 = vmatpush1.msra.mxu0 0.0
    %818 = vmatprep.subr.mxu0 0.0
    %819 = vmatpush1.msra.mxu0 0.0
    %820 = vmatprep.subr.mxu0 0.0
    %821 = vmatpush1.msra.mxu0 0.0
    %822 = vmatprep.subr.mxu0 0.0
    %823 = vmatpush1.msra.mxu0 0.0
    %824 = vmatprep.subr.mxu0 0.0
    %825 = vmatpush1.msra.mxu0 0.0
    %826 = vmatprep.subr.mxu0 0.0
    %827 = vmatpush1.msra.mxu0 0.0
    %828 = vmatprep.subr.mxu0 0.0
    %829 = vmatpush1.msra.mxu0 0.0
    %830 = vmatprep.subr.mxu0 0.0
    %831 = vmatpush1.msra.mxu0 0.0
    %832 = vmatprep.subr.mxu0 0.0
    %833 = vmatpush1.msra.mxu0 0.0
    %834 = vmatprep.subr.mxu0 0.0
    %835 = vmatpush1.msra.mxu0 0.0
    %836 = vmatprep.subr.mxu0 0.0
    %837 = vmatpush1.msra.mxu0 0.0
    %838 = vmatprep.subr.mxu0 0.0
    %839 = vmatpush1.msra.mxu0 0.0
    %840 = vmatprep.subr.mxu0 0.0
    %841 = vmatpush1.msra.mxu0 0.0
    %842 = vmatprep.subr.mxu0 0.0
    %843 = vmatpush1.msra.mxu0 0.0
    %844 = vmatprep.subr.mxu0 0.0
    %845 = vmatpush1.msra.mxu0 0.0
    %846 = vmatprep.subr.mxu0 0.0
    %847 = vmatpush1.msra.mxu0 0.0
    %848 = vmatprep.subr.mxu0 0.0
    %849 = vmatpush1.msra.mxu0 0.0
    %850 = vmatprep.subr.mxu0 0.0
    %851 = vmatpush1.msra.mxu0 0.0
    %852 = vmatprep.subr.mxu0 0.0
    %853 = vmatpush1.msra.mxu0 0.0
    %854 = vmatprep.subr.mxu0 0.0
    %855 = vmatpush1.msra.mxu0 0.0
    %856 = vmatprep.subr.mxu0 0.0
    %857 = vmatpush1.msra.mxu0 0.0
    %858 = vmatprep.subr.mxu0 0.0
    %859 = vmatpush1.msra.mxu0 0.0
    %860 = vmatprep.subr.mxu0 0.0
    %861 = vmatpush1.msra.mxu0 0.0
    %862 = vmatprep.subr.mxu0 0.0
    %863 = vmatpush1.msra.mxu0 0.0
    %864 = vmatprep.subr.mxu0 0.0
    %865 = vmatpush1.msra.mxu0 0.0
    %866 = vmatprep.subr.mxu0 0.0
    %867 = vmatpush1.msra.mxu0 0.0
    %868 = vmatprep.subr.mxu0 0.0
    %869 = vmatpush1.msra.mxu0 0.0
    %870 = vmatprep.subr.mxu0 0.0
    %871 = vmatpush1.msra.mxu0 0.0
    %872 = vmatprep.subr.mxu0 0.0
    %873 = vmatpush1.msra.mxu0 0.0
    %874 = vmatprep.subr.mxu0 0.0
    %875 = vmatpush1.msra.mxu0 0.0
    %876 = vmatprep.mubr.f32.mxu0 0.0
    %877 = vmatmul.mubr.f32.gmra.mrb[0].mxu0 %v345
    %v878 = vpop.f32.mrb[0].mxu0
    %v879 = vadd.f32 0.0, %v878
    %v880 = vpop.f32.mrb[0].mxu0
    %v881 = vadd.f32 0.0, %v880
    %882 = vmatprep.mubr.f32.mxu0 0.0
    %883 = vmatmul.mubr.f32.gmra.mrb[0].mxu0 %v348
    %v884 = vpop.f32.mrb[0].mxu0
    %v885 = vadd.f32 0.0, %v884
    %v886 = vpop.f32.mrb[0].mxu0
    %v887 = vadd.f32 0.0, %v886
    %888 = vdwg.mxu0
    %889 = vmatprep.subr.mxu0 %v45
    %890 = vmatpush1.msra.mxu0 %v44
    %891 = vmatprep.subr.mxu0 %v61
    %892 = vmatpush1.msra.mxu0 %v60
    %893 = vmatprep.subr.mxu0 0.0
    %894 = vmatpush1.msra.mxu0 0.0
    %895 = vmatprep.subr.mxu0 0.0
    %896 = vmatpush1.msra.mxu0 0.0
    %897 = vmatprep.subr.mxu0 0.0
    %898 = vmatpush1.msra.mxu0 0.0
    %899 = vmatprep.subr.mxu0 0.0
    %900 = vmatpush1.msra.mxu0 0.0
    %901 = vmatprep.subr.mxu0 0.0
    %902 = vmatpush1.msra.mxu0 0.0
    %903 = vmatprep.subr.mxu0 0.0
    %904 = vmatpush1.msra.mxu0 0.0
    %905 = vmatprep.subr.mxu0 0.0
    %906 = vmatpush1.msra.mxu0 0.0
    %907 = vmatprep.subr.mxu0 0.0
    %908 = vmatpush1.msra.mxu0 0.0
    %909 = vmatprep.subr.mxu0 0.0
    %910 = vmatpush1.msra.mxu0 0.0
    %911 = vmatprep.subr.mxu0 0.0
    %912 = vmatpush1.msra.mxu0 0.0
    %913 = vmatprep.subr.mxu0 0.0
    %914 = vmatpush1.msra.mxu0 0.0
    %915 = vmatprep.subr.mxu0 0.0
    %916 = vmatpush1.msra.mxu0 0.0
    %917 = vmatprep.subr.mxu0 0.0
    %918 = vmatpush1.msra.mxu0 0.0
    %919 = vmatprep.subr.mxu0 0.0
    %920 = vmatpush1.msra.mxu0 0.0
    %921 = vmatprep.subr.mxu0 0.0
    %922 = vmatpush1.msra.mxu0 0.0
    %923 = vmatprep.subr.mxu0 0.0
    %924 = vmatpush1.msra.mxu0 0.0
    %925 = vmatprep.subr.mxu0 0.0
    %926 = vmatpush1.msra.mxu0 0.0
    %927 = vmatprep.subr.mxu0 0.0
    %928 = vmatpush1.msra.mxu0 0.0
    %929 = vmatprep.subr.mxu0 0.0
    %930 = vmatpush1.msra.mxu0 0.0
    %931 = vmatprep.subr.mxu0 0.0
    %932 = vmatpush1.msra.mxu0 0.0
    %933 = vmatprep.subr.mxu0 0.0
    %934 = vmatpush1.msra.mxu0 0.0
    %935 = vmatprep.subr.mxu0 0.0
    %936 = vmatpush1.msra.mxu0 0.0
    %937 = vmatprep.subr.mxu0 0.0
    %938 = vmatpush1.msra.mxu0 0.0
    %939 = vmatprep.subr.mxu0 0.0
    %940 = vmatpush1.msra.mxu0 0.0
    %941 = vmatprep.subr.mxu0 0.0
    %942 = vmatpush1.msra.mxu0 0.0
    %943 = vmatprep.subr.mxu0 0.0
    %944 = vmatpush1.msra.mxu0 0.0
    %945 = vmatprep.subr.mxu0 0.0
    %946 = vmatpush1.msra.mxu0 0.0
    %947 = vmatprep.subr.mxu0 0.0
    %948 = vmatpush1.msra.mxu0 0.0
    %949 = vmatprep.subr.mxu0 0.0
    %950 = vmatpush1.msra.mxu0 0.0
    %951 = vmatprep.subr.mxu0 0.0
    %952 = vmatpush1.msra.mxu0 0.0
    %953 = vmatprep.mubr.f32.mxu0 0.0
    %954 = vmatmul.mubr.f32.gmra.mrb[0].mxu0 %v345
    %v955 = vpop.f32.mrb[0].mxu0
    %v956 = vadd.f32 0.0, %v955
    %v957 = vpop.f32.mrb[0].mxu0
    %v958 = vadd.f32 0.0, %v957
    %959 = vmatprep.mubr.f32.mxu0 0.0
    %960 = vmatmul.mubr.f32.gmra.mrb[0].mxu0 %v348
    %v961 = vpop.f32.mrb[0].mxu0
    %v962 = vadd.f32 0.0, %v961
    %v963 = vpop.f32.mrb[0].mxu0
    %v964 = vadd.f32 0.0, %v963
    %965 = vdwg.mxu0
    %966 = vmatprep.subr.mxu0 0.0
    %967 = vmatpush1.msra.mxu0 %v62
    %968 = vmatprep.subr.mxu0 0.0
    %969 = vmatpush1.msra.mxu0 %v63
    %970 = vmatprep.subr.mxu0 0.0
    %971 = vmatpush1.msra.mxu0 %v64
    %972 = vmatprep.subr.mxu0 0.0
    %973 = vmatpush1.msra.mxu0 %v65
    %974 = vmatprep.subr.mxu0 0.0
    %975 = vmatpush1.msra.mxu0 %v66
    %976 = vmatprep.subr.mxu0 0.0
    %977 = vmatpush1.msra.mxu0 %v67
    %978 = vmatprep.subr.mxu0 0.0
    %979 = vmatpush1.msra.mxu0 %v68
    %980 = vmatprep.subr.mxu0 0.0
    %981 = vmatpush1.msra.mxu0 %v69
    %982 = vmatprep.subr.mxu0 0.0
    %983 = vmatpush1.msra.mxu0 %v70
    %984 = vmatprep.subr.mxu0 0.0
    %985 = vmatpush1.msra.mxu0 %v71
    %986 = vmatprep.subr.mxu0 0.0
    %987 = vmatpush1.msra.mxu0 %v72
    %988 = vmatprep.subr.mxu0 0.0
    %989 = vmatpush1.msra.mxu0 %v73
    %990 = vmatprep.subr.mxu0 0.0
    %991 = vmatpush1.msra.mxu0 %v74
    %992 = vmatprep.subr.mxu0 0.0
    %993 = vmatpush1.msra.mxu0 %v75
    %994 = vmatprep.subr.mxu0 0.0
    %995 = vmatpush1.msra.mxu0 %v76
    %996 = vmatprep.subr.mxu0 0.0
    %997 = vmatpush1.msra.mxu0 %v77
    %998 = vmatprep.subr.mxu0 0.0
    %999 = vmatpush1.msra.mxu0 %v78
    %1000 = vmatprep.subr.mxu0 0.0
    %1001 = vmatpush1.msra.mxu0 %v79
    %1002 = vmatprep.subr.mxu0 0.0
    %1003 = vmatpush1.msra.mxu0 %v80
    %1004 = vmatprep.subr.mxu0 0.0
    %1005 = vmatpush1.msra.mxu0 %v81
    %1006 = vmatprep.subr.mxu0 0.0
    %1007 = vmatpush1.msra.mxu0 %v82
    %1008 = vmatprep.subr.mxu0 0.0
    %1009 = vmatpush1.msra.mxu0 %v83
    %1010 = vmatprep.subr.mxu0 0.0
    %1011 = vmatpush1.msra.mxu0 %v84
    %1012 = vmatprep.subr.mxu0 0.0
    %1013 = vmatpush1.msra.mxu0 %v85
    %1014 = vmatprep.subr.mxu0 0.0
    %1015 = vmatpush1.msra.mxu0 %v86
    %1016 = vmatprep.subr.mxu0 0.0
    %1017 = vmatpush1.msra.mxu0 %v87
    %1018 = vmatprep.subr.mxu0 0.0
    %1019 = vmatpush1.msra.mxu0 %v88
    %1020 = vmatprep.subr.mxu0 0.0
    %1021 = vmatpush1.msra.mxu0 %v89
    %1022 = vmatprep.subr.mxu0 0.0
    %1023 = vmatpush1.msra.mxu0 %v90
    %1024 = vmatprep.subr.mxu0 0.0
    %1025 = vmatpush1.msra.mxu0 %v91
    %1026 = vmatprep.subr.mxu0 0.0
    %1027 = vmatpush1.msra.mxu0 %v92
    %1028 = vmatprep.subr.mxu0 0.0
    %1029 = vmatpush1.msra.mxu0 %v93
    %1030 = vmatprep.mubr.f32.mxu0 %v419
    %1031 = vmatmul.mubr.f32.gmra.mrb[0].mxu0 %v417
    %v1032 = vpop.f32.mrb[0].mxu0
    %v1033 = vadd.f32 0.0, %v1032
    %v1034 = vpop.f32.mrb[0].mxu0
    %1035 = vmatprep.mubr.f32.mxu0 %v425
    %1036 = vmatmul.mubr.f32.gmra.mrb[0].mxu0 %v423
    %v1037 = vpop.f32.mrb[0].mxu0
    %v1038 = vadd.f32 0.0, %v1037
    %v1039 = vpop.f32.mrb[0].mxu0
    %1040 = vdwg.mxu0
    %1041 = vmatprep.subr.mxu0 0.0
    %1042 = vmatpush1.msra.mxu0 %v94
    %1043 = vmatprep.subr.mxu0 0.0
    %1044 = vmatpush1.msra.mxu0 %v95
    %1045 = vmatprep.subr.mxu0 0.0
    %1046 = vmatpush1.msra.mxu0 %v96
    %1047 = vmatprep.subr.mxu0 0.0
    %1048 = vmatpush1.msra.mxu0 %v97
    %1049 = vmatprep.subr.mxu0 0.0
    %1050 = vmatpush1.msra.mxu0 %v98
    %1051 = vmatprep.subr.mxu0 0.0
    %1052 = vmatpush1.msra.mxu0 %v99
    %1053 = vmatprep.subr.mxu0 0.0
    %1054 = vmatpush1.msra.mxu0 %v100
    %1055 = vmatprep.subr.mxu0 0.0
    %1056 = vmatpush1.msra.mxu0 %v101
    %1057 = vmatprep.subr.mxu0 0.0
    %1058 = vmatpush1.msra.mxu0 %v102
    %1059 = vmatprep.subr.mxu0 0.0
    %1060 = vmatpush1.msra.mxu0 %v103
    %1061 = vmatprep.subr.mxu0 0.0
    %1062 = vmatpush1.msra.mxu0 %v104
    %1063 = vmatprep.subr.mxu0 0.0
    %1064 = vmatpush1.msra.mxu0 %v105
    %1065 = vmatprep.subr.mxu0 0.0
    %1066 = vmatpush1.msra.mxu0 %v106
    %1067 = vmatprep.subr.mxu0 0.0
    %1068 = vmatpush1.msra.mxu0 %v107
    %1069 = vmatprep.subr.mxu0 0.0
    %1070 = vmatpush1.msra.mxu0 %v108
    %1071 = vmatprep.subr.mxu0 0.0
    %1072 = vmatpush1.msra.mxu0 %v109
    %1073 = vmatprep.subr.mxu0 0.0
    %1074 = vmatpush1.msra.mxu0 %v110
    %1075 = vmatprep.subr.mxu0 0.0
    %1076 = vmatpush1.msra.mxu0 %v111
    %1077 = vmatprep.subr.mxu0 0.0
    %1078 = vmatpush1.msra.mxu0 %v112
    %1079 = vmatprep.subr.mxu0 0.0
    %1080 = vmatpush1.msra.mxu0 %v113
    %1081 = vmatprep.subr.mxu0 0.0
    %1082 = vmatpush1.msra.mxu0 %v114
    %1083 = vmatprep.subr.mxu0 0.0
    %1084 = vmatpush1.msra.mxu0 %v115
    %1085 = vmatprep.subr.mxu0 0.0
    %1086 = vmatpush1.msra.mxu0 %v116
    %1087 = vmatprep.subr.mxu0 0.0
    %1088 = vmatpush1.msra.mxu0 %v117
    %1089 = vmatprep.subr.mxu0 0.0
    %1090 = vmatpush1.msra.mxu0 %v118
    %1091 = vmatprep.subr.mxu0 0.0
    %1092 = vmatpush1.msra.mxu0 %v119
    %1093 = vmatprep.subr.mxu0 0.0
    %1094 = vmatpush1.msra.mxu0 %v120
    %1095 = vmatprep.subr.mxu0 0.0
    %1096 = vmatpush1.msra.mxu0 %v121
    %1097 = vmatprep.subr.mxu0 0.0
    %1098 = vmatpush1.msra.mxu0 %v122
    %1099 = vmatprep.subr.mxu0 0.0
    %1100 = vmatpush1.msra.mxu0 %v123
    %1101 = vmatprep.subr.mxu0 0.0
    %1102 = vmatpush1.msra.mxu0 %v124
    %1103 = vmatprep.subr.mxu0 0.0
    %1104 = vmatpush1.msra.mxu0 %v125
    %1105 = vmatprep.mubr.f32.mxu0 %v496
    %1106 = vmatmul.mubr.f32.gmra.mrb[0].mxu0 %v494
    %v1107 = vpop.f32.mrb[0].mxu0
    %v1108 = vadd.f32 %v1033, %v1107
    %v1109 = vpop.f32.mrb[0].mxu0
    %1110 = vmatprep.mubr.f32.mxu0 %v502
    %1111 = vmatmul.mubr.f32.gmra.mrb[0].mxu0 %v500
    %v1112 = vpop.f32.mrb[0].mxu0
    %v1113 = vadd.f32 %v1038, %v1112
    %v1114 = vpop.f32.mrb[0].mxu0
    %1115 = vdwg.mxu0
    %1116 = vmatprep.subr.mxu0 0.0
    %1117 = vmatpush1.msra.mxu0 %v126
    %1118 = vmatprep.subr.mxu0 0.0
    %1119 = vmatpush1.msra.mxu0 %v127
    %1120 = vmatprep.subr.mxu0 0.0
    %1121 = vmatpush1.msra.mxu0 %v128
    %1122 = vmatprep.subr.mxu0 0.0
    %1123 = vmatpush1.msra.mxu0 %v129
    %1124 = vmatprep.subr.mxu0 0.0
    %1125 = vmatpush1.msra.mxu0 %v130
    %1126 = vmatprep.subr.mxu0 0.0
    %1127 = vmatpush1.msra.mxu0 %v131
    %1128 = vmatprep.subr.mxu0 0.0
    %1129 = vmatpush1.msra.mxu0 %v132
    %1130 = vmatprep.subr.mxu0 0.0
    %1131 = vmatpush1.msra.mxu0 %v133
    %1132 = vmatprep.subr.mxu0 0.0
    %1133 = vmatpush1.msra.mxu0 %v134
    %1134 = vmatprep.subr.mxu0 0.0
    %1135 = vmatpush1.msra.mxu0 %v135
    %1136 = vmatprep.subr.mxu0 0.0
    %1137 = vmatpush1.msra.mxu0 %v136
    %1138 = vmatprep.subr.mxu0 0.0
    %1139 = vmatpush1.msra.mxu0 %v137
    %1140 = vmatprep.subr.mxu0 0.0
    %1141 = vmatpush1.msra.mxu0 %v138
    %1142 = vmatprep.subr.mxu0 0.0
    %1143 = vmatpush1.msra.mxu0 %v139
    %1144 = vmatprep.subr.mxu0 0.0
    %1145 = vmatpush1.msra.mxu0 %v140
    %1146 = vmatprep.subr.mxu0 0.0
    %1147 = vmatpush1.msra.mxu0 %v141
    %1148 = vmatprep.subr.mxu0 0.0
    %1149 = vmatpush1.msra.mxu0 %v142
    %1150 = vmatprep.subr.mxu0 0.0
    %1151 = vmatpush1.msra.mxu0 %v143
    %1152 = vmatprep.subr.mxu0 0.0
    %1153 = vmatpush1.msra.mxu0 %v144
    %1154 = vmatprep.subr.mxu0 0.0
    %1155 = vmatpush1.msra.mxu0 %v145
    %1156 = vmatprep.subr.mxu0 0.0
    %1157 = vmatpush1.msra.mxu0 %v146
    %1158 = vmatprep.subr.mxu0 0.0
    %1159 = vmatpush1.msra.mxu0 %v147
    %1160 = vmatprep.subr.mxu0 0.0
    %1161 = vmatpush1.msra.mxu0 %v148
    %1162 = vmatprep.subr.mxu0 0.0
    %1163 = vmatpush1.msra.mxu0 %v149
    %1164 = vmatprep.subr.mxu0 0.0
    %1165 = vmatpush1.msra.mxu0 %v150
    %1166 = vmatprep.subr.mxu0 0.0
    %1167 = vmatpush1.msra.mxu0 %v151
    %1168 = vmatprep.subr.mxu0 0.0
    %1169 = vmatpush1.msra.mxu0 %v152
    %1170 = vmatprep.subr.mxu0 0.0
    %1171 = vmatpush1.msra.mxu0 %v153
    %1172 = vmatprep.subr.mxu0 0.0
    %1173 = vmatpush1.msra.mxu0 %v154
    %1174 = vmatprep.subr.mxu0 0.0
    %1175 = vmatpush1.msra.mxu0 %v155
    %1176 = vmatprep.subr.mxu0 0.0
    %1177 = vmatpush1.msra.mxu0 %v156
    %1178 = vmatprep.subr.mxu0 0.0
    %1179 = vmatpush1.msra.mxu0 %v157
    %1180 = vmatprep.mubr.f32.mxu0 %v573
    %1181 = vmatmul.mubr.f32.gmra.mrb[0].mxu0 %v571
    %v1182 = vpop.f32.mrb[0].mxu0
    %v1183 = vadd.f32 %v1108, %v1182
    %v1184 = vpop.f32.mrb[0].mxu0
    %1185 = vmatprep.mubr.f32.mxu0 %v579
    %1186 = vmatmul.mubr.f32.gmra.mrb[0].mxu0 %v577
    %v1187 = vpop.f32.mrb[0].mxu0
    %v1188 = vadd.f32 %v1113, %v1187
    %v1189 = vpop.f32.mrb[0].mxu0
    %1190 = vdwg.mxu0
    %1191 = vmatprep.subr.mxu0 0.0
    %1192 = vmatpush1.msra.mxu0 %v158
    %1193 = vmatprep.subr.mxu0 0.0
    %1194 = vmatpush1.msra.mxu0 %v159
    %1195 = vmatprep.subr.mxu0 0.0
    %1196 = vmatpush1.msra.mxu0 %v160
    %1197 = vmatprep.subr.mxu0 0.0
    %1198 = vmatpush1.msra.mxu0 %v161
    %1199 = vmatprep.subr.mxu0 0.0
    %1200 = vmatpush1.msra.mxu0 %v162
    %1201 = vmatprep.subr.mxu0 0.0
    %1202 = vmatpush1.msra.mxu0 %v163
    %1203 = vmatprep.subr.mxu0 0.0
    %1204 = vmatpush1.msra.mxu0 %v164
    %1205 = vmatprep.subr.mxu0 0.0
    %1206 = vmatpush1.msra.mxu0 %v165
    %1207 = vmatprep.subr.mxu0 0.0
    %1208 = vmatpush1.msra.mxu0 %v166
    %1209 = vmatprep.subr.mxu0 0.0
    %1210 = vmatpush1.msra.mxu0 %v167
    %1211 = vmatprep.subr.mxu0 0.0
    %1212 = vmatpush1.msra.mxu0 %v168
    %1213 = vmatprep.subr.mxu0 0.0
    %1214 = vmatpush1.msra.mxu0 %v169
    %1215 = vmatprep.subr.mxu0 0.0
    %1216 = vmatpush1.msra.mxu0 %v170
    %1217 = vmatprep.subr.mxu0 0.0
    %1218 = vmatpush1.msra.mxu0 %v171
    %1219 = vmatprep.subr.mxu0 0.0
    %1220 = vmatpush1.msra.mxu0 %v172
    %1221 = vmatprep.subr.mxu0 0.0
    %1222 = vmatpush1.msra.mxu0 %v173
    %1223 = vmatprep.subr.mxu0 0.0
    %1224 = vmatpush1.msra.mxu0 %v174
    %1225 = vmatprep.subr.mxu0 0.0
    %1226 = vmatpush1.msra.mxu0 %v175
    %1227 = vmatprep.subr.mxu0 0.0
    %1228 = vmatpush1.msra.mxu0 %v176
    %1229 = vmatprep.subr.mxu0 0.0
    %1230 = vmatpush1.msra.mxu0 %v177
    %1231 = vmatprep.subr.mxu0 0.0
    %1232 = vmatpush1.msra.mxu0 %v178
    %1233 = vmatprep.subr.mxu0 0.0
    %1234 = vmatpush1.msra.mxu0 %v179
    %1235 = vmatprep.subr.mxu0 0.0
    %1236 = vmatpush1.msra.mxu0 %v180
    %1237 = vmatprep.subr.mxu0 0.0
    %1238 = vmatpush1.msra.mxu0 %v181
    %1239 = vmatprep.subr.mxu0 0.0
    %1240 = vmatpush1.msra.mxu0 %v182
    %1241 = vmatprep.subr.mxu0 0.0
    %1242 = vmatpush1.msra.mxu0 %v183
    %1243 = vmatprep.subr.mxu0 0.0
    %1244 = vmatpush1.msra.mxu0 %v184
    %1245 = vmatprep.subr.mxu0 0.0
    %1246 = vmatpush1.msra.mxu0 %v185
    %1247 = vmatprep.subr.mxu0 0.0
    %1248 = vmatpush1.msra.mxu0 %v186
    %1249 = vmatprep.subr.mxu0 0.0
    %1250 = vmatpush1.msra.mxu0 %v187
    %1251 = vmatprep.subr.mxu0 0.0
    %1252 = vmatpush1.msra.mxu0 %v188
    %1253 = vmatprep.subr.mxu0 0.0
    %1254 = vmatpush1.msra.mxu0 %v189
    %1255 = vmatprep.mubr.f32.mxu0 %v650
    %1256 = vmatmul.mubr.f32.gmra.mrb[0].mxu0 %v648
    %v1257 = vpop.f32.mrb[0].mxu0
    %v1258 = vadd.f32 %v1183, %v1257
    %v1259 = vpop.f32.mrb[0].mxu0
    %1260 = vmatprep.mubr.f32.mxu0 %v656
    %1261 = vmatmul.mubr.f32.gmra.mrb[0].mxu0 %v654
    %v1262 = vpop.f32.mrb[0].mxu0
    %v1263 = vadd.f32 %v1188, %v1262
    %v1264 = vpop.f32.mrb[0].mxu0
    %1265 = vdwg.mxu0
    %1266 = vmatprep.subr.mxu0 0.0
    %1267 = vmatpush1.msra.mxu0 %v190
    %1268 = vmatprep.subr.mxu0 0.0
    %1269 = vmatpush1.msra.mxu0 %v191
    %1270 = vmatprep.subr.mxu0 0.0
    %1271 = vmatpush1.msra.mxu0 %v192
    %1272 = vmatprep.subr.mxu0 0.0
    %1273 = vmatpush1.msra.mxu0 %v193
    %1274 = vmatprep.subr.mxu0 0.0
    %1275 = vmatpush1.msra.mxu0 %v194
    %1276 = vmatprep.subr.mxu0 0.0
    %1277 = vmatpush1.msra.mxu0 %v195
    %1278 = vmatprep.subr.mxu0 0.0
    %1279 = vmatpush1.msra.mxu0 %v196
    %1280 = vmatprep.subr.mxu0 0.0
    %1281 = vmatpush1.msra.mxu0 %v197
    %1282 = vmatprep.subr.mxu0 0.0
    %1283 = vmatpush1.msra.mxu0 %v198
    %1284 = vmatprep.subr.mxu0 0.0
    %1285 = vmatpush1.msra.mxu0 %v199
    %1286 = vmatprep.subr.mxu0 0.0
    %1287 = vmatpush1.msra.mxu0 %v200
    %1288 = vmatprep.subr.mxu0 0.0
    %1289 = vmatpush1.msra.mxu0 %v201
    %1290 = vmatprep.subr.mxu0 0.0
    %1291 = vmatpush1.msra.mxu0 %v202
    %1292 = vmatprep.subr.mxu0 0.0
    %1293 = vmatpush1.msra.mxu0 %v203
    %1294 = vmatprep.subr.mxu0 0.0
    %1295 = vmatpush1.msra.mxu0 %v204
    %1296 = vmatprep.subr.mxu0 0.0
    %1297 = vmatpush1.msra.mxu0 %v205
    %1298 = vmatprep.subr.mxu0 0.0
    %1299 = vmatpush1.msra.mxu0 %v206
    %1300 = vmatprep.subr.mxu0 0.0
    %1301 = vmatpush1.msra.mxu0 %v207
    %1302 = vmatprep.subr.mxu0 0.0
    %1303 = vmatpush1.msra.mxu0 %v208
    %1304 = vmatprep.subr.mxu0 0.0
    %1305 = vmatpush1.msra.mxu0 %v209
    %1306 = vmatprep.subr.mxu0 0.0
    %1307 = vmatpush1.msra.mxu0 %v210
    %1308 = vmatprep.subr.mxu0 0.0
    %1309 = vmatpush1.msra.mxu0 %v211
    %1310 = vmatprep.subr.mxu0 0.0
    %1311 = vmatpush1.msra.mxu0 %v212
    %1312 = vmatprep.subr.mxu0 0.0
    %1313 = vmatpush1.msra.mxu0 %v213
    %1314 = vmatprep.subr.mxu0 0.0
    %1315 = vmatpush1.msra.mxu0 %v214
    %1316 = vmatprep.subr.mxu0 0.0
    %1317 = vmatpush1.msra.mxu0 %v215
    %1318 = vmatprep.subr.mxu0 0.0
    %1319 = vmatpush1.msra.mxu0 %v216
    %1320 = vmatprep.subr.mxu0 0.0
    %1321 = vmatpush1.msra.mxu0 %v217
    %1322 = vmatprep.subr.mxu0 0.0
    %1323 = vmatpush1.msra.mxu0 %v218
    %1324 = vmatprep.subr.mxu0 0.0
    %1325 = vmatpush1.msra.mxu0 %v219
    %1326 = vmatprep.subr.mxu0 0.0
    %1327 = vmatpush1.msra.mxu0 %v220
    %1328 = vmatprep.subr.mxu0 0.0
    %1329 = vmatpush1.msra.mxu0 %v221
    %1330 = vmatprep.mubr.f32.mxu0 %v727
    %1331 = vmatmul.mubr.f32.gmra.mrb[0].mxu0 %v725
    %v1332 = vpop.f32.mrb[0].mxu0
    %v1333 = vadd.f32 %v1258, %v1332
    %v1334 = vpop.f32.mrb[0].mxu0
    %1335 = vmatprep.mubr.f32.mxu0 %v733
    %1336 = vmatmul.mubr.f32.gmra.mrb[0].mxu0 %v731
    %v1337 = vpop.f32.mrb[0].mxu0
    %v1338 = vadd.f32 %v1263, %v1337
    %v1339 = vpop.f32.mrb[0].mxu0
    %1340 = vdwg.mxu0
    %1341 = vmatprep.subr.mxu0 0.0
    %1342 = vmatpush1.msra.mxu0 %v222
    %1343 = vmatprep.subr.mxu0 0.0
    %1344 = vmatpush1.msra.mxu0 %v223
    %1345 = vmatprep.subr.mxu0 0.0
    %1346 = vmatpush1.msra.mxu0 %v224
    %1347 = vmatprep.subr.mxu0 0.0
    %1348 = vmatpush1.msra.mxu0 %v225
    %1349 = vmatprep.subr.mxu0 0.0
    %1350 = vmatpush1.msra.mxu0 %v226
    %1351 = vmatprep.subr.mxu0 0.0
    %1352 = vmatpush1.msra.mxu0 %v227
    %1353 = vmatprep.subr.mxu0 0.0
    %1354 = vmatpush1.msra.mxu0 %v228
    %1355 = vmatprep.subr.mxu0 0.0
    %1356 = vmatpush1.msra.mxu0 %v229
    %1357 = vmatprep.subr.mxu0 0.0
    %1358 = vmatpush1.msra.mxu0 %v230
    %1359 = vmatprep.subr.mxu0 0.0
    %1360 = vmatpush1.msra.mxu0 %v231
    %1361 = vmatprep.subr.mxu0 0.0
    %1362 = vmatpush1.msra.mxu0 %v232
    %1363 = vmatprep.subr.mxu0 0.0
    %1364 = vmatpush1.msra.mxu0 %v233
    %1365 = vmatprep.subr.mxu0 0.0
    %1366 = vmatpush1.msra.mxu0 %v234
    %1367 = vmatprep.subr.mxu0 0.0
    %1368 = vmatpush1.msra.mxu0 %v235
    %1369 = vmatprep.subr.mxu0 0.0
    %1370 = vmatpush1.msra.mxu0 %v236
    %1371 = vmatprep.subr.mxu0 0.0
    %1372 = vmatpush1.msra.mxu0 %v237
    %1373 = vmatprep.subr.mxu0 0.0
    %1374 = vmatpush1.msra.mxu0 %v238
    %1375 = vmatprep.subr.mxu0 0.0
    %1376 = vmatpush1.msra.mxu0 %v239
    %1377 = vmatprep.subr.mxu0 0.0
    %1378 = vmatpush1.msra.mxu0 %v240
    %1379 = vmatprep.subr.mxu0 0.0
    %1380 = vmatpush1.msra.mxu0 %v241
    %1381 = vmatprep.subr.mxu0 0.0
    %1382 = vmatpush1.msra.mxu0 %v242
    %1383 = vmatprep.subr.mxu0 0.0
    %1384 = vmatpush1.msra.mxu0 %v243
    %1385 = vmatprep.subr.mxu0 0.0
    %1386 = vmatpush1.msra.mxu0 %v244
    %1387 = vmatprep.subr.mxu0 0.0
    %1388 = vmatpush1.msra.mxu0 %v245
    %1389 = vmatprep.subr.mxu0 0.0
    %1390 = vmatpush1.msra.mxu0 %v246
    %1391 = vmatprep.subr.mxu0 0.0
    %1392 = vmatpush1.msra.mxu0 %v247
    %1393 = vmatprep.subr.mxu0 0.0
    %1394 = vmatpush1.msra.mxu0 %v248
    %1395 = vmatprep.subr.mxu0 0.0
    %1396 = vmatpush1.msra.mxu0 %v249
    %1397 = vmatprep.subr.mxu0 0.0
    %1398 = vmatpush1.msra.mxu0 %v250
    %1399 = vmatprep.subr.mxu0 0.0
    %1400 = vmatpush1.msra.mxu0 %v251
    %1401 = vmatprep.subr.mxu0 0.0
    %1402 = vmatpush1.msra.mxu0 %v252
    %1403 = vmatprep.subr.mxu0 0.0
    %1404 = vmatpush1.msra.mxu0 %v253
    %1405 = vmatprep.mubr.f32.mxu0 %v804
    %1406 = vmatmul.mubr.f32.gmra.mrb[0].mxu0 %v802
    %v1407 = vpop.f32.mrb[0].mxu0
    %v1408 = vadd.f32 %v1333, %v1407
    %v1409 = vpop.f32.mrb[0].mxu0
    %1410 = vmatprep.mubr.f32.mxu0 %v810
    %1411 = vmatmul.mubr.f32.gmra.mrb[0].mxu0 %v808
    %v1412 = vpop.f32.mrb[0].mxu0
    %v1413 = vadd.f32 %v1338, %v1412
    %v1414 = vpop.f32.mrb[0].mxu0
    %1415 = vdwg.mxu0
    %1416 = vmatprep.subr.mxu0 0.0
    %1417 = vmatpush1.msra.mxu0 %v254
    %1418 = vmatprep.subr.mxu0 0.0
    %1419 = vmatpush1.msra.mxu0 %v255
    %1420 = vmatprep.subr.mxu0 0.0
    %1421 = vmatpush1.msra.mxu0 %v256
    %1422 = vmatprep.subr.mxu0 0.0
    %1423 = vmatpush1.msra.mxu0 %v257
    %1424 = vmatprep.subr.mxu0 0.0
    %1425 = vmatpush1.msra.mxu0 %v258
    %1426 = vmatprep.subr.mxu0 0.0
    %1427 = vmatpush1.msra.mxu0 %v259
    %1428 = vmatprep.subr.mxu0 0.0
    %1429 = vmatpush1.msra.mxu0 %v260
    %1430 = vmatprep.subr.mxu0 0.0
    %1431 = vmatpush1.msra.mxu0 %v261
    %1432 = vmatprep.subr.mxu0 0.0
    %1433 = vmatpush1.msra.mxu0 %v262
    %1434 = vmatprep.subr.mxu0 0.0
    %1435 = vmatpush1.msra.mxu0 %v263
    %1436 = vmatprep.subr.mxu0 0.0
    %1437 = vmatpush1.msra.mxu0 %v264
    %1438 = vmatprep.subr.mxu0 0.0
    %1439 = vmatpush1.msra.mxu0 %v265
    %1440 = vmatprep.subr.mxu0 0.0
    %1441 = vmatpush1.msra.mxu0 %v266
    %1442 = vmatprep.subr.mxu0 0.0
    %1443 = vmatpush1.msra.mxu0 %v267
    %1444 = vmatprep.subr.mxu0 0.0
    %1445 = vmatpush1.msra.mxu0 %v268
    %1446 = vmatprep.subr.mxu0 0.0
    %1447 = vmatpush1.msra.mxu0 %v269
    %1448 = vmatprep.subr.mxu0 0.0
    %1449 = vmatpush1.msra.mxu0 %v270
    %1450 = vmatprep.subr.mxu0 0.0
    %1451 = vmatpush1.msra.mxu0 %v271
    %1452 = vmatprep.subr.mxu0 0.0
    %1453 = vmatpush1.msra.mxu0 %v272
    %1454 = vmatprep.subr.mxu0 0.0
    %1455 = vmatpush1.msra.mxu0 %v273
    %1456 = vmatprep.subr.mxu0 0.0
    %1457 = vmatpush1.msra.mxu0 %v274
    %1458 = vmatprep.subr.mxu0 0.0
    %1459 = vmatpush1.msra.mxu0 %v275
    %1460 = vmatprep.subr.mxu0 0.0
    %1461 = vmatpush1.msra.mxu0 %v276
    %1462 = vmatprep.subr.mxu0 0.0
    %1463 = vmatpush1.msra.mxu0 %v277
    %1464 = vmatprep.subr.mxu0 0.0
    %1465 = vmatpush1.msra.mxu0 %v278
    %1466 = vmatprep.subr.mxu0 0.0
    %1467 = vmatpush1.msra.mxu0 %v279
    %1468 = vmatprep.subr.mxu0 0.0
    %1469 = vmatpush1.msra.mxu0 %v280
    %1470 = vmatprep.subr.mxu0 0.0
    %1471 = vmatpush1.msra.mxu0 %v281
    %1472 = vmatprep.subr.mxu0 0.0
    %1473 = vmatpush1.msra.mxu0 %v282
    %1474 = vmatprep.subr.mxu0 0.0
    %1475 = vmatpush1.msra.mxu0 %v283
    %1476 = vmatprep.subr.mxu0 0.0
    %1477 = vmatpush1.msra.mxu0 %v284
    %1478 = vmatprep.subr.mxu0 0.0
    %1479 = vmatpush1.msra.mxu0 %v285
    %1480 = vmatprep.mubr.f32.mxu0 %v881
    %1481 = vmatmul.mubr.f32.gmra.mrb[0].mxu0 %v879
    %v1482 = vpop.f32.mrb[0].mxu0
    %v1483 = vadd.f32 %v1408, %v1482
    %v1484 = vpop.f32.mrb[0].mxu0
    %1485 = vmatprep.mubr.f32.mxu0 %v887
    %1486 = vmatmul.mubr.f32.gmra.mrb[0].mxu0 %v885
    %v1487 = vpop.f32.mrb[0].mxu0
    %v1488 = vadd.f32 %v1413, %v1487
    %v1489 = vpop.f32.mrb[0].mxu0
    %1490 = vdwg.mxu0
    %1491 = vmatprep.subr.mxu0 0.0
    %1492 = vmatpush1.msra.mxu0 %v286
    %1493 = vmatprep.subr.mxu0 0.0
    %1494 = vmatpush1.msra.mxu0 %v287
    %1495 = vmatprep.subr.mxu0 0.0
    %1496 = vmatpush1.msra.mxu0 %v288
    %1497 = vmatprep.subr.mxu0 0.0
    %1498 = vmatpush1.msra.mxu0 %v289
    %1499 = vmatprep.subr.mxu0 0.0
    %1500 = vmatpush1.msra.mxu0 %v290
    %1501 = vmatprep.subr.mxu0 0.0
    %1502 = vmatpush1.msra.mxu0 %v291
    %1503 = vmatprep.subr.mxu0 0.0
    %1504 = vmatpush1.msra.mxu0 %v292
    %1505 = vmatprep.subr.mxu0 0.0
    %1506 = vmatpush1.msra.mxu0 %v293
    %1507 = vmatprep.subr.mxu0 0.0
    %1508 = vmatpush1.msra.mxu0 %v294
    %1509 = vmatprep.subr.mxu0 0.0
    %1510 = vmatpush1.msra.mxu0 %v295
    %1511 = vmatprep.subr.mxu0 0.0
    %1512 = vmatpush1.msra.mxu0 %v296
    %1513 = vmatprep.subr.mxu0 0.0
    %1514 = vmatpush1.msra.mxu0 %v297
    %1515 = vmatprep.subr.mxu0 0.0
    %1516 = vmatpush1.msra.mxu0 %v298
    %1517 = vmatprep.subr.mxu0 0.0
    %1518 = vmatpush1.msra.mxu0 %v299
    %1519 = vmatprep.subr.mxu0 0.0
    %1520 = vmatpush1.msra.mxu0 %v300
    %1521 = vmatprep.subr.mxu0 0.0
    %1522 = vmatpush1.msra.mxu0 %v301
    %1523 = vmatprep.subr.mxu0 0.0
    %1524 = vmatpush1.msra.mxu0 %v302
    %1525 = vmatprep.subr.mxu0 0.0
    %1526 = vmatpush1.msra.mxu0 %v303
    %1527 = vmatprep.subr.mxu0 0.0
    %1528 = vmatpush1.msra.mxu0 %v304
    %1529 = vmatprep.subr.mxu0 0.0
    %1530 = vmatpush1.msra.mxu0 %v305
    %1531 = vmatprep.subr.mxu0 0.0
    %1532 = vmatpush1.msra.mxu0 %v306
    %1533 = vmatprep.subr.mxu0 0.0
    %1534 = vmatpush1.msra.mxu0 %v307
    %1535 = vmatprep.subr.mxu0 0.0
    %1536 = vmatpush1.msra.mxu0 %v308
    %1537 = vmatprep.subr.mxu0 0.0
    %1538 = vmatpush1.msra.mxu0 %v309
    %1539 = vmatprep.subr.mxu0 0.0
    %1540 = vmatpush1.msra.mxu0 %v310
    %1541 = vmatprep.subr.mxu0 0.0
    %1542 = vmatpush1.msra.mxu0 %v311
    %1543 = vmatprep.subr.mxu0 0.0
    %1544 = vmatpush1.msra.mxu0 %v312
    %1545 = vmatprep.subr.mxu0 0.0
    %1546 = vmatpush1.msra.mxu0 %v313
    %1547 = vmatprep.subr.mxu0 0.0
    %1548 = vmatpush1.msra.mxu0 %v314
    %1549 = vmatprep.subr.mxu0 0.0
    %1550 = vmatpush1.msra.mxu0 %v315
    %1551 = vmatprep.subr.mxu0 0.0
    %1552 = vmatpush1.msra.mxu0 %v316
    %1553 = vmatprep.subr.mxu0 0.0
    %1554 = vmatpush1.msra.mxu0 %v317
    %1555 = vmatprep.mubr.f32.mxu0 %v958
    %1556 = vmatmul.mubr.f32.gmra.mrb[0].mxu0 %v956
    %v1557 = vpop.f32.mrb[0].mxu0
    %v1558 = vadd.f32 %v1483, %v1557
    %v1559 = vpop.f32.mrb[0].mxu0
    %1560 = vmatprep.mubr.f32.mxu0 %v964
    %1561 = vmatmul.mubr.f32.gmra.mrb[0].mxu0 %v962
    %v1562 = vpop.f32.mrb[0].mxu0
    %v1563 = vadd.f32 %v1488, %v1562
    %v1564 = vpop.f32.mrb[0].mxu0
    %1565 = vdwg.mxu0
    %v1566 = vmul.f32 %v417, %v417
    %v1567 = vmul.f32 %v419, %v419
    %v1568 = vmul.f32 %v494, %v494
    %v1569 = vmul.f32 %v496, %v496
    %v1570 = vmul.f32 %v571, %v571
    %v1571 = vmul.f32 %v573, %v573
    %v1572 = vmul.f32 %v648, %v648
    %v1573 = vmul.f32 %v650, %v650
    %v1574 = vmul.f32 %v725, %v725
    %v1575 = vmul.f32 %v727, %v727
    %v1576 = vmul.f32 %v802, %v802
    %v1577 = vmul.f32 %v804, %v804
    %v1578 = vmul.f32 %v879, %v879
    %v1579 = vmul.f32 %v881, %v881
    %v1580 = vmul.f32 %v956, %v956
    %v1581 = vmul.f32 %v958, %v958
    %v1582 = vmul.f32 %v423, %v423
    %v1583 = vmul.f32 %v425, %v425
    %v1584 = vmul.f32 %v500, %v500
    %v1585 = vmul.f32 %v502, %v502
    %v1586 = vmul.f32 %v577, %v577
    %v1587 = vmul.f32 %v579, %v579
    %v1588 = vmul.f32 %v654, %v654
    %v1589 = vmul.f32 %v656, %v656
    %v1590 = vmul.f32 %v731, %v731
    %v1591 = vmul.f32 %v733, %v733
    %v1592 = vmul.f32 %v808, %v808
    %v1593 = vmul.f32 %v810, %v810
    %v1594 = vmul.f32 %v885, %v885
    %v1595 = vmul.f32 %v887, %v887
    %v1596 = vmul.f32 %v962, %v962
    %v1597 = vmul.f32 %v964, %v964
    %1598 = vmatprep.subr.mxu0 0.0
    %1599 = vmatpush1.msra.mxu0 %v62
    %1600 = vmatprep.subr.mxu0 0.0
    %1601 = vmatpush1.msra.mxu0 %v63
    %1602 = vmatprep.subr.mxu0 0.0
    %1603 = vmatpush1.msra.mxu0 %v64
    %1604 = vmatprep.subr.mxu0 0.0
    %1605 = vmatpush1.msra.mxu0 %v65
    %1606 = vmatprep.subr.mxu0 0.0
    %1607 = vmatpush1.msra.mxu0 %v66
    %1608 = vmatprep.subr.mxu0 0.0
    %1609 = vmatpush1.msra.mxu0 %v67
    %1610 = vmatprep.subr.mxu0 0.0
    %1611 = vmatpush1.msra.mxu0 %v68
    %1612 = vmatprep.subr.mxu0 0.0
    %1613 = vmatpush1.msra.mxu0 %v69
    %1614 = vmatprep.subr.mxu0 0.0
    %1615 = vmatpush1.msra.mxu0 %v70
    %1616 = vmatprep.subr.mxu0 0.0
    %1617 = vmatpush1.msra.mxu0 %v71
    %1618 = vmatprep.subr.mxu0 0.0
    %1619 = vmatpush1.msra.mxu0 %v72
    %1620 = vmatprep.subr.mxu0 0.0
    %1621 = vmatpush1.msra.mxu0 %v73
    %1622 = vmatprep.subr.mxu0 0.0
    %1623 = vmatpush1.msra.mxu0 %v74
    %1624 = vmatprep.subr.mxu0 0.0
    %1625 = vmatpush1.msra.mxu0 %v75
    %1626 = vmatprep.subr.mxu0 0.0
    %1627 = vmatpush1.msra.mxu0 %v76
    %1628 = vmatprep.subr.mxu0 0.0
    %1629 = vmatpush1.msra.mxu0 %v77
    %1630 = vmatprep.subr.mxu0 0.0
    %1631 = vmatpush1.msra.mxu0 %v78
    %1632 = vmatprep.subr.mxu0 0.0
    %1633 = vmatpush1.msra.mxu0 %v79
    %1634 = vmatprep.subr.mxu0 0.0
    %1635 = vmatpush1.msra.mxu0 %v80
    %1636 = vmatprep.subr.mxu0 0.0
    %1637 = vmatpush1.msra.mxu0 %v81
    %1638 = vmatprep.subr.mxu0 0.0
    %1639 = vmatpush1.msra.mxu0 %v82
    %1640 = vmatprep.subr.mxu0 0.0
    %1641 = vmatpush1.msra.mxu0 %v83
    %1642 = vmatprep.subr.mxu0 0.0
    %1643 = vmatpush1.msra.mxu0 %v84
    %1644 = vmatprep.subr.mxu0 0.0
    %1645 = vmatpush1.msra.mxu0 %v85
    %1646 = vmatprep.subr.mxu0 0.0
    %1647 = vmatpush1.msra.mxu0 %v86
    %1648 = vmatprep.subr.mxu0 0.0
    %1649 = vmatpush1.msra.mxu0 %v87
    %1650 = vmatprep.subr.mxu0 0.0
    %1651 = vmatpush1.msra.mxu0 %v88
    %1652 = vmatprep.subr.mxu0 0.0
    %1653 = vmatpush1.msra.mxu0 %v89
    %1654 = vmatprep.subr.mxu0 0.0
    %1655 = vmatpush1.msra.mxu0 %v90
    %1656 = vmatprep.subr.mxu0 0.0
    %1657 = vmatpush1.msra.mxu0 %v91
    %1658 = vmatprep.subr.mxu0 0.0
    %1659 = vmatpush1.msra.mxu0 %v92
    %1660 = vmatprep.subr.mxu0 0.0
    %1661 = vmatpush1.msra.mxu0 %v93
    %1662 = vmatprep.mubr.f32.mxu0 %v1567
    %1663 = vmatmul.mubr.f32.gmra.mrb[0].mxu0 %v1566
    %v1664 = vpop.f32.mrb[0].mxu0
    %v1665 = vadd.f32 0.0, %v1664
    %v1666 = vpop.f32.mrb[0].mxu0
    %1667 = vmatprep.mubr.f32.mxu0 %v1583
    %1668 = vmatmul.mubr.f32.gmra.mrb[0].mxu0 %v1582
    %v1669 = vpop.f32.mrb[0].mxu0
    %v1670 = vadd.f32 0.0, %v1669
    %v1671 = vpop.f32.mrb[0].mxu0
    %1672 = vdwg.mxu0
    %1673 = vmatprep.subr.mxu0 0.0
    %1674 = vmatpush1.msra.mxu0 %v94
    %1675 = vmatprep.subr.mxu0 0.0
    %1676 = vmatpush1.msra.mxu0 %v95
    %1677 = vmatprep.subr.mxu0 0.0
    %1678 = vmatpush1.msra.mxu0 %v96
    %1679 = vmatprep.subr.mxu0 0.0
    %1680 = vmatpush1.msra.mxu0 %v97
    %1681 = vmatprep.subr.mxu0 0.0
    %1682 = vmatpush1.msra.mxu0 %v98
    %1683 = vmatprep.subr.mxu0 0.0
    %1684 = vmatpush1.msra.mxu0 %v99
    %1685 = vmatprep.subr.mxu0 0.0
    %1686 = vmatpush1.msra.mxu0 %v100
    %1687 = vmatprep.subr.mxu0 0.0
    %1688 = vmatpush1.msra.mxu0 %v101
    %1689 = vmatprep.subr.mxu0 0.0
    %1690 = vmatpush1.msra.mxu0 %v102
    %1691 = vmatprep.subr.mxu0 0.0
    %1692 = vmatpush1.msra.mxu0 %v103
    %1693 = vmatprep.subr.mxu0 0.0
    %1694 = vmatpush1.msra.mxu0 %v104
    %1695 = vmatprep.subr.mxu0 0.0
    %1696 = vmatpush1.msra.mxu0 %v105
    %1697 = vmatprep.subr.mxu0 0.0
    %1698 = vmatpush1.msra.mxu0 %v106
    %1699 = vmatprep.subr.mxu0 0.0
    %1700 = vmatpush1.msra.mxu0 %v107
    %1701 = vmatprep.subr.mxu0 0.0
    %1702 = vmatpush1.msra.mxu0 %v108
    %1703 = vmatprep.subr.mxu0 0.0
    %1704 = vmatpush1.msra.mxu0 %v109
    %1705 = vmatprep.subr.mxu0 0.0
    %1706 = vmatpush1.msra.mxu0 %v110
    %1707 = vmatprep.subr.mxu0 0.0
    %1708 = vmatpush1.msra.mxu0 %v111
    %1709 = vmatprep.subr.mxu0 0.0
    %1710 = vmatpush1.msra.mxu0 %v112
    %1711 = vmatprep.subr.mxu0 0.0
    %1712 = vmatpush1.msra.mxu0 %v113
    %1713 = vmatprep.subr.mxu0 0.0
    %1714 = vmatpush1.msra.mxu0 %v114
    %1715 = vmatprep.subr.mxu0 0.0
    %1716 = vmatpush1.msra.mxu0 %v115
    %1717 = vmatprep.subr.mxu0 0.0
    %1718 = vmatpush1.msra.mxu0 %v116
    %1719 = vmatprep.subr.mxu0 0.0
    %1720 = vmatpush1.msra.mxu0 %v117
    %1721 = vmatprep.subr.mxu0 0.0
    %1722 = vmatpush1.msra.mxu0 %v118
    %1723 = vmatprep.subr.mxu0 0.0
    %1724 = vmatpush1.msra.mxu0 %v119
    %1725 = vmatprep.subr.mxu0 0.0
    %1726 = vmatpush1.msra.mxu0 %v120
    %1727 = vmatprep.subr.mxu0 0.0
    %1728 = vmatpush1.msra.mxu0 %v121
    %1729 = vmatprep.subr.mxu0 0.0
    %1730 = vmatpush1.msra.mxu0 %v122
    %1731 = vmatprep.subr.mxu0 0.0
    %1732 = vmatpush1.msra.mxu0 %v123
    %1733 = vmatprep.subr.mxu0 0.0
    %1734 = vmatpush1.msra.mxu0 %v124
    %1735 = vmatprep.subr.mxu0 0.0
    %1736 = vmatpush1.msra.mxu0 %v125
    %1737 = vmatprep.mubr.f32.mxu0 %v1569
    %1738 = vmatmul.mubr.f32.gmra.mrb[0].mxu0 %v1568
    %v1739 = vpop.f32.mrb[0].mxu0
    %v1740 = vadd.f32 %v1665, %v1739
    %v1741 = vpop.f32.mrb[0].mxu0
    %1742 = vmatprep.mubr.f32.mxu0 %v1585
    %1743 = vmatmul.mubr.f32.gmra.mrb[0].mxu0 %v1584
    %v1744 = vpop.f32.mrb[0].mxu0
    %v1745 = vadd.f32 %v1670, %v1744
    %v1746 = vpop.f32.mrb[0].mxu0
    %1747 = vdwg.mxu0
    %1748 = vmatprep.subr.mxu0 0.0
    %1749 = vmatpush1.msra.mxu0 %v126
    %1750 = vmatprep.subr.mxu0 0.0
    %1751 = vmatpush1.msra.mxu0 %v127
    %1752 = vmatprep.subr.mxu0 0.0
    %1753 = vmatpush1.msra.mxu0 %v128
    %1754 = vmatprep.subr.mxu0 0.0
    %1755 = vmatpush1.msra.mxu0 %v129
    %1756 = vmatprep.subr.mxu0 0.0
    %1757 = vmatpush1.msra.mxu0 %v130
    %1758 = vmatprep.subr.mxu0 0.0
    %1759 = vmatpush1.msra.mxu0 %v131
    %1760 = vmatprep.subr.mxu0 0.0
    %1761 = vmatpush1.msra.mxu0 %v132
    %1762 = vmatprep.subr.mxu0 0.0
    %1763 = vmatpush1.msra.mxu0 %v133
    %1764 = vmatprep.subr.mxu0 0.0
    %1765 = vmatpush1.msra.mxu0 %v134
    %1766 = vmatprep.subr.mxu0 0.0
    %1767 = vmatpush1.msra.mxu0 %v135
    %1768 = vmatprep.subr.mxu0 0.0
    %1769 = vmatpush1.msra.mxu0 %v136
    %1770 = vmatprep.subr.mxu0 0.0
    %1771 = vmatpush1.msra.mxu0 %v137
    %1772 = vmatprep.subr.mxu0 0.0
    %1773 = vmatpush1.msra.mxu0 %v138
    %1774 = vmatprep.subr.mxu0 0.0
    %1775 = vmatpush1.msra.mxu0 %v139
    %1776 = vmatprep.subr.mxu0 0.0
    %1777 = vmatpush1.msra.mxu0 %v140
    %1778 = vmatprep.subr.mxu0 0.0
    %1779 = vmatpush1.msra.mxu0 %v141
    %1780 = vmatprep.subr.mxu0 0.0
    %1781 = vmatpush1.msra.mxu0 %v142
    %1782 = vmatprep.subr.mxu0 0.0
    %1783 = vmatpush1.msra.mxu0 %v143
    %1784 = vmatprep.subr.mxu0 0.0
    %1785 = vmatpush1.msra.mxu0 %v144
    %1786 = vmatprep.subr.mxu0 0.0
    %1787 = vmatpush1.msra.mxu0 %v145
    %1788 = vmatprep.subr.mxu0 0.0
    %1789 = vmatpush1.msra.mxu0 %v146
    %1790 = vmatprep.subr.mxu0 0.0
    %1791 = vmatpush1.msra.mxu0 %v147
    %1792 = vmatprep.subr.mxu0 0.0
    %1793 = vmatpush1.msra.mxu0 %v148
    %1794 = vmatprep.subr.mxu0 0.0
    %1795 = vmatpush1.msra.mxu0 %v149
    %1796 = vmatprep.subr.mxu0 0.0
    %1797 = vmatpush1.msra.mxu0 %v150
    %1798 = vmatprep.subr.mxu0 0.0
    %1799 = vmatpush1.msra.mxu0 %v151
    %1800 = vmatprep.subr.mxu0 0.0
    %1801 = vmatpush1.msra.mxu0 %v152
    %1802 = vmatprep.subr.mxu0 0.0
    %1803 = vmatpush1.msra.mxu0 %v153
    %1804 = vmatprep.subr.mxu0 0.0
    %1805 = vmatpush1.msra.mxu0 %v154
    %1806 = vmatprep.subr.mxu0 0.0
    %1807 = vmatpush1.msra.mxu0 %v155
    %1808 = vmatprep.subr.mxu0 0.0
    %1809 = vmatpush1.msra.mxu0 %v156
    %1810 = vmatprep.subr.mxu0 0.0
    %1811 = vmatpush1.msra.mxu0 %v157
    %1812 = vmatprep.mubr.f32.mxu0 %v1571
    %1813 = vmatmul.mubr.f32.gmra.mrb[0].mxu0 %v1570
    %v1814 = vpop.f32.mrb[0].mxu0
    %v1815 = vadd.f32 %v1740, %v1814
    %v1816 = vpop.f32.mrb[0].mxu0
    %1817 = vmatprep.mubr.f32.mxu0 %v1587
    %1818 = vmatmul.mubr.f32.gmra.mrb[0].mxu0 %v1586
    %v1819 = vpop.f32.mrb[0].mxu0
    %v1820 = vadd.f32 %v1745, %v1819
    %v1821 = vpop.f32.mrb[0].mxu0
    %1822 = vdwg.mxu0
    %1823 = vmatprep.subr.mxu0 0.0
    %1824 = vmatpush1.msra.mxu0 %v158
    %1825 = vmatprep.subr.mxu0 0.0
    %1826 = vmatpush1.msra.mxu0 %v159
    %1827 = vmatprep.subr.mxu0 0.0
    %1828 = vmatpush1.msra.mxu0 %v160
    %1829 = vmatprep.subr.mxu0 0.0
    %1830 = vmatpush1.msra.mxu0 %v161
    %1831 = vmatprep.subr.mxu0 0.0
    %1832 = vmatpush1.msra.mxu0 %v162
    %1833 = vmatprep.subr.mxu0 0.0
    %1834 = vmatpush1.msra.mxu0 %v163
    %1835 = vmatprep.subr.mxu0 0.0
    %1836 = vmatpush1.msra.mxu0 %v164
    %1837 = vmatprep.subr.mxu0 0.0
    %1838 = vmatpush1.msra.mxu0 %v165
    %1839 = vmatprep.subr.mxu0 0.0
    %1840 = vmatpush1.msra.mxu0 %v166
    %1841 = vmatprep.subr.mxu0 0.0
    %1842 = vmatpush1.msra.mxu0 %v167
    %1843 = vmatprep.subr.mxu0 0.0
    %1844 = vmatpush1.msra.mxu0 %v168
    %1845 = vmatprep.subr.mxu0 0.0
    %1846 = vmatpush1.msra.mxu0 %v169
    %1847 = vmatprep.subr.mxu0 0.0
    %1848 = vmatpush1.msra.mxu0 %v170
    %1849 = vmatprep.subr.mxu0 0.0
    %1850 = vmatpush1.msra.mxu0 %v171
    %1851 = vmatprep.subr.mxu0 0.0
    %1852 = vmatpush1.msra.mxu0 %v172
    %1853 = vmatprep.subr.mxu0 0.0
    %1854 = vmatpush1.msra.mxu0 %v173
    %1855 = vmatprep.subr.mxu0 0.0
    %1856 = vmatpush1.msra.mxu0 %v174
    %1857 = vmatprep.subr.mxu0 0.0
    %1858 = vmatpush1.msra.mxu0 %v175
    %1859 = vmatprep.subr.mxu0 0.0
    %1860 = vmatpush1.msra.mxu0 %v176
    %1861 = vmatprep.subr.mxu0 0.0
    %1862 = vmatpush1.msra.mxu0 %v177
    %1863 = vmatprep.subr.mxu0 0.0
    %1864 = vmatpush1.msra.mxu0 %v178
    %1865 = vmatprep.subr.mxu0 0.0
    %1866 = vmatpush1.msra.mxu0 %v179
    %1867 = vmatprep.subr.mxu0 0.0
    %1868 = vmatpush1.msra.mxu0 %v180
    %1869 = vmatprep.subr.mxu0 0.0
    %1870 = vmatpush1.msra.mxu0 %v181
    %1871 = vmatprep.subr.mxu0 0.0
    %1872 = vmatpush1.msra.mxu0 %v182
    %1873 = vmatprep.subr.mxu0 0.0
    %1874 = vmatpush1.msra.mxu0 %v183
    %1875 = vmatprep.subr.mxu0 0.0
    %1876 = vmatpush1.msra.mxu0 %v184
    %1877 = vmatprep.subr.mxu0 0.0
    %1878 = vmatpush1.msra.mxu0 %v185
    %1879 = vmatprep.subr.mxu0 0.0
    %1880 = vmatpush1.msra.mxu0 %v186
    %1881 = vmatprep.subr.mxu0 0.0
    %1882 = vmatpush1.msra.mxu0 %v187
    %1883 = vmatprep.subr.mxu0 0.0
    %1884 = vmatpush1.msra.mxu0 %v188
    %1885 = vmatprep.subr.mxu0 0.0
    %1886 = vmatpush1.msra.mxu0 %v189
    %1887 = vmatprep.mubr.f32.mxu0 %v1573
    %1888 = vmatmul.mubr.f32.gmra.mrb[0].mxu0 %v1572
    %v1889 = vpop.f32.mrb[0].mxu0
    %v1890 = vadd.f32 %v1815, %v1889
    %v1891 = vpop.f32.mrb[0].mxu0
    %1892 = vmatprep.mubr.f32.mxu0 %v1589
    %1893 = vmatmul.mubr.f32.gmra.mrb[0].mxu0 %v1588
    %v1894 = vpop.f32.mrb[0].mxu0
    %v1895 = vadd.f32 %v1820, %v1894
    %v1896 = vpop.f32.mrb[0].mxu0
    %1897 = vdwg.mxu0
    %1898 = vmatprep.subr.mxu0 0.0
    %1899 = vmatpush1.msra.mxu0 %v190
    %1900 = vmatprep.subr.mxu0 0.0
    %1901 = vmatpush1.msra.mxu0 %v191
    %1902 = vmatprep.subr.mxu0 0.0
    %1903 = vmatpush1.msra.mxu0 %v192
    %1904 = vmatprep.subr.mxu0 0.0
    %1905 = vmatpush1.msra.mxu0 %v193
    %1906 = vmatprep.subr.mxu0 0.0
    %1907 = vmatpush1.msra.mxu0 %v194
    %1908 = vmatprep.subr.mxu0 0.0
    %1909 = vmatpush1.msra.mxu0 %v195
    %1910 = vmatprep.subr.mxu0 0.0
    %1911 = vmatpush1.msra.mxu0 %v196
    %1912 = vmatprep.subr.mxu0 0.0
    %1913 = vmatpush1.msra.mxu0 %v197
    %1914 = vmatprep.subr.mxu0 0.0
    %1915 = vmatpush1.msra.mxu0 %v198
    %1916 = vmatprep.subr.mxu0 0.0
    %1917 = vmatpush1.msra.mxu0 %v199
    %1918 = vmatprep.subr.mxu0 0.0
    %1919 = vmatpush1.msra.mxu0 %v200
    %1920 = vmatprep.subr.mxu0 0.0
    %1921 = vmatpush1.msra.mxu0 %v201
    %1922 = vmatprep.subr.mxu0 0.0
    %1923 = vmatpush1.msra.mxu0 %v202
    %1924 = vmatprep.subr.mxu0 0.0
    %1925 = vmatpush1.msra.mxu0 %v203
    %1926 = vmatprep.subr.mxu0 0.0
    %1927 = vmatpush1.msra.mxu0 %v204
    %1928 = vmatprep.subr.mxu0 0.0
    %1929 = vmatpush1.msra.mxu0 %v205
    %1930 = vmatprep.subr.mxu0 0.0
    %1931 = vmatpush1.msra.mxu0 %v206
    %1932 = vmatprep.subr.mxu0 0.0
    %1933 = vmatpush1.msra.mxu0 %v207
    %1934 = vmatprep.subr.mxu0 0.0
    %1935 = vmatpush1.msra.mxu0 %v208
    %1936 = vmatprep.subr.mxu0 0.0
    %1937 = vmatpush1.msra.mxu0 %v209
    %1938 = vmatprep.subr.mxu0 0.0
    %1939 = vmatpush1.msra.mxu0 %v210
    %1940 = vmatprep.subr.mxu0 0.0
    %1941 = vmatpush1.msra.mxu0 %v211
    %1942 = vmatprep.subr.mxu0 0.0
    %1943 = vmatpush1.msra.mxu0 %v212
    %1944 = vmatprep.subr.mxu0 0.0
    %1945 = vmatpush1.msra.mxu0 %v213
    %1946 = vmatprep.subr.mxu0 0.0
    %1947 = vmatpush1.msra.mxu0 %v214
    %1948 = vmatprep.subr.mxu0 0.0
    %1949 = vmatpush1.msra.mxu0 %v215
    %1950 = vmatprep.subr.mxu0 0.0
    %1951 = vmatpush1.msra.mxu0 %v216
    %1952 = vmatprep.subr.mxu0 0.0
    %1953 = vmatpush1.msra.mxu0 %v217
    %1954 = vmatprep.subr.mxu0 0.0
    %1955 = vmatpush1.msra.mxu0 %v218
    %1956 = vmatprep.subr.mxu0 0.0
    %1957 = vmatpush1.msra.mxu0 %v219
    %1958 = vmatprep.subr.mxu0 0.0
    %1959 = vmatpush1.msra.mxu0 %v220
    %1960 = vmatprep.subr.mxu0 0.0
    %1961 = vmatpush1.msra.mxu0 %v221
    %1962 = vmatprep.mubr.f32.mxu0 %v1575
    %1963 = vmatmul.mubr.f32.gmra.mrb[0].mxu0 %v1574
    %v1964 = vpop.f32.mrb[0].mxu0
    %v1965 = vadd.f32 %v1890, %v1964
    %v1966 = vpop.f32.mrb[0].mxu0
    %1967 = vmatprep.mubr.f32.mxu0 %v1591
    %1968 = vmatmul.mubr.f32.gmra.mrb[0].mxu0 %v1590
    %v1969 = vpop.f32.mrb[0].mxu0
    %v1970 = vadd.f32 %v1895, %v1969
    %v1971 = vpop.f32.mrb[0].mxu0
    %1972 = vdwg.mxu0
    %1973 = vmatprep.subr.mxu0 0.0
    %1974 = vmatpush1.msra.mxu0 %v222
    %1975 = vmatprep.subr.mxu0 0.0
    %1976 = vmatpush1.msra.mxu0 %v223
    %1977 = vmatprep.subr.mxu0 0.0
    %1978 = vmatpush1.msra.mxu0 %v224
    %1979 = vmatprep.subr.mxu0 0.0
    %1980 = vmatpush1.msra.mxu0 %v225
    %1981 = vmatprep.subr.mxu0 0.0
    %1982 = vmatpush1.msra.mxu0 %v226
    %1983 = vmatprep.subr.mxu0 0.0
    %1984 = vmatpush1.msra.mxu0 %v227
    %1985 = vmatprep.subr.mxu0 0.0
    %1986 = vmatpush1.msra.mxu0 %v228
    %1987 = vmatprep.subr.mxu0 0.0
    %1988 = vmatpush1.msra.mxu0 %v229
    %1989 = vmatprep.subr.mxu0 0.0
    %1990 = vmatpush1.msra.mxu0 %v230
    %1991 = vmatprep.subr.mxu0 0.0
    %1992 = vmatpush1.msra.mxu0 %v231
    %1993 = vmatprep.subr.mxu0 0.0
    %1994 = vmatpush1.msra.mxu0 %v232
    %1995 = vmatprep.subr.mxu0 0.0
    %1996 = vmatpush1.msra.mxu0 %v233
    %1997 = vmatprep.subr.mxu0 0.0
    %1998 = vmatpush1.msra.mxu0 %v234
    %1999 = vmatprep.subr.mxu0 0.0
    %2000 = vmatpush1.msra.mxu0 %v235
    %2001 = vmatprep.subr.mxu0 0.0
    %2002 = vmatpush1.msra.mxu0 %v236
    %2003 = vmatprep.subr.mxu0 0.0
    %2004 = vmatpush1.msra.mxu0 %v237
    %2005 = vmatprep.subr.mxu0 0.0
    %2006 = vmatpush1.msra.mxu0 %v238
    %2007 = vmatprep.subr.mxu0 0.0
    %2008 = vmatpush1.msra.mxu0 %v239
    %2009 = vmatprep.subr.mxu0 0.0
    %2010 = vmatpush1.msra.mxu0 %v240
    %2011 = vmatprep.subr.mxu0 0.0
    %2012 = vmatpush1.msra.mxu0 %v241
    %2013 = vmatprep.subr.mxu0 0.0
    %2014 = vmatpush1.msra.mxu0 %v242
    %2015 = vmatprep.subr.mxu0 0.0
    %2016 = vmatpush1.msra.mxu0 %v243
    %2017 = vmatprep.subr.mxu0 0.0
    %2018 = vmatpush1.msra.mxu0 %v244
    %2019 = vmatprep.subr.mxu0 0.0
    %2020 = vmatpush1.msra.mxu0 %v245
    %2021 = vmatprep.subr.mxu0 0.0
    %2022 = vmatpush1.msra.mxu0 %v246
    %2023 = vmatprep.subr.mxu0 0.0
    %2024 = vmatpush1.msra.mxu0 %v247
    %2025 = vmatprep.subr.mxu0 0.0
    %2026 = vmatpush1.msra.mxu0 %v248
    %2027 = vmatprep.subr.mxu0 0.0
    %2028 = vmatpush1.msra.mxu0 %v249
    %2029 = vmatprep.subr.mxu0 0.0
    %2030 = vmatpush1.msra.mxu0 %v250
    %2031 = vmatprep.subr.mxu0 0.0
    %2032 = vmatpush1.msra.mxu0 %v251
    %2033 = vmatprep.subr.mxu0 0.0
    %2034 = vmatpush1.msra.mxu0 %v252
    %2035 = vmatprep.subr.mxu0 0.0
    %2036 = vmatpush1.msra.mxu0 %v253
    %2037 = vmatprep.mubr.f32.mxu0 %v1577
    %2038 = vmatmul.mubr.f32.gmra.mrb[0].mxu0 %v1576
    %v2039 = vpop.f32.mrb[0].mxu0
    %v2040 = vadd.f32 %v1965, %v2039
    %v2041 = vpop.f32.mrb[0].mxu0
    %2042 = vmatprep.mubr.f32.mxu0 %v1593
    %2043 = vmatmul.mubr.f32.gmra.mrb[0].mxu0 %v1592
    %v2044 = vpop.f32.mrb[0].mxu0
    %v2045 = vadd.f32 %v1970, %v2044
    %v2046 = vpop.f32.mrb[0].mxu0
    %2047 = vdwg.mxu0
    %2048 = vmatprep.subr.mxu0 0.0
    %2049 = vmatpush1.msra.mxu0 %v254
    %2050 = vmatprep.subr.mxu0 0.0
    %2051 = vmatpush1.msra.mxu0 %v255
    %2052 = vmatprep.subr.mxu0 0.0
    %2053 = vmatpush1.msra.mxu0 %v256
    %2054 = vmatprep.subr.mxu0 0.0
    %2055 = vmatpush1.msra.mxu0 %v257
    %2056 = vmatprep.subr.mxu0 0.0
    %2057 = vmatpush1.msra.mxu0 %v258
    %2058 = vmatprep.subr.mxu0 0.0
    %2059 = vmatpush1.msra.mxu0 %v259
    %2060 = vmatprep.subr.mxu0 0.0
    %2061 = vmatpush1.msra.mxu0 %v260
    %2062 = vmatprep.subr.mxu0 0.0
    %2063 = vmatpush1.msra.mxu0 %v261
    %2064 = vmatprep.subr.mxu0 0.0
    %2065 = vmatpush1.msra.mxu0 %v262
    %2066 = vmatprep.subr.mxu0 0.0
    %2067 = vmatpush1.msra.mxu0 %v263
    %2068 = vmatprep.subr.mxu0 0.0
    %2069 = vmatpush1.msra.mxu0 %v264
    %2070 = vmatprep.subr.mxu0 0.0
    %2071 = vmatpush1.msra.mxu0 %v265
    %2072 = vmatprep.subr.mxu0 0.0
    %2073 = vmatpush1.msra.mxu0 %v266
    %2074 = vmatprep.subr.mxu0 0.0
    %2075 = vmatpush1.msra.mxu0 %v267
    %2076 = vmatprep.subr.mxu0 0.0
    %2077 = vmatpush1.msra.mxu0 %v268
    %2078 = vmatprep.subr.mxu0 0.0
    %2079 = vmatpush1.msra.mxu0 %v269
    %2080 = vmatprep.subr.mxu0 0.0
    %2081 = vmatpush1.msra.mxu0 %v270
    %2082 = vmatprep.subr.mxu0 0.0
    %2083 = vmatpush1.msra.mxu0 %v271
    %2084 = vmatprep.subr.mxu0 0.0
    %2085 = vmatpush1.msra.mxu0 %v272
    %2086 = vmatprep.subr.mxu0 0.0
    %2087 = vmatpush1.msra.mxu0 %v273
    %2088 = vmatprep.subr.mxu0 0.0
    %2089 = vmatpush1.msra.mxu0 %v274
    %2090 = vmatprep.subr.mxu0 0.0
    %2091 = vmatpush1.msra.mxu0 %v275
    %2092 = vmatprep.subr.mxu0 0.0
    %2093 = vmatpush1.msra.mxu0 %v276
    %2094 = vmatprep.subr.mxu0 0.0
    %2095 = vmatpush1.msra.mxu0 %v277
    %2096 = vmatprep.subr.mxu0 0.0
    %2097 = vmatpush1.msra.mxu0 %v278
    %2098 = vmatprep.subr.mxu0 0.0
    %2099 = vmatpush1.msra.mxu0 %v279
    %2100 = vmatprep.subr.mxu0 0.0
    %2101 = vmatpush1.msra.mxu0 %v280
    %2102 = vmatprep.subr.mxu0 0.0
    %2103 = vmatpush1.msra.mxu0 %v281
    %2104 = vmatprep.subr.mxu0 0.0
    %2105 = vmatpush1.msra.mxu0 %v282
    %2106 = vmatprep.subr.mxu0 0.0
    %2107 = vmatpush1.msra.mxu0 %v283
    %2108 = vmatprep.subr.mxu0 0.0
    %2109 = vmatpush1.msra.mxu0 %v284
    %2110 = vmatprep.subr.mxu0 0.0
    %2111 = vmatpush1.msra.mxu0 %v285
    %2112 = vmatprep.mubr.f32.mxu0 %v1579
    %2113 = vmatmul.mubr.f32.gmra.mrb[0].mxu0 %v1578
    %v2114 = vpop.f32.mrb[0].mxu0
    %v2115 = vadd.f32 %v2040, %v2114
    %v2116 = vpop.f32.mrb[0].mxu0
    %2117 = vmatprep.mubr.f32.mxu0 %v1595
    %2118 = vmatmul.mubr.f32.gmra.mrb[0].mxu0 %v1594
    %v2119 = vpop.f32.mrb[0].mxu0
    %v2120 = vadd.f32 %v2045, %v2119
    %v2121 = vpop.f32.mrb[0].mxu0
    %2122 = vdwg.mxu0
    %2123 = vmatprep.subr.mxu0 0.0
    %2124 = vmatpush1.msra.mxu0 %v286
    %2125 = vmatprep.subr.mxu0 0.0
    %2126 = vmatpush1.msra.mxu0 %v287
    %2127 = vmatprep.subr.mxu0 0.0
    %2128 = vmatpush1.msra.mxu0 %v288
    %2129 = vmatprep.subr.mxu0 0.0
    %2130 = vmatpush1.msra.mxu0 %v289
    %2131 = vmatprep.subr.mxu0 0.0
    %2132 = vmatpush1.msra.mxu0 %v290
    %2133 = vmatprep.subr.mxu0 0.0
    %2134 = vmatpush1.msra.mxu0 %v291
    %2135 = vmatprep.subr.mxu0 0.0
    %2136 = vmatpush1.msra.mxu0 %v292
    %2137 = vmatprep.subr.mxu0 0.0
    %2138 = vmatpush1.msra.mxu0 %v293
    %2139 = vmatprep.subr.mxu0 0.0
    %2140 = vmatpush1.msra.mxu0 %v294
    %2141 = vmatprep.subr.mxu0 0.0
    %2142 = vmatpush1.msra.mxu0 %v295
    %2143 = vmatprep.subr.mxu0 0.0
    %2144 = vmatpush1.msra.mxu0 %v296
    %2145 = vmatprep.subr.mxu0 0.0
    %2146 = vmatpush1.msra.mxu0 %v297
    %2147 = vmatprep.subr.mxu0 0.0
    %2148 = vmatpush1.msra.mxu0 %v298
    %2149 = vmatprep.subr.mxu0 0.0
    %2150 = vmatpush1.msra.mxu0 %v299
    %2151 = vmatprep.subr.mxu0 0.0
    %2152 = vmatpush1.msra.mxu0 %v300
    %2153 = vmatprep.subr.mxu0 0.0
    %2154 = vmatpush1.msra.mxu0 %v301
    %2155 = vmatprep.subr.mxu0 0.0
    %2156 = vmatpush1.msra.mxu0 %v302
    %2157 = vmatprep.subr.mxu0 0.0
    %2158 = vmatpush1.msra.mxu0 %v303
    %2159 = vmatprep.subr.mxu0 0.0
    %2160 = vmatpush1.msra.mxu0 %v304
    %2161 = vmatprep.subr.mxu0 0.0
    %2162 = vmatpush1.msra.mxu0 %v305
    %2163 = vmatprep.subr.mxu0 0.0
    %2164 = vmatpush1.msra.mxu0 %v306
    %2165 = vmatprep.subr.mxu0 0.0
    %2166 = vmatpush1.msra.mxu0 %v307
    %2167 = vmatprep.subr.mxu0 0.0
    %2168 = vmatpush1.msra.mxu0 %v308
    %2169 = vmatprep.subr.mxu0 0.0
    %2170 = vmatpush1.msra.mxu0 %v309
    %2171 = vmatprep.subr.mxu0 0.0
    %2172 = vmatpush1.msra.mxu0 %v310
    %2173 = vmatprep.subr.mxu0 0.0
    %2174 = vmatpush1.msra.mxu0 %v311
    %2175 = vmatprep.subr.mxu0 0.0
    %2176 = vmatpush1.msra.mxu0 %v312
    %2177 = vmatprep.subr.mxu0 0.0
    %2178 = vmatpush1.msra.mxu0 %v313
    %2179 = vmatprep.subr.mxu0 0.0
    %2180 = vmatpush1.msra.mxu0 %v314
    %2181 = vmatprep.subr.mxu0 0.0
    %2182 = vmatpush1.msra.mxu0 %v315
    %2183 = vmatprep.subr.mxu0 0.0
    %2184 = vmatpush1.msra.mxu0 %v316
    %2185 = vmatprep.subr.mxu0 0.0
    %2186 = vmatpush1.msra.mxu0 %v317
    %2187 = vmatprep.mubr.f32.mxu0 %v1581
    %2188 = vmatmul.mubr.f32.gmra.mrb[0].mxu0 %v1580
    %v2189 = vpop.f32.mrb[0].mxu0
    %v2190 = vadd.f32 %v2115, %v2189
    %v2191 = vpop.f32.mrb[0].mxu0
    %2192 = vmatprep.mubr.f32.mxu0 %v1597
    %2193 = vmatmul.mubr.f32.gmra.mrb[0].mxu0 %v1596
    %v2194 = vpop.f32.mrb[0].mxu0
    %v2195 = vadd.f32 %v2120, %v2194
    %v2196 = vpop.f32.mrb[0].mxu0
    %2197 = vdwg.mxu0
    %v2199 = vsel %vm343, %v334, 0
    %2201 = vmatprep.subr.mxu0 0.0
    %2202 = vmatpush1.msra.mxu0 %v1558
    %2203 = vmatprep.subr.mxu0 0.0
    %2204 = vmatpush1.msra.mxu0 %v1563
    %2205 = vmatprep.subr.mxu0 0.0
    %2206 = vmatpush1.msra.mxu0 0.0
    %2207 = vmatprep.subr.mxu0 0.0
    %2208 = vmatpush1.msra.mxu0 0.0
    %2209 = vmatprep.subr.mxu0 0.0
    %2210 = vmatpush1.msra.mxu0 0.0
    %2211 = vmatprep.subr.mxu0 0.0
    %2212 = vmatpush1.msra.mxu0 0.0
    %2213 = vmatprep.subr.mxu0 0.0
    %2214 = vmatpush1.msra.mxu0 0.0
    %2215 = vmatprep.subr.mxu0 0.0
    %2216 = vmatpush1.msra.mxu0 0.0
    %2217 = vmatprep.subr.mxu0 0.0
    %2218 = vmatpush1.msra.mxu0 0.0
    %2219 = vmatprep.subr.mxu0 0.0
    %2220 = vmatpush1.msra.mxu0 0.0
    %2221 = vmatprep.subr.mxu0 0.0
    %2222 = vmatpush1.msra.mxu0 0.0
    %2223 = vmatprep.subr.mxu0 0.0
    %2224 = vmatpush1.msra.mxu0 0.0
    %2225 = vmatprep.subr.mxu0 0.0
    %2226 = vmatpush1.msra.mxu0 0.0
    %2227 = vmatprep.subr.mxu0 0.0
    %2228 = vmatpush1.msra.mxu0 0.0
    %2229 = vmatprep.subr.mxu0 0.0
    %2230 = vmatpush1.msra.mxu0 0.0
    %2231 = vmatprep.subr.mxu0 0.0
    %2232 = vmatpush1.msra.mxu0 0.0
    %2233 = vmatprep.subr.mxu0 0.0
    %2234 = vmatpush1.msra.mxu0 0.0
    %2235 = vmatprep.subr.mxu0 0.0
    %2236 = vmatpush1.msra.mxu0 0.0
    %2237 = vmatprep.subr.mxu0 0.0
    %2238 = vmatpush1.msra.mxu0 0.0
    %2239 = vmatprep.subr.mxu0 0.0
    %2240 = vmatpush1.msra.mxu0 0.0
    %2241 = vmatprep.subr.mxu0 0.0
    %2242 = vmatpush1.msra.mxu0 0.0
    %2243 = vmatprep.subr.mxu0 0.0
    %2244 = vmatpush1.msra.mxu0 0.0
    %2245 = vmatprep.subr.mxu0 0.0
    %2246 = vmatpush1.msra.mxu0 0.0
    %2247 = vmatprep.subr.mxu0 0.0
    %2248 = vmatpush1.msra.mxu0 0.0
    %2249 = vmatprep.subr.mxu0 0.0
    %2250 = vmatpush1.msra.mxu0 0.0
    %2251 = vmatprep.subr.mxu0 0.0
    %2252 = vmatpush1.msra.mxu0 0.0
    %2253 = vmatprep.subr.mxu0 0.0
    %2254 = vmatpush1.msra.mxu0 0.0
    %2255 = vmatprep.subr.mxu0 0.0
    %2256 = vmatpush1.msra.mxu0 0.0
    %2257 = vmatprep.subr.mxu0 0.0
    %2258 = vmatpush1.msra.mxu0 0.0
    %2259 = vmatprep.subr.mxu0 0.0
    %2260 = vmatpush1.msra.mxu0 0.0
    %2261 = vmatprep.subr.mxu0 0.0
    %2262 = vmatpush1.msra.mxu0 0.0
    %2263 = vmatprep.subr.mxu0 0.0
    %2264 = vmatpush1.msra.mxu0 0.0
    %2265 = vmatprep.mubr.f32.mxu0 0.0
    %2266 = vmatmul.mubr.f32.gmra.mrb[0].mxu0 %v2199
    %v2267 = vpop.f32.mrb[0].mxu0
    %v2268 = vadd.f32 0.0, %v2267
    %v2269 = vpop.f32.mrb[0].mxu0
    %2270 = vdwg.mxu0
    %2271 = vmatprep.subr.mxu0 0.0
    %2272 = vmatpush1.msra.mxu0 %v2190
    %2273 = vmatprep.subr.mxu0 0.0
    %2274 = vmatpush1.msra.mxu0 %v2195
    %2275 = vmatprep.subr.mxu0 0.0
    %2276 = vmatpush1.msra.mxu0 0.0
    %2277 = vmatprep.subr.mxu0 0.0
    %2278 = vmatpush1.msra.mxu0 0.0
    %2279 = vmatprep.subr.mxu0 0.0
    %2280 = vmatpush1.msra.mxu0 0.0
    %2281 = vmatprep.subr.mxu0 0.0
    %2282 = vmatpush1.msra.mxu0 0.0
    %2283 = vmatprep.subr.mxu0 0.0
    %2284 = vmatpush1.msra.mxu0 0.0
    %2285 = vmatprep.subr.mxu0 0.0
    %2286 = vmatpush1.msra.mxu0 0.0
    %2287 = vmatprep.subr.mxu0 0.0
    %2288 = vmatpush1.msra.mxu0 0.0
    %2289 = vmatprep.subr.mxu0 0.0
    %2290 = vmatpush1.msra.mxu0 0.0
    %2291 = vmatprep.subr.mxu0 0.0
    %2292 = vmatpush1.msra.mxu0 0.0
    %2293 = vmatprep.subr.mxu0 0.0
    %2294 = vmatpush1.msra.mxu0 0.0
    %2295 = vmatprep.subr.mxu0 0.0
    %2296 = vmatpush1.msra.mxu0 0.0
    %2297 = vmatprep.subr.mxu0 0.0
    %2298 = vmatpush1.msra.mxu0 0.0
    %2299 = vmatprep.subr.mxu0 0.0
    %2300 = vmatpush1.msra.mxu0 0.0
    %2301 = vmatprep.subr.mxu0 0.0
    %2302 = vmatpush1.msra.mxu0 0.0
    %2303 = vmatprep.subr.mxu0 0.0
    %2304 = vmatpush1.msra.mxu0 0.0
    %2305 = vmatprep.subr.mxu0 0.0
    %2306 = vmatpush1.msra.mxu0 0.0
    %2307 = vmatprep.subr.mxu0 0.0
    %2308 = vmatpush1.msra.mxu0 0.0
    %2309 = vmatprep.subr.mxu0 0.0
    %2310 = vmatpush1.msra.mxu0 0.0
    %2311 = vmatprep.subr.mxu0 0.0
    %2312 = vmatpush1.msra.mxu0 0.0
    %2313 = vmatprep.subr.mxu0 0.0
    %2314 = vmatpush1.msra.mxu0 0.0
    %2315 = vmatprep.subr.mxu0 0.0
    %2316 = vmatpush1.msra.mxu0 0.0
    %2317 = vmatprep.subr.mxu0 0.0
    %2318 = vmatpush1.msra.mxu0 0.0
    %2319 = vmatprep.subr.mxu0 0.0
    %2320 = vmatpush1.msra.mxu0 0.0
    %2321 = vmatprep.subr.mxu0 0.0
    %2322 = vmatpush1.msra.mxu0 0.0
    %2323 = vmatprep.subr.mxu0 0.0
    %2324 = vmatpush1.msra.mxu0 0.0
    %2325 = vmatprep.subr.mxu0 0.0
    %2326 = vmatpush1.msra.mxu0 0.0
    %2327 = vmatprep.subr.mxu0 0.0
    %2328 = vmatpush1.msra.mxu0 0.0
    %2329 = vmatprep.subr.mxu0 0.0
    %2330 = vmatpush1.msra.mxu0 0.0
    %2331 = vmatprep.subr.mxu0 0.0
    %2332 = vmatpush1.msra.mxu0 0.0
    %2333 = vmatprep.subr.mxu0 0.0
    %2334 = vmatpush1.msra.mxu0 0.0
    %2335 = vmatprep.mubr.f32.mxu0 0.0
    %2336 = vmatmul.mubr.f32.gmra.mrb[0].mxu0 %v2199
    %v2337 = vpop.f32.mrb[0].mxu0
    %v2338 = vadd.f32 0.0, %v2337
    %v2339 = vpop.f32.mrb[0].mxu0
    %2340 = vdwg.mxu0
    %v2341 = vmul.f32 %v2268, 0.001953125
    %v2342 = vmul.f32 %v2338, 0.001953125
    %v2343 = vmul.f32 %v2341, %v2341
    %v2344 = vsub.f32 %v2342, %v2343
    %v2345 = vmax.f32 %v2344, 0.0
    %v2346 = vadd.f32 %v2345, 1e-05
    %v2347 = vrsqrt.pop %v2346
    %vm2348 = vcmask 64512
    %v2350 = vsel %vm2348, %v335, 0
    %v2353 = vsel %vm2348, %v336, 0
    %2355 = vmatprep.subr.mxu0 0.0
    %2356 = vmatpush1.msra.mxu0 %v2341
    %2357 = vmatprep.subr.mxu0 0.0
    %2358 = vmatpush1.msra.mxu0 0.0
    %2359 = vmatprep.subr.mxu0 0.0
    %2360 = vmatpush1.msra.mxu0 0.0
    %2361 = vmatprep.subr.mxu0 0.0
    %2362 = vmatpush1.msra.mxu0 0.0
    %2363 = vmatprep.subr.mxu0 0.0
    %2364 = vmatpush1.msra.mxu0 0.0
    %2365 = vmatprep.subr.mxu0 0.0
    %2366 = vmatpush1.msra.mxu0 0.0
    %2367 = vmatprep.subr.mxu0 0.0
    %2368 = vmatpush1.msra.mxu0 0.0
    %2369 = vmatprep.subr.mxu0 0.0
    %2370 = vmatpush1.msra.mxu0 0.0
    %2371 = vmatprep.subr.mxu0 0.0
    %2372 = vmatpush1.msra.mxu0 0.0
    %2373 = vmatprep.subr.mxu0 0.0
    %2374 = vmatpush1.msra.mxu0 0.0
    %2375 = vmatprep.subr.mxu0 0.0
    %2376 = vmatpush1.msra.mxu0 0.0
    %2377 = vmatprep.subr.mxu0 0.0
    %2378 = vmatpush1.msra.mxu0 0.0
    %2379 = vmatprep.subr.mxu0 0.0
    %2380 = vmatpush1.msra.mxu0 0.0
    %2381 = vmatprep.subr.mxu0 0.0
    %2382 = vmatpush1.msra.mxu0 0.0
    %2383 = vmatprep.subr.mxu0 0.0
    %2384 = vmatpush1.msra.mxu0 0.0
    %2385 = vmatprep.subr.mxu0 0.0
    %2386 = vmatpush1.msra.mxu0 0.0
    %2387 = vmatprep.subr.mxu0 0.0
    %2388 = vmatpush1.msra.mxu0 0.0
    %2389 = vmatprep.subr.mxu0 0.0
    %2390 = vmatpush1.msra.mxu0 0.0
    %2391 = vmatprep.subr.mxu0 0.0
    %2392 = vmatpush1.msra.mxu0 0.0
    %2393 = vmatprep.subr.mxu0 0.0
    %2394 = vmatpush1.msra.mxu0 0.0
    %2395 = vmatprep.subr.mxu0 0.0
    %2396 = vmatpush1.msra.mxu0 0.0
    %2397 = vmatprep.subr.mxu0 0.0
    %2398 = vmatpush1.msra.mxu0 0.0
    %2399 = vmatprep.subr.mxu0 0.0
    %2400 = vmatpush1.msra.mxu0 0.0
    %2401 = vmatprep.subr.mxu0 0.0
    %2402 = vmatpush1.msra.mxu0 0.0
    %2403 = vmatprep.subr.mxu0 0.0
    %2404 = vmatpush1.msra.mxu0 0.0
    %2405 = vmatprep.subr.mxu0 0.0
    %2406 = vmatpush1.msra.mxu0 0.0
    %2407 = vmatprep.subr.mxu0 0.0
    %2408 = vmatpush1.msra.mxu0 0.0
    %2409 = vmatprep.subr.mxu0 0.0
    %2410 = vmatpush1.msra.mxu0 0.0
    %2411 = vmatprep.subr.mxu0 0.0
    %2412 = vmatpush1.msra.mxu0 0.0
    %2413 = vmatprep.subr.mxu0 0.0
    %2414 = vmatpush1.msra.mxu0 0.0
    %2415 = vmatprep.subr.mxu0 0.0
    %2416 = vmatpush1.msra.mxu0 0.0
    %2417 = vmatprep.subr.mxu0 0.0
    %2418 = vmatpush1.msra.mxu0 0.0
    %2419 = vmatprep.mubr.f32.mxu0 0.0
    %2420 = vmatmul.mubr.f32.gmra.mrb[0].mxu0 %v2350
    %v2421 = vpop.f32.mrb[0].mxu0
    %v2422 = vadd.f32 0.0, %v2421
    %v2423 = vpop.f32.mrb[0].mxu0
    %2424 = vmatprep.mubr.f32.mxu0 0.0
    %2425 = vmatmul.mubr.f32.gmra.mrb[0].mxu0 %v2353
    %v2426 = vpop.f32.mrb[0].mxu0
    %v2427 = vadd.f32 0.0, %v2426
    %v2428 = vpop.f32.mrb[0].mxu0
    %2429 = vdwg.mxu0
    %2430 = vmatprep.subr.mxu0 0.0
    %2431 = vmatpush1.msra.mxu0 %v2347
    %2432 = vmatprep.subr.mxu0 0.0
    %2433 = vmatpush1.msra.mxu0 0.0
    %2434 = vmatprep.subr.mxu0 0.0
    %2435 = vmatpush1.msra.mxu0 0.0
    %2436 = vmatprep.subr.mxu0 0.0
    %2437 = vmatpush1.msra.mxu0 0.0
    %2438 = vmatprep.subr.mxu0 0.0
    %2439 = vmatpush1.msra.mxu0 0.0
    %2440 = vmatprep.subr.mxu0 0.0
    %2441 = vmatpush1.msra.mxu0 0.0
    %2442 = vmatprep.subr.mxu0 0.0
    %2443 = vmatpush1.msra.mxu0 0.0
    %2444 = vmatprep.subr.mxu0 0.0
    %2445 = vmatpush1.msra.mxu0 0.0
    %2446 = vmatprep.subr.mxu0 0.0
    %2447 = vmatpush1.msra.mxu0 0.0
    %2448 = vmatprep.subr.mxu0 0.0
    %2449 = vmatpush1.msra.mxu0 0.0
    %2450 = vmatprep.subr.mxu0 0.0
    %2451 = vmatpush1.msra.mxu0 0.0
    %2452 = vmatprep.subr.mxu0 0.0
    %2453 = vmatpush1.msra.mxu0 0.0
    %2454 = vmatprep.subr.mxu0 0.0
    %2455 = vmatpush1.msra.mxu0 0.0
    %2456 = vmatprep.subr.mxu0 0.0
    %2457 = vmatpush1.msra.mxu0 0.0
    %2458 = vmatprep.subr.mxu0 0.0
    %2459 = vmatpush1.msra.mxu0 0.0
    %2460 = vmatprep.subr.mxu0 0.0
    %2461 = vmatpush1.msra.mxu0 0.0
    %2462 = vmatprep.subr.mxu0 0.0
    %2463 = vmatpush1.msra.mxu0 0.0
    %2464 = vmatprep.subr.mxu0 0.0
    %2465 = vmatpush1.msra.mxu0 0.0
    %2466 = vmatprep.subr.mxu0 0.0
    %2467 = vmatpush1.msra.mxu0 0.0
    %2468 = vmatprep.subr.mxu0 0.0
    %2469 = vmatpush1.msra.mxu0 0.0
    %2470 = vmatprep.subr.mxu0 0.0
    %2471 = vmatpush1.msra.mxu0 0.0
    %2472 = vmatprep.subr.mxu0 0.0
    %2473 = vmatpush1.msra.mxu0 0.0
    %2474 = vmatprep.subr.mxu0 0.0
    %2475 = vmatpush1.msra.mxu0 0.0
    %2476 = vmatprep.subr.mxu0 0.0
    %2477 = vmatpush1.msra.mxu0 0.0
    %2478 = vmatprep.subr.mxu0 0.0
    %2479 = vmatpush1.msra.mxu0 0.0
    %2480 = vmatprep.subr.mxu0 0.0
    %2481 = vmatpush1.msra.mxu0 0.0
    %2482 = vmatprep.subr.mxu0 0.0
    %2483 = vmatpush1.msra.mxu0 0.0
    %2484 = vmatprep.subr.mxu0 0.0
    %2485 = vmatpush1.msra.mxu0 0.0
    %2486 = vmatprep.subr.mxu0 0.0
    %2487 = vmatpush1.msra.mxu0 0.0
    %2488 = vmatprep.subr.mxu0 0.0
    %2489 = vmatpush1.msra.mxu0 0.0
    %2490 = vmatprep.subr.mxu0 0.0
    %2491 = vmatpush1.msra.mxu0 0.0
    %2492 = vmatprep.subr.mxu0 0.0
    %2493 = vmatpush1.msra.mxu0 0.0
    %2494 = vmatprep.mubr.f32.mxu0 0.0
    %2495 = vmatmul.mubr.f32.gmra.mrb[0].mxu0 %v2350
    %v2496 = vpop.f32.mrb[0].mxu0
    %v2497 = vadd.f32 0.0, %v2496
    %v2498 = vpop.f32.mrb[0].mxu0
    %2499 = vmatprep.mubr.f32.mxu0 0.0
    %2500 = vmatmul.mubr.f32.gmra.mrb[0].mxu0 %v2353
    %v2501 = vpop.f32.mrb[0].mxu0
    %v2502 = vadd.f32 0.0, %v2501
    %v2503 = vpop.f32.mrb[0].mxu0
    %2504 = vdwg.mxu0
    %2506 = vset.pattern.permute.xlu0 0
    %2507 = vperm.xlu0 %2506, %v337
    %v2508 = vpop.permute.xlu0 %2507
    %2511 = vset.pattern.permute.xlu0 0
    %2512 = vperm.xlu0 %2511, %v338
    %v2513 = vpop.permute.xlu0 %2512
    %v2515 = vmul.f32 %v2497, %v2508
    %v2516 = vmul.f32 %v2502, %v2513
    %v2517 = vmul.f32 %v2422, %v2515
    %v2518 = vmul.f32 %v2427, %v2516
    %2519 = vset.pattern.permute.xlu0 1
    %2520 = vperm.xlu0 %2519, %v337
    %v2521 = vpop.permute.xlu0 %2520
    %2523 = vset.pattern.permute.xlu0 1
    %2524 = vperm.xlu0 %2523, %v338
    %v2525 = vpop.permute.xlu0 %2524
    %v2527 = vsub.f32 %v2521, %v2517
    %v2528 = vsub.f32 %v2525, %v2518
    %v2530 = vsel %vm2348, %v2515, 0
    %v2533 = vsel %vm2348, %v2516, 0
    %2535 = vmatprep.subr.mxu0 %v319
    %2536 = vmatpush1.msra.mxu0 %v318
    %2537 = vmatprep.subr.mxu0 0.0
    %2538 = vmatpush1.msra.mxu0 0.0
    %2539 = vmatprep.subr.mxu0 0.0
    %2540 = vmatpush1.msra.mxu0 0.0
    %2541 = vmatprep.subr.mxu0 0.0
    %2542 = vmatpush1.msra.mxu0 0.0
    %2543 = vmatprep.subr.mxu0 0.0
    %2544 = vmatpush1.msra.mxu0 0.0
    %2545 = vmatprep.subr.mxu0 0.0
    %2546 = vmatpush1.msra.mxu0 0.0
    %2547 = vmatprep.subr.mxu0 0.0
    %2548 = vmatpush1.msra.mxu0 0.0
    %2549 = vmatprep.subr.mxu0 0.0
    %2550 = vmatpush1.msra.mxu0 0.0
    %2551 = vmatprep.subr.mxu0 0.0
    %2552 = vmatpush1.msra.mxu0 0.0
    %2553 = vmatprep.subr.mxu0 0.0
    %2554 = vmatpush1.msra.mxu0 0.0
    %2555 = vmatprep.subr.mxu0 0.0
    %2556 = vmatpush1.msra.mxu0 0.0
    %2557 = vmatprep.subr.mxu0 0.0
    %2558 = vmatpush1.msra.mxu0 0.0
    %2559 = vmatprep.subr.mxu0 0.0
    %2560 = vmatpush1.msra.mxu0 0.0
    %2561 = vmatprep.subr.mxu0 0.0
    %2562 = vmatpush1.msra.mxu0 0.0
    %2563 = vmatprep.subr.mxu0 0.0
    %2564 = vmatpush1.msra.mxu0 0.0
    %2565 = vmatprep.subr.mxu0 0.0
    %2566 = vmatpush1.msra.mxu0 0.0
    %2567 = vmatprep.subr.mxu0 0.0
    %2568 = vmatpush1.msra.mxu0 0.0
    %2569 = vmatprep.subr.mxu0 0.0
    %2570 = vmatpush1.msra.mxu0 0.0
    %2571 = vmatprep.subr.mxu0 0.0
    %2572 = vmatpush1.msra.mxu0 0.0
    %2573 = vmatprep.subr.mxu0 0.0
    %2574 = vmatpush1.msra.mxu0 0.0
    %2575 = vmatprep.subr.mxu0 0.0
    %2576 = vmatpush1.msra.mxu0 0.0
    %2577 = vmatprep.subr.mxu0 0.0
    %2578 = vmatpush1.msra.mxu0 0.0
    %2579 = vmatprep.subr.mxu0 0.0
    %2580 = vmatpush1.msra.mxu0 0.0
    %2581 = vmatprep.subr.mxu0 0.0
    %2582 = vmatpush1.msra.mxu0 0.0
    %2583 = vmatprep.subr.mxu0 0.0
    %2584 = vmatpush1.msra.mxu0 0.0
    %2585 = vmatprep.subr.mxu0 0.0
    %2586 = vmatpush1.msra.mxu0 0.0
    %2587 = vmatprep.subr.mxu0 0.0
    %2588 = vmatpush1.msra.mxu0 0.0
    %2589 = vmatprep.subr.mxu0 0.0
    %2590 = vmatpush1.msra.mxu0 0.0
    %2591 = vmatprep.subr.mxu0 0.0
    %2592 = vmatpush1.msra.mxu0 0.0
    %2593 = vmatprep.subr.mxu0 0.0
    %2594 = vmatpush1.msra.mxu0 0.0
    %2595 = vmatprep.subr.mxu0 0.0
    %2596 = vmatpush1.msra.mxu0 0.0
    %2597 = vmatprep.subr.mxu0 0.0
    %2598 = vmatpush1.msra.mxu0 0.0
    %2599 = vmatprep.mubr.f32.mxu0 0.0
    %2600 = vmatmul.mubr.f32.gmra.mrb[0].mxu0 %v2530
    %v2601 = vpop.f32.mrb[0].mxu0
    %v2602 = vadd.f32 0.0, %v2601
    %v2603 = vpop.f32.mrb[0].mxu0
    %v2604 = vadd.f32 0.0, %v2603
    %2605 = vmatprep.mubr.f32.mxu0 0.0
    %2606 = vmatmul.mubr.f32.gmra.mrb[0].mxu0 %v2533
    %v2607 = vpop.f32.mrb[0].mxu0
    %v2608 = vadd.f32 0.0, %v2607
    %v2609 = vpop.f32.mrb[0].mxu0
    %v2610 = vadd.f32 0.0, %v2609
    %2611 = vdwg.mxu0
    %2612 = vmatprep.subr.mxu0 %v321
    %2613 = vmatpush1.msra.mxu0 %v320
    %2614 = vmatprep.subr.mxu0 0.0
    %2615 = vmatpush1.msra.mxu0 0.0
    %2616 = vmatprep.subr.mxu0 0.0
    %2617 = vmatpush1.msra.mxu0 0.0
    %2618 = vmatprep.subr.mxu0 0.0
    %2619 = vmatpush1.msra.mxu0 0.0
    %2620 = vmatprep.subr.mxu0 0.0
    %2621 = vmatpush1.msra.mxu0 0.0
    %2622 = vmatprep.subr.mxu0 0.0
    %2623 = vmatpush1.msra.mxu0 0.0
    %2624 = vmatprep.subr.mxu0 0.0
    %2625 = vmatpush1.msra.mxu0 0.0
    %2626 = vmatprep.subr.mxu0 0.0
    %2627 = vmatpush1.msra.mxu0 0.0
    %2628 = vmatprep.subr.mxu0 0.0
    %2629 = vmatpush1.msra.mxu0 0.0
    %2630 = vmatprep.subr.mxu0 0.0
    %2631 = vmatpush1.msra.mxu0 0.0
    %2632 = vmatprep.subr.mxu0 0.0
    %2633 = vmatpush1.msra.mxu0 0.0
    %2634 = vmatprep.subr.mxu0 0.0
    %2635 = vmatpush1.msra.mxu0 0.0
    %2636 = vmatprep.subr.mxu0 0.0
    %2637 = vmatpush1.msra.mxu0 0.0
    %2638 = vmatprep.subr.mxu0 0.0
    %2639 = vmatpush1.msra.mxu0 0.0
    %2640 = vmatprep.subr.mxu0 0.0
    %2641 = vmatpush1.msra.mxu0 0.0
    %2642 = vmatprep.subr.mxu0 0.0
    %2643 = vmatpush1.msra.mxu0 0.0
    %2644 = vmatprep.subr.mxu0 0.0
    %2645 = vmatpush1.msra.mxu0 0.0
    %2646 = vmatprep.subr.mxu0 0.0
    %2647 = vmatpush1.msra.mxu0 0.0
    %2648 = vmatprep.subr.mxu0 0.0
    %2649 = vmatpush1.msra.mxu0 0.0
    %2650 = vmatprep.subr.mxu0 0.0
    %2651 = vmatpush1.msra.mxu0 0.0
    %2652 = vmatprep.subr.mxu0 0.0
    %2653 = vmatpush1.msra.mxu0 0.0
    %2654 = vmatprep.subr.mxu0 0.0
    %2655 = vmatpush1.msra.mxu0 0.0
    %2656 = vmatprep.subr.mxu0 0.0
    %2657 = vmatpush1.msra.mxu0 0.0
    %2658 = vmatprep.subr.mxu0 0.0
    %2659 = vmatpush1.msra.mxu0 0.0
    %2660 = vmatprep.subr.mxu0 0.0
    %2661 = vmatpush1.msra.mxu0 0.0
    %2662 = vmatprep.subr.mxu0 0.0
    %2663 = vmatpush1.msra.mxu0 0.0
    %2664 = vmatprep.subr.mxu0 0.0
    %2665 = vmatpush1.msra.mxu0 0.0
    %2666 = vmatprep.subr.mxu0 0.0
    %2667 = vmatpush1.msra.mxu0 0.0
    %2668 = vmatprep.subr.mxu0 0.0
    %2669 = vmatpush1.msra.mxu0 0.0
    %2670 = vmatprep.subr.mxu0 0.0
    %2671 = vmatpush1.msra.mxu0 0.0
    %2672 = vmatprep.subr.mxu0 0.0
    %2673 = vmatpush1.msra.mxu0 0.0
    %2674 = vmatprep.subr.mxu0 0.0
    %2675 = vmatpush1.msra.mxu0 0.0
    %2676 = vmatprep.mubr.f32.mxu0 0.0
    %2677 = vmatmul.mubr.f32.gmra.mrb[0].mxu0 %v2530
    %v2678 = vpop.f32.mrb[0].mxu0
    %v2679 = vadd.f32 0.0, %v2678
    %v2680 = vpop.f32.mrb[0].mxu0
    %v2681 = vadd.f32 0.0, %v2680
    %2682 = vmatprep.mubr.f32.mxu0 0.0
    %2683 = vmatmul.mubr.f32.gmra.mrb[0].mxu0 %v2533
    %v2684 = vpop.f32.mrb[0].mxu0
    %v2685 = vadd.f32 0.0, %v2684
    %v2686 = vpop.f32.mrb[0].mxu0
    %v2687 = vadd.f32 0.0, %v2686
    %2688 = vdwg.mxu0
    %2689 = vmatprep.subr.mxu0 %v323
    %2690 = vmatpush1.msra.mxu0 %v322
    %2691 = vmatprep.subr.mxu0 0.0
    %2692 = vmatpush1.msra.mxu0 0.0
    %2693 = vmatprep.subr.mxu0 0.0
    %2694 = vmatpush1.msra.mxu0 0.0
    %2695 = vmatprep.subr.mxu0 0.0
    %2696 = vmatpush1.msra.mxu0 0.0
    %2697 = vmatprep.subr.mxu0 0.0
    %2698 = vmatpush1.msra.mxu0 0.0
    %2699 = vmatprep.subr.mxu0 0.0
    %2700 = vmatpush1.msra.mxu0 0.0
    %2701 = vmatprep.subr.mxu0 0.0
    %2702 = vmatpush1.msra.mxu0 0.0
    %2703 = vmatprep.subr.mxu0 0.0
    %2704 = vmatpush1.msra.mxu0 0.0
    %2705 = vmatprep.subr.mxu0 0.0
    %2706 = vmatpush1.msra.mxu0 0.0
    %2707 = vmatprep.subr.mxu0 0.0
    %2708 = vmatpush1.msra.mxu0 0.0
    %2709 = vmatprep.subr.mxu0 0.0
    %2710 = vmatpush1.msra.mxu0 0.0
    %2711 = vmatprep.subr.mxu0 0.0
    %2712 = vmatpush1.msra.mxu0 0.0
    %2713 = vmatprep.subr.mxu0 0.0
    %2714 = vmatpush1.msra.mxu0 0.0
    %2715 = vmatprep.subr.mxu0 0.0
    %2716 = vmatpush1.msra.mxu0 0.0
    %2717 = vmatprep.subr.mxu0 0.0
    %2718 = vmatpush1.msra.mxu0 0.0
    %2719 = vmatprep.subr.mxu0 0.0
    %2720 = vmatpush1.msra.mxu0 0.0
    %2721 = vmatprep.subr.mxu0 0.0
    %2722 = vmatpush1.msra.mxu0 0.0
    %2723 = vmatprep.subr.mxu0 0.0
    %2724 = vmatpush1.msra.mxu0 0.0
    %2725 = vmatprep.subr.mxu0 0.0
    %2726 = vmatpush1.msra.mxu0 0.0
    %2727 = vmatprep.subr.mxu0 0.0
    %2728 = vmatpush1.msra.mxu0 0.0
    %2729 = vmatprep.subr.mxu0 0.0
    %2730 = vmatpush1.msra.mxu0 0.0
    %2731 = vmatprep.subr.mxu0 0.0
    %2732 = vmatpush1.msra.mxu0 0.0
    %2733 = vmatprep.subr.mxu0 0.0
    %2734 = vmatpush1.msra.mxu0 0.0
    %2735 = vmatprep.subr.mxu0 0.0
    %2736 = vmatpush1.msra.mxu0 0.0
    %2737 = vmatprep.subr.mxu0 0.0
    %2738 = vmatpush1.msra.mxu0 0.0
    %2739 = vmatprep.subr.mxu0 0.0
    %2740 = vmatpush1.msra.mxu0 0.0
    %2741 = vmatprep.subr.mxu0 0.0
    %2742 = vmatpush1.msra.mxu0 0.0
    %2743 = vmatprep.subr.mxu0 0.0
    %2744 = vmatpush1.msra.mxu0 0.0
    %2745 = vmatprep.subr.mxu0 0.0
    %2746 = vmatpush1.msra.mxu0 0.0
    %2747 = vmatprep.subr.mxu0 0.0
    %2748 = vmatpush1.msra.mxu0 0.0
    %2749 = vmatprep.subr.mxu0 0.0
    %2750 = vmatpush1.msra.mxu0 0.0
    %2751 = vmatprep.subr.mxu0 0.0
    %2752 = vmatpush1.msra.mxu0 0.0
    %2753 = vmatprep.mubr.f32.mxu0 0.0
    %2754 = vmatmul.mubr.f32.gmra.mrb[0].mxu0 %v2530
    %v2755 = vpop.f32.mrb[0].mxu0
    %v2756 = vadd.f32 0.0, %v2755
    %v2757 = vpop.f32.mrb[0].mxu0
    %v2758 = vadd.f32 0.0, %v2757
    %2759 = vmatprep.mubr.f32.mxu0 0.0
    %2760 = vmatmul.mubr.f32.gmra.mrb[0].mxu0 %v2533
    %v2761 = vpop.f32.mrb[0].mxu0
    %v2762 = vadd.f32 0.0, %v2761
    %v2763 = vpop.f32.mrb[0].mxu0
    %v2764 = vadd.f32 0.0, %v2763
    %2765 = vdwg.mxu0
    %2766 = vmatprep.subr.mxu0 %v325
    %2767 = vmatpush1.msra.mxu0 %v324
    %2768 = vmatprep.subr.mxu0 0.0
    %2769 = vmatpush1.msra.mxu0 0.0
    %2770 = vmatprep.subr.mxu0 0.0
    %2771 = vmatpush1.msra.mxu0 0.0
    %2772 = vmatprep.subr.mxu0 0.0
    %2773 = vmatpush1.msra.mxu0 0.0
    %2774 = vmatprep.subr.mxu0 0.0
    %2775 = vmatpush1.msra.mxu0 0.0
    %2776 = vmatprep.subr.mxu0 0.0
    %2777 = vmatpush1.msra.mxu0 0.0
    %2778 = vmatprep.subr.mxu0 0.0
    %2779 = vmatpush1.msra.mxu0 0.0
    %2780 = vmatprep.subr.mxu0 0.0
    %2781 = vmatpush1.msra.mxu0 0.0
    %2782 = vmatprep.subr.mxu0 0.0
    %2783 = vmatpush1.msra.mxu0 0.0
    %2784 = vmatprep.subr.mxu0 0.0
    %2785 = vmatpush1.msra.mxu0 0.0
    %2786 = vmatprep.subr.mxu0 0.0
    %2787 = vmatpush1.msra.mxu0 0.0
    %2788 = vmatprep.subr.mxu0 0.0
    %2789 = vmatpush1.msra.mxu0 0.0
    %2790 = vmatprep.subr.mxu0 0.0
    %2791 = vmatpush1.msra.mxu0 0.0
    %2792 = vmatprep.subr.mxu0 0.0
    %2793 = vmatpush1.msra.mxu0 0.0
    %2794 = vmatprep.subr.mxu0 0.0
    %2795 = vmatpush1.msra.mxu0 0.0
    %2796 = vmatprep.subr.mxu0 0.0
    %2797 = vmatpush1.msra.mxu0 0.0
    %2798 = vmatprep.subr.mxu0 0.0
    %2799 = vmatpush1.msra.mxu0 0.0
    %2800 = vmatprep.subr.mxu0 0.0
    %2801 = vmatpush1.msra.mxu0 0.0
    %2802 = vmatprep.subr.mxu0 0.0
    %2803 = vmatpush1.msra.mxu0 0.0
    %2804 = vmatprep.subr.mxu0 0.0
    %2805 = vmatpush1.msra.mxu0 0.0
    %2806 = vmatprep.subr.mxu0 0.0
    %2807 = vmatpush1.msra.mxu0 0.0
    %2808 = vmatprep.subr.mxu0 0.0
    %2809 = vmatpush1.msra.mxu0 0.0
    %2810 = vmatprep.subr.mxu0 0.0
    %2811 = vmatpush1.msra.mxu0 0.0
    %2812 = vmatprep.subr.mxu0 0.0
    %2813 = vmatpush1.msra.mxu0 0.0
    %2814 = vmatprep.subr.mxu0 0.0
    %2815 = vmatpush1.msra.mxu0 0.0
    %2816 = vmatprep.subr.mxu0 0.0
    %2817 = vmatpush1.msra.mxu0 0.0
    %2818 = vmatprep.subr.mxu0 0.0
    %2819 = vmatpush1.msra.mxu0 0.0
    %2820 = vmatprep.subr.mxu0 0.0
    %2821 = vmatpush1.msra.mxu0 0.0
    %2822 = vmatprep.subr.mxu0 0.0
    %2823 = vmatpush1.msra.mxu0 0.0
    %2824 = vmatprep.subr.mxu0 0.0
    %2825 = vmatpush1.msra.mxu0 0.0
    %2826 = vmatprep.subr.mxu0 0.0
    %2827 = vmatpush1.msra.mxu0 0.0
    %2828 = vmatprep.subr.mxu0 0.0
    %2829 = vmatpush1.msra.mxu0 0.0
    %2830 = vmatprep.mubr.f32.mxu0 0.0
    %2831 = vmatmul.mubr.f32.gmra.mrb[0].mxu0 %v2530
    %v2832 = vpop.f32.mrb[0].mxu0
    %v2833 = vadd.f32 0.0, %v2832
    %v2834 = vpop.f32.mrb[0].mxu0
    %v2835 = vadd.f32 0.0, %v2834
    %2836 = vmatprep.mubr.f32.mxu0 0.0
    %2837 = vmatmul.mubr.f32.gmra.mrb[0].mxu0 %v2533
    %v2838 = vpop.f32.mrb[0].mxu0
    %v2839 = vadd.f32 0.0, %v2838
    %v2840 = vpop.f32.mrb[0].mxu0
    %v2841 = vadd.f32 0.0, %v2840
    %2842 = vdwg.mxu0
    %2843 = vmatprep.subr.mxu0 %v327
    %2844 = vmatpush1.msra.mxu0 %v326
    %2845 = vmatprep.subr.mxu0 0.0
    %2846 = vmatpush1.msra.mxu0 0.0
    %2847 = vmatprep.subr.mxu0 0.0
    %2848 = vmatpush1.msra.mxu0 0.0
    %2849 = vmatprep.subr.mxu0 0.0
    %2850 = vmatpush1.msra.mxu0 0.0
    %2851 = vmatprep.subr.mxu0 0.0
    %2852 = vmatpush1.msra.mxu0 0.0
    %2853 = vmatprep.subr.mxu0 0.0
    %2854 = vmatpush1.msra.mxu0 0.0
    %2855 = vmatprep.subr.mxu0 0.0
    %2856 = vmatpush1.msra.mxu0 0.0
    %2857 = vmatprep.subr.mxu0 0.0
    %2858 = vmatpush1.msra.mxu0 0.0
    %2859 = vmatprep.subr.mxu0 0.0
    %2860 = vmatpush1.msra.mxu0 0.0
    %2861 = vmatprep.subr.mxu0 0.0
    %2862 = vmatpush1.msra.mxu0 0.0
    %2863 = vmatprep.subr.mxu0 0.0
    %2864 = vmatpush1.msra.mxu0 0.0
    %2865 = vmatprep.subr.mxu0 0.0
    %2866 = vmatpush1.msra.mxu0 0.0
    %2867 = vmatprep.subr.mxu0 0.0
    %2868 = vmatpush1.msra.mxu0 0.0
    %2869 = vmatprep.subr.mxu0 0.0
    %2870 = vmatpush1.msra.mxu0 0.0
    %2871 = vmatprep.subr.mxu0 0.0
    %2872 = vmatpush1.msra.mxu0 0.0
    %2873 = vmatprep.subr.mxu0 0.0
    %2874 = vmatpush1.msra.mxu0 0.0
    %2875 = vmatprep.subr.mxu0 0.0
    %2876 = vmatpush1.msra.mxu0 0.0
    %2877 = vmatprep.subr.mxu0 0.0
    %2878 = vmatpush1.msra.mxu0 0.0
    %2879 = vmatprep.subr.mxu0 0.0
    %2880 = vmatpush1.msra.mxu0 0.0
    %2881 = vmatprep.subr.mxu0 0.0
    %2882 = vmatpush1.msra.mxu0 0.0
    %2883 = vmatprep.subr.mxu0 0.0
    %2884 = vmatpush1.msra.mxu0 0.0
    %2885 = vmatprep.subr.mxu0 0.0
    %2886 = vmatpush1.msra.mxu0 0.0
    %2887 = vmatprep.subr.mxu0 0.0
    %2888 = vmatpush1.msra.mxu0 0.0
    %2889 = vmatprep.subr.mxu0 0.0
    %2890 = vmatpush1.msra.mxu0 0.0
    %2891 = vmatprep.subr.mxu0 0.0
    %2892 = vmatpush1.msra.mxu0 0.0
    %2893 = vmatprep.subr.mxu0 0.0
    %2894 = vmatpush1.msra.mxu0 0.0
    %2895 = vmatprep.subr.mxu0 0.0
    %2896 = vmatpush1.msra.mxu0 0.0
    %2897 = vmatprep.subr.mxu0 0.0
    %2898 = vmatpush1.msra.mxu0 0.0
    %2899 = vmatprep.subr.mxu0 0.0
    %2900 = vmatpush1.msra.mxu0 0.0
    %2901 = vmatprep.subr.mxu0 0.0
    %2902 = vmatpush1.msra.mxu0 0.0
    %2903 = vmatprep.subr.mxu0 0.0
    %2904 = vmatpush1.msra.mxu0 0.0
    %2905 = vmatprep.subr.mxu0 0.0
    %2906 = vmatpush1.msra.mxu0 0.0
    %2907 = vmatprep.mubr.f32.mxu0 0.0
    %2908 = vmatmul.mubr.f32.gmra.mrb[0].mxu0 %v2530
    %v2909 = vpop.f32.mrb[0].mxu0
    %v2910 = vadd.f32 0.0, %v2909
    %v2911 = vpop.f32.mrb[0].mxu0
    %v2912 = vadd.f32 0.0, %v2911
    %2913 = vmatprep.mubr.f32.mxu0 0.0
    %2914 = vmatmul.mubr.f32.gmra.mrb[0].mxu0 %v2533
    %v2915 = vpop.f32.mrb[0].mxu0
    %v2916 = vadd.f32 0.0, %v2915
    %v2917 = vpop.f32.mrb[0].mxu0
    %v2918 = vadd.f32 0.0, %v2917
    %2919 = vdwg.mxu0
    %2920 = vmatprep.subr.mxu0 %v329
    %2921 = vmatpush1.msra.mxu0 %v328
    %2922 = vmatprep.subr.mxu0 0.0
    %2923 = vmatpush1.msra.mxu0 0.0
    %2924 = vmatprep.subr.mxu0 0.0
    %2925 = vmatpush1.msra.mxu0 0.0
    %2926 = vmatprep.subr.mxu0 0.0
    %2927 = vmatpush1.msra.mxu0 0.0
    %2928 = vmatprep.subr.mxu0 0.0
    %2929 = vmatpush1.msra.mxu0 0.0
    %2930 = vmatprep.subr.mxu0 0.0
    %2931 = vmatpush1.msra.mxu0 0.0
    %2932 = vmatprep.subr.mxu0 0.0
    %2933 = vmatpush1.msra.mxu0 0.0
    %2934 = vmatprep.subr.mxu0 0.0
    %2935 = vmatpush1.msra.mxu0 0.0
    %2936 = vmatprep.subr.mxu0 0.0
    %2937 = vmatpush1.msra.mxu0 0.0
    %2938 = vmatprep.subr.mxu0 0.0
    %2939 = vmatpush1.msra.mxu0 0.0
    %2940 = vmatprep.subr.mxu0 0.0
    %2941 = vmatpush1.msra.mxu0 0.0
    %2942 = vmatprep.subr.mxu0 0.0
    %2943 = vmatpush1.msra.mxu0 0.0
    %2944 = vmatprep.subr.mxu0 0.0
    %2945 = vmatpush1.msra.mxu0 0.0
    %2946 = vmatprep.subr.mxu0 0.0
    %2947 = vmatpush1.msra.mxu0 0.0
    %2948 = vmatprep.subr.mxu0 0.0
    %2949 = vmatpush1.msra.mxu0 0.0
    %2950 = vmatprep.subr.mxu0 0.0
    %2951 = vmatpush1.msra.mxu0 0.0
    %2952 = vmatprep.subr.mxu0 0.0
    %2953 = vmatpush1.msra.mxu0 0.0
    %2954 = vmatprep.subr.mxu0 0.0
    %2955 = vmatpush1.msra.mxu0 0.0
    %2956 = vmatprep.subr.mxu0 0.0
    %2957 = vmatpush1.msra.mxu0 0.0
    %2958 = vmatprep.subr.mxu0 0.0
    %2959 = vmatpush1.msra.mxu0 0.0
    %2960 = vmatprep.subr.mxu0 0.0
    %2961 = vmatpush1.msra.mxu0 0.0
    %2962 = vmatprep.subr.mxu0 0.0
    %2963 = vmatpush1.msra.mxu0 0.0
    %2964 = vmatprep.subr.mxu0 0.0
    %2965 = vmatpush1.msra.mxu0 0.0
    %2966 = vmatprep.subr.mxu0 0.0
    %2967 = vmatpush1.msra.mxu0 0.0
    %2968 = vmatprep.subr.mxu0 0.0
    %2969 = vmatpush1.msra.mxu0 0.0
    %2970 = vmatprep.subr.mxu0 0.0
    %2971 = vmatpush1.msra.mxu0 0.0
    %2972 = vmatprep.subr.mxu0 0.0
    %2973 = vmatpush1.msra.mxu0 0.0
    %2974 = vmatprep.subr.mxu0 0.0
    %2975 = vmatpush1.msra.mxu0 0.0
    %2976 = vmatprep.subr.mxu0 0.0
    %2977 = vmatpush1.msra.mxu0 0.0
    %2978 = vmatprep.subr.mxu0 0.0
    %2979 = vmatpush1.msra.mxu0 0.0
    %2980 = vmatprep.subr.mxu0 0.0
    %2981 = vmatpush1.msra.mxu0 0.0
    %2982 = vmatprep.subr.mxu0 0.0
    %2983 = vmatpush1.msra.mxu0 0.0
    %2984 = vmatprep.mubr.f32.mxu0 0.0
    %2985 = vmatmul.mubr.f32.gmra.mrb[0].mxu0 %v2530
    %v2986 = vpop.f32.mrb[0].mxu0
    %v2987 = vadd.f32 0.0, %v2986
    %v2988 = vpop.f32.mrb[0].mxu0
    %v2989 = vadd.f32 0.0, %v2988
    %2990 = vmatprep.mubr.f32.mxu0 0.0
    %2991 = vmatmul.mubr.f32.gmra.mrb[0].mxu0 %v2533
    %v2992 = vpop.f32.mrb[0].mxu0
    %v2993 = vadd.f32 0.0, %v2992
    %v2994 = vpop.f32.mrb[0].mxu0
    %v2995 = vadd.f32 0.0, %v2994
    %2996 = vdwg.mxu0
    %2997 = vmatprep.subr.mxu0 %v331
    %2998 = vmatpush1.msra.mxu0 %v330
    %2999 = vmatprep.subr.mxu0 0.0
    %3000 = vmatpush1.msra.mxu0 0.0
    %3001 = vmatprep.subr.mxu0 0.0
    %3002 = vmatpush1.msra.mxu0 0.0
    %3003 = vmatprep.subr.mxu0 0.0
    %3004 = vmatpush1.msra.mxu0 0.0
    %3005 = vmatprep.subr.mxu0 0.0
    %3006 = vmatpush1.msra.mxu0 0.0
    %3007 = vmatprep.subr.mxu0 0.0
    %3008 = vmatpush1.msra.mxu0 0.0
    %3009 = vmatprep.subr.mxu0 0.0
    %3010 = vmatpush1.msra.mxu0 0.0
    %3011 = vmatprep.subr.mxu0 0.0
    %3012 = vmatpush1.msra.mxu0 0.0
    %3013 = vmatprep.subr.mxu0 0.0
    %3014 = vmatpush1.msra.mxu0 0.0
    %3015 = vmatprep.subr.mxu0 0.0
    %3016 = vmatpush1.msra.mxu0 0.0
    %3017 = vmatprep.subr.mxu0 0.0
    %3018 = vmatpush1.msra.mxu0 0.0
    %3019 = vmatprep.subr.mxu0 0.0
    %3020 = vmatpush1.msra.mxu0 0.0
    %3021 = vmatprep.subr.mxu0 0.0
    %3022 = vmatpush1.msra.mxu0 0.0
    %3023 = vmatprep.subr.mxu0 0.0
    %3024 = vmatpush1.msra.mxu0 0.0
    %3025 = vmatprep.subr.mxu0 0.0
    %3026 = vmatpush1.msra.mxu0 0.0
    %3027 = vmatprep.subr.mxu0 0.0
    %3028 = vmatpush1.msra.mxu0 0.0
    %3029 = vmatprep.subr.mxu0 0.0
    %3030 = vmatpush1.msra.mxu0 0.0
    %3031 = vmatprep.subr.mxu0 0.0
    %3032 = vmatpush1.msra.mxu0 0.0
    %3033 = vmatprep.subr.mxu0 0.0
    %3034 = vmatpush1.msra.mxu0 0.0
    %3035 = vmatprep.subr.mxu0 0.0
    %3036 = vmatpush1.msra.mxu0 0.0
    %3037 = vmatprep.subr.mxu0 0.0
    %3038 = vmatpush1.msra.mxu0 0.0
    %3039 = vmatprep.subr.mxu0 0.0
    %3040 = vmatpush1.msra.mxu0 0.0
    %3041 = vmatprep.subr.mxu0 0.0
    %3042 = vmatpush1.msra.mxu0 0.0
    %3043 = vmatprep.subr.mxu0 0.0
    %3044 = vmatpush1.msra.mxu0 0.0
    %3045 = vmatprep.subr.mxu0 0.0
    %3046 = vmatpush1.msra.mxu0 0.0
    %3047 = vmatprep.subr.mxu0 0.0
    %3048 = vmatpush1.msra.mxu0 0.0
    %3049 = vmatprep.subr.mxu0 0.0
    %3050 = vmatpush1.msra.mxu0 0.0
    %3051 = vmatprep.subr.mxu0 0.0
    %3052 = vmatpush1.msra.mxu0 0.0
    %3053 = vmatprep.subr.mxu0 0.0
    %3054 = vmatpush1.msra.mxu0 0.0
    %3055 = vmatprep.subr.mxu0 0.0
    %3056 = vmatpush1.msra.mxu0 0.0
    %3057 = vmatprep.subr.mxu0 0.0
    %3058 = vmatpush1.msra.mxu0 0.0
    %3059 = vmatprep.subr.mxu0 0.0
    %3060 = vmatpush1.msra.mxu0 0.0
    %3061 = vmatprep.mubr.f32.mxu0 0.0
    %3062 = vmatmul.mubr.f32.gmra.mrb[0].mxu0 %v2530
    %v3063 = vpop.f32.mrb[0].mxu0
    %v3064 = vadd.f32 0.0, %v3063
    %v3065 = vpop.f32.mrb[0].mxu0
    %v3066 = vadd.f32 0.0, %v3065
    %3067 = vmatprep.mubr.f32.mxu0 0.0
    %3068 = vmatmul.mubr.f32.gmra.mrb[0].mxu0 %v2533
    %v3069 = vpop.f32.mrb[0].mxu0
    %v3070 = vadd.f32 0.0, %v3069
    %v3071 = vpop.f32.mrb[0].mxu0
    %v3072 = vadd.f32 0.0, %v3071
    %3073 = vdwg.mxu0
    %3074 = vmatprep.subr.mxu0 %v333
    %3075 = vmatpush1.msra.mxu0 %v332
    %3076 = vmatprep.subr.mxu0 0.0
    %3077 = vmatpush1.msra.mxu0 0.0
    %3078 = vmatprep.subr.mxu0 0.0
    %3079 = vmatpush1.msra.mxu0 0.0
    %3080 = vmatprep.subr.mxu0 0.0
    %3081 = vmatpush1.msra.mxu0 0.0
    %3082 = vmatprep.subr.mxu0 0.0
    %3083 = vmatpush1.msra.mxu0 0.0
    %3084 = vmatprep.subr.mxu0 0.0
    %3085 = vmatpush1.msra.mxu0 0.0
    %3086 = vmatprep.subr.mxu0 0.0
    %3087 = vmatpush1.msra.mxu0 0.0
    %3088 = vmatprep.subr.mxu0 0.0
    %3089 = vmatpush1.msra.mxu0 0.0
    %3090 = vmatprep.subr.mxu0 0.0
    %3091 = vmatpush1.msra.mxu0 0.0
    %3092 = vmatprep.subr.mxu0 0.0
    %3093 = vmatpush1.msra.mxu0 0.0
    %3094 = vmatprep.subr.mxu0 0.0
    %3095 = vmatpush1.msra.mxu0 0.0
    %3096 = vmatprep.subr.mxu0 0.0
    %3097 = vmatpush1.msra.mxu0 0.0
    %3098 = vmatprep.subr.mxu0 0.0
    %3099 = vmatpush1.msra.mxu0 0.0
    %3100 = vmatprep.subr.mxu0 0.0
    %3101 = vmatpush1.msra.mxu0 0.0
    %3102 = vmatprep.subr.mxu0 0.0
    %3103 = vmatpush1.msra.mxu0 0.0
    %3104 = vmatprep.subr.mxu0 0.0
    %3105 = vmatpush1.msra.mxu0 0.0
    %3106 = vmatprep.subr.mxu0 0.0
    %3107 = vmatpush1.msra.mxu0 0.0
    %3108 = vmatprep.subr.mxu0 0.0
    %3109 = vmatpush1.msra.mxu0 0.0
    %3110 = vmatprep.subr.mxu0 0.0
    %3111 = vmatpush1.msra.mxu0 0.0
    %3112 = vmatprep.subr.mxu0 0.0
    %3113 = vmatpush1.msra.mxu0 0.0
    %3114 = vmatprep.subr.mxu0 0.0
    %3115 = vmatpush1.msra.mxu0 0.0
    %3116 = vmatprep.subr.mxu0 0.0
    %3117 = vmatpush1.msra.mxu0 0.0
    %3118 = vmatprep.subr.mxu0 0.0
    %3119 = vmatpush1.msra.mxu0 0.0
    %3120 = vmatprep.subr.mxu0 0.0
    %3121 = vmatpush1.msra.mxu0 0.0
    %3122 = vmatprep.subr.mxu0 0.0
    %3123 = vmatpush1.msra.mxu0 0.0
    %3124 = vmatprep.subr.mxu0 0.0
    %3125 = vmatpush1.msra.mxu0 0.0
    %3126 = vmatprep.subr.mxu0 0.0
    %3127 = vmatpush1.msra.mxu0 0.0
    %3128 = vmatprep.subr.mxu0 0.0
    %3129 = vmatpush1.msra.mxu0 0.0
    %3130 = vmatprep.subr.mxu0 0.0
    %3131 = vmatpush1.msra.mxu0 0.0
    %3132 = vmatprep.subr.mxu0 0.0
    %3133 = vmatpush1.msra.mxu0 0.0
    %3134 = vmatprep.subr.mxu0 0.0
    %3135 = vmatpush1.msra.mxu0 0.0
    %3136 = vmatprep.subr.mxu0 0.0
    %3137 = vmatpush1.msra.mxu0 0.0
    %3138 = vmatprep.mubr.f32.mxu0 0.0
    %3139 = vmatmul.mubr.f32.gmra.mrb[0].mxu0 %v2530
    %v3140 = vpop.f32.mrb[0].mxu0
    %v3141 = vadd.f32 0.0, %v3140
    %v3142 = vpop.f32.mrb[0].mxu0
    %v3143 = vadd.f32 0.0, %v3142
    %3144 = vmatprep.mubr.f32.mxu0 0.0
    %3145 = vmatmul.mubr.f32.gmra.mrb[0].mxu0 %v2533
    %v3146 = vpop.f32.mrb[0].mxu0
    %v3147 = vadd.f32 0.0, %v3146
    %v3148 = vpop.f32.mrb[0].mxu0
    %v3149 = vadd.f32 0.0, %v3148
    %3150 = vdwg.mxu0
    %v3152 = vsel %vm2348, %v2527, 0
    %v3155 = vsel %vm2348, %v2528, 0
    %3157 = vmatprep.subr.mxu0 %v319
    %3158 = vmatpush1.msra.mxu0 %v318
    %3159 = vmatprep.subr.mxu0 0.0
    %3160 = vmatpush1.msra.mxu0 0.0
    %3161 = vmatprep.subr.mxu0 0.0
    %3162 = vmatpush1.msra.mxu0 0.0
    %3163 = vmatprep.subr.mxu0 0.0
    %3164 = vmatpush1.msra.mxu0 0.0
    %3165 = vmatprep.subr.mxu0 0.0
    %3166 = vmatpush1.msra.mxu0 0.0
    %3167 = vmatprep.subr.mxu0 0.0
    %3168 = vmatpush1.msra.mxu0 0.0
    %3169 = vmatprep.subr.mxu0 0.0
    %3170 = vmatpush1.msra.mxu0 0.0
    %3171 = vmatprep.subr.mxu0 0.0
    %3172 = vmatpush1.msra.mxu0 0.0
    %3173 = vmatprep.subr.mxu0 0.0
    %3174 = vmatpush1.msra.mxu0 0.0
    %3175 = vmatprep.subr.mxu0 0.0
    %3176 = vmatpush1.msra.mxu0 0.0
    %3177 = vmatprep.subr.mxu0 0.0
    %3178 = vmatpush1.msra.mxu0 0.0
    %3179 = vmatprep.subr.mxu0 0.0
    %3180 = vmatpush1.msra.mxu0 0.0
    %3181 = vmatprep.subr.mxu0 0.0
    %3182 = vmatpush1.msra.mxu0 0.0
    %3183 = vmatprep.subr.mxu0 0.0
    %3184 = vmatpush1.msra.mxu0 0.0
    %3185 = vmatprep.subr.mxu0 0.0
    %3186 = vmatpush1.msra.mxu0 0.0
    %3187 = vmatprep.subr.mxu0 0.0
    %3188 = vmatpush1.msra.mxu0 0.0
    %3189 = vmatprep.subr.mxu0 0.0
    %3190 = vmatpush1.msra.mxu0 0.0
    %3191 = vmatprep.subr.mxu0 0.0
    %3192 = vmatpush1.msra.mxu0 0.0
    %3193 = vmatprep.subr.mxu0 0.0
    %3194 = vmatpush1.msra.mxu0 0.0
    %3195 = vmatprep.subr.mxu0 0.0
    %3196 = vmatpush1.msra.mxu0 0.0
    %3197 = vmatprep.subr.mxu0 0.0
    %3198 = vmatpush1.msra.mxu0 0.0
    %3199 = vmatprep.subr.mxu0 0.0
    %3200 = vmatpush1.msra.mxu0 0.0
    %3201 = vmatprep.subr.mxu0 0.0
    %3202 = vmatpush1.msra.mxu0 0.0
    %3203 = vmatprep.subr.mxu0 0.0
    %3204 = vmatpush1.msra.mxu0 0.0
    %3205 = vmatprep.subr.mxu0 0.0
    %3206 = vmatpush1.msra.mxu0 0.0
    %3207 = vmatprep.subr.mxu0 0.0
    %3208 = vmatpush1.msra.mxu0 0.0
    %3209 = vmatprep.subr.mxu0 0.0
    %3210 = vmatpush1.msra.mxu0 0.0
    %3211 = vmatprep.subr.mxu0 0.0
    %3212 = vmatpush1.msra.mxu0 0.0
    %3213 = vmatprep.subr.mxu0 0.0
    %3214 = vmatpush1.msra.mxu0 0.0
    %3215 = vmatprep.subr.mxu0 0.0
    %3216 = vmatpush1.msra.mxu0 0.0
    %3217 = vmatprep.subr.mxu0 0.0
    %3218 = vmatpush1.msra.mxu0 0.0
    %3219 = vmatprep.subr.mxu0 0.0
    %3220 = vmatpush1.msra.mxu0 0.0
    %3221 = vmatprep.mubr.f32.mxu0 0.0
    %3222 = vmatmul.mubr.f32.gmra.mrb[0].mxu0 %v3152
    %v3223 = vpop.f32.mrb[0].mxu0
    %v3224 = vadd.f32 0.0, %v3223
    %v3225 = vpop.f32.mrb[0].mxu0
    %v3226 = vadd.f32 0.0, %v3225
    %3227 = vmatprep.mubr.f32.mxu0 0.0
    %3228 = vmatmul.mubr.f32.gmra.mrb[0].mxu0 %v3155
    %v3229 = vpop.f32.mrb[0].mxu0
    %v3230 = vadd.f32 0.0, %v3229
    %v3231 = vpop.f32.mrb[0].mxu0
    %v3232 = vadd.f32 0.0, %v3231
    %3233 = vdwg.mxu0
    %3234 = vmatprep.subr.mxu0 %v321
    %3235 = vmatpush1.msra.mxu0 %v320
    %3236 = vmatprep.subr.mxu0 0.0
    %3237 = vmatpush1.msra.mxu0 0.0
    %3238 = vmatprep.subr.mxu0 0.0
    %3239 = vmatpush1.msra.mxu0 0.0
    %3240 = vmatprep.subr.mxu0 0.0
    %3241 = vmatpush1.msra.mxu0 0.0
    %3242 = vmatprep.subr.mxu0 0.0
    %3243 = vmatpush1.msra.mxu0 0.0
    %3244 = vmatprep.subr.mxu0 0.0
    %3245 = vmatpush1.msra.mxu0 0.0
    %3246 = vmatprep.subr.mxu0 0.0
    %3247 = vmatpush1.msra.mxu0 0.0
    %3248 = vmatprep.subr.mxu0 0.0
    %3249 = vmatpush1.msra.mxu0 0.0
    %3250 = vmatprep.subr.mxu0 0.0
    %3251 = vmatpush1.msra.mxu0 0.0
    %3252 = vmatprep.subr.mxu0 0.0
    %3253 = vmatpush1.msra.mxu0 0.0
    %3254 = vmatprep.subr.mxu0 0.0
    %3255 = vmatpush1.msra.mxu0 0.0
    %3256 = vmatprep.subr.mxu0 0.0
    %3257 = vmatpush1.msra.mxu0 0.0
    %3258 = vmatprep.subr.mxu0 0.0
    %3259 = vmatpush1.msra.mxu0 0.0
    %3260 = vmatprep.subr.mxu0 0.0
    %3261 = vmatpush1.msra.mxu0 0.0
    %3262 = vmatprep.subr.mxu0 0.0
    %3263 = vmatpush1.msra.mxu0 0.0
    %3264 = vmatprep.subr.mxu0 0.0
    %3265 = vmatpush1.msra.mxu0 0.0
    %3266 = vmatprep.subr.mxu0 0.0
    %3267 = vmatpush1.msra.mxu0 0.0
    %3268 = vmatprep.subr.mxu0 0.0
    %3269 = vmatpush1.msra.mxu0 0.0
    %3270 = vmatprep.subr.mxu0 0.0
    %3271 = vmatpush1.msra.mxu0 0.0
    %3272 = vmatprep.subr.mxu0 0.0
    %3273 = vmatpush1.msra.mxu0 0.0
    %3274 = vmatprep.subr.mxu0 0.0
    %3275 = vmatpush1.msra.mxu0 0.0
    %3276 = vmatprep.subr.mxu0 0.0
    %3277 = vmatpush1.msra.mxu0 0.0
    %3278 = vmatprep.subr.mxu0 0.0
    %3279 = vmatpush1.msra.mxu0 0.0
    %3280 = vmatprep.subr.mxu0 0.0
    %3281 = vmatpush1.msra.mxu0 0.0
    %3282 = vmatprep.subr.mxu0 0.0
    %3283 = vmatpush1.msra.mxu0 0.0
    %3284 = vmatprep.subr.mxu0 0.0
    %3285 = vmatpush1.msra.mxu0 0.0
    %3286 = vmatprep.subr.mxu0 0.0
    %3287 = vmatpush1.msra.mxu0 0.0
    %3288 = vmatprep.subr.mxu0 0.0
    %3289 = vmatpush1.msra.mxu0 0.0
    %3290 = vmatprep.subr.mxu0 0.0
    %3291 = vmatpush1.msra.mxu0 0.0
    %3292 = vmatprep.subr.mxu0 0.0
    %3293 = vmatpush1.msra.mxu0 0.0
    %3294 = vmatprep.subr.mxu0 0.0
    %3295 = vmatpush1.msra.mxu0 0.0
    %3296 = vmatprep.subr.mxu0 0.0
    %3297 = vmatpush1.msra.mxu0 0.0
    %3298 = vmatprep.mubr.f32.mxu0 0.0
    %3299 = vmatmul.mubr.f32.gmra.mrb[0].mxu0 %v3152
    %v3300 = vpop.f32.mrb[0].mxu0
    %v3301 = vadd.f32 0.0, %v3300
    %v3302 = vpop.f32.mrb[0].mxu0
    %v3303 = vadd.f32 0.0, %v3302
    %3304 = vmatprep.mubr.f32.mxu0 0.0
    %3305 = vmatmul.mubr.f32.gmra.mrb[0].mxu0 %v3155
    %v3306 = vpop.f32.mrb[0].mxu0
    %v3307 = vadd.f32 0.0, %v3306
    %v3308 = vpop.f32.mrb[0].mxu0
    %v3309 = vadd.f32 0.0, %v3308
    %3310 = vdwg.mxu0
    %3311 = vmatprep.subr.mxu0 %v323
    %3312 = vmatpush1.msra.mxu0 %v322
    %3313 = vmatprep.subr.mxu0 0.0
    %3314 = vmatpush1.msra.mxu0 0.0
    %3315 = vmatprep.subr.mxu0 0.0
    %3316 = vmatpush1.msra.mxu0 0.0
    %3317 = vmatprep.subr.mxu0 0.0
    %3318 = vmatpush1.msra.mxu0 0.0
    %3319 = vmatprep.subr.mxu0 0.0
    %3320 = vmatpush1.msra.mxu0 0.0
    %3321 = vmatprep.subr.mxu0 0.0
    %3322 = vmatpush1.msra.mxu0 0.0
    %3323 = vmatprep.subr.mxu0 0.0
    %3324 = vmatpush1.msra.mxu0 0.0
    %3325 = vmatprep.subr.mxu0 0.0
    %3326 = vmatpush1.msra.mxu0 0.0
    %3327 = vmatprep.subr.mxu0 0.0
    %3328 = vmatpush1.msra.mxu0 0.0
    %3329 = vmatprep.subr.mxu0 0.0
    %3330 = vmatpush1.msra.mxu0 0.0
    %3331 = vmatprep.subr.mxu0 0.0
    %3332 = vmatpush1.msra.mxu0 0.0
    %3333 = vmatprep.subr.mxu0 0.0
    %3334 = vmatpush1.msra.mxu0 0.0
    %3335 = vmatprep.subr.mxu0 0.0
    %3336 = vmatpush1.msra.mxu0 0.0
    %3337 = vmatprep.subr.mxu0 0.0
    %3338 = vmatpush1.msra.mxu0 0.0
    %3339 = vmatprep.subr.mxu0 0.0
    %3340 = vmatpush1.msra.mxu0 0.0
    %3341 = vmatprep.subr.mxu0 0.0
    %3342 = vmatpush1.msra.mxu0 0.0
    %3343 = vmatprep.subr.mxu0 0.0
    %3344 = vmatpush1.msra.mxu0 0.0
    %3345 = vmatprep.subr.mxu0 0.0
    %3346 = vmatpush1.msra.mxu0 0.0
    %3347 = vmatprep.subr.mxu0 0.0
    %3348 = vmatpush1.msra.mxu0 0.0
    %3349 = vmatprep.subr.mxu0 0.0
    %3350 = vmatpush1.msra.mxu0 0.0
    %3351 = vmatprep.subr.mxu0 0.0
    %3352 = vmatpush1.msra.mxu0 0.0
    %3353 = vmatprep.subr.mxu0 0.0
    %3354 = vmatpush1.msra.mxu0 0.0
    %3355 = vmatprep.subr.mxu0 0.0
    %3356 = vmatpush1.msra.mxu0 0.0
    %3357 = vmatprep.subr.mxu0 0.0
    %3358 = vmatpush1.msra.mxu0 0.0
    %3359 = vmatprep.subr.mxu0 0.0
    %3360 = vmatpush1.msra.mxu0 0.0
    %3361 = vmatprep.subr.mxu0 0.0
    %3362 = vmatpush1.msra.mxu0 0.0
    %3363 = vmatprep.subr.mxu0 0.0
    %3364 = vmatpush1.msra.mxu0 0.0
    %3365 = vmatprep.subr.mxu0 0.0
    %3366 = vmatpush1.msra.mxu0 0.0
    %3367 = vmatprep.subr.mxu0 0.0
    %3368 = vmatpush1.msra.mxu0 0.0
    %3369 = vmatprep.subr.mxu0 0.0
    %3370 = vmatpush1.msra.mxu0 0.0
    %3371 = vmatprep.subr.mxu0 0.0
    %3372 = vmatpush1.msra.mxu0 0.0
    %3373 = vmatprep.subr.mxu0 0.0
    %3374 = vmatpush1.msra.mxu0 0.0
    %3375 = vmatprep.mubr.f32.mxu0 0.0
    %3376 = vmatmul.mubr.f32.gmra.mrb[0].mxu0 %v3152
    %v3377 = vpop.f32.mrb[0].mxu0
    %v3378 = vadd.f32 0.0, %v3377
    %v3379 = vpop.f32.mrb[0].mxu0
    %v3380 = vadd.f32 0.0, %v3379
    %3381 = vmatprep.mubr.f32.mxu0 0.0
    %3382 = vmatmul.mubr.f32.gmra.mrb[0].mxu0 %v3155
    %v3383 = vpop.f32.mrb[0].mxu0
    %v3384 = vadd.f32 0.0, %v3383
    %v3385 = vpop.f32.mrb[0].mxu0
    %v3386 = vadd.f32 0.0, %v3385
    %3387 = vdwg.mxu0
    %3388 = vmatprep.subr.mxu0 %v325
    %3389 = vmatpush1.msra.mxu0 %v324
    %3390 = vmatprep.subr.mxu0 0.0
    %3391 = vmatpush1.msra.mxu0 0.0
    %3392 = vmatprep.subr.mxu0 0.0
    %3393 = vmatpush1.msra.mxu0 0.0
    %3394 = vmatprep.subr.mxu0 0.0
    %3395 = vmatpush1.msra.mxu0 0.0
    %3396 = vmatprep.subr.mxu0 0.0
    %3397 = vmatpush1.msra.mxu0 0.0
    %3398 = vmatprep.subr.mxu0 0.0
    %3399 = vmatpush1.msra.mxu0 0.0
    %3400 = vmatprep.subr.mxu0 0.0
    %3401 = vmatpush1.msra.mxu0 0.0
    %3402 = vmatprep.subr.mxu0 0.0
    %3403 = vmatpush1.msra.mxu0 0.0
    %3404 = vmatprep.subr.mxu0 0.0
    %3405 = vmatpush1.msra.mxu0 0.0
    %3406 = vmatprep.subr.mxu0 0.0
    %3407 = vmatpush1.msra.mxu0 0.0
    %3408 = vmatprep.subr.mxu0 0.0
    %3409 = vmatpush1.msra.mxu0 0.0
    %3410 = vmatprep.subr.mxu0 0.0
    %3411 = vmatpush1.msra.mxu0 0.0
    %3412 = vmatprep.subr.mxu0 0.0
    %3413 = vmatpush1.msra.mxu0 0.0
    %3414 = vmatprep.subr.mxu0 0.0
    %3415 = vmatpush1.msra.mxu0 0.0
    %3416 = vmatprep.subr.mxu0 0.0
    %3417 = vmatpush1.msra.mxu0 0.0
    %3418 = vmatprep.subr.mxu0 0.0
    %3419 = vmatpush1.msra.mxu0 0.0
    %3420 = vmatprep.subr.mxu0 0.0
    %3421 = vmatpush1.msra.mxu0 0.0
    %3422 = vmatprep.subr.mxu0 0.0
    %3423 = vmatpush1.msra.mxu0 0.0
    %3424 = vmatprep.subr.mxu0 0.0
    %3425 = vmatpush1.msra.mxu0 0.0
    %3426 = vmatprep.subr.mxu0 0.0
    %3427 = vmatpush1.msra.mxu0 0.0
    %3428 = vmatprep.subr.mxu0 0.0
    %3429 = vmatpush1.msra.mxu0 0.0
    %3430 = vmatprep.subr.mxu0 0.0
    %3431 = vmatpush1.msra.mxu0 0.0
    %3432 = vmatprep.subr.mxu0 0.0
    %3433 = vmatpush1.msra.mxu0 0.0
    %3434 = vmatprep.subr.mxu0 0.0
    %3435 = vmatpush1.msra.mxu0 0.0
    %3436 = vmatprep.subr.mxu0 0.0
    %3437 = vmatpush1.msra.mxu0 0.0
    %3438 = vmatprep.subr.mxu0 0.0
    %3439 = vmatpush1.msra.mxu0 0.0
    %3440 = vmatprep.subr.mxu0 0.0
    %3441 = vmatpush1.msra.mxu0 0.0
    %3442 = vmatprep.subr.mxu0 0.0
    %3443 = vmatpush1.msra.mxu0 0.0
    %3444 = vmatprep.subr.mxu0 0.0
    %3445 = vmatpush1.msra.mxu0 0.0
    %3446 = vmatprep.subr.mxu0 0.0
    %3447 = vmatpush1.msra.mxu0 0.0
    %3448 = vmatprep.subr.mxu0 0.0
    %3449 = vmatpush1.msra.mxu0 0.0
    %3450 = vmatprep.subr.mxu0 0.0
    %3451 = vmatpush1.msra.mxu0 0.0
    %3452 = vmatprep.mubr.f32.mxu0 0.0
    %3453 = vmatmul.mubr.f32.gmra.mrb[0].mxu0 %v3152
    %v3454 = vpop.f32.mrb[0].mxu0
    %v3455 = vadd.f32 0.0, %v3454
    %v3456 = vpop.f32.mrb[0].mxu0
    %v3457 = vadd.f32 0.0, %v3456
    %3458 = vmatprep.mubr.f32.mxu0 0.0
    %3459 = vmatmul.mubr.f32.gmra.mrb[0].mxu0 %v3155
    %v3460 = vpop.f32.mrb[0].mxu0
    %v3461 = vadd.f32 0.0, %v3460
    %v3462 = vpop.f32.mrb[0].mxu0
    %v3463 = vadd.f32 0.0, %v3462
    %3464 = vdwg.mxu0
    %3465 = vmatprep.subr.mxu0 %v327
    %3466 = vmatpush1.msra.mxu0 %v326
    %3467 = vmatprep.subr.mxu0 0.0
    %3468 = vmatpush1.msra.mxu0 0.0
    %3469 = vmatprep.subr.mxu0 0.0
    %3470 = vmatpush1.msra.mxu0 0.0
    %3471 = vmatprep.subr.mxu0 0.0
    %3472 = vmatpush1.msra.mxu0 0.0
    %3473 = vmatprep.subr.mxu0 0.0
    %3474 = vmatpush1.msra.mxu0 0.0
    %3475 = vmatprep.subr.mxu0 0.0
    %3476 = vmatpush1.msra.mxu0 0.0
    %3477 = vmatprep.subr.mxu0 0.0
    %3478 = vmatpush1.msra.mxu0 0.0
    %3479 = vmatprep.subr.mxu0 0.0
    %3480 = vmatpush1.msra.mxu0 0.0
    %3481 = vmatprep.subr.mxu0 0.0
    %3482 = vmatpush1.msra.mxu0 0.0
    %3483 = vmatprep.subr.mxu0 0.0
    %3484 = vmatpush1.msra.mxu0 0.0
    %3485 = vmatprep.subr.mxu0 0.0
    %3486 = vmatpush1.msra.mxu0 0.0
    %3487 = vmatprep.subr.mxu0 0.0
    %3488 = vmatpush1.msra.mxu0 0.0
    %3489 = vmatprep.subr.mxu0 0.0
    %3490 = vmatpush1.msra.mxu0 0.0
    %3491 = vmatprep.subr.mxu0 0.0
    %3492 = vmatpush1.msra.mxu0 0.0
    %3493 = vmatprep.subr.mxu0 0.0
    %3494 = vmatpush1.msra.mxu0 0.0
    %3495 = vmatprep.subr.mxu0 0.0
    %3496 = vmatpush1.msra.mxu0 0.0
    %3497 = vmatprep.subr.mxu0 0.0
    %3498 = vmatpush1.msra.mxu0 0.0
    %3499 = vmatprep.subr.mxu0 0.0
    %3500 = vmatpush1.msra.mxu0 0.0
    %3501 = vmatprep.subr.mxu0 0.0
    %3502 = vmatpush1.msra.mxu0 0.0
    %3503 = vmatprep.subr.mxu0 0.0
    %3504 = vmatpush1.msra.mxu0 0.0
    %3505 = vmatprep.subr.mxu0 0.0
    %3506 = vmatpush1.msra.mxu0 0.0
    %3507 = vmatprep.subr.mxu0 0.0
    %3508 = vmatpush1.msra.mxu0 0.0
    %3509 = vmatprep.subr.mxu0 0.0
    %3510 = vmatpush1.msra.mxu0 0.0
    %3511 = vmatprep.subr.mxu0 0.0
    %3512 = vmatpush1.msra.mxu0 0.0
    %3513 = vmatprep.subr.mxu0 0.0
    %3514 = vmatpush1.msra.mxu0 0.0
    %3515 = vmatprep.subr.mxu0 0.0
    %3516 = vmatpush1.msra.mxu0 0.0
    %3517 = vmatprep.subr.mxu0 0.0
    %3518 = vmatpush1.msra.mxu0 0.0
    %3519 = vmatprep.subr.mxu0 0.0
    %3520 = vmatpush1.msra.mxu0 0.0
    %3521 = vmatprep.subr.mxu0 0.0
    %3522 = vmatpush1.msra.mxu0 0.0
    %3523 = vmatprep.subr.mxu0 0.0
    %3524 = vmatpush1.msra.mxu0 0.0
    %3525 = vmatprep.subr.mxu0 0.0
    %3526 = vmatpush1.msra.mxu0 0.0
    %3527 = vmatprep.subr.mxu0 0.0
    %3528 = vmatpush1.msra.mxu0 0.0
    %3529 = vmatprep.mubr.f32.mxu0 0.0
    %3530 = vmatmul.mubr.f32.gmra.mrb[0].mxu0 %v3152
    %v3531 = vpop.f32.mrb[0].mxu0
    %v3532 = vadd.f32 0.0, %v3531
    %v3533 = vpop.f32.mrb[0].mxu0
    %v3534 = vadd.f32 0.0, %v3533
    %3535 = vmatprep.mubr.f32.mxu0 0.0
    %3536 = vmatmul.mubr.f32.gmra.mrb[0].mxu0 %v3155
    %v3537 = vpop.f32.mrb[0].mxu0
    %v3538 = vadd.f32 0.0, %v3537
    %v3539 = vpop.f32.mrb[0].mxu0
    %v3540 = vadd.f32 0.0, %v3539
    %3541 = vdwg.mxu0
    %3542 = vmatprep.subr.mxu0 %v329
    %3543 = vmatpush1.msra.mxu0 %v328
    %3544 = vmatprep.subr.mxu0 0.0
    %3545 = vmatpush1.msra.mxu0 0.0
    %3546 = vmatprep.subr.mxu0 0.0
    %3547 = vmatpush1.msra.mxu0 0.0
    %3548 = vmatprep.subr.mxu0 0.0
    %3549 = vmatpush1.msra.mxu0 0.0
    %3550 = vmatprep.subr.mxu0 0.0
    %3551 = vmatpush1.msra.mxu0 0.0
    %3552 = vmatprep.subr.mxu0 0.0
    %3553 = vmatpush1.msra.mxu0 0.0
    %3554 = vmatprep.subr.mxu0 0.0
    %3555 = vmatpush1.msra.mxu0 0.0
    %3556 = vmatprep.subr.mxu0 0.0
    %3557 = vmatpush1.msra.mxu0 0.0
    %3558 = vmatprep.subr.mxu0 0.0
    %3559 = vmatpush1.msra.mxu0 0.0
    %3560 = vmatprep.subr.mxu0 0.0
    %3561 = vmatpush1.msra.mxu0 0.0
    %3562 = vmatprep.subr.mxu0 0.0
    %3563 = vmatpush1.msra.mxu0 0.0
    %3564 = vmatprep.subr.mxu0 0.0
    %3565 = vmatpush1.msra.mxu0 0.0
    %3566 = vmatprep.subr.mxu0 0.0
    %3567 = vmatpush1.msra.mxu0 0.0
    %3568 = vmatprep.subr.mxu0 0.0
    %3569 = vmatpush1.msra.mxu0 0.0
    %3570 = vmatprep.subr.mxu0 0.0
    %3571 = vmatpush1.msra.mxu0 0.0
    %3572 = vmatprep.subr.mxu0 0.0
    %3573 = vmatpush1.msra.mxu0 0.0
    %3574 = vmatprep.subr.mxu0 0.0
    %3575 = vmatpush1.msra.mxu0 0.0
    %3576 = vmatprep.subr.mxu0 0.0
    %3577 = vmatpush1.msra.mxu0 0.0
    %3578 = vmatprep.subr.mxu0 0.0
    %3579 = vmatpush1.msra.mxu0 0.0
    %3580 = vmatprep.subr.mxu0 0.0
    %3581 = vmatpush1.msra.mxu0 0.0
    %3582 = vmatprep.subr.mxu0 0.0
    %3583 = vmatpush1.msra.mxu0 0.0
    %3584 = vmatprep.subr.mxu0 0.0
    %3585 = vmatpush1.msra.mxu0 0.0
    %3586 = vmatprep.subr.mxu0 0.0
    %3587 = vmatpush1.msra.mxu0 0.0
    %3588 = vmatprep.subr.mxu0 0.0
    %3589 = vmatpush1.msra.mxu0 0.0
    %3590 = vmatprep.subr.mxu0 0.0
    %3591 = vmatpush1.msra.mxu0 0.0
    %3592 = vmatprep.subr.mxu0 0.0
    %3593 = vmatpush1.msra.mxu0 0.0
    %3594 = vmatprep.subr.mxu0 0.0
    %3595 = vmatpush1.msra.mxu0 0.0
    %3596 = vmatprep.subr.mxu0 0.0
    %3597 = vmatpush1.msra.mxu0 0.0
    %3598 = vmatprep.subr.mxu0 0.0
    %3599 = vmatpush1.msra.mxu0 0.0
    %3600 = vmatprep.subr.mxu0 0.0
    %3601 = vmatpush1.msra.mxu0 0.0
    %3602 = vmatprep.subr.mxu0 0.0
    %3603 = vmatpush1.msra.mxu0 0.0
    %3604 = vmatprep.subr.mxu0 0.0
    %3605 = vmatpush1.msra.mxu0 0.0
    %3606 = vmatprep.mubr.f32.mxu0 0.0
    %3607 = vmatmul.mubr.f32.gmra.mrb[0].mxu0 %v3152
    %v3608 = vpop.f32.mrb[0].mxu0
    %v3609 = vadd.f32 0.0, %v3608
    %v3610 = vpop.f32.mrb[0].mxu0
    %v3611 = vadd.f32 0.0, %v3610
    %3612 = vmatprep.mubr.f32.mxu0 0.0
    %3613 = vmatmul.mubr.f32.gmra.mrb[0].mxu0 %v3155
    %v3614 = vpop.f32.mrb[0].mxu0
    %v3615 = vadd.f32 0.0, %v3614
    %v3616 = vpop.f32.mrb[0].mxu0
    %v3617 = vadd.f32 0.0, %v3616
    %3618 = vdwg.mxu0
    %3619 = vmatprep.subr.mxu0 %v331
    %3620 = vmatpush1.msra.mxu0 %v330
    %3621 = vmatprep.subr.mxu0 0.0
    %3622 = vmatpush1.msra.mxu0 0.0
    %3623 = vmatprep.subr.mxu0 0.0
    %3624 = vmatpush1.msra.mxu0 0.0
    %3625 = vmatprep.subr.mxu0 0.0
    %3626 = vmatpush1.msra.mxu0 0.0
    %3627 = vmatprep.subr.mxu0 0.0
    %3628 = vmatpush1.msra.mxu0 0.0
    %3629 = vmatprep.subr.mxu0 0.0
    %3630 = vmatpush1.msra.mxu0 0.0
    %3631 = vmatprep.subr.mxu0 0.0
    %3632 = vmatpush1.msra.mxu0 0.0
    %3633 = vmatprep.subr.mxu0 0.0
    %3634 = vmatpush1.msra.mxu0 0.0
    %3635 = vmatprep.subr.mxu0 0.0
    %3636 = vmatpush1.msra.mxu0 0.0
    %3637 = vmatprep.subr.mxu0 0.0
    %3638 = vmatpush1.msra.mxu0 0.0
    %3639 = vmatprep.subr.mxu0 0.0
    %3640 = vmatpush1.msra.mxu0 0.0
    %3641 = vmatprep.subr.mxu0 0.0
    %3642 = vmatpush1.msra.mxu0 0.0
    %3643 = vmatprep.subr.mxu0 0.0
    %3644 = vmatpush1.msra.mxu0 0.0
    %3645 = vmatprep.subr.mxu0 0.0
    %3646 = vmatpush1.msra.mxu0 0.0
    %3647 = vmatprep.subr.mxu0 0.0
    %3648 = vmatpush1.msra.mxu0 0.0
    %3649 = vmatprep.subr.mxu0 0.0
    %3650 = vmatpush1.msra.mxu0 0.0
    %3651 = vmatprep.subr.mxu0 0.0
    %3652 = vmatpush1.msra.mxu0 0.0
    %3653 = vmatprep.subr.mxu0 0.0
    %3654 = vmatpush1.msra.mxu0 0.0
    %3655 = vmatprep.subr.mxu0 0.0
    %3656 = vmatpush1.msra.mxu0 0.0
    %3657 = vmatprep.subr.mxu0 0.0
    %3658 = vmatpush1.msra.mxu0 0.0
    %3659 = vmatprep.subr.mxu0 0.0
    %3660 = vmatpush1.msra.mxu0 0.0
    %3661 = vmatprep.subr.mxu0 0.0
    %3662 = vmatpush1.msra.mxu0 0.0
    %3663 = vmatprep.subr.mxu0 0.0
    %3664 = vmatpush1.msra.mxu0 0.0
    %3665 = vmatprep.subr.mxu0 0.0
    %3666 = vmatpush1.msra.mxu0 0.0
    %3667 = vmatprep.subr.mxu0 0.0
    %3668 = vmatpush1.msra.mxu0 0.0
    %3669 = vmatprep.subr.mxu0 0.0
    %3670 = vmatpush1.msra.mxu0 0.0
    %3671 = vmatprep.subr.mxu0 0.0
    %3672 = vmatpush1.msra.mxu0 0.0
    %3673 = vmatprep.subr.mxu0 0.0
    %3674 = vmatpush1.msra.mxu0 0.0
    %3675 = vmatprep.subr.mxu0 0.0
    %3676 = vmatpush1.msra.mxu0 0.0
    %3677 = vmatprep.subr.mxu0 0.0
    %3678 = vmatpush1.msra.mxu0 0.0
    %3679 = vmatprep.subr.mxu0 0.0
    %3680 = vmatpush1.msra.mxu0 0.0
    %3681 = vmatprep.subr.mxu0 0.0
    %3682 = vmatpush1.msra.mxu0 0.0
    %3683 = vmatprep.mubr.f32.mxu0 0.0
    %3684 = vmatmul.mubr.f32.gmra.mrb[0].mxu0 %v3152
    %v3685 = vpop.f32.mrb[0].mxu0
    %v3686 = vadd.f32 0.0, %v3685
    %v3687 = vpop.f32.mrb[0].mxu0
    %v3688 = vadd.f32 0.0, %v3687
    %3689 = vmatprep.mubr.f32.mxu0 0.0
    %3690 = vmatmul.mubr.f32.gmra.mrb[0].mxu0 %v3155
    %v3691 = vpop.f32.mrb[0].mxu0
    %v3692 = vadd.f32 0.0, %v3691
    %v3693 = vpop.f32.mrb[0].mxu0
    %v3694 = vadd.f32 0.0, %v3693
    %3695 = vdwg.mxu0
    %3696 = vmatprep.subr.mxu0 %v333
    %3697 = vmatpush1.msra.mxu0 %v332
    %3698 = vmatprep.subr.mxu0 0.0
    %3699 = vmatpush1.msra.mxu0 0.0
    %3700 = vmatprep.subr.mxu0 0.0
    %3701 = vmatpush1.msra.mxu0 0.0
    %3702 = vmatprep.subr.mxu0 0.0
    %3703 = vmatpush1.msra.mxu0 0.0
    %3704 = vmatprep.subr.mxu0 0.0
    %3705 = vmatpush1.msra.mxu0 0.0
    %3706 = vmatprep.subr.mxu0 0.0
    %3707 = vmatpush1.msra.mxu0 0.0
    %3708 = vmatprep.subr.mxu0 0.0
    %3709 = vmatpush1.msra.mxu0 0.0
    %3710 = vmatprep.subr.mxu0 0.0
    %3711 = vmatpush1.msra.mxu0 0.0
    %3712 = vmatprep.subr.mxu0 0.0
    %3713 = vmatpush1.msra.mxu0 0.0
    %3714 = vmatprep.subr.mxu0 0.0
    %3715 = vmatpush1.msra.mxu0 0.0
    %3716 = vmatprep.subr.mxu0 0.0
    %3717 = vmatpush1.msra.mxu0 0.0
    %3718 = vmatprep.subr.mxu0 0.0
    %3719 = vmatpush1.msra.mxu0 0.0
    %3720 = vmatprep.subr.mxu0 0.0
    %3721 = vmatpush1.msra.mxu0 0.0
    %3722 = vmatprep.subr.mxu0 0.0
    %3723 = vmatpush1.msra.mxu0 0.0
    %3724 = vmatprep.subr.mxu0 0.0
    %3725 = vmatpush1.msra.mxu0 0.0
    %3726 = vmatprep.subr.mxu0 0.0
    %3727 = vmatpush1.msra.mxu0 0.0
    %3728 = vmatprep.subr.mxu0 0.0
    %3729 = vmatpush1.msra.mxu0 0.0
    %3730 = vmatprep.subr.mxu0 0.0
    %3731 = vmatpush1.msra.mxu0 0.0
    %3732 = vmatprep.subr.mxu0 0.0
    %3733 = vmatpush1.msra.mxu0 0.0
    %3734 = vmatprep.subr.mxu0 0.0
    %3735 = vmatpush1.msra.mxu0 0.0
    %3736 = vmatprep.subr.mxu0 0.0
    %3737 = vmatpush1.msra.mxu0 0.0
    %3738 = vmatprep.subr.mxu0 0.0
    %3739 = vmatpush1.msra.mxu0 0.0
    %3740 = vmatprep.subr.mxu0 0.0
    %3741 = vmatpush1.msra.mxu0 0.0
    %3742 = vmatprep.subr.mxu0 0.0
    %3743 = vmatpush1.msra.mxu0 0.0
    %3744 = vmatprep.subr.mxu0 0.0
    %3745 = vmatpush1.msra.mxu0 0.0
    %3746 = vmatprep.subr.mxu0 0.0
    %3747 = vmatpush1.msra.mxu0 0.0
    %3748 = vmatprep.subr.mxu0 0.0
    %3749 = vmatpush1.msra.mxu0 0.0
    %3750 = vmatprep.subr.mxu0 0.0
    %3751 = vmatpush1.msra.mxu0 0.0
    %3752 = vmatprep.subr.mxu0 0.0
    %3753 = vmatpush1.msra.mxu0 0.0
    %3754 = vmatprep.subr.mxu0 0.0
    %3755 = vmatpush1.msra.mxu0 0.0
    %3756 = vmatprep.subr.mxu0 0.0
    %3757 = vmatpush1.msra.mxu0 0.0
    %3758 = vmatprep.subr.mxu0 0.0
    %3759 = vmatpush1.msra.mxu0 0.0
    %3760 = vmatprep.mubr.f32.mxu0 0.0
    %3761 = vmatmul.mubr.f32.gmra.mrb[0].mxu0 %v3152
    %v3762 = vpop.f32.mrb[0].mxu0
    %v3763 = vadd.f32 0.0, %v3762
    %v3764 = vpop.f32.mrb[0].mxu0
    %v3765 = vadd.f32 0.0, %v3764
    %3766 = vmatprep.mubr.f32.mxu0 0.0
    %3767 = vmatmul.mubr.f32.gmra.mrb[0].mxu0 %v3155
    %v3768 = vpop.f32.mrb[0].mxu0
    %v3769 = vadd.f32 0.0, %v3768
    %v3770 = vpop.f32.mrb[0].mxu0
    %v3771 = vadd.f32 0.0, %v3770
    %3772 = vdwg.mxu0
    %v3773 = vmul.f32 %v417, %v2602
    %v3774 = vmul.f32 %v419, %v2604
    %v3775 = vmul.f32 %v494, %v2679
    %v3776 = vmul.f32 %v496, %v2681
    %v3777 = vmul.f32 %v571, %v2756
    %v3778 = vmul.f32 %v573, %v2758
    %v3779 = vmul.f32 %v648, %v2833
    %v3780 = vmul.f32 %v650, %v2835
    %v3781 = vmul.f32 %v725, %v2910
    %v3782 = vmul.f32 %v727, %v2912
    %v3783 = vmul.f32 %v802, %v2987
    %v3784 = vmul.f32 %v804, %v2989
    %v3785 = vmul.f32 %v879, %v3064
    %v3786 = vmul.f32 %v881, %v3066
    %v3787 = vmul.f32 %v956, %v3141
    %v3788 = vmul.f32 %v958, %v3143
    %v3789 = vmul.f32 %v423, %v2608
    %v3790 = vmul.f32 %v425, %v2610
    %v3791 = vmul.f32 %v500, %v2685
    %v3792 = vmul.f32 %v502, %v2687
    %v3793 = vmul.f32 %v577, %v2762
    %v3794 = vmul.f32 %v579, %v2764
    %v3795 = vmul.f32 %v654, %v2839
    %v3796 = vmul.f32 %v656, %v2841
    %v3797 = vmul.f32 %v731, %v2916
    %v3798 = vmul.f32 %v733, %v2918
    %v3799 = vmul.f32 %v808, %v2993
    %v3800 = vmul.f32 %v810, %v2995
    %v3801 = vmul.f32 %v885, %v3070
    %v3802 = vmul.f32 %v887, %v3072
    %v3803 = vmul.f32 %v962, %v3147
    %v3804 = vmul.f32 %v964, %v3149
    %v3805 = vadd.f32 %v3773, %v3224
    %v3806 = vadd.f32 %v3774, %v3226
    %v3807 = vadd.f32 %v3775, %v3301
    %v3808 = vadd.f32 %v3776, %v3303
    %v3809 = vadd.f32 %v3777, %v3378
    %v3810 = vadd.f32 %v3778, %v3380
    %v3811 = vadd.f32 %v3779, %v3455
    %v3812 = vadd.f32 %v3780, %v3457
    %v3813 = vadd.f32 %v3781, %v3532
    %v3814 = vadd.f32 %v3782, %v3534
    %v3815 = vadd.f32 %v3783, %v3609
    %v3816 = vadd.f32 %v3784, %v3611
    %v3817 = vadd.f32 %v3785, %v3686
    %v3818 = vadd.f32 %v3786, %v3688
    %v3819 = vadd.f32 %v3787, %v3763
    %v3820 = vadd.f32 %v3788, %v3765
    %v3821 = vadd.f32 %v3789, %v3230
    %v3822 = vadd.f32 %v3790, %v3232
    %v3823 = vadd.f32 %v3791, %v3307
    %v3824 = vadd.f32 %v3792, %v3309
    %v3825 = vadd.f32 %v3793, %v3384
    %v3826 = vadd.f32 %v3794, %v3386
    %v3827 = vadd.f32 %v3795, %v3461
    %v3828 = vadd.f32 %v3796, %v3463
    %v3829 = vadd.f32 %v3797, %v3538
    %v3830 = vadd.f32 %v3798, %v3540
    %v3831 = vadd.f32 %v3799, %v3615
    %v3832 = vadd.f32 %v3800, %v3617
    %v3833 = vadd.f32 %v3801, %v3692
    %v3834 = vadd.f32 %v3802, %v3694
    %v3835 = vadd.f32 %v3803, %v3769
    %v3836 = vadd.f32 %v3804, %v3771
    %v3837 = vmax.f32 %v3805, 0.0
    %v3838 = vmax.f32 %v3806, 0.0
    %v3839 = vmax.f32 %v3807, 0.0
    %v3840 = vmax.f32 %v3808, 0.0
    %v3841 = vmax.f32 %v3809, 0.0
    %v3842 = vmax.f32 %v3810, 0.0
    %v3843 = vmax.f32 %v3811, 0.0
    %v3844 = vmax.f32 %v3812, 0.0
    %v3845 = vmax.f32 %v3813, 0.0
    %v3846 = vmax.f32 %v3814, 0.0
    %v3847 = vmax.f32 %v3815, 0.0
    %v3848 = vmax.f32 %v3816, 0.0
    %v3849 = vmax.f32 %v3817, 0.0
    %v3850 = vmax.f32 %v3818, 0.0
    %v3851 = vmax.f32 %v3819, 0.0
    %v3852 = vmax.f32 %v3820, 0.0
    %v3853 = vmax.f32 %v3821, 0.0
    %v3854 = vmax.f32 %v3822, 0.0
    %v3855 = vmax.f32 %v3823, 0.0
    %v3856 = vmax.f32 %v3824, 0.0
    %v3857 = vmax.f32 %v3825, 0.0
    %v3858 = vmax.f32 %v3826, 0.0
    %v3859 = vmax.f32 %v3827, 0.0
    %v3860 = vmax.f32 %v3828, 0.0
    %v3861 = vmax.f32 %v3829, 0.0
    %v3862 = vmax.f32 %v3830, 0.0
    %v3863 = vmax.f32 %v3831, 0.0
    %v3864 = vmax.f32 %v3832, 0.0
    %v3865 = vmax.f32 %v3833, 0.0
    %v3866 = vmax.f32 %v3834, 0.0
    %v3867 = vmax.f32 %v3835, 0.0
    %v3868 = vmax.f32 %v3836, 0.0
    %v3870 = vsel %vm343, %v341, 0
    %v3873 = vsel %vm343, %v342, 0
    %3875 = vmatprep.subr.mxu0 %v3838
    %3876 = vmatpush1.msra.mxu0 %v3837
    %3877 = vmatprep.subr.mxu0 %v3854
    %3878 = vmatpush1.msra.mxu0 %v3853
    %3879 = vmatprep.subr.mxu0 0.0
    %3880 = vmatpush1.msra.mxu0 0.0
    %3881 = vmatprep.subr.mxu0 0.0
    %3882 = vmatpush1.msra.mxu0 0.0
    %3883 = vmatprep.subr.mxu0 0.0
    %3884 = vmatpush1.msra.mxu0 0.0
    %3885 = vmatprep.subr.mxu0 0.0
    %3886 = vmatpush1.msra.mxu0 0.0
    %3887 = vmatprep.subr.mxu0 0.0
    %3888 = vmatpush1.msra.mxu0 0.0
    %3889 = vmatprep.subr.mxu0 0.0
    %3890 = vmatpush1.msra.mxu0 0.0
    %3891 = vmatprep.subr.mxu0 0.0
    %3892 = vmatpush1.msra.mxu0 0.0
    %3893 = vmatprep.subr.mxu0 0.0
    %3894 = vmatpush1.msra.mxu0 0.0
    %3895 = vmatprep.subr.mxu0 0.0
    %3896 = vmatpush1.msra.mxu0 0.0
    %3897 = vmatprep.subr.mxu0 0.0
    %3898 = vmatpush1.msra.mxu0 0.0
    %3899 = vmatprep.subr.mxu0 0.0
    %3900 = vmatpush1.msra.mxu0 0.0
    %3901 = vmatprep.subr.mxu0 0.0
    %3902 = vmatpush1.msra.mxu0 0.0
    %3903 = vmatprep.subr.mxu0 0.0
    %3904 = vmatpush1.msra.mxu0 0.0
    %3905 = vmatprep.subr.mxu0 0.0
    %3906 = vmatpush1.msra.mxu0 0.0
    %3907 = vmatprep.subr.mxu0 0.0
    %3908 = vmatpush1.msra.mxu0 0.0
    %3909 = vmatprep.subr.mxu0 0.0
    %3910 = vmatpush1.msra.mxu0 0.0
    %3911 = vmatprep.subr.mxu0 0.0
    %3912 = vmatpush1.msra.mxu0 0.0
    %3913 = vmatprep.subr.mxu0 0.0
    %3914 = vmatpush1.msra.mxu0 0.0
    %3915 = vmatprep.subr.mxu0 0.0
    %3916 = vmatpush1.msra.mxu0 0.0
    %3917 = vmatprep.subr.mxu0 0.0
    %3918 = vmatpush1.msra.mxu0 0.0
    %3919 = vmatprep.subr.mxu0 0.0
    %3920 = vmatpush1.msra.mxu0 0.0
    %3921 = vmatprep.subr.mxu0 0.0
    %3922 = vmatpush1.msra.mxu0 0.0
    %3923 = vmatprep.subr.mxu0 0.0
    %3924 = vmatpush1.msra.mxu0 0.0
    %3925 = vmatprep.subr.mxu0 0.0
    %3926 = vmatpush1.msra.mxu0 0.0
    %3927 = vmatprep.subr.mxu0 0.0
    %3928 = vmatpush1.msra.mxu0 0.0
    %3929 = vmatprep.subr.mxu0 0.0
    %3930 = vmatpush1.msra.mxu0 0.0
    %3931 = vmatprep.subr.mxu0 0.0
    %3932 = vmatpush1.msra.mxu0 0.0
    %3933 = vmatprep.subr.mxu0 0.0
    %3934 = vmatpush1.msra.mxu0 0.0
    %3935 = vmatprep.subr.mxu0 0.0
    %3936 = vmatpush1.msra.mxu0 0.0
    %3937 = vmatprep.subr.mxu0 0.0
    %3938 = vmatpush1.msra.mxu0 0.0
    %3939 = vmatprep.mubr.f32.mxu0 0.0
    %3940 = vmatmul.mubr.f32.gmra.mrb[0].mxu0 %v3870
    %v3941 = vpop.f32.mrb[0].mxu0
    %v3942 = vadd.f32 0.0, %v3941
    %v3943 = vpop.f32.mrb[0].mxu0
    %v3944 = vadd.f32 0.0, %v3943
    %3945 = vmatprep.mubr.f32.mxu0 0.0
    %3946 = vmatmul.mubr.f32.gmra.mrb[0].mxu0 %v3873
    %v3947 = vpop.f32.mrb[0].mxu0
    %v3948 = vadd.f32 0.0, %v3947
    %v3949 = vpop.f32.mrb[0].mxu0
    %v3950 = vadd.f32 0.0, %v3949
    %3951 = vdwg.mxu0
    %3952 = vmatprep.subr.mxu0 %v3840
    %3953 = vmatpush1.msra.mxu0 %v3839
    %3954 = vmatprep.subr.mxu0 %v3856
    %3955 = vmatpush1.msra.mxu0 %v3855
    %3956 = vmatprep.subr.mxu0 0.0
    %3957 = vmatpush1.msra.mxu0 0.0
    %3958 = vmatprep.subr.mxu0 0.0
    %3959 = vmatpush1.msra.mxu0 0.0
    %3960 = vmatprep.subr.mxu0 0.0
    %3961 = vmatpush1.msra.mxu0 0.0
    %3962 = vmatprep.subr.mxu0 0.0
    %3963 = vmatpush1.msra.mxu0 0.0
    %3964 = vmatprep.subr.mxu0 0.0
    %3965 = vmatpush1.msra.mxu0 0.0
    %3966 = vmatprep.subr.mxu0 0.0
    %3967 = vmatpush1.msra.mxu0 0.0
    %3968 = vmatprep.subr.mxu0 0.0
    %3969 = vmatpush1.msra.mxu0 0.0
    %3970 = vmatprep.subr.mxu0 0.0
    %3971 = vmatpush1.msra.mxu0 0.0
    %3972 = vmatprep.subr.mxu0 0.0
    %3973 = vmatpush1.msra.mxu0 0.0
    %3974 = vmatprep.subr.mxu0 0.0
    %3975 = vmatpush1.msra.mxu0 0.0
    %3976 = vmatprep.subr.mxu0 0.0
    %3977 = vmatpush1.msra.mxu0 0.0
    %3978 = vmatprep.subr.mxu0 0.0
    %3979 = vmatpush1.msra.mxu0 0.0
    %3980 = vmatprep.subr.mxu0 0.0
    %3981 = vmatpush1.msra.mxu0 0.0
    %3982 = vmatprep.subr.mxu0 0.0
    %3983 = vmatpush1.msra.mxu0 0.0
    %3984 = vmatprep.subr.mxu0 0.0
    %3985 = vmatpush1.msra.mxu0 0.0
    %3986 = vmatprep.subr.mxu0 0.0
    %3987 = vmatpush1.msra.mxu0 0.0
    %3988 = vmatprep.subr.mxu0 0.0
    %3989 = vmatpush1.msra.mxu0 0.0
    %3990 = vmatprep.subr.mxu0 0.0
    %3991 = vmatpush1.msra.mxu0 0.0
    %3992 = vmatprep.subr.mxu0 0.0
    %3993 = vmatpush1.msra.mxu0 0.0
    %3994 = vmatprep.subr.mxu0 0.0
    %3995 = vmatpush1.msra.mxu0 0.0
    %3996 = vmatprep.subr.mxu0 0.0
    %3997 = vmatpush1.msra.mxu0 0.0
    %3998 = vmatprep.subr.mxu0 0.0
    %3999 = vmatpush1.msra.mxu0 0.0
    %4000 = vmatprep.subr.mxu0 0.0
    %4001 = vmatpush1.msra.mxu0 0.0
    %4002 = vmatprep.subr.mxu0 0.0
    %4003 = vmatpush1.msra.mxu0 0.0
    %4004 = vmatprep.subr.mxu0 0.0
    %4005 = vmatpush1.msra.mxu0 0.0
    %4006 = vmatprep.subr.mxu0 0.0
    %4007 = vmatpush1.msra.mxu0 0.0
    %4008 = vmatprep.subr.mxu0 0.0
    %4009 = vmatpush1.msra.mxu0 0.0
    %4010 = vmatprep.subr.mxu0 0.0
    %4011 = vmatpush1.msra.mxu0 0.0
    %4012 = vmatprep.subr.mxu0 0.0
    %4013 = vmatpush1.msra.mxu0 0.0
    %4014 = vmatprep.subr.mxu0 0.0
    %4015 = vmatpush1.msra.mxu0 0.0
    %4016 = vmatprep.mubr.f32.mxu0 0.0
    %4017 = vmatmul.mubr.f32.gmra.mrb[0].mxu0 %v3870
    %v4018 = vpop.f32.mrb[0].mxu0
    %v4019 = vadd.f32 0.0, %v4018
    %v4020 = vpop.f32.mrb[0].mxu0
    %v4021 = vadd.f32 0.0, %v4020
    %4022 = vmatprep.mubr.f32.mxu0 0.0
    %4023 = vmatmul.mubr.f32.gmra.mrb[0].mxu0 %v3873
    %v4024 = vpop.f32.mrb[0].mxu0
    %v4025 = vadd.f32 0.0, %v4024
    %v4026 = vpop.f32.mrb[0].mxu0
    %v4027 = vadd.f32 0.0, %v4026
    %4028 = vdwg.mxu0
    %4029 = vmatprep.subr.mxu0 %v3842
    %4030 = vmatpush1.msra.mxu0 %v3841
    %4031 = vmatprep.subr.mxu0 %v3858
    %4032 = vmatpush1.msra.mxu0 %v3857
    %4033 = vmatprep.subr.mxu0 0.0
    %4034 = vmatpush1.msra.mxu0 0.0
    %4035 = vmatprep.subr.mxu0 0.0
    %4036 = vmatpush1.msra.mxu0 0.0
    %4037 = vmatprep.subr.mxu0 0.0
    %4038 = vmatpush1.msra.mxu0 0.0
    %4039 = vmatprep.subr.mxu0 0.0
    %4040 = vmatpush1.msra.mxu0 0.0
    %4041 = vmatprep.subr.mxu0 0.0
    %4042 = vmatpush1.msra.mxu0 0.0
    %4043 = vmatprep.subr.mxu0 0.0
    %4044 = vmatpush1.msra.mxu0 0.0
    %4045 = vmatprep.subr.mxu0 0.0
    %4046 = vmatpush1.msra.mxu0 0.0
    %4047 = vmatprep.subr.mxu0 0.0
    %4048 = vmatpush1.msra.mxu0 0.0
    %4049 = vmatprep.subr.mxu0 0.0
    %4050 = vmatpush1.msra.mxu0 0.0
    %4051 = vmatprep.subr.mxu0 0.0
    %4052 = vmatpush1.msra.mxu0 0.0
    %4053 = vmatprep.subr.mxu0 0.0
    %4054 = vmatpush1.msra.mxu0 0.0
    %4055 = vmatprep.subr.mxu0 0.0
    %4056 = vmatpush1.msra.mxu0 0.0
    %4057 = vmatprep.subr.mxu0 0.0
    %4058 = vmatpush1.msra.mxu0 0.0
    %4059 = vmatprep.subr.mxu0 0.0
    %4060 = vmatpush1.msra.mxu0 0.0
    %4061 = vmatprep.subr.mxu0 0.0
    %4062 = vmatpush1.msra.mxu0 0.0
    %4063 = vmatprep.subr.mxu0 0.0
    %4064 = vmatpush1.msra.mxu0 0.0
    %4065 = vmatprep.subr.mxu0 0.0
    %4066 = vmatpush1.msra.mxu0 0.0
    %4067 = vmatprep.subr.mxu0 0.0
    %4068 = vmatpush1.msra.mxu0 0.0
    %4069 = vmatprep.subr.mxu0 0.0
    %4070 = vmatpush1.msra.mxu0 0.0
    %4071 = vmatprep.subr.mxu0 0.0
    %4072 = vmatpush1.msra.mxu0 0.0
    %4073 = vmatprep.subr.mxu0 0.0
    %4074 = vmatpush1.msra.mxu0 0.0
    %4075 = vmatprep.subr.mxu0 0.0
    %4076 = vmatpush1.msra.mxu0 0.0
    %4077 = vmatprep.subr.mxu0 0.0
    %4078 = vmatpush1.msra.mxu0 0.0
    %4079 = vmatprep.subr.mxu0 0.0
    %4080 = vmatpush1.msra.mxu0 0.0
    %4081 = vmatprep.subr.mxu0 0.0
    %4082 = vmatpush1.msra.mxu0 0.0
    %4083 = vmatprep.subr.mxu0 0.0
    %4084 = vmatpush1.msra.mxu0 0.0
    %4085 = vmatprep.subr.mxu0 0.0
    %4086 = vmatpush1.msra.mxu0 0.0
    %4087 = vmatprep.subr.mxu0 0.0
    %4088 = vmatpush1.msra.mxu0 0.0
    %4089 = vmatprep.subr.mxu0 0.0
    %4090 = vmatpush1.msra.mxu0 0.0
    %4091 = vmatprep.subr.mxu0 0.0
    %4092 = vmatpush1.msra.mxu0 0.0
    %4093 = vmatprep.mubr.f32.mxu0 0.0
    %4094 = vmatmul.mubr.f32.gmra.mrb[0].mxu0 %v3870
    %v4095 = vpop.f32.mrb[0].mxu0
    %v4096 = vadd.f32 0.0, %v4095
    %v4097 = vpop.f32.mrb[0].mxu0
    %v4098 = vadd.f32 0.0, %v4097
    %4099 = vmatprep.mubr.f32.mxu0 0.0
    %4100 = vmatmul.mubr.f32.gmra.mrb[0].mxu0 %v3873
    %v4101 = vpop.f32.mrb[0].mxu0
    %v4102 = vadd.f32 0.0, %v4101
    %v4103 = vpop.f32.mrb[0].mxu0
    %v4104 = vadd.f32 0.0, %v4103
    %4105 = vdwg.mxu0
    %4106 = vmatprep.subr.mxu0 %v3844
    %4107 = vmatpush1.msra.mxu0 %v3843
    %4108 = vmatprep.subr.mxu0 %v3860
    %4109 = vmatpush1.msra.mxu0 %v3859
    %4110 = vmatprep.subr.mxu0 0.0
    %4111 = vmatpush1.msra.mxu0 0.0
    %4112 = vmatprep.subr.mxu0 0.0
    %4113 = vmatpush1.msra.mxu0 0.0
    %4114 = vmatprep.subr.mxu0 0.0
    %4115 = vmatpush1.msra.mxu0 0.0
    %4116 = vmatprep.subr.mxu0 0.0
    %4117 = vmatpush1.msra.mxu0 0.0
    %4118 = vmatprep.subr.mxu0 0.0
    %4119 = vmatpush1.msra.mxu0 0.0
    %4120 = vmatprep.subr.mxu0 0.0
    %4121 = vmatpush1.msra.mxu0 0.0
    %4122 = vmatprep.subr.mxu0 0.0
    %4123 = vmatpush1.msra.mxu0 0.0
    %4124 = vmatprep.subr.mxu0 0.0
    %4125 = vmatpush1.msra.mxu0 0.0
    %4126 = vmatprep.subr.mxu0 0.0
    %4127 = vmatpush1.msra.mxu0 0.0
    %4128 = vmatprep.subr.mxu0 0.0
    %4129 = vmatpush1.msra.mxu0 0.0
    %4130 = vmatprep.subr.mxu0 0.0
    %4131 = vmatpush1.msra.mxu0 0.0
    %4132 = vmatprep.subr.mxu0 0.0
    %4133 = vmatpush1.msra.mxu0 0.0
    %4134 = vmatprep.subr.mxu0 0.0
    %4135 = vmatpush1.msra.mxu0 0.0
    %4136 = vmatprep.subr.mxu0 0.0
    %4137 = vmatpush1.msra.mxu0 0.0
    %4138 = vmatprep.subr.mxu0 0.0
    %4139 = vmatpush1.msra.mxu0 0.0
    %4140 = vmatprep.subr.mxu0 0.0
    %4141 = vmatpush1.msra.mxu0 0.0
    %4142 = vmatprep.subr.mxu0 0.0
    %4143 = vmatpush1.msra.mxu0 0.0
    %4144 = vmatprep.subr.mxu0 0.0
    %4145 = vmatpush1.msra.mxu0 0.0
    %4146 = vmatprep.subr.mxu0 0.0
    %4147 = vmatpush1.msra.mxu0 0.0
    %4148 = vmatprep.subr.mxu0 0.0
    %4149 = vmatpush1.msra.mxu0 0.0
    %4150 = vmatprep.subr.mxu0 0.0
    %4151 = vmatpush1.msra.mxu0 0.0
    %4152 = vmatprep.subr.mxu0 0.0
    %4153 = vmatpush1.msra.mxu0 0.0
    %4154 = vmatprep.subr.mxu0 0.0
    %4155 = vmatpush1.msra.mxu0 0.0
    %4156 = vmatprep.subr.mxu0 0.0
    %4157 = vmatpush1.msra.mxu0 0.0
    %4158 = vmatprep.subr.mxu0 0.0
    %4159 = vmatpush1.msra.mxu0 0.0
    %4160 = vmatprep.subr.mxu0 0.0
    %4161 = vmatpush1.msra.mxu0 0.0
    %4162 = vmatprep.subr.mxu0 0.0
    %4163 = vmatpush1.msra.mxu0 0.0
    %4164 = vmatprep.subr.mxu0 0.0
    %4165 = vmatpush1.msra.mxu0 0.0
    %4166 = vmatprep.subr.mxu0 0.0
    %4167 = vmatpush1.msra.mxu0 0.0
    %4168 = vmatprep.subr.mxu0 0.0
    %4169 = vmatpush1.msra.mxu0 0.0
    %4170 = vmatprep.mubr.f32.mxu0 0.0
    %4171 = vmatmul.mubr.f32.gmra.mrb[0].mxu0 %v3870
    %v4172 = vpop.f32.mrb[0].mxu0
    %v4173 = vadd.f32 0.0, %v4172
    %v4174 = vpop.f32.mrb[0].mxu0
    %v4175 = vadd.f32 0.0, %v4174
    %4176 = vmatprep.mubr.f32.mxu0 0.0
    %4177 = vmatmul.mubr.f32.gmra.mrb[0].mxu0 %v3873
    %v4178 = vpop.f32.mrb[0].mxu0
    %v4179 = vadd.f32 0.0, %v4178
    %v4180 = vpop.f32.mrb[0].mxu0
    %v4181 = vadd.f32 0.0, %v4180
    %4182 = vdwg.mxu0
    %4183 = vmatprep.subr.mxu0 %v3846
    %4184 = vmatpush1.msra.mxu0 %v3845
    %4185 = vmatprep.subr.mxu0 %v3862
    %4186 = vmatpush1.msra.mxu0 %v3861
    %4187 = vmatprep.subr.mxu0 0.0
    %4188 = vmatpush1.msra.mxu0 0.0
    %4189 = vmatprep.subr.mxu0 0.0
    %4190 = vmatpush1.msra.mxu0 0.0
    %4191 = vmatprep.subr.mxu0 0.0
    %4192 = vmatpush1.msra.mxu0 0.0
    %4193 = vmatprep.subr.mxu0 0.0
    %4194 = vmatpush1.msra.mxu0 0.0
    %4195 = vmatprep.subr.mxu0 0.0
    %4196 = vmatpush1.msra.mxu0 0.0
    %4197 = vmatprep.subr.mxu0 0.0
    %4198 = vmatpush1.msra.mxu0 0.0
    %4199 = vmatprep.subr.mxu0 0.0
    %4200 = vmatpush1.msra.mxu0 0.0
    %4201 = vmatprep.subr.mxu0 0.0
    %4202 = vmatpush1.msra.mxu0 0.0
    %4203 = vmatprep.subr.mxu0 0.0
    %4204 = vmatpush1.msra.mxu0 0.0
    %4205 = vmatprep.subr.mxu0 0.0
    %4206 = vmatpush1.msra.mxu0 0.0
    %4207 = vmatprep.subr.mxu0 0.0
    %4208 = vmatpush1.msra.mxu0 0.0
    %4209 = vmatprep.subr.mxu0 0.0
    %4210 = vmatpush1.msra.mxu0 0.0
    %4211 = vmatprep.subr.mxu0 0.0
    %4212 = vmatpush1.msra.mxu0 0.0
    %4213 = vmatprep.subr.mxu0 0.0
    %4214 = vmatpush1.msra.mxu0 0.0
    %4215 = vmatprep.subr.mxu0 0.0
    %4216 = vmatpush1.msra.mxu0 0.0
    %4217 = vmatprep.subr.mxu0 0.0
    %4218 = vmatpush1.msra.mxu0 0.0
    %4219 = vmatprep.subr.mxu0 0.0
    %4220 = vmatpush1.msra.mxu0 0.0
    %4221 = vmatprep.subr.mxu0 0.0
    %4222 = vmatpush1.msra.mxu0 0.0
    %4223 = vmatprep.subr.mxu0 0.0
    %4224 = vmatpush1.msra.mxu0 0.0
    %4225 = vmatprep.subr.mxu0 0.0
    %4226 = vmatpush1.msra.mxu0 0.0
    %4227 = vmatprep.subr.mxu0 0.0
    %4228 = vmatpush1.msra.mxu0 0.0
    %4229 = vmatprep.subr.mxu0 0.0
    %4230 = vmatpush1.msra.mxu0 0.0
    %4231 = vmatprep.subr.mxu0 0.0
    %4232 = vmatpush1.msra.mxu0 0.0
    %4233 = vmatprep.subr.mxu0 0.0
    %4234 = vmatpush1.msra.mxu0 0.0
    %4235 = vmatprep.subr.mxu0 0.0
    %4236 = vmatpush1.msra.mxu0 0.0
    %4237 = vmatprep.subr.mxu0 0.0
    %4238 = vmatpush1.msra.mxu0 0.0
    %4239 = vmatprep.subr.mxu0 0.0
    %4240 = vmatpush1.msra.mxu0 0.0
    %4241 = vmatprep.subr.mxu0 0.0
    %4242 = vmatpush1.msra.mxu0 0.0
    %4243 = vmatprep.subr.mxu0 0.0
    %4244 = vmatpush1.msra.mxu0 0.0
    %4245 = vmatprep.subr.mxu0 0.0
    %4246 = vmatpush1.msra.mxu0 0.0
    %4247 = vmatprep.mubr.f32.mxu0 0.0
    %4248 = vmatmul.mubr.f32.gmra.mrb[0].mxu0 %v3870
    %v4249 = vpop.f32.mrb[0].mxu0
    %v4250 = vadd.f32 0.0, %v4249
    %v4251 = vpop.f32.mrb[0].mxu0
    %v4252 = vadd.f32 0.0, %v4251
    %4253 = vmatprep.mubr.f32.mxu0 0.0
    %4254 = vmatmul.mubr.f32.gmra.mrb[0].mxu0 %v3873
    %v4255 = vpop.f32.mrb[0].mxu0
    %v4256 = vadd.f32 0.0, %v4255
    %v4257 = vpop.f32.mrb[0].mxu0
    %v4258 = vadd.f32 0.0, %v4257
    %4259 = vdwg.mxu0
    %4260 = vmatprep.subr.mxu0 %v3848
    %4261 = vmatpush1.msra.mxu0 %v3847
    %4262 = vmatprep.subr.mxu0 %v3864
    %4263 = vmatpush1.msra.mxu0 %v3863
    %4264 = vmatprep.subr.mxu0 0.0
    %4265 = vmatpush1.msra.mxu0 0.0
    %4266 = vmatprep.subr.mxu0 0.0
    %4267 = vmatpush1.msra.mxu0 0.0
    %4268 = vmatprep.subr.mxu0 0.0
    %4269 = vmatpush1.msra.mxu0 0.0
    %4270 = vmatprep.subr.mxu0 0.0
    %4271 = vmatpush1.msra.mxu0 0.0
    %4272 = vmatprep.subr.mxu0 0.0
    %4273 = vmatpush1.msra.mxu0 0.0
    %4274 = vmatprep.subr.mxu0 0.0
    %4275 = vmatpush1.msra.mxu0 0.0
    %4276 = vmatprep.subr.mxu0 0.0
    %4277 = vmatpush1.msra.mxu0 0.0
    %4278 = vmatprep.subr.mxu0 0.0
    %4279 = vmatpush1.msra.mxu0 0.0
    %4280 = vmatprep.subr.mxu0 0.0
    %4281 = vmatpush1.msra.mxu0 0.0
    %4282 = vmatprep.subr.mxu0 0.0
    %4283 = vmatpush1.msra.mxu0 0.0
    %4284 = vmatprep.subr.mxu0 0.0
    %4285 = vmatpush1.msra.mxu0 0.0
    %4286 = vmatprep.subr.mxu0 0.0
    %4287 = vmatpush1.msra.mxu0 0.0
    %4288 = vmatprep.subr.mxu0 0.0
    %4289 = vmatpush1.msra.mxu0 0.0
    %4290 = vmatprep.subr.mxu0 0.0
    %4291 = vmatpush1.msra.mxu0 0.0
    %4292 = vmatprep.subr.mxu0 0.0
    %4293 = vmatpush1.msra.mxu0 0.0
    %4294 = vmatprep.subr.mxu0 0.0
    %4295 = vmatpush1.msra.mxu0 0.0
    %4296 = vmatprep.subr.mxu0 0.0
    %4297 = vmatpush1.msra.mxu0 0.0
    %4298 = vmatprep.subr.mxu0 0.0
    %4299 = vmatpush1.msra.mxu0 0.0
    %4300 = vmatprep.subr.mxu0 0.0
    %4301 = vmatpush1.msra.mxu0 0.0
    %4302 = vmatprep.subr.mxu0 0.0
    %4303 = vmatpush1.msra.mxu0 0.0
    %4304 = vmatprep.subr.mxu0 0.0
    %4305 = vmatpush1.msra.mxu0 0.0
    %4306 = vmatprep.subr.mxu0 0.0
    %4307 = vmatpush1.msra.mxu0 0.0
    %4308 = vmatprep.subr.mxu0 0.0
    %4309 = vmatpush1.msra.mxu0 0.0
    %4310 = vmatprep.subr.mxu0 0.0
    %4311 = vmatpush1.msra.mxu0 0.0
    %4312 = vmatprep.subr.mxu0 0.0
    %4313 = vmatpush1.msra.mxu0 0.0
    %4314 = vmatprep.subr.mxu0 0.0
    %4315 = vmatpush1.msra.mxu0 0.0
    %4316 = vmatprep.subr.mxu0 0.0
    %4317 = vmatpush1.msra.mxu0 0.0
    %4318 = vmatprep.subr.mxu0 0.0
    %4319 = vmatpush1.msra.mxu0 0.0
    %4320 = vmatprep.subr.mxu0 0.0
    %4321 = vmatpush1.msra.mxu0 0.0
    %4322 = vmatprep.subr.mxu0 0.0
    %4323 = vmatpush1.msra.mxu0 0.0
    %4324 = vmatprep.mubr.f32.mxu0 0.0
    %4325 = vmatmul.mubr.f32.gmra.mrb[0].mxu0 %v3870
    %v4326 = vpop.f32.mrb[0].mxu0
    %v4327 = vadd.f32 0.0, %v4326
    %v4328 = vpop.f32.mrb[0].mxu0
    %v4329 = vadd.f32 0.0, %v4328
    %4330 = vmatprep.mubr.f32.mxu0 0.0
    %4331 = vmatmul.mubr.f32.gmra.mrb[0].mxu0 %v3873
    %v4332 = vpop.f32.mrb[0].mxu0
    %v4333 = vadd.f32 0.0, %v4332
    %v4334 = vpop.f32.mrb[0].mxu0
    %v4335 = vadd.f32 0.0, %v4334
    %4336 = vdwg.mxu0
    %4337 = vmatprep.subr.mxu0 %v3850
    %4338 = vmatpush1.msra.mxu0 %v3849
    %4339 = vmatprep.subr.mxu0 %v3866
    %4340 = vmatpush1.msra.mxu0 %v3865
    %4341 = vmatprep.subr.mxu0 0.0
    %4342 = vmatpush1.msra.mxu0 0.0
    %4343 = vmatprep.subr.mxu0 0.0
    %4344 = vmatpush1.msra.mxu0 0.0
    %4345 = vmatprep.subr.mxu0 0.0
    %4346 = vmatpush1.msra.mxu0 0.0
    %4347 = vmatprep.subr.mxu0 0.0
    %4348 = vmatpush1.msra.mxu0 0.0
    %4349 = vmatprep.subr.mxu0 0.0
    %4350 = vmatpush1.msra.mxu0 0.0
    %4351 = vmatprep.subr.mxu0 0.0
    %4352 = vmatpush1.msra.mxu0 0.0
    %4353 = vmatprep.subr.mxu0 0.0
    %4354 = vmatpush1.msra.mxu0 0.0
    %4355 = vmatprep.subr.mxu0 0.0
    %4356 = vmatpush1.msra.mxu0 0.0
    %4357 = vmatprep.subr.mxu0 0.0
    %4358 = vmatpush1.msra.mxu0 0.0
    %4359 = vmatprep.subr.mxu0 0.0
    %4360 = vmatpush1.msra.mxu0 0.0
    %4361 = vmatprep.subr.mxu0 0.0
    %4362 = vmatpush1.msra.mxu0 0.0
    %4363 = vmatprep.subr.mxu0 0.0
    %4364 = vmatpush1.msra.mxu0 0.0
    %4365 = vmatprep.subr.mxu0 0.0
    %4366 = vmatpush1.msra.mxu0 0.0
    %4367 = vmatprep.subr.mxu0 0.0
    %4368 = vmatpush1.msra.mxu0 0.0
    %4369 = vmatprep.subr.mxu0 0.0
    %4370 = vmatpush1.msra.mxu0 0.0
    %4371 = vmatprep.subr.mxu0 0.0
    %4372 = vmatpush1.msra.mxu0 0.0
    %4373 = vmatprep.subr.mxu0 0.0
    %4374 = vmatpush1.msra.mxu0 0.0
    %4375 = vmatprep.subr.mxu0 0.0
    %4376 = vmatpush1.msra.mxu0 0.0
    %4377 = vmatprep.subr.mxu0 0.0
    %4378 = vmatpush1.msra.mxu0 0.0
    %4379 = vmatprep.subr.mxu0 0.0
    %4380 = vmatpush1.msra.mxu0 0.0
    %4381 = vmatprep.subr.mxu0 0.0
    %4382 = vmatpush1.msra.mxu0 0.0
    %4383 = vmatprep.subr.mxu0 0.0
    %4384 = vmatpush1.msra.mxu0 0.0
    %4385 = vmatprep.subr.mxu0 0.0
    %4386 = vmatpush1.msra.mxu0 0.0
    %4387 = vmatprep.subr.mxu0 0.0
    %4388 = vmatpush1.msra.mxu0 0.0
    %4389 = vmatprep.subr.mxu0 0.0
    %4390 = vmatpush1.msra.mxu0 0.0
    %4391 = vmatprep.subr.mxu0 0.0
    %4392 = vmatpush1.msra.mxu0 0.0
    %4393 = vmatprep.subr.mxu0 0.0
    %4394 = vmatpush1.msra.mxu0 0.0
    %4395 = vmatprep.subr.mxu0 0.0
    %4396 = vmatpush1.msra.mxu0 0.0
    %4397 = vmatprep.subr.mxu0 0.0
    %4398 = vmatpush1.msra.mxu0 0.0
    %4399 = vmatprep.subr.mxu0 0.0
    %4400 = vmatpush1.msra.mxu0 0.0
    %4401 = vmatprep.mubr.f32.mxu0 0.0
    %4402 = vmatmul.mubr.f32.gmra.mrb[0].mxu0 %v3870
    %v4403 = vpop.f32.mrb[0].mxu0
    %v4404 = vadd.f32 0.0, %v4403
    %v4405 = vpop.f32.mrb[0].mxu0
    %v4406 = vadd.f32 0.0, %v4405
    %4407 = vmatprep.mubr.f32.mxu0 0.0
    %4408 = vmatmul.mubr.f32.gmra.mrb[0].mxu0 %v3873
    %v4409 = vpop.f32.mrb[0].mxu0
    %v4410 = vadd.f32 0.0, %v4409
    %v4411 = vpop.f32.mrb[0].mxu0
    %v4412 = vadd.f32 0.0, %v4411
    %4413 = vdwg.mxu0
    %4414 = vmatprep.subr.mxu0 %v3852
    %4415 = vmatpush1.msra.mxu0 %v3851
    %4416 = vmatprep.subr.mxu0 %v3868
    %4417 = vmatpush1.msra.mxu0 %v3867
    %4418 = vmatprep.subr.mxu0 0.0
    %4419 = vmatpush1.msra.mxu0 0.0
    %4420 = vmatprep.subr.mxu0 0.0
    %4421 = vmatpush1.msra.mxu0 0.0
    %4422 = vmatprep.subr.mxu0 0.0
    %4423 = vmatpush1.msra.mxu0 0.0
    %4424 = vmatprep.subr.mxu0 0.0
    %4425 = vmatpush1.msra.mxu0 0.0
    %4426 = vmatprep.subr.mxu0 0.0
    %4427 = vmatpush1.msra.mxu0 0.0
    %4428 = vmatprep.subr.mxu0 0.0
    %4429 = vmatpush1.msra.mxu0 0.0
    %4430 = vmatprep.subr.mxu0 0.0
    %4431 = vmatpush1.msra.mxu0 0.0
    %4432 = vmatprep.subr.mxu0 0.0
    %4433 = vmatpush1.msra.mxu0 0.0
    %4434 = vmatprep.subr.mxu0 0.0
    %4435 = vmatpush1.msra.mxu0 0.0
    %4436 = vmatprep.subr.mxu0 0.0
    %4437 = vmatpush1.msra.mxu0 0.0
    %4438 = vmatprep.subr.mxu0 0.0
    %4439 = vmatpush1.msra.mxu0 0.0
    %4440 = vmatprep.subr.mxu0 0.0
    %4441 = vmatpush1.msra.mxu0 0.0
    %4442 = vmatprep.subr.mxu0 0.0
    %4443 = vmatpush1.msra.mxu0 0.0
    %4444 = vmatprep.subr.mxu0 0.0
    %4445 = vmatpush1.msra.mxu0 0.0
    %4446 = vmatprep.subr.mxu0 0.0
    %4447 = vmatpush1.msra.mxu0 0.0
    %4448 = vmatprep.subr.mxu0 0.0
    %4449 = vmatpush1.msra.mxu0 0.0
    %4450 = vmatprep.subr.mxu0 0.0
    %4451 = vmatpush1.msra.mxu0 0.0
    %4452 = vmatprep.subr.mxu0 0.0
    %4453 = vmatpush1.msra.mxu0 0.0
    %4454 = vmatprep.subr.mxu0 0.0
    %4455 = vmatpush1.msra.mxu0 0.0
    %4456 = vmatprep.subr.mxu0 0.0
    %4457 = vmatpush1.msra.mxu0 0.0
    %4458 = vmatprep.subr.mxu0 0.0
    %4459 = vmatpush1.msra.mxu0 0.0
    %4460 = vmatprep.subr.mxu0 0.0
    %4461 = vmatpush1.msra.mxu0 0.0
    %4462 = vmatprep.subr.mxu0 0.0
    %4463 = vmatpush1.msra.mxu0 0.0
    %4464 = vmatprep.subr.mxu0 0.0
    %4465 = vmatpush1.msra.mxu0 0.0
    %4466 = vmatprep.subr.mxu0 0.0
    %4467 = vmatpush1.msra.mxu0 0.0
    %4468 = vmatprep.subr.mxu0 0.0
    %4469 = vmatpush1.msra.mxu0 0.0
    %4470 = vmatprep.subr.mxu0 0.0
    %4471 = vmatpush1.msra.mxu0 0.0
    %4472 = vmatprep.subr.mxu0 0.0
    %4473 = vmatpush1.msra.mxu0 0.0
    %4474 = vmatprep.subr.mxu0 0.0
    %4475 = vmatpush1.msra.mxu0 0.0
    %4476 = vmatprep.subr.mxu0 0.0
    %4477 = vmatpush1.msra.mxu0 0.0
    %4478 = vmatprep.mubr.f32.mxu0 0.0
    %4479 = vmatmul.mubr.f32.gmra.mrb[0].mxu0 %v3870
    %v4480 = vpop.f32.mrb[0].mxu0
    %v4481 = vadd.f32 0.0, %v4480
    %v4482 = vpop.f32.mrb[0].mxu0
    %v4483 = vadd.f32 0.0, %v4482
    %4484 = vmatprep.mubr.f32.mxu0 0.0
    %4485 = vmatmul.mubr.f32.gmra.mrb[0].mxu0 %v3873
    %v4486 = vpop.f32.mrb[0].mxu0
    %v4487 = vadd.f32 0.0, %v4486
    %v4488 = vpop.f32.mrb[0].mxu0
    %v4489 = vadd.f32 0.0, %v4488
    %4490 = vdwg.mxu0
    %4491 = vmatprep.subr.mxu0 0.0
    %4492 = vmatpush1.msra.mxu0 %v62
    %4493 = vmatprep.subr.mxu0 0.0
    %4494 = vmatpush1.msra.mxu0 %v63
    %4495 = vmatprep.subr.mxu0 0.0
    %4496 = vmatpush1.msra.mxu0 %v64
    %4497 = vmatprep.subr.mxu0 0.0
    %4498 = vmatpush1.msra.mxu0 %v65
    %4499 = vmatprep.subr.mxu0 0.0
    %4500 = vmatpush1.msra.mxu0 %v66
    %4501 = vmatprep.subr.mxu0 0.0
    %4502 = vmatpush1.msra.mxu0 %v67
    %4503 = vmatprep.subr.mxu0 0.0
    %4504 = vmatpush1.msra.mxu0 %v68
    %4505 = vmatprep.subr.mxu0 0.0
    %4506 = vmatpush1.msra.mxu0 %v69
    %4507 = vmatprep.subr.mxu0 0.0
    %4508 = vmatpush1.msra.mxu0 %v70
    %4509 = vmatprep.subr.mxu0 0.0
    %4510 = vmatpush1.msra.mxu0 %v71
    %4511 = vmatprep.subr.mxu0 0.0
    %4512 = vmatpush1.msra.mxu0 %v72
    %4513 = vmatprep.subr.mxu0 0.0
    %4514 = vmatpush1.msra.mxu0 %v73
    %4515 = vmatprep.subr.mxu0 0.0
    %4516 = vmatpush1.msra.mxu0 %v74
    %4517 = vmatprep.subr.mxu0 0.0
    %4518 = vmatpush1.msra.mxu0 %v75
    %4519 = vmatprep.subr.mxu0 0.0
    %4520 = vmatpush1.msra.mxu0 %v76
    %4521 = vmatprep.subr.mxu0 0.0
    %4522 = vmatpush1.msra.mxu0 %v77
    %4523 = vmatprep.subr.mxu0 0.0
    %4524 = vmatpush1.msra.mxu0 %v78
    %4525 = vmatprep.subr.mxu0 0.0
    %4526 = vmatpush1.msra.mxu0 %v79
    %4527 = vmatprep.subr.mxu0 0.0
    %4528 = vmatpush1.msra.mxu0 %v80
    %4529 = vmatprep.subr.mxu0 0.0
    %4530 = vmatpush1.msra.mxu0 %v81
    %4531 = vmatprep.subr.mxu0 0.0
    %4532 = vmatpush1.msra.mxu0 %v82
    %4533 = vmatprep.subr.mxu0 0.0
    %4534 = vmatpush1.msra.mxu0 %v83
    %4535 = vmatprep.subr.mxu0 0.0
    %4536 = vmatpush1.msra.mxu0 %v84
    %4537 = vmatprep.subr.mxu0 0.0
    %4538 = vmatpush1.msra.mxu0 %v85
    %4539 = vmatprep.subr.mxu0 0.0
    %4540 = vmatpush1.msra.mxu0 %v86
    %4541 = vmatprep.subr.mxu0 0.0
    %4542 = vmatpush1.msra.mxu0 %v87
    %4543 = vmatprep.subr.mxu0 0.0
    %4544 = vmatpush1.msra.mxu0 %v88
    %4545 = vmatprep.subr.mxu0 0.0
    %4546 = vmatpush1.msra.mxu0 %v89
    %4547 = vmatprep.subr.mxu0 0.0
    %4548 = vmatpush1.msra.mxu0 %v90
    %4549 = vmatprep.subr.mxu0 0.0
    %4550 = vmatpush1.msra.mxu0 %v91
    %4551 = vmatprep.subr.mxu0 0.0
    %4552 = vmatpush1.msra.mxu0 %v92
    %4553 = vmatprep.subr.mxu0 0.0
    %4554 = vmatpush1.msra.mxu0 %v93
    %4555 = vmatprep.mubr.f32.mxu0 %v3944
    %4556 = vmatmul.mubr.f32.gmra.mrb[0].mxu0 %v3942
    %v4557 = vpop.f32.mrb[0].mxu0
    %v4558 = vadd.f32 0.0, %v4557
    %v4559 = vpop.f32.mrb[0].mxu0
    %4560 = vmatprep.mubr.f32.mxu0 %v3950
    %4561 = vmatmul.mubr.f32.gmra.mrb[0].mxu0 %v3948
    %v4562 = vpop.f32.mrb[0].mxu0
    %v4563 = vadd.f32 0.0, %v4562
    %v4564 = vpop.f32.mrb[0].mxu0
    %4565 = vdwg.mxu0
    %4566 = vmatprep.subr.mxu0 0.0
    %4567 = vmatpush1.msra.mxu0 %v94
    %4568 = vmatprep.subr.mxu0 0.0
    %4569 = vmatpush1.msra.mxu0 %v95
    %4570 = vmatprep.subr.mxu0 0.0
    %4571 = vmatpush1.msra.mxu0 %v96
    %4572 = vmatprep.subr.mxu0 0.0
    %4573 = vmatpush1.msra.mxu0 %v97
    %4574 = vmatprep.subr.mxu0 0.0
    %4575 = vmatpush1.msra.mxu0 %v98
    %4576 = vmatprep.subr.mxu0 0.0
    %4577 = vmatpush1.msra.mxu0 %v99
    %4578 = vmatprep.subr.mxu0 0.0
    %4579 = vmatpush1.msra.mxu0 %v100
    %4580 = vmatprep.subr.mxu0 0.0
    %4581 = vmatpush1.msra.mxu0 %v101
    %4582 = vmatprep.subr.mxu0 0.0
    %4583 = vmatpush1.msra.mxu0 %v102
    %4584 = vmatprep.subr.mxu0 0.0
    %4585 = vmatpush1.msra.mxu0 %v103
    %4586 = vmatprep.subr.mxu0 0.0
    %4587 = vmatpush1.msra.mxu0 %v104
    %4588 = vmatprep.subr.mxu0 0.0
    %4589 = vmatpush1.msra.mxu0 %v105
    %4590 = vmatprep.subr.mxu0 0.0
    %4591 = vmatpush1.msra.mxu0 %v106
    %4592 = vmatprep.subr.mxu0 0.0
    %4593 = vmatpush1.msra.mxu0 %v107
    %4594 = vmatprep.subr.mxu0 0.0
    %4595 = vmatpush1.msra.mxu0 %v108
    %4596 = vmatprep.subr.mxu0 0.0
    %4597 = vmatpush1.msra.mxu0 %v109
    %4598 = vmatprep.subr.mxu0 0.0
    %4599 = vmatpush1.msra.mxu0 %v110
    %4600 = vmatprep.subr.mxu0 0.0
    %4601 = vmatpush1.msra.mxu0 %v111
    %4602 = vmatprep.subr.mxu0 0.0
    %4603 = vmatpush1.msra.mxu0 %v112
    %4604 = vmatprep.subr.mxu0 0.0
    %4605 = vmatpush1.msra.mxu0 %v113
    %4606 = vmatprep.subr.mxu0 0.0
    %4607 = vmatpush1.msra.mxu0 %v114
    %4608 = vmatprep.subr.mxu0 0.0
    %4609 = vmatpush1.msra.mxu0 %v115
    %4610 = vmatprep.subr.mxu0 0.0
    %4611 = vmatpush1.msra.mxu0 %v116
    %4612 = vmatprep.subr.mxu0 0.0
    %4613 = vmatpush1.msra.mxu0 %v117
    %4614 = vmatprep.subr.mxu0 0.0
    %4615 = vmatpush1.msra.mxu0 %v118
    %4616 = vmatprep.subr.mxu0 0.0
    %4617 = vmatpush1.msra.mxu0 %v119
    %4618 = vmatprep.subr.mxu0 0.0
    %4619 = vmatpush1.msra.mxu0 %v120
    %4620 = vmatprep.subr.mxu0 0.0
    %4621 = vmatpush1.msra.mxu0 %v121
    %4622 = vmatprep.subr.mxu0 0.0
    %4623 = vmatpush1.msra.mxu0 %v122
    %4624 = vmatprep.subr.mxu0 0.0
    %4625 = vmatpush1.msra.mxu0 %v123
    %4626 = vmatprep.subr.mxu0 0.0
    %4627 = vmatpush1.msra.mxu0 %v124
    %4628 = vmatprep.subr.mxu0 0.0
    %4629 = vmatpush1.msra.mxu0 %v125
    %4630 = vmatprep.mubr.f32.mxu0 %v4021
    %4631 = vmatmul.mubr.f32.gmra.mrb[0].mxu0 %v4019
    %v4632 = vpop.f32.mrb[0].mxu0
    %v4633 = vadd.f32 %v4558, %v4632
    %v4634 = vpop.f32.mrb[0].mxu0
    %4635 = vmatprep.mubr.f32.mxu0 %v4027
    %4636 = vmatmul.mubr.f32.gmra.mrb[0].mxu0 %v4025
    %v4637 = vpop.f32.mrb[0].mxu0
    %v4638 = vadd.f32 %v4563, %v4637
    %v4639 = vpop.f32.mrb[0].mxu0
    %4640 = vdwg.mxu0
    %4641 = vmatprep.subr.mxu0 0.0
    %4642 = vmatpush1.msra.mxu0 %v126
    %4643 = vmatprep.subr.mxu0 0.0
    %4644 = vmatpush1.msra.mxu0 %v127
    %4645 = vmatprep.subr.mxu0 0.0
    %4646 = vmatpush1.msra.mxu0 %v128
    %4647 = vmatprep.subr.mxu0 0.0
    %4648 = vmatpush1.msra.mxu0 %v129
    %4649 = vmatprep.subr.mxu0 0.0
    %4650 = vmatpush1.msra.mxu0 %v130
    %4651 = vmatprep.subr.mxu0 0.0
    %4652 = vmatpush1.msra.mxu0 %v131
    %4653 = vmatprep.subr.mxu0 0.0
    %4654 = vmatpush1.msra.mxu0 %v132
    %4655 = vmatprep.subr.mxu0 0.0
    %4656 = vmatpush1.msra.mxu0 %v133
    %4657 = vmatprep.subr.mxu0 0.0
    %4658 = vmatpush1.msra.mxu0 %v134
    %4659 = vmatprep.subr.mxu0 0.0
    %4660 = vmatpush1.msra.mxu0 %v135
    %4661 = vmatprep.subr.mxu0 0.0
    %4662 = vmatpush1.msra.mxu0 %v136
    %4663 = vmatprep.subr.mxu0 0.0
    %4664 = vmatpush1.msra.mxu0 %v137
    %4665 = vmatprep.subr.mxu0 0.0
    %4666 = vmatpush1.msra.mxu0 %v138
    %4667 = vmatprep.subr.mxu0 0.0
    %4668 = vmatpush1.msra.mxu0 %v139
    %4669 = vmatprep.subr.mxu0 0.0
    %4670 = vmatpush1.msra.mxu0 %v140
    %4671 = vmatprep.subr.mxu0 0.0
    %4672 = vmatpush1.msra.mxu0 %v141
    %4673 = vmatprep.subr.mxu0 0.0
    %4674 = vmatpush1.msra.mxu0 %v142
    %4675 = vmatprep.subr.mxu0 0.0
    %4676 = vmatpush1.msra.mxu0 %v143
    %4677 = vmatprep.subr.mxu0 0.0
    %4678 = vmatpush1.msra.mxu0 %v144
    %4679 = vmatprep.subr.mxu0 0.0
    %4680 = vmatpush1.msra.mxu0 %v145
    %4681 = vmatprep.subr.mxu0 0.0
    %4682 = vmatpush1.msra.mxu0 %v146
    %4683 = vmatprep.subr.mxu0 0.0
    %4684 = vmatpush1.msra.mxu0 %v147
    %4685 = vmatprep.subr.mxu0 0.0
    %4686 = vmatpush1.msra.mxu0 %v148
    %4687 = vmatprep.subr.mxu0 0.0
    %4688 = vmatpush1.msra.mxu0 %v149
    %4689 = vmatprep.subr.mxu0 0.0
    %4690 = vmatpush1.msra.mxu0 %v150
    %4691 = vmatprep.subr.mxu0 0.0
    %4692 = vmatpush1.msra.mxu0 %v151
    %4693 = vmatprep.subr.mxu0 0.0
    %4694 = vmatpush1.msra.mxu0 %v152
    %4695 = vmatprep.subr.mxu0 0.0
    %4696 = vmatpush1.msra.mxu0 %v153
    %4697 = vmatprep.subr.mxu0 0.0
    %4698 = vmatpush1.msra.mxu0 %v154
    %4699 = vmatprep.subr.mxu0 0.0
    %4700 = vmatpush1.msra.mxu0 %v155
    %4701 = vmatprep.subr.mxu0 0.0
    %4702 = vmatpush1.msra.mxu0 %v156
    %4703 = vmatprep.subr.mxu0 0.0
    %4704 = vmatpush1.msra.mxu0 %v157
    %4705 = vmatprep.mubr.f32.mxu0 %v4098
    %4706 = vmatmul.mubr.f32.gmra.mrb[0].mxu0 %v4096
    %v4707 = vpop.f32.mrb[0].mxu0
    %v4708 = vadd.f32 %v4633, %v4707
    %v4709 = vpop.f32.mrb[0].mxu0
    %4710 = vmatprep.mubr.f32.mxu0 %v4104
    %4711 = vmatmul.mubr.f32.gmra.mrb[0].mxu0 %v4102
    %v4712 = vpop.f32.mrb[0].mxu0
    %v4713 = vadd.f32 %v4638, %v4712
    %v4714 = vpop.f32.mrb[0].mxu0
    %4715 = vdwg.mxu0
    %4716 = vmatprep.subr.mxu0 0.0
    %4717 = vmatpush1.msra.mxu0 %v158
    %4718 = vmatprep.subr.mxu0 0.0
    %4719 = vmatpush1.msra.mxu0 %v159
    %4720 = vmatprep.subr.mxu0 0.0
    %4721 = vmatpush1.msra.mxu0 %v160
    %4722 = vmatprep.subr.mxu0 0.0
    %4723 = vmatpush1.msra.mxu0 %v161
    %4724 = vmatprep.subr.mxu0 0.0
    %4725 = vmatpush1.msra.mxu0 %v162
    %4726 = vmatprep.subr.mxu0 0.0
    %4727 = vmatpush1.msra.mxu0 %v163
    %4728 = vmatprep.subr.mxu0 0.0
    %4729 = vmatpush1.msra.mxu0 %v164
    %4730 = vmatprep.subr.mxu0 0.0
    %4731 = vmatpush1.msra.mxu0 %v165
    %4732 = vmatprep.subr.mxu0 0.0
    %4733 = vmatpush1.msra.mxu0 %v166
    %4734 = vmatprep.subr.mxu0 0.0
    %4735 = vmatpush1.msra.mxu0 %v167
    %4736 = vmatprep.subr.mxu0 0.0
    %4737 = vmatpush1.msra.mxu0 %v168
    %4738 = vmatprep.subr.mxu0 0.0
    %4739 = vmatpush1.msra.mxu0 %v169
    %4740 = vmatprep.subr.mxu0 0.0
    %4741 = vmatpush1.msra.mxu0 %v170
    %4742 = vmatprep.subr.mxu0 0.0
    %4743 = vmatpush1.msra.mxu0 %v171
    %4744 = vmatprep.subr.mxu0 0.0
    %4745 = vmatpush1.msra.mxu0 %v172
    %4746 = vmatprep.subr.mxu0 0.0
    %4747 = vmatpush1.msra.mxu0 %v173
    %4748 = vmatprep.subr.mxu0 0.0
    %4749 = vmatpush1.msra.mxu0 %v174
    %4750 = vmatprep.subr.mxu0 0.0
    %4751 = vmatpush1.msra.mxu0 %v175
    %4752 = vmatprep.subr.mxu0 0.0
    %4753 = vmatpush1.msra.mxu0 %v176
    %4754 = vmatprep.subr.mxu0 0.0
    %4755 = vmatpush1.msra.mxu0 %v177
    %4756 = vmatprep.subr.mxu0 0.0
    %4757 = vmatpush1.msra.mxu0 %v178
    %4758 = vmatprep.subr.mxu0 0.0
    %4759 = vmatpush1.msra.mxu0 %v179
    %4760 = vmatprep.subr.mxu0 0.0
    %4761 = vmatpush1.msra.mxu0 %v180
    %4762 = vmatprep.subr.mxu0 0.0
    %4763 = vmatpush1.msra.mxu0 %v181
    %4764 = vmatprep.subr.mxu0 0.0
    %4765 = vmatpush1.msra.mxu0 %v182
    %4766 = vmatprep.subr.mxu0 0.0
    %4767 = vmatpush1.msra.mxu0 %v183
    %4768 = vmatprep.subr.mxu0 0.0
    %4769 = vmatpush1.msra.mxu0 %v184
    %4770 = vmatprep.subr.mxu0 0.0
    %4771 = vmatpush1.msra.mxu0 %v185
    %4772 = vmatprep.subr.mxu0 0.0
    %4773 = vmatpush1.msra.mxu0 %v186
    %4774 = vmatprep.subr.mxu0 0.0
    %4775 = vmatpush1.msra.mxu0 %v187
    %4776 = vmatprep.subr.mxu0 0.0
    %4777 = vmatpush1.msra.mxu0 %v188
    %4778 = vmatprep.subr.mxu0 0.0
    %4779 = vmatpush1.msra.mxu0 %v189
    %4780 = vmatprep.mubr.f32.mxu0 %v4175
    %4781 = vmatmul.mubr.f32.gmra.mrb[0].mxu0 %v4173
    %v4782 = vpop.f32.mrb[0].mxu0
    %v4783 = vadd.f32 %v4708, %v4782
    %v4784 = vpop.f32.mrb[0].mxu0
    %4785 = vmatprep.mubr.f32.mxu0 %v4181
    %4786 = vmatmul.mubr.f32.gmra.mrb[0].mxu0 %v4179
    %v4787 = vpop.f32.mrb[0].mxu0
    %v4788 = vadd.f32 %v4713, %v4787
    %v4789 = vpop.f32.mrb[0].mxu0
    %4790 = vdwg.mxu0
    %4791 = vmatprep.subr.mxu0 0.0
    %4792 = vmatpush1.msra.mxu0 %v190
    %4793 = vmatprep.subr.mxu0 0.0
    %4794 = vmatpush1.msra.mxu0 %v191
    %4795 = vmatprep.subr.mxu0 0.0
    %4796 = vmatpush1.msra.mxu0 %v192
    %4797 = vmatprep.subr.mxu0 0.0
    %4798 = vmatpush1.msra.mxu0 %v193
    %4799 = vmatprep.subr.mxu0 0.0
    %4800 = vmatpush1.msra.mxu0 %v194
    %4801 = vmatprep.subr.mxu0 0.0
    %4802 = vmatpush1.msra.mxu0 %v195
    %4803 = vmatprep.subr.mxu0 0.0
    %4804 = vmatpush1.msra.mxu0 %v196
    %4805 = vmatprep.subr.mxu0 0.0
    %4806 = vmatpush1.msra.mxu0 %v197
    %4807 = vmatprep.subr.mxu0 0.0
    %4808 = vmatpush1.msra.mxu0 %v198
    %4809 = vmatprep.subr.mxu0 0.0
    %4810 = vmatpush1.msra.mxu0 %v199
    %4811 = vmatprep.subr.mxu0 0.0
    %4812 = vmatpush1.msra.mxu0 %v200
    %4813 = vmatprep.subr.mxu0 0.0
    %4814 = vmatpush1.msra.mxu0 %v201
    %4815 = vmatprep.subr.mxu0 0.0
    %4816 = vmatpush1.msra.mxu0 %v202
    %4817 = vmatprep.subr.mxu0 0.0
    %4818 = vmatpush1.msra.mxu0 %v203
    %4819 = vmatprep.subr.mxu0 0.0
    %4820 = vmatpush1.msra.mxu0 %v204
    %4821 = vmatprep.subr.mxu0 0.0
    %4822 = vmatpush1.msra.mxu0 %v205
    %4823 = vmatprep.subr.mxu0 0.0
    %4824 = vmatpush1.msra.mxu0 %v206
    %4825 = vmatprep.subr.mxu0 0.0
    %4826 = vmatpush1.msra.mxu0 %v207
    %4827 = vmatprep.subr.mxu0 0.0
    %4828 = vmatpush1.msra.mxu0 %v208
    %4829 = vmatprep.subr.mxu0 0.0
    %4830 = vmatpush1.msra.mxu0 %v209
    %4831 = vmatprep.subr.mxu0 0.0
    %4832 = vmatpush1.msra.mxu0 %v210
    %4833 = vmatprep.subr.mxu0 0.0
    %4834 = vmatpush1.msra.mxu0 %v211
    %4835 = vmatprep.subr.mxu0 0.0
    %4836 = vmatpush1.msra.mxu0 %v212
    %4837 = vmatprep.subr.mxu0 0.0
    %4838 = vmatpush1.msra.mxu0 %v213
    %4839 = vmatprep.subr.mxu0 0.0
    %4840 = vmatpush1.msra.mxu0 %v214
    %4841 = vmatprep.subr.mxu0 0.0
    %4842 = vmatpush1.msra.mxu0 %v215
    %4843 = vmatprep.subr.mxu0 0.0
    %4844 = vmatpush1.msra.mxu0 %v216
    %4845 = vmatprep.subr.mxu0 0.0
    %4846 = vmatpush1.msra.mxu0 %v217
    %4847 = vmatprep.subr.mxu0 0.0
    %4848 = vmatpush1.msra.mxu0 %v218
    %4849 = vmatprep.subr.mxu0 0.0
    %4850 = vmatpush1.msra.mxu0 %v219
    %4851 = vmatprep.subr.mxu0 0.0
    %4852 = vmatpush1.msra.mxu0 %v220
    %4853 = vmatprep.subr.mxu0 0.0
    %4854 = vmatpush1.msra.mxu0 %v221
    %4855 = vmatprep.mubr.f32.mxu0 %v4252
    %4856 = vmatmul.mubr.f32.gmra.mrb[0].mxu0 %v4250
    %v4857 = vpop.f32.mrb[0].mxu0
    %v4858 = vadd.f32 %v4783, %v4857
    %v4859 = vpop.f32.mrb[0].mxu0
    %4860 = vmatprep.mubr.f32.mxu0 %v4258
    %4861 = vmatmul.mubr.f32.gmra.mrb[0].mxu0 %v4256
    %v4862 = vpop.f32.mrb[0].mxu0
    %v4863 = vadd.f32 %v4788, %v4862
    %v4864 = vpop.f32.mrb[0].mxu0
    %4865 = vdwg.mxu0
    %4866 = vmatprep.subr.mxu0 0.0
    %4867 = vmatpush1.msra.mxu0 %v222
    %4868 = vmatprep.subr.mxu0 0.0
    %4869 = vmatpush1.msra.mxu0 %v223
    %4870 = vmatprep.subr.mxu0 0.0
    %4871 = vmatpush1.msra.mxu0 %v224
    %4872 = vmatprep.subr.mxu0 0.0
    %4873 = vmatpush1.msra.mxu0 %v225
    %4874 = vmatprep.subr.mxu0 0.0
    %4875 = vmatpush1.msra.mxu0 %v226
    %4876 = vmatprep.subr.mxu0 0.0
    %4877 = vmatpush1.msra.mxu0 %v227
    %4878 = vmatprep.subr.mxu0 0.0
    %4879 = vmatpush1.msra.mxu0 %v228
    %4880 = vmatprep.subr.mxu0 0.0
    %4881 = vmatpush1.msra.mxu0 %v229
    %4882 = vmatprep.subr.mxu0 0.0
    %4883 = vmatpush1.msra.mxu0 %v230
    %4884 = vmatprep.subr.mxu0 0.0
    %4885 = vmatpush1.msra.mxu0 %v231
    %4886 = vmatprep.subr.mxu0 0.0
    %4887 = vmatpush1.msra.mxu0 %v232
    %4888 = vmatprep.subr.mxu0 0.0
    %4889 = vmatpush1.msra.mxu0 %v233
    %4890 = vmatprep.subr.mxu0 0.0
    %4891 = vmatpush1.msra.mxu0 %v234
    %4892 = vmatprep.subr.mxu0 0.0
    %4893 = vmatpush1.msra.mxu0 %v235
    %4894 = vmatprep.subr.mxu0 0.0
    %4895 = vmatpush1.msra.mxu0 %v236
    %4896 = vmatprep.subr.mxu0 0.0
    %4897 = vmatpush1.msra.mxu0 %v237
    %4898 = vmatprep.subr.mxu0 0.0
    %4899 = vmatpush1.msra.mxu0 %v238
    %4900 = vmatprep.subr.mxu0 0.0
    %4901 = vmatpush1.msra.mxu0 %v239
    %4902 = vmatprep.subr.mxu0 0.0
    %4903 = vmatpush1.msra.mxu0 %v240
    %4904 = vmatprep.subr.mxu0 0.0
    %4905 = vmatpush1.msra.mxu0 %v241
    %4906 = vmatprep.subr.mxu0 0.0
    %4907 = vmatpush1.msra.mxu0 %v242
    %4908 = vmatprep.subr.mxu0 0.0
    %4909 = vmatpush1.msra.mxu0 %v243
    %4910 = vmatprep.subr.mxu0 0.0
    %4911 = vmatpush1.msra.mxu0 %v244
    %4912 = vmatprep.subr.mxu0 0.0
    %4913 = vmatpush1.msra.mxu0 %v245
    %4914 = vmatprep.subr.mxu0 0.0
    %4915 = vmatpush1.msra.mxu0 %v246
    %4916 = vmatprep.subr.mxu0 0.0
    %4917 = vmatpush1.msra.mxu0 %v247
    %4918 = vmatprep.subr.mxu0 0.0
    %4919 = vmatpush1.msra.mxu0 %v248
    %4920 = vmatprep.subr.mxu0 0.0
    %4921 = vmatpush1.msra.mxu0 %v249
    %4922 = vmatprep.subr.mxu0 0.0
    %4923 = vmatpush1.msra.mxu0 %v250
    %4924 = vmatprep.subr.mxu0 0.0
    %4925 = vmatpush1.msra.mxu0 %v251
    %4926 = vmatprep.subr.mxu0 0.0
    %4927 = vmatpush1.msra.mxu0 %v252
    %4928 = vmatprep.subr.mxu0 0.0
    %4929 = vmatpush1.msra.mxu0 %v253
    %4930 = vmatprep.mubr.f32.mxu0 %v4329
    %4931 = vmatmul.mubr.f32.gmra.mrb[0].mxu0 %v4327
    %v4932 = vpop.f32.mrb[0].mxu0
    %v4933 = vadd.f32 %v4858, %v4932
    %v4934 = vpop.f32.mrb[0].mxu0
    %4935 = vmatprep.mubr.f32.mxu0 %v4335
    %4936 = vmatmul.mubr.f32.gmra.mrb[0].mxu0 %v4333
    %v4937 = vpop.f32.mrb[0].mxu0
    %v4938 = vadd.f32 %v4863, %v4937
    %v4939 = vpop.f32.mrb[0].mxu0
    %4940 = vdwg.mxu0
    %4941 = vmatprep.subr.mxu0 0.0
    %4942 = vmatpush1.msra.mxu0 %v254
    %4943 = vmatprep.subr.mxu0 0.0
    %4944 = vmatpush1.msra.mxu0 %v255
    %4945 = vmatprep.subr.mxu0 0.0
    %4946 = vmatpush1.msra.mxu0 %v256
    %4947 = vmatprep.subr.mxu0 0.0
    %4948 = vmatpush1.msra.mxu0 %v257
    %4949 = vmatprep.subr.mxu0 0.0
    %4950 = vmatpush1.msra.mxu0 %v258
    %4951 = vmatprep.subr.mxu0 0.0
    %4952 = vmatpush1.msra.mxu0 %v259
    %4953 = vmatprep.subr.mxu0 0.0
    %4954 = vmatpush1.msra.mxu0 %v260
    %4955 = vmatprep.subr.mxu0 0.0
    %4956 = vmatpush1.msra.mxu0 %v261
    %4957 = vmatprep.subr.mxu0 0.0
    %4958 = vmatpush1.msra.mxu0 %v262
    %4959 = vmatprep.subr.mxu0 0.0
    %4960 = vmatpush1.msra.mxu0 %v263
    %4961 = vmatprep.subr.mxu0 0.0
    %4962 = vmatpush1.msra.mxu0 %v264
    %4963 = vmatprep.subr.mxu0 0.0
    %4964 = vmatpush1.msra.mxu0 %v265
    %4965 = vmatprep.subr.mxu0 0.0
    %4966 = vmatpush1.msra.mxu0 %v266
    %4967 = vmatprep.subr.mxu0 0.0
    %4968 = vmatpush1.msra.mxu0 %v267
    %4969 = vmatprep.subr.mxu0 0.0
    %4970 = vmatpush1.msra.mxu0 %v268
    %4971 = vmatprep.subr.mxu0 0.0
    %4972 = vmatpush1.msra.mxu0 %v269
    %4973 = vmatprep.subr.mxu0 0.0
    %4974 = vmatpush1.msra.mxu0 %v270
    %4975 = vmatprep.subr.mxu0 0.0
    %4976 = vmatpush1.msra.mxu0 %v271
    %4977 = vmatprep.subr.mxu0 0.0
    %4978 = vmatpush1.msra.mxu0 %v272
    %4979 = vmatprep.subr.mxu0 0.0
    %4980 = vmatpush1.msra.mxu0 %v273
    %4981 = vmatprep.subr.mxu0 0.0
    %4982 = vmatpush1.msra.mxu0 %v274
    %4983 = vmatprep.subr.mxu0 0.0
    %4984 = vmatpush1.msra.mxu0 %v275
    %4985 = vmatprep.subr.mxu0 0.0
    %4986 = vmatpush1.msra.mxu0 %v276
    %4987 = vmatprep.subr.mxu0 0.0
    %4988 = vmatpush1.msra.mxu0 %v277
    %4989 = vmatprep.subr.mxu0 0.0
    %4990 = vmatpush1.msra.mxu0 %v278
    %4991 = vmatprep.subr.mxu0 0.0
    %4992 = vmatpush1.msra.mxu0 %v279
    %4993 = vmatprep.subr.mxu0 0.0
    %4994 = vmatpush1.msra.mxu0 %v280
    %4995 = vmatprep.subr.mxu0 0.0
    %4996 = vmatpush1.msra.mxu0 %v281
    %4997 = vmatprep.subr.mxu0 0.0
    %4998 = vmatpush1.msra.mxu0 %v282
    %4999 = vmatprep.subr.mxu0 0.0
    %5000 = vmatpush1.msra.mxu0 %v283
    %5001 = vmatprep.subr.mxu0 0.0
    %5002 = vmatpush1.msra.mxu0 %v284
    %5003 = vmatprep.subr.mxu0 0.0
    %5004 = vmatpush1.msra.mxu0 %v285
    %5005 = vmatprep.mubr.f32.mxu0 %v4406
    %5006 = vmatmul.mubr.f32.gmra.mrb[0].mxu0 %v4404
    %v5007 = vpop.f32.mrb[0].mxu0
    %v5008 = vadd.f32 %v4933, %v5007
    %v5009 = vpop.f32.mrb[0].mxu0
    %5010 = vmatprep.mubr.f32.mxu0 %v4412
    %5011 = vmatmul.mubr.f32.gmra.mrb[0].mxu0 %v4410
    %v5012 = vpop.f32.mrb[0].mxu0
    %v5013 = vadd.f32 %v4938, %v5012
    %v5014 = vpop.f32.mrb[0].mxu0
    %5015 = vdwg.mxu0
    %5016 = vmatprep.subr.mxu0 0.0
    %5017 = vmatpush1.msra.mxu0 %v286
    %5018 = vmatprep.subr.mxu0 0.0
    %5019 = vmatpush1.msra.mxu0 %v287
    %5020 = vmatprep.subr.mxu0 0.0
    %5021 = vmatpush1.msra.mxu0 %v288
    %5022 = vmatprep.subr.mxu0 0.0
    %5023 = vmatpush1.msra.mxu0 %v289
    %5024 = vmatprep.subr.mxu0 0.0
    %5025 = vmatpush1.msra.mxu0 %v290
    %5026 = vmatprep.subr.mxu0 0.0
    %5027 = vmatpush1.msra.mxu0 %v291
    %5028 = vmatprep.subr.mxu0 0.0
    %5029 = vmatpush1.msra.mxu0 %v292
    %5030 = vmatprep.subr.mxu0 0.0
    %5031 = vmatpush1.msra.mxu0 %v293
    %5032 = vmatprep.subr.mxu0 0.0
    %5033 = vmatpush1.msra.mxu0 %v294
    %5034 = vmatprep.subr.mxu0 0.0
    %5035 = vmatpush1.msra.mxu0 %v295
    %5036 = vmatprep.subr.mxu0 0.0
    %5037 = vmatpush1.msra.mxu0 %v296
    %5038 = vmatprep.subr.mxu0 0.0
    %5039 = vmatpush1.msra.mxu0 %v297
    %5040 = vmatprep.subr.mxu0 0.0
    %5041 = vmatpush1.msra.mxu0 %v298
    %5042 = vmatprep.subr.mxu0 0.0
    %5043 = vmatpush1.msra.mxu0 %v299
    %5044 = vmatprep.subr.mxu0 0.0
    %5045 = vmatpush1.msra.mxu0 %v300
    %5046 = vmatprep.subr.mxu0 0.0
    %5047 = vmatpush1.msra.mxu0 %v301
    %5048 = vmatprep.subr.mxu0 0.0
    %5049 = vmatpush1.msra.mxu0 %v302
    %5050 = vmatprep.subr.mxu0 0.0
    %5051 = vmatpush1.msra.mxu0 %v303
    %5052 = vmatprep.subr.mxu0 0.0
    %5053 = vmatpush1.msra.mxu0 %v304
    %5054 = vmatprep.subr.mxu0 0.0
    %5055 = vmatpush1.msra.mxu0 %v305
    %5056 = vmatprep.subr.mxu0 0.0
    %5057 = vmatpush1.msra.mxu0 %v306
    %5058 = vmatprep.subr.mxu0 0.0
    %5059 = vmatpush1.msra.mxu0 %v307
    %5060 = vmatprep.subr.mxu0 0.0
    %5061 = vmatpush1.msra.mxu0 %v308
    %5062 = vmatprep.subr.mxu0 0.0
    %5063 = vmatpush1.msra.mxu0 %v309
    %5064 = vmatprep.subr.mxu0 0.0
    %5065 = vmatpush1.msra.mxu0 %v310
    %5066 = vmatprep.subr.mxu0 0.0
    %5067 = vmatpush1.msra.mxu0 %v311
    %5068 = vmatprep.subr.mxu0 0.0
    %5069 = vmatpush1.msra.mxu0 %v312
    %5070 = vmatprep.subr.mxu0 0.0
    %5071 = vmatpush1.msra.mxu0 %v313
    %5072 = vmatprep.subr.mxu0 0.0
    %5073 = vmatpush1.msra.mxu0 %v314
    %5074 = vmatprep.subr.mxu0 0.0
    %5075 = vmatpush1.msra.mxu0 %v315
    %5076 = vmatprep.subr.mxu0 0.0
    %5077 = vmatpush1.msra.mxu0 %v316
    %5078 = vmatprep.subr.mxu0 0.0
    %5079 = vmatpush1.msra.mxu0 %v317
    %5080 = vmatprep.mubr.f32.mxu0 %v4483
    %5081 = vmatmul.mubr.f32.gmra.mrb[0].mxu0 %v4481
    %v5082 = vpop.f32.mrb[0].mxu0
    %v5083 = vadd.f32 %v5008, %v5082
    %v5084 = vpop.f32.mrb[0].mxu0
    %5085 = vmatprep.mubr.f32.mxu0 %v4489
    %5086 = vmatmul.mubr.f32.gmra.mrb[0].mxu0 %v4487
    %v5087 = vpop.f32.mrb[0].mxu0
    %v5088 = vadd.f32 %v5013, %v5087
    %v5089 = vpop.f32.mrb[0].mxu0
    %5090 = vdwg.mxu0
    %v5091 = vmul.f32 %v3942, %v3942
    %v5092 = vmul.f32 %v3944, %v3944
    %v5093 = vmul.f32 %v4019, %v4019
    %v5094 = vmul.f32 %v4021, %v4021
    %v5095 = vmul.f32 %v4096, %v4096
    %v5096 = vmul.f32 %v4098, %v4098
    %v5097 = vmul.f32 %v4173, %v4173
    %v5098 = vmul.f32 %v4175, %v4175
    %v5099 = vmul.f32 %v4250, %v4250
    %v5100 = vmul.f32 %v4252, %v4252
    %v5101 = vmul.f32 %v4327, %v4327
    %v5102 = vmul.f32 %v4329, %v4329
    %v5103 = vmul.f32 %v4404, %v4404
    %v5104 = vmul.f32 %v4406, %v4406
    %v5105 = vmul.f32 %v4481, %v4481
    %v5106 = vmul.f32 %v4483, %v4483
    %v5107 = vmul.f32 %v3948, %v3948
    %v5108 = vmul.f32 %v3950, %v3950
    %v5109 = vmul.f32 %v4025, %v4025
    %v5110 = vmul.f32 %v4027, %v4027
    %v5111 = vmul.f32 %v4102, %v4102
    %v5112 = vmul.f32 %v4104, %v4104
    %v5113 = vmul.f32 %v4179, %v4179
    %v5114 = vmul.f32 %v4181, %v4181
    %v5115 = vmul.f32 %v4256, %v4256
    %v5116 = vmul.f32 %v4258, %v4258
    %v5117 = vmul.f32 %v4333, %v4333
    %v5118 = vmul.f32 %v4335, %v4335
    %v5119 = vmul.f32 %v4410, %v4410
    %v5120 = vmul.f32 %v4412, %v4412
    %v5121 = vmul.f32 %v4487, %v4487
    %v5122 = vmul.f32 %v4489, %v4489
    %5123 = vmatprep.subr.mxu0 0.0
    %5124 = vmatpush1.msra.mxu0 %v62
    %5125 = vmatprep.subr.mxu0 0.0
    %5126 = vmatpush1.msra.mxu0 %v63
    %5127 = vmatprep.subr.mxu0 0.0
    %5128 = vmatpush1.msra.mxu0 %v64
    %5129 = vmatprep.subr.mxu0 0.0
    %5130 = vmatpush1.msra.mxu0 %v65
    %5131 = vmatprep.subr.mxu0 0.0
    %5132 = vmatpush1.msra.mxu0 %v66
    %5133 = vmatprep.subr.mxu0 0.0
    %5134 = vmatpush1.msra.mxu0 %v67
    %5135 = vmatprep.subr.mxu0 0.0
    %5136 = vmatpush1.msra.mxu0 %v68
    %5137 = vmatprep.subr.mxu0 0.0
    %5138 = vmatpush1.msra.mxu0 %v69
    %5139 = vmatprep.subr.mxu0 0.0
    %5140 = vmatpush1.msra.mxu0 %v70
    %5141 = vmatprep.subr.mxu0 0.0
    %5142 = vmatpush1.msra.mxu0 %v71
    %5143 = vmatprep.subr.mxu0 0.0
    %5144 = vmatpush1.msra.mxu0 %v72
    %5145 = vmatprep.subr.mxu0 0.0
    %5146 = vmatpush1.msra.mxu0 %v73
    %5147 = vmatprep.subr.mxu0 0.0
    %5148 = vmatpush1.msra.mxu0 %v74
    %5149 = vmatprep.subr.mxu0 0.0
    %5150 = vmatpush1.msra.mxu0 %v75
    %5151 = vmatprep.subr.mxu0 0.0
    %5152 = vmatpush1.msra.mxu0 %v76
    %5153 = vmatprep.subr.mxu0 0.0
    %5154 = vmatpush1.msra.mxu0 %v77
    %5155 = vmatprep.subr.mxu0 0.0
    %5156 = vmatpush1.msra.mxu0 %v78
    %5157 = vmatprep.subr.mxu0 0.0
    %5158 = vmatpush1.msra.mxu0 %v79
    %5159 = vmatprep.subr.mxu0 0.0
    %5160 = vmatpush1.msra.mxu0 %v80
    %5161 = vmatprep.subr.mxu0 0.0
    %5162 = vmatpush1.msra.mxu0 %v81
    %5163 = vmatprep.subr.mxu0 0.0
    %5164 = vmatpush1.msra.mxu0 %v82
    %5165 = vmatprep.subr.mxu0 0.0
    %5166 = vmatpush1.msra.mxu0 %v83
    %5167 = vmatprep.subr.mxu0 0.0
    %5168 = vmatpush1.msra.mxu0 %v84
    %5169 = vmatprep.subr.mxu0 0.0
    %5170 = vmatpush1.msra.mxu0 %v85
    %5171 = vmatprep.subr.mxu0 0.0
    %5172 = vmatpush1.msra.mxu0 %v86
    %5173 = vmatprep.subr.mxu0 0.0
    %5174 = vmatpush1.msra.mxu0 %v87
    %5175 = vmatprep.subr.mxu0 0.0
    %5176 = vmatpush1.msra.mxu0 %v88
    %5177 = vmatprep.subr.mxu0 0.0
    %5178 = vmatpush1.msra.mxu0 %v89
    %5179 = vmatprep.subr.mxu0 0.0
    %5180 = vmatpush1.msra.mxu0 %v90
    %5181 = vmatprep.subr.mxu0 0.0
    %5182 = vmatpush1.msra.mxu0 %v91
    %5183 = vmatprep.subr.mxu0 0.0
    %5184 = vmatpush1.msra.mxu0 %v92
    %5185 = vmatprep.subr.mxu0 0.0
    %5186 = vmatpush1.msra.mxu0 %v93
    %5187 = vmatprep.mubr.f32.mxu0 %v5092
    %5188 = vmatmul.mubr.f32.gmra.mrb[0].mxu0 %v5091
    %v5189 = vpop.f32.mrb[0].mxu0
    %v5190 = vadd.f32 0.0, %v5189
    %v5191 = vpop.f32.mrb[0].mxu0
    %5192 = vmatprep.mubr.f32.mxu0 %v5108
    %5193 = vmatmul.mubr.f32.gmra.mrb[0].mxu0 %v5107
    %v5194 = vpop.f32.mrb[0].mxu0
    %v5195 = vadd.f32 0.0, %v5194
    %v5196 = vpop.f32.mrb[0].mxu0
    %5197 = vdwg.mxu0
    %5198 = vmatprep.subr.mxu0 0.0
    %5199 = vmatpush1.msra.mxu0 %v94
    %5200 = vmatprep.subr.mxu0 0.0
    %5201 = vmatpush1.msra.mxu0 %v95
    %5202 = vmatprep.subr.mxu0 0.0
    %5203 = vmatpush1.msra.mxu0 %v96
    %5204 = vmatprep.subr.mxu0 0.0
    %5205 = vmatpush1.msra.mxu0 %v97
    %5206 = vmatprep.subr.mxu0 0.0
    %5207 = vmatpush1.msra.mxu0 %v98
    %5208 = vmatprep.subr.mxu0 0.0
    %5209 = vmatpush1.msra.mxu0 %v99
    %5210 = vmatprep.subr.mxu0 0.0
    %5211 = vmatpush1.msra.mxu0 %v100
    %5212 = vmatprep.subr.mxu0 0.0
    %5213 = vmatpush1.msra.mxu0 %v101
    %5214 = vmatprep.subr.mxu0 0.0
    %5215 = vmatpush1.msra.mxu0 %v102
    %5216 = vmatprep.subr.mxu0 0.0
    %5217 = vmatpush1.msra.mxu0 %v103
    %5218 = vmatprep.subr.mxu0 0.0
    %5219 = vmatpush1.msra.mxu0 %v104
    %5220 = vmatprep.subr.mxu0 0.0
    %5221 = vmatpush1.msra.mxu0 %v105
    %5222 = vmatprep.subr.mxu0 0.0
    %5223 = vmatpush1.msra.mxu0 %v106
    %5224 = vmatprep.subr.mxu0 0.0
    %5225 = vmatpush1.msra.mxu0 %v107
    %5226 = vmatprep.subr.mxu0 0.0
    %5227 = vmatpush1.msra.mxu0 %v108
    %5228 = vmatprep.subr.mxu0 0.0
    %5229 = vmatpush1.msra.mxu0 %v109
    %5230 = vmatprep.subr.mxu0 0.0
    %5231 = vmatpush1.msra.mxu0 %v110
    %5232 = vmatprep.subr.mxu0 0.0
    %5233 = vmatpush1.msra.mxu0 %v111
    %5234 = vmatprep.subr.mxu0 0.0
    %5235 = vmatpush1.msra.mxu0 %v112
    %5236 = vmatprep.subr.mxu0 0.0
    %5237 = vmatpush1.msra.mxu0 %v113
    %5238 = vmatprep.subr.mxu0 0.0
    %5239 = vmatpush1.msra.mxu0 %v114
    %5240 = vmatprep.subr.mxu0 0.0
    %5241 = vmatpush1.msra.mxu0 %v115
    %5242 = vmatprep.subr.mxu0 0.0
    %5243 = vmatpush1.msra.mxu0 %v116
    %5244 = vmatprep.subr.mxu0 0.0
    %5245 = vmatpush1.msra.mxu0 %v117
    %5246 = vmatprep.subr.mxu0 0.0
    %5247 = vmatpush1.msra.mxu0 %v118
    %5248 = vmatprep.subr.mxu0 0.0
    %5249 = vmatpush1.msra.mxu0 %v119
    %5250 = vmatprep.subr.mxu0 0.0
    %5251 = vmatpush1.msra.mxu0 %v120
    %5252 = vmatprep.subr.mxu0 0.0
    %5253 = vmatpush1.msra.mxu0 %v121
    %5254 = vmatprep.subr.mxu0 0.0
    %5255 = vmatpush1.msra.mxu0 %v122
    %5256 = vmatprep.subr.mxu0 0.0
    %5257 = vmatpush1.msra.mxu0 %v123
    %5258 = vmatprep.subr.mxu0 0.0
    %5259 = vmatpush1.msra.mxu0 %v124
    %5260 = vmatprep.subr.mxu0 0.0
    %5261 = vmatpush1.msra.mxu0 %v125
    %5262 = vmatprep.mubr.f32.mxu0 %v5094
    %5263 = vmatmul.mubr.f32.gmra.mrb[0].mxu0 %v5093
    %v5264 = vpop.f32.mrb[0].mxu0
    %v5265 = vadd.f32 %v5190, %v5264
    %v5266 = vpop.f32.mrb[0].mxu0
    %5267 = vmatprep.mubr.f32.mxu0 %v5110
    %5268 = vmatmul.mubr.f32.gmra.mrb[0].mxu0 %v5109
    %v5269 = vpop.f32.mrb[0].mxu0
    %v5270 = vadd.f32 %v5195, %v5269
    %v5271 = vpop.f32.mrb[0].mxu0
    %5272 = vdwg.mxu0
    %5273 = vmatprep.subr.mxu0 0.0
    %5274 = vmatpush1.msra.mxu0 %v126
    %5275 = vmatprep.subr.mxu0 0.0
    %5276 = vmatpush1.msra.mxu0 %v127
    %5277 = vmatprep.subr.mxu0 0.0
    %5278 = vmatpush1.msra.mxu0 %v128
    %5279 = vmatprep.subr.mxu0 0.0
    %5280 = vmatpush1.msra.mxu0 %v129
    %5281 = vmatprep.subr.mxu0 0.0
    %5282 = vmatpush1.msra.mxu0 %v130
    %5283 = vmatprep.subr.mxu0 0.0
    %5284 = vmatpush1.msra.mxu0 %v131
    %5285 = vmatprep.subr.mxu0 0.0
    %5286 = vmatpush1.msra.mxu0 %v132
    %5287 = vmatprep.subr.mxu0 0.0
    %5288 = vmatpush1.msra.mxu0 %v133
    %5289 = vmatprep.subr.mxu0 0.0
    %5290 = vmatpush1.msra.mxu0 %v134
    %5291 = vmatprep.subr.mxu0 0.0
    %5292 = vmatpush1.msra.mxu0 %v135
    %5293 = vmatprep.subr.mxu0 0.0
    %5294 = vmatpush1.msra.mxu0 %v136
    %5295 = vmatprep.subr.mxu0 0.0
    %5296 = vmatpush1.msra.mxu0 %v137
    %5297 = vmatprep.subr.mxu0 0.0
    %5298 = vmatpush1.msra.mxu0 %v138
    %5299 = vmatprep.subr.mxu0 0.0
    %5300 = vmatpush1.msra.mxu0 %v139
    %5301 = vmatprep.subr.mxu0 0.0
    %5302 = vmatpush1.msra.mxu0 %v140
    %5303 = vmatprep.subr.mxu0 0.0
    %5304 = vmatpush1.msra.mxu0 %v141
    %5305 = vmatprep.subr.mxu0 0.0
    %5306 = vmatpush1.msra.mxu0 %v142
    %5307 = vmatprep.subr.mxu0 0.0
    %5308 = vmatpush1.msra.mxu0 %v143
    %5309 = vmatprep.subr.mxu0 0.0
    %5310 = vmatpush1.msra.mxu0 %v144
    %5311 = vmatprep.subr.mxu0 0.0
    %5312 = vmatpush1.msra.mxu0 %v145
    %5313 = vmatprep.subr.mxu0 0.0
    %5314 = vmatpush1.msra.mxu0 %v146
    %5315 = vmatprep.subr.mxu0 0.0
    %5316 = vmatpush1.msra.mxu0 %v147
    %5317 = vmatprep.subr.mxu0 0.0
    %5318 = vmatpush1.msra.mxu0 %v148
    %5319 = vmatprep.subr.mxu0 0.0
    %5320 = vmatpush1.msra.mxu0 %v149
    %5321 = vmatprep.subr.mxu0 0.0
    %5322 = vmatpush1.msra.mxu0 %v150
    %5323 = vmatprep.subr.mxu0 0.0
    %5324 = vmatpush1.msra.mxu0 %v151
    %5325 = vmatprep.subr.mxu0 0.0
    %5326 = vmatpush1.msra.mxu0 %v152
    %5327 = vmatprep.subr.mxu0 0.0
    %5328 = vmatpush1.msra.mxu0 %v153
    %5329 = vmatprep.subr.mxu0 0.0
    %5330 = vmatpush1.msra.mxu0 %v154
    %5331 = vmatprep.subr.mxu0 0.0
    %5332 = vmatpush1.msra.mxu0 %v155
    %5333 = vmatprep.subr.mxu0 0.0
    %5334 = vmatpush1.msra.mxu0 %v156
    %5335 = vmatprep.subr.mxu0 0.0
    %5336 = vmatpush1.msra.mxu0 %v157
    %5337 = vmatprep.mubr.f32.mxu0 %v5096
    %5338 = vmatmul.mubr.f32.gmra.mrb[0].mxu0 %v5095
    %v5339 = vpop.f32.mrb[0].mxu0
    %v5340 = vadd.f32 %v5265, %v5339
    %v5341 = vpop.f32.mrb[0].mxu0
    %5342 = vmatprep.mubr.f32.mxu0 %v5112
    %5343 = vmatmul.mubr.f32.gmra.mrb[0].mxu0 %v5111
    %v5344 = vpop.f32.mrb[0].mxu0
    %v5345 = vadd.f32 %v5270, %v5344
    %v5346 = vpop.f32.mrb[0].mxu0
    %5347 = vdwg.mxu0
    %5348 = vmatprep.subr.mxu0 0.0
    %5349 = vmatpush1.msra.mxu0 %v158
    %5350 = vmatprep.subr.mxu0 0.0
    %5351 = vmatpush1.msra.mxu0 %v159
    %5352 = vmatprep.subr.mxu0 0.0
    %5353 = vmatpush1.msra.mxu0 %v160
    %5354 = vmatprep.subr.mxu0 0.0
    %5355 = vmatpush1.msra.mxu0 %v161
    %5356 = vmatprep.subr.mxu0 0.0
    %5357 = vmatpush1.msra.mxu0 %v162
    %5358 = vmatprep.subr.mxu0 0.0
    %5359 = vmatpush1.msra.mxu0 %v163
    %5360 = vmatprep.subr.mxu0 0.0
    %5361 = vmatpush1.msra.mxu0 %v164
    %5362 = vmatprep.subr.mxu0 0.0
    %5363 = vmatpush1.msra.mxu0 %v165
    %5364 = vmatprep.subr.mxu0 0.0
    %5365 = vmatpush1.msra.mxu0 %v166
    %5366 = vmatprep.subr.mxu0 0.0
    %5367 = vmatpush1.msra.mxu0 %v167
    %5368 = vmatprep.subr.mxu0 0.0
    %5369 = vmatpush1.msra.mxu0 %v168
    %5370 = vmatprep.subr.mxu0 0.0
    %5371 = vmatpush1.msra.mxu0 %v169
    %5372 = vmatprep.subr.mxu0 0.0
    %5373 = vmatpush1.msra.mxu0 %v170
    %5374 = vmatprep.subr.mxu0 0.0
    %5375 = vmatpush1.msra.mxu0 %v171
    %5376 = vmatprep.subr.mxu0 0.0
    %5377 = vmatpush1.msra.mxu0 %v172
    %5378 = vmatprep.subr.mxu0 0.0
    %5379 = vmatpush1.msra.mxu0 %v173
    %5380 = vmatprep.subr.mxu0 0.0
    %5381 = vmatpush1.msra.mxu0 %v174
    %5382 = vmatprep.subr.mxu0 0.0
    %5383 = vmatpush1.msra.mxu0 %v175
    %5384 = vmatprep.subr.mxu0 0.0
    %5385 = vmatpush1.msra.mxu0 %v176
    %5386 = vmatprep.subr.mxu0 0.0
    %5387 = vmatpush1.msra.mxu0 %v177
    %5388 = vmatprep.subr.mxu0 0.0
    %5389 = vmatpush1.msra.mxu0 %v178
    %5390 = vmatprep.subr.mxu0 0.0
    %5391 = vmatpush1.msra.mxu0 %v179
    %5392 = vmatprep.subr.mxu0 0.0
    %5393 = vmatpush1.msra.mxu0 %v180
    %5394 = vmatprep.subr.mxu0 0.0
    %5395 = vmatpush1.msra.mxu0 %v181
    %5396 = vmatprep.subr.mxu0 0.0
    %5397 = vmatpush1.msra.mxu0 %v182
    %5398 = vmatprep.subr.mxu0 0.0
    %5399 = vmatpush1.msra.mxu0 %v183
    %5400 = vmatprep.subr.mxu0 0.0
    %5401 = vmatpush1.msra.mxu0 %v184
    %5402 = vmatprep.subr.mxu0 0.0
    %5403 = vmatpush1.msra.mxu0 %v185
    %5404 = vmatprep.subr.mxu0 0.0
    %5405 = vmatpush1.msra.mxu0 %v186
    %5406 = vmatprep.subr.mxu0 0.0
    %5407 = vmatpush1.msra.mxu0 %v187
    %5408 = vmatprep.subr.mxu0 0.0
    %5409 = vmatpush1.msra.mxu0 %v188
    %5410 = vmatprep.subr.mxu0 0.0
    %5411 = vmatpush1.msra.mxu0 %v189
    %5412 = vmatprep.mubr.f32.mxu0 %v5098
    %5413 = vmatmul.mubr.f32.gmra.mrb[0].mxu0 %v5097
    %v5414 = vpop.f32.mrb[0].mxu0
    %v5415 = vadd.f32 %v5340, %v5414
    %v5416 = vpop.f32.mrb[0].mxu0
    %5417 = vmatprep.mubr.f32.mxu0 %v5114
    %5418 = vmatmul.mubr.f32.gmra.mrb[0].mxu0 %v5113
    %v5419 = vpop.f32.mrb[0].mxu0
    %v5420 = vadd.f32 %v5345, %v5419
    %v5421 = vpop.f32.mrb[0].mxu0
    %5422 = vdwg.mxu0
    %5423 = vmatprep.subr.mxu0 0.0
    %5424 = vmatpush1.msra.mxu0 %v190
    %5425 = vmatprep.subr.mxu0 0.0
    %5426 = vmatpush1.msra.mxu0 %v191
    %5427 = vmatprep.subr.mxu0 0.0
    %5428 = vmatpush1.msra.mxu0 %v192
    %5429 = vmatprep.subr.mxu0 0.0
    %5430 = vmatpush1.msra.mxu0 %v193
    %5431 = vmatprep.subr.mxu0 0.0
    %5432 = vmatpush1.msra.mxu0 %v194
    %5433 = vmatprep.subr.mxu0 0.0
    %5434 = vmatpush1.msra.mxu0 %v195
    %5435 = vmatprep.subr.mxu0 0.0
    %5436 = vmatpush1.msra.mxu0 %v196
    %5437 = vmatprep.subr.mxu0 0.0
    %5438 = vmatpush1.msra.mxu0 %v197
    %5439 = vmatprep.subr.mxu0 0.0
    %5440 = vmatpush1.msra.mxu0 %v198
    %5441 = vmatprep.subr.mxu0 0.0
    %5442 = vmatpush1.msra.mxu0 %v199
    %5443 = vmatprep.subr.mxu0 0.0
    %5444 = vmatpush1.msra.mxu0 %v200
    %5445 = vmatprep.subr.mxu0 0.0
    %5446 = vmatpush1.msra.mxu0 %v201
    %5447 = vmatprep.subr.mxu0 0.0
    %5448 = vmatpush1.msra.mxu0 %v202
    %5449 = vmatprep.subr.mxu0 0.0
    %5450 = vmatpush1.msra.mxu0 %v203
    %5451 = vmatprep.subr.mxu0 0.0
    %5452 = vmatpush1.msra.mxu0 %v204
    %5453 = vmatprep.subr.mxu0 0.0
    %5454 = vmatpush1.msra.mxu0 %v205
    %5455 = vmatprep.subr.mxu0 0.0
    %5456 = vmatpush1.msra.mxu0 %v206
    %5457 = vmatprep.subr.mxu0 0.0
    %5458 = vmatpush1.msra.mxu0 %v207
    %5459 = vmatprep.subr.mxu0 0.0
    %5460 = vmatpush1.msra.mxu0 %v208
    %5461 = vmatprep.subr.mxu0 0.0
    %5462 = vmatpush1.msra.mxu0 %v209
    %5463 = vmatprep.subr.mxu0 0.0
    %5464 = vmatpush1.msra.mxu0 %v210
    %5465 = vmatprep.subr.mxu0 0.0
    %5466 = vmatpush1.msra.mxu0 %v211
    %5467 = vmatprep.subr.mxu0 0.0
    %5468 = vmatpush1.msra.mxu0 %v212
    %5469 = vmatprep.subr.mxu0 0.0
    %5470 = vmatpush1.msra.mxu0 %v213
    %5471 = vmatprep.subr.mxu0 0.0
    %5472 = vmatpush1.msra.mxu0 %v214
    %5473 = vmatprep.subr.mxu0 0.0
    %5474 = vmatpush1.msra.mxu0 %v215
    %5475 = vmatprep.subr.mxu0 0.0
    %5476 = vmatpush1.msra.mxu0 %v216
    %5477 = vmatprep.subr.mxu0 0.0
    %5478 = vmatpush1.msra.mxu0 %v217
    %5479 = vmatprep.subr.mxu0 0.0
    %5480 = vmatpush1.msra.mxu0 %v218
    %5481 = vmatprep.subr.mxu0 0.0
    %5482 = vmatpush1.msra.mxu0 %v219
    %5483 = vmatprep.subr.mxu0 0.0
    %5484 = vmatpush1.msra.mxu0 %v220
    %5485 = vmatprep.subr.mxu0 0.0
    %5486 = vmatpush1.msra.mxu0 %v221
    %5487 = vmatprep.mubr.f32.mxu0 %v5100
    %5488 = vmatmul.mubr.f32.gmra.mrb[0].mxu0 %v5099
    %v5489 = vpop.f32.mrb[0].mxu0
    %v5490 = vadd.f32 %v5415, %v5489
    %v5491 = vpop.f32.mrb[0].mxu0
    %5492 = vmatprep.mubr.f32.mxu0 %v5116
    %5493 = vmatmul.mubr.f32.gmra.mrb[0].mxu0 %v5115
    %v5494 = vpop.f32.mrb[0].mxu0
    %v5495 = vadd.f32 %v5420, %v5494
    %v5496 = vpop.f32.mrb[0].mxu0
    %5497 = vdwg.mxu0
    %5498 = vmatprep.subr.mxu0 0.0
    %5499 = vmatpush1.msra.mxu0 %v222
    %5500 = vmatprep.subr.mxu0 0.0
    %5501 = vmatpush1.msra.mxu0 %v223
    %5502 = vmatprep.subr.mxu0 0.0
    %5503 = vmatpush1.msra.mxu0 %v224
    %5504 = vmatprep.subr.mxu0 0.0
    %5505 = vmatpush1.msra.mxu0 %v225
    %5506 = vmatprep.subr.mxu0 0.0
    %5507 = vmatpush1.msra.mxu0 %v226
    %5508 = vmatprep.subr.mxu0 0.0
    %5509 = vmatpush1.msra.mxu0 %v227
    %5510 = vmatprep.subr.mxu0 0.0
    %5511 = vmatpush1.msra.mxu0 %v228
    %5512 = vmatprep.subr.mxu0 0.0
    %5513 = vmatpush1.msra.mxu0 %v229
    %5514 = vmatprep.subr.mxu0 0.0
    %5515 = vmatpush1.msra.mxu0 %v230
    %5516 = vmatprep.subr.mxu0 0.0
    %5517 = vmatpush1.msra.mxu0 %v231
    %5518 = vmatprep.subr.mxu0 0.0
    %5519 = vmatpush1.msra.mxu0 %v232
    %5520 = vmatprep.subr.mxu0 0.0
    %5521 = vmatpush1.msra.mxu0 %v233
    %5522 = vmatprep.subr.mxu0 0.0
    %5523 = vmatpush1.msra.mxu0 %v234
    %5524 = vmatprep.subr.mxu0 0.0
    %5525 = vmatpush1.msra.mxu0 %v235
    %5526 = vmatprep.subr.mxu0 0.0
    %5527 = vmatpush1.msra.mxu0 %v236
    %5528 = vmatprep.subr.mxu0 0.0
    %5529 = vmatpush1.msra.mxu0 %v237
    %5530 = vmatprep.subr.mxu0 0.0
    %5531 = vmatpush1.msra.mxu0 %v238
    %5532 = vmatprep.subr.mxu0 0.0
    %5533 = vmatpush1.msra.mxu0 %v239
    %5534 = vmatprep.subr.mxu0 0.0
    %5535 = vmatpush1.msra.mxu0 %v240
    %5536 = vmatprep.subr.mxu0 0.0
    %5537 = vmatpush1.msra.mxu0 %v241
    %5538 = vmatprep.subr.mxu0 0.0
    %5539 = vmatpush1.msra.mxu0 %v242
    %5540 = vmatprep.subr.mxu0 0.0
    %5541 = vmatpush1.msra.mxu0 %v243
    %5542 = vmatprep.subr.mxu0 0.0
    %5543 = vmatpush1.msra.mxu0 %v244
    %5544 = vmatprep.subr.mxu0 0.0
    %5545 = vmatpush1.msra.mxu0 %v245
    %5546 = vmatprep.subr.mxu0 0.0
    %5547 = vmatpush1.msra.mxu0 %v246
    %5548 = vmatprep.subr.mxu0 0.0
    %5549 = vmatpush1.msra.mxu0 %v247
    %5550 = vmatprep.subr.mxu0 0.0
    %5551 = vmatpush1.msra.mxu0 %v248
    %5552 = vmatprep.subr.mxu0 0.0
    %5553 = vmatpush1.msra.mxu0 %v249
    %5554 = vmatprep.subr.mxu0 0.0
    %5555 = vmatpush1.msra.mxu0 %v250
    %5556 = vmatprep.subr.mxu0 0.0
    %5557 = vmatpush1.msra.mxu0 %v251
    %5558 = vmatprep.subr.mxu0 0.0
    %5559 = vmatpush1.msra.mxu0 %v252
    %5560 = vmatprep.subr.mxu0 0.0
    %5561 = vmatpush1.msra.mxu0 %v253
    %5562 = vmatprep.mubr.f32.mxu0 %v5102
    %5563 = vmatmul.mubr.f32.gmra.mrb[0].mxu0 %v5101
    %v5564 = vpop.f32.mrb[0].mxu0
    %v5565 = vadd.f32 %v5490, %v5564
    %v5566 = vpop.f32.mrb[0].mxu0
    %5567 = vmatprep.mubr.f32.mxu0 %v5118
    %5568 = vmatmul.mubr.f32.gmra.mrb[0].mxu0 %v5117
    %v5569 = vpop.f32.mrb[0].mxu0
    %v5570 = vadd.f32 %v5495, %v5569
    %v5571 = vpop.f32.mrb[0].mxu0
    %5572 = vdwg.mxu0
    %5573 = vmatprep.subr.mxu0 0.0
    %5574 = vmatpush1.msra.mxu0 %v254
    %5575 = vmatprep.subr.mxu0 0.0
    %5576 = vmatpush1.msra.mxu0 %v255
    %5577 = vmatprep.subr.mxu0 0.0
    %5578 = vmatpush1.msra.mxu0 %v256
    %5579 = vmatprep.subr.mxu0 0.0
    %5580 = vmatpush1.msra.mxu0 %v257
    %5581 = vmatprep.subr.mxu0 0.0
    %5582 = vmatpush1.msra.mxu0 %v258
    %5583 = vmatprep.subr.mxu0 0.0
    %5584 = vmatpush1.msra.mxu0 %v259
    %5585 = vmatprep.subr.mxu0 0.0
    %5586 = vmatpush1.msra.mxu0 %v260
    %5587 = vmatprep.subr.mxu0 0.0
    %5588 = vmatpush1.msra.mxu0 %v261
    %5589 = vmatprep.subr.mxu0 0.0
    %5590 = vmatpush1.msra.mxu0 %v262
    %5591 = vmatprep.subr.mxu0 0.0
    %5592 = vmatpush1.msra.mxu0 %v263
    %5593 = vmatprep.subr.mxu0 0.0
    %5594 = vmatpush1.msra.mxu0 %v264
    %5595 = vmatprep.subr.mxu0 0.0
    %5596 = vmatpush1.msra.mxu0 %v265
    %5597 = vmatprep.subr.mxu0 0.0
    %5598 = vmatpush1.msra.mxu0 %v266
    %5599 = vmatprep.subr.mxu0 0.0
    %5600 = vmatpush1.msra.mxu0 %v267
    %5601 = vmatprep.subr.mxu0 0.0
    %5602 = vmatpush1.msra.mxu0 %v268
    %5603 = vmatprep.subr.mxu0 0.0
    %5604 = vmatpush1.msra.mxu0 %v269
    %5605 = vmatprep.subr.mxu0 0.0
    %5606 = vmatpush1.msra.mxu0 %v270
    %5607 = vmatprep.subr.mxu0 0.0
    %5608 = vmatpush1.msra.mxu0 %v271
    %5609 = vmatprep.subr.mxu0 0.0
    %5610 = vmatpush1.msra.mxu0 %v272
    %5611 = vmatprep.subr.mxu0 0.0
    %5612 = vmatpush1.msra.mxu0 %v273
    %5613 = vmatprep.subr.mxu0 0.0
    %5614 = vmatpush1.msra.mxu0 %v274
    %5615 = vmatprep.subr.mxu0 0.0
    %5616 = vmatpush1.msra.mxu0 %v275
    %5617 = vmatprep.subr.mxu0 0.0
    %5618 = vmatpush1.msra.mxu0 %v276
    %5619 = vmatprep.subr.mxu0 0.0
    %5620 = vmatpush1.msra.mxu0 %v277
    %5621 = vmatprep.subr.mxu0 0.0
    %5622 = vmatpush1.msra.mxu0 %v278
    %5623 = vmatprep.subr.mxu0 0.0
    %5624 = vmatpush1.msra.mxu0 %v279
    %5625 = vmatprep.subr.mxu0 0.0
    %5626 = vmatpush1.msra.mxu0 %v280
    %5627 = vmatprep.subr.mxu0 0.0
    %5628 = vmatpush1.msra.mxu0 %v281
    %5629 = vmatprep.subr.mxu0 0.0
    %5630 = vmatpush1.msra.mxu0 %v282
    %5631 = vmatprep.subr.mxu0 0.0
    %5632 = vmatpush1.msra.mxu0 %v283
    %5633 = vmatprep.subr.mxu0 0.0
    %5634 = vmatpush1.msra.mxu0 %v284
    %5635 = vmatprep.subr.mxu0 0.0
    %5636 = vmatpush1.msra.mxu0 %v285
    %5637 = vmatprep.mubr.f32.mxu0 %v5104
    %5638 = vmatmul.mubr.f32.gmra.mrb[0].mxu0 %v5103
    %v5639 = vpop.f32.mrb[0].mxu0
    %v5640 = vadd.f32 %v5565, %v5639
    %v5641 = vpop.f32.mrb[0].mxu0
    %5642 = vmatprep.mubr.f32.mxu0 %v5120
    %5643 = vmatmul.mubr.f32.gmra.mrb[0].mxu0 %v5119
    %v5644 = vpop.f32.mrb[0].mxu0
    %v5645 = vadd.f32 %v5570, %v5644
    %v5646 = vpop.f32.mrb[0].mxu0
    %5647 = vdwg.mxu0
    %5648 = vmatprep.subr.mxu0 0.0
    %5649 = vmatpush1.msra.mxu0 %v286
    %5650 = vmatprep.subr.mxu0 0.0
    %5651 = vmatpush1.msra.mxu0 %v287
    %5652 = vmatprep.subr.mxu0 0.0
    %5653 = vmatpush1.msra.mxu0 %v288
    %5654 = vmatprep.subr.mxu0 0.0
    %5655 = vmatpush1.msra.mxu0 %v289
    %5656 = vmatprep.subr.mxu0 0.0
    %5657 = vmatpush1.msra.mxu0 %v290
    %5658 = vmatprep.subr.mxu0 0.0
    %5659 = vmatpush1.msra.mxu0 %v291
    %5660 = vmatprep.subr.mxu0 0.0
    %5661 = vmatpush1.msra.mxu0 %v292
    %5662 = vmatprep.subr.mxu0 0.0
    %5663 = vmatpush1.msra.mxu0 %v293
    %5664 = vmatprep.subr.mxu0 0.0
    %5665 = vmatpush1.msra.mxu0 %v294
    %5666 = vmatprep.subr.mxu0 0.0
    %5667 = vmatpush1.msra.mxu0 %v295
    %5668 = vmatprep.subr.mxu0 0.0
    %5669 = vmatpush1.msra.mxu0 %v296
    %5670 = vmatprep.subr.mxu0 0.0
    %5671 = vmatpush1.msra.mxu0 %v297
    %5672 = vmatprep.subr.mxu0 0.0
    %5673 = vmatpush1.msra.mxu0 %v298
    %5674 = vmatprep.subr.mxu0 0.0
    %5675 = vmatpush1.msra.mxu0 %v299
    %5676 = vmatprep.subr.mxu0 0.0
    %5677 = vmatpush1.msra.mxu0 %v300
    %5678 = vmatprep.subr.mxu0 0.0
    %5679 = vmatpush1.msra.mxu0 %v301
    %5680 = vmatprep.subr.mxu0 0.0
    %5681 = vmatpush1.msra.mxu0 %v302
    %5682 = vmatprep.subr.mxu0 0.0
    %5683 = vmatpush1.msra.mxu0 %v303
    %5684 = vmatprep.subr.mxu0 0.0
    %5685 = vmatpush1.msra.mxu0 %v304
    %5686 = vmatprep.subr.mxu0 0.0
    %5687 = vmatpush1.msra.mxu0 %v305
    %5688 = vmatprep.subr.mxu0 0.0
    %5689 = vmatpush1.msra.mxu0 %v306
    %5690 = vmatprep.subr.mxu0 0.0
    %5691 = vmatpush1.msra.mxu0 %v307
    %5692 = vmatprep.subr.mxu0 0.0
    %5693 = vmatpush1.msra.mxu0 %v308
    %5694 = vmatprep.subr.mxu0 0.0
    %5695 = vmatpush1.msra.mxu0 %v309
    %5696 = vmatprep.subr.mxu0 0.0
    %5697 = vmatpush1.msra.mxu0 %v310
    %5698 = vmatprep.subr.mxu0 0.0
    %5699 = vmatpush1.msra.mxu0 %v311
    %5700 = vmatprep.subr.mxu0 0.0
    %5701 = vmatpush1.msra.mxu0 %v312
    %5702 = vmatprep.subr.mxu0 0.0
    %5703 = vmatpush1.msra.mxu0 %v313
    %5704 = vmatprep.subr.mxu0 0.0
    %5705 = vmatpush1.msra.mxu0 %v314
    %5706 = vmatprep.subr.mxu0 0.0
    %5707 = vmatpush1.msra.mxu0 %v315
    %5708 = vmatprep.subr.mxu0 0.0
    %5709 = vmatpush1.msra.mxu0 %v316
    %5710 = vmatprep.subr.mxu0 0.0
    %5711 = vmatpush1.msra.mxu0 %v317
    %5712 = vmatprep.mubr.f32.mxu0 %v5106
    %5713 = vmatmul.mubr.f32.gmra.mrb[0].mxu0 %v5105
    %v5714 = vpop.f32.mrb[0].mxu0
    %v5715 = vadd.f32 %v5640, %v5714
    %v5716 = vpop.f32.mrb[0].mxu0
    %5717 = vmatprep.mubr.f32.mxu0 %v5122
    %5718 = vmatmul.mubr.f32.gmra.mrb[0].mxu0 %v5121
    %v5719 = vpop.f32.mrb[0].mxu0
    %v5720 = vadd.f32 %v5645, %v5719
    %v5721 = vpop.f32.mrb[0].mxu0
    %5722 = vdwg.mxu0
    %5723 = vmatprep.subr.mxu0 0.0
    %5724 = vmatpush1.msra.mxu0 %v5083
    %5725 = vmatprep.subr.mxu0 0.0
    %5726 = vmatpush1.msra.mxu0 %v5088
    %5727 = vmatprep.subr.mxu0 0.0
    %5728 = vmatpush1.msra.mxu0 0.0
    %5729 = vmatprep.subr.mxu0 0.0
    %5730 = vmatpush1.msra.mxu0 0.0
    %5731 = vmatprep.subr.mxu0 0.0
    %5732 = vmatpush1.msra.mxu0 0.0
    %5733 = vmatprep.subr.mxu0 0.0
    %5734 = vmatpush1.msra.mxu0 0.0
    %5735 = vmatprep.subr.mxu0 0.0
    %5736 = vmatpush1.msra.mxu0 0.0
    %5737 = vmatprep.subr.mxu0 0.0
    %5738 = vmatpush1.msra.mxu0 0.0
    %5739 = vmatprep.subr.mxu0 0.0
    %5740 = vmatpush1.msra.mxu0 0.0
    %5741 = vmatprep.subr.mxu0 0.0
    %5742 = vmatpush1.msra.mxu0 0.0
    %5743 = vmatprep.subr.mxu0 0.0
    %5744 = vmatpush1.msra.mxu0 0.0
    %5745 = vmatprep.subr.mxu0 0.0
    %5746 = vmatpush1.msra.mxu0 0.0
    %5747 = vmatprep.subr.mxu0 0.0
    %5748 = vmatpush1.msra.mxu0 0.0
    %5749 = vmatprep.subr.mxu0 0.0
    %5750 = vmatpush1.msra.mxu0 0.0
    %5751 = vmatprep.subr.mxu0 0.0
    %5752 = vmatpush1.msra.mxu0 0.0
    %5753 = vmatprep.subr.mxu0 0.0
    %5754 = vmatpush1.msra.mxu0 0.0
    %5755 = vmatprep.subr.mxu0 0.0
    %5756 = vmatpush1.msra.mxu0 0.0
    %5757 = vmatprep.subr.mxu0 0.0
    %5758 = vmatpush1.msra.mxu0 0.0
    %5759 = vmatprep.subr.mxu0 0.0
    %5760 = vmatpush1.msra.mxu0 0.0
    %5761 = vmatprep.subr.mxu0 0.0
    %5762 = vmatpush1.msra.mxu0 0.0
    %5763 = vmatprep.subr.mxu0 0.0
    %5764 = vmatpush1.msra.mxu0 0.0
    %5765 = vmatprep.subr.mxu0 0.0
    %5766 = vmatpush1.msra.mxu0 0.0
    %5767 = vmatprep.subr.mxu0 0.0
    %5768 = vmatpush1.msra.mxu0 0.0
    %5769 = vmatprep.subr.mxu0 0.0
    %5770 = vmatpush1.msra.mxu0 0.0
    %5771 = vmatprep.subr.mxu0 0.0
    %5772 = vmatpush1.msra.mxu0 0.0
    %5773 = vmatprep.subr.mxu0 0.0
    %5774 = vmatpush1.msra.mxu0 0.0
    %5775 = vmatprep.subr.mxu0 0.0
    %5776 = vmatpush1.msra.mxu0 0.0
    %5777 = vmatprep.subr.mxu0 0.0
    %5778 = vmatpush1.msra.mxu0 0.0
    %5779 = vmatprep.subr.mxu0 0.0
    %5780 = vmatpush1.msra.mxu0 0.0
    %5781 = vmatprep.subr.mxu0 0.0
    %5782 = vmatpush1.msra.mxu0 0.0
    %5783 = vmatprep.subr.mxu0 0.0
    %5784 = vmatpush1.msra.mxu0 0.0
    %5785 = vmatprep.subr.mxu0 0.0
    %5786 = vmatpush1.msra.mxu0 0.0
    %5787 = vmatprep.mubr.f32.mxu0 0.0
    %5788 = vmatmul.mubr.f32.gmra.mrb[0].mxu0 %v2199
    %v5789 = vpop.f32.mrb[0].mxu0
    %v5790 = vadd.f32 0.0, %v5789
    %v5791 = vpop.f32.mrb[0].mxu0
    %5792 = vdwg.mxu0
    %5793 = vmatprep.subr.mxu0 0.0
    %5794 = vmatpush1.msra.mxu0 %v5715
    %5795 = vmatprep.subr.mxu0 0.0
    %5796 = vmatpush1.msra.mxu0 %v5720
    %5797 = vmatprep.subr.mxu0 0.0
    %5798 = vmatpush1.msra.mxu0 0.0
    %5799 = vmatprep.subr.mxu0 0.0
    %5800 = vmatpush1.msra.mxu0 0.0
    %5801 = vmatprep.subr.mxu0 0.0
    %5802 = vmatpush1.msra.mxu0 0.0
    %5803 = vmatprep.subr.mxu0 0.0
    %5804 = vmatpush1.msra.mxu0 0.0
    %5805 = vmatprep.subr.mxu0 0.0
    %5806 = vmatpush1.msra.mxu0 0.0
    %5807 = vmatprep.subr.mxu0 0.0
    %5808 = vmatpush1.msra.mxu0 0.0
    %5809 = vmatprep.subr.mxu0 0.0
    %5810 = vmatpush1.msra.mxu0 0.0
    %5811 = vmatprep.subr.mxu0 0.0
    %5812 = vmatpush1.msra.mxu0 0.0
    %5813 = vmatprep.subr.mxu0 0.0
    %5814 = vmatpush1.msra.mxu0 0.0
    %5815 = vmatprep.subr.mxu0 0.0
    %5816 = vmatpush1.msra.mxu0 0.0
    %5817 = vmatprep.subr.mxu0 0.0
    %5818 = vmatpush1.msra.mxu0 0.0
    %5819 = vmatprep.subr.mxu0 0.0
    %5820 = vmatpush1.msra.mxu0 0.0
    %5821 = vmatprep.subr.mxu0 0.0
    %5822 = vmatpush1.msra.mxu0 0.0
    %5823 = vmatprep.subr.mxu0 0.0
    %5824 = vmatpush1.msra.mxu0 0.0
    %5825 = vmatprep.subr.mxu0 0.0
    %5826 = vmatpush1.msra.mxu0 0.0
    %5827 = vmatprep.subr.mxu0 0.0
    %5828 = vmatpush1.msra.mxu0 0.0
    %5829 = vmatprep.subr.mxu0 0.0
    %5830 = vmatpush1.msra.mxu0 0.0
    %5831 = vmatprep.subr.mxu0 0.0
    %5832 = vmatpush1.msra.mxu0 0.0
    %5833 = vmatprep.subr.mxu0 0.0
    %5834 = vmatpush1.msra.mxu0 0.0
    %5835 = vmatprep.subr.mxu0 0.0
    %5836 = vmatpush1.msra.mxu0 0.0
    %5837 = vmatprep.subr.mxu0 0.0
    %5838 = vmatpush1.msra.mxu0 0.0
    %5839 = vmatprep.subr.mxu0 0.0
    %5840 = vmatpush1.msra.mxu0 0.0
    %5841 = vmatprep.subr.mxu0 0.0
    %5842 = vmatpush1.msra.mxu0 0.0
    %5843 = vmatprep.subr.mxu0 0.0
    %5844 = vmatpush1.msra.mxu0 0.0
    %5845 = vmatprep.subr.mxu0 0.0
    %5846 = vmatpush1.msra.mxu0 0.0
    %5847 = vmatprep.subr.mxu0 0.0
    %5848 = vmatpush1.msra.mxu0 0.0
    %5849 = vmatprep.subr.mxu0 0.0
    %5850 = vmatpush1.msra.mxu0 0.0
    %5851 = vmatprep.subr.mxu0 0.0
    %5852 = vmatpush1.msra.mxu0 0.0
    %5853 = vmatprep.subr.mxu0 0.0
    %5854 = vmatpush1.msra.mxu0 0.0
    %5855 = vmatprep.subr.mxu0 0.0
    %5856 = vmatpush1.msra.mxu0 0.0
    %5857 = vmatprep.mubr.f32.mxu0 0.0
    %5858 = vmatmul.mubr.f32.gmra.mrb[0].mxu0 %v2199
    %v5859 = vpop.f32.mrb[0].mxu0
    %v5860 = vadd.f32 0.0, %v5859
    %v5861 = vpop.f32.mrb[0].mxu0
    %5862 = vdwg.mxu0
    %v5863 = vmul.f32 %v5790, 0.001953125
    %v5864 = vmul.f32 %v5860, 0.001953125
    %v5865 = vmul.f32 %v5863, %v5863
    %v5866 = vsub.f32 %v5864, %v5865
    %v5867 = vmax.f32 %v5866, 0.0
    %v5868 = vadd.f32 %v5867, 1e-05
    %v5869 = vrsqrt.pop %v5868
    %5870 = vmatprep.subr.mxu0 0.0
    %5871 = vmatpush1.msra.mxu0 %v5863
    %5872 = vmatprep.subr.mxu0 0.0
    %5873 = vmatpush1.msra.mxu0 0.0
    %5874 = vmatprep.subr.mxu0 0.0
    %5875 = vmatpush1.msra.mxu0 0.0
    %5876 = vmatprep.subr.mxu0 0.0
    %5877 = vmatpush1.msra.mxu0 0.0
    %5878 = vmatprep.subr.mxu0 0.0
    %5879 = vmatpush1.msra.mxu0 0.0
    %5880 = vmatprep.subr.mxu0 0.0
    %5881 = vmatpush1.msra.mxu0 0.0
    %5882 = vmatprep.subr.mxu0 0.0
    %5883 = vmatpush1.msra.mxu0 0.0
    %5884 = vmatprep.subr.mxu0 0.0
    %5885 = vmatpush1.msra.mxu0 0.0
    %5886 = vmatprep.subr.mxu0 0.0
    %5887 = vmatpush1.msra.mxu0 0.0
    %5888 = vmatprep.subr.mxu0 0.0
    %5889 = vmatpush1.msra.mxu0 0.0
    %5890 = vmatprep.subr.mxu0 0.0
    %5891 = vmatpush1.msra.mxu0 0.0
    %5892 = vmatprep.subr.mxu0 0.0
    %5893 = vmatpush1.msra.mxu0 0.0
    %5894 = vmatprep.subr.mxu0 0.0
    %5895 = vmatpush1.msra.mxu0 0.0
    %5896 = vmatprep.subr.mxu0 0.0
    %5897 = vmatpush1.msra.mxu0 0.0
    %5898 = vmatprep.subr.mxu0 0.0
    %5899 = vmatpush1.msra.mxu0 0.0
    %5900 = vmatprep.subr.mxu0 0.0
    %5901 = vmatpush1.msra.mxu0 0.0
    %5902 = vmatprep.subr.mxu0 0.0
    %5903 = vmatpush1.msra.mxu0 0.0
    %5904 = vmatprep.subr.mxu0 0.0
    %5905 = vmatpush1.msra.mxu0 0.0
    %5906 = vmatprep.subr.mxu0 0.0
    %5907 = vmatpush1.msra.mxu0 0.0
    %5908 = vmatprep.subr.mxu0 0.0
    %5909 = vmatpush1.msra.mxu0 0.0
    %5910 = vmatprep.subr.mxu0 0.0
    %5911 = vmatpush1.msra.mxu0 0.0
    %5912 = vmatprep.subr.mxu0 0.0
    %5913 = vmatpush1.msra.mxu0 0.0
    %5914 = vmatprep.subr.mxu0 0.0
    %5915 = vmatpush1.msra.mxu0 0.0
    %5916 = vmatprep.subr.mxu0 0.0
    %5917 = vmatpush1.msra.mxu0 0.0
    %5918 = vmatprep.subr.mxu0 0.0
    %5919 = vmatpush1.msra.mxu0 0.0
    %5920 = vmatprep.subr.mxu0 0.0
    %5921 = vmatpush1.msra.mxu0 0.0
    %5922 = vmatprep.subr.mxu0 0.0
    %5923 = vmatpush1.msra.mxu0 0.0
    %5924 = vmatprep.subr.mxu0 0.0
    %5925 = vmatpush1.msra.mxu0 0.0
    %5926 = vmatprep.subr.mxu0 0.0
    %5927 = vmatpush1.msra.mxu0 0.0
    %5928 = vmatprep.subr.mxu0 0.0
    %5929 = vmatpush1.msra.mxu0 0.0
    %5930 = vmatprep.subr.mxu0 0.0
    %5931 = vmatpush1.msra.mxu0 0.0
    %5932 = vmatprep.subr.mxu0 0.0
    %5933 = vmatpush1.msra.mxu0 0.0
    %5934 = vmatprep.mubr.f32.mxu0 0.0
    %5935 = vmatmul.mubr.f32.gmra.mrb[0].mxu0 %v2350
    %v5936 = vpop.f32.mrb[0].mxu0
    %v5937 = vadd.f32 0.0, %v5936
    %v5938 = vpop.f32.mrb[0].mxu0
    %5939 = vmatprep.mubr.f32.mxu0 0.0
    %5940 = vmatmul.mubr.f32.gmra.mrb[0].mxu0 %v2353
    %v5941 = vpop.f32.mrb[0].mxu0
    %v5942 = vadd.f32 0.0, %v5941
    %v5943 = vpop.f32.mrb[0].mxu0
    %5944 = vdwg.mxu0
    %5945 = vmatprep.subr.mxu0 0.0
    %5946 = vmatpush1.msra.mxu0 %v5869
    %5947 = vmatprep.subr.mxu0 0.0
    %5948 = vmatpush1.msra.mxu0 0.0
    %5949 = vmatprep.subr.mxu0 0.0
    %5950 = vmatpush1.msra.mxu0 0.0
    %5951 = vmatprep.subr.mxu0 0.0
    %5952 = vmatpush1.msra.mxu0 0.0
    %5953 = vmatprep.subr.mxu0 0.0
    %5954 = vmatpush1.msra.mxu0 0.0
    %5955 = vmatprep.subr.mxu0 0.0
    %5956 = vmatpush1.msra.mxu0 0.0
    %5957 = vmatprep.subr.mxu0 0.0
    %5958 = vmatpush1.msra.mxu0 0.0
    %5959 = vmatprep.subr.mxu0 0.0
    %5960 = vmatpush1.msra.mxu0 0.0
    %5961 = vmatprep.subr.mxu0 0.0
    %5962 = vmatpush1.msra.mxu0 0.0
    %5963 = vmatprep.subr.mxu0 0.0
    %5964 = vmatpush1.msra.mxu0 0.0
    %5965 = vmatprep.subr.mxu0 0.0
    %5966 = vmatpush1.msra.mxu0 0.0
    %5967 = vmatprep.subr.mxu0 0.0
    %5968 = vmatpush1.msra.mxu0 0.0
    %5969 = vmatprep.subr.mxu0 0.0
    %5970 = vmatpush1.msra.mxu0 0.0
    %5971 = vmatprep.subr.mxu0 0.0
    %5972 = vmatpush1.msra.mxu0 0.0
    %5973 = vmatprep.subr.mxu0 0.0
    %5974 = vmatpush1.msra.mxu0 0.0
    %5975 = vmatprep.subr.mxu0 0.0
    %5976 = vmatpush1.msra.mxu0 0.0
    %5977 = vmatprep.subr.mxu0 0.0
    %5978 = vmatpush1.msra.mxu0 0.0
    %5979 = vmatprep.subr.mxu0 0.0
    %5980 = vmatpush1.msra.mxu0 0.0
    %5981 = vmatprep.subr.mxu0 0.0
    %5982 = vmatpush1.msra.mxu0 0.0
    %5983 = vmatprep.subr.mxu0 0.0
    %5984 = vmatpush1.msra.mxu0 0.0
    %5985 = vmatprep.subr.mxu0 0.0
    %5986 = vmatpush1.msra.mxu0 0.0
    %5987 = vmatprep.subr.mxu0 0.0
    %5988 = vmatpush1.msra.mxu0 0.0
    %5989 = vmatprep.subr.mxu0 0.0
    %5990 = vmatpush1.msra.mxu0 0.0
    %5991 = vmatprep.subr.mxu0 0.0
    %5992 = vmatpush1.msra.mxu0 0.0
    %5993 = vmatprep.subr.mxu0 0.0
    %5994 = vmatpush1.msra.mxu0 0.0
    %5995 = vmatprep.subr.mxu0 0.0
    %5996 = vmatpush1.msra.mxu0 0.0
    %5997 = vmatprep.subr.mxu0 0.0
    %5998 = vmatpush1.msra.mxu0 0.0
    %5999 = vmatprep.subr.mxu0 0.0
    %6000 = vmatpush1.msra.mxu0 0.0
    %6001 = vmatprep.subr.mxu0 0.0
    %6002 = vmatpush1.msra.mxu0 0.0
    %6003 = vmatprep.subr.mxu0 0.0
    %6004 = vmatpush1.msra.mxu0 0.0
    %6005 = vmatprep.subr.mxu0 0.0
    %6006 = vmatpush1.msra.mxu0 0.0
    %6007 = vmatprep.subr.mxu0 0.0
    %6008 = vmatpush1.msra.mxu0 0.0
    %6009 = vmatprep.mubr.f32.mxu0 0.0
    %6010 = vmatmul.mubr.f32.gmra.mrb[0].mxu0 %v2350
    %v6011 = vpop.f32.mrb[0].mxu0
    %v6012 = vadd.f32 0.0, %v6011
    %v6013 = vpop.f32.mrb[0].mxu0
    %6014 = vmatprep.mubr.f32.mxu0 0.0
    %6015 = vmatmul.mubr.f32.gmra.mrb[0].mxu0 %v2353
    %v6016 = vpop.f32.mrb[0].mxu0
    %v6017 = vadd.f32 0.0, %v6016
    %v6018 = vpop.f32.mrb[0].mxu0
    %6019 = vdwg.mxu0
    %6020 = vset.pattern.permute.xlu0 2
    %6021 = vperm.xlu0 %6020, %v337
    %v6022 = vpop.permute.xlu0 %6021
    %6024 = vset.pattern.permute.xlu0 2
    %6025 = vperm.xlu0 %6024, %v338
    %v6026 = vpop.permute.xlu0 %6025
    %v6028 = vmul.f32 %v6012, %v6022
    %v6029 = vmul.f32 %v6017, %v6026
    %v6030 = vmul.f32 %v5937, %v6028
    %v6031 = vmul.f32 %v5942, %v6029
    %6032 = vset.pattern.permute.xlu0 3
    %6033 = vperm.xlu0 %6032, %v337
    %v6034 = vpop.permute.xlu0 %6033
    %6036 = vset.pattern.permute.xlu0 3
    %6037 = vperm.xlu0 %6036, %v338
    %v6038 = vpop.permute.xlu0 %6037
    %v6040 = vsub.f32 %v6034, %v6030
    %v6041 = vsub.f32 %v6038, %v6031
    %v6043 = vsel %vm2348, %v6028, 0
    %v6046 = vsel %vm2348, %v6029, 0
    %6048 = vmatprep.subr.mxu0 %v319
    %6049 = vmatpush1.msra.mxu0 %v318
    %6050 = vmatprep.subr.mxu0 0.0
    %6051 = vmatpush1.msra.mxu0 0.0
    %6052 = vmatprep.subr.mxu0 0.0
    %6053 = vmatpush1.msra.mxu0 0.0
    %6054 = vmatprep.subr.mxu0 0.0
    %6055 = vmatpush1.msra.mxu0 0.0
    %6056 = vmatprep.subr.mxu0 0.0
    %6057 = vmatpush1.msra.mxu0 0.0
    %6058 = vmatprep.subr.mxu0 0.0
    %6059 = vmatpush1.msra.mxu0 0.0
    %6060 = vmatprep.subr.mxu0 0.0
    %6061 = vmatpush1.msra.mxu0 0.0
    %6062 = vmatprep.subr.mxu0 0.0
    %6063 = vmatpush1.msra.mxu0 0.0
    %6064 = vmatprep.subr.mxu0 0.0
    %6065 = vmatpush1.msra.mxu0 0.0
    %6066 = vmatprep.subr.mxu0 0.0
    %6067 = vmatpush1.msra.mxu0 0.0
    %6068 = vmatprep.subr.mxu0 0.0
    %6069 = vmatpush1.msra.mxu0 0.0
    %6070 = vmatprep.subr.mxu0 0.0
    %6071 = vmatpush1.msra.mxu0 0.0
    %6072 = vmatprep.subr.mxu0 0.0
    %6073 = vmatpush1.msra.mxu0 0.0
    %6074 = vmatprep.subr.mxu0 0.0
    %6075 = vmatpush1.msra.mxu0 0.0
    %6076 = vmatprep.subr.mxu0 0.0
    %6077 = vmatpush1.msra.mxu0 0.0
    %6078 = vmatprep.subr.mxu0 0.0
    %6079 = vmatpush1.msra.mxu0 0.0
    %6080 = vmatprep.subr.mxu0 0.0
    %6081 = vmatpush1.msra.mxu0 0.0
    %6082 = vmatprep.subr.mxu0 0.0
    %6083 = vmatpush1.msra.mxu0 0.0
    %6084 = vmatprep.subr.mxu0 0.0
    %6085 = vmatpush1.msra.mxu0 0.0
    %6086 = vmatprep.subr.mxu0 0.0
    %6087 = vmatpush1.msra.mxu0 0.0
    %6088 = vmatprep.subr.mxu0 0.0
    %6089 = vmatpush1.msra.mxu0 0.0
    %6090 = vmatprep.subr.mxu0 0.0
    %6091 = vmatpush1.msra.mxu0 0.0
    %6092 = vmatprep.subr.mxu0 0.0
    %6093 = vmatpush1.msra.mxu0 0.0
    %6094 = vmatprep.subr.mxu0 0.0
    %6095 = vmatpush1.msra.mxu0 0.0
    %6096 = vmatprep.subr.mxu0 0.0
    %6097 = vmatpush1.msra.mxu0 0.0
    %6098 = vmatprep.subr.mxu0 0.0
    %6099 = vmatpush1.msra.mxu0 0.0
    %6100 = vmatprep.subr.mxu0 0.0
    %6101 = vmatpush1.msra.mxu0 0.0
    %6102 = vmatprep.subr.mxu0 0.0
    %6103 = vmatpush1.msra.mxu0 0.0
    %6104 = vmatprep.subr.mxu0 0.0
    %6105 = vmatpush1.msra.mxu0 0.0
    %6106 = vmatprep.subr.mxu0 0.0
    %6107 = vmatpush1.msra.mxu0 0.0
    %6108 = vmatprep.subr.mxu0 0.0
    %6109 = vmatpush1.msra.mxu0 0.0
    %6110 = vmatprep.subr.mxu0 0.0
    %6111 = vmatpush1.msra.mxu0 0.0
    %6112 = vmatprep.mubr.f32.mxu0 0.0
    %6113 = vmatmul.mubr.f32.gmra.mrb[0].mxu0 %v6043
    %v6114 = vpop.f32.mrb[0].mxu0
    %v6115 = vadd.f32 0.0, %v6114
    %v6116 = vpop.f32.mrb[0].mxu0
    %v6117 = vadd.f32 0.0, %v6116
    %6118 = vmatprep.mubr.f32.mxu0 0.0
    %6119 = vmatmul.mubr.f32.gmra.mrb[0].mxu0 %v6046
    %v6120 = vpop.f32.mrb[0].mxu0
    %v6121 = vadd.f32 0.0, %v6120
    %v6122 = vpop.f32.mrb[0].mxu0
    %v6123 = vadd.f32 0.0, %v6122
    %6124 = vdwg.mxu0
    %6125 = vmatprep.subr.mxu0 %v321
    %6126 = vmatpush1.msra.mxu0 %v320
    %6127 = vmatprep.subr.mxu0 0.0
    %6128 = vmatpush1.msra.mxu0 0.0
    %6129 = vmatprep.subr.mxu0 0.0
    %6130 = vmatpush1.msra.mxu0 0.0
    %6131 = vmatprep.subr.mxu0 0.0
    %6132 = vmatpush1.msra.mxu0 0.0
    %6133 = vmatprep.subr.mxu0 0.0
    %6134 = vmatpush1.msra.mxu0 0.0
    %6135 = vmatprep.subr.mxu0 0.0
    %6136 = vmatpush1.msra.mxu0 0.0
    %6137 = vmatprep.subr.mxu0 0.0
    %6138 = vmatpush1.msra.mxu0 0.0
    %6139 = vmatprep.subr.mxu0 0.0
    %6140 = vmatpush1.msra.mxu0 0.0
    %6141 = vmatprep.subr.mxu0 0.0
    %6142 = vmatpush1.msra.mxu0 0.0
    %6143 = vmatprep.subr.mxu0 0.0
    %6144 = vmatpush1.msra.mxu0 0.0
    %6145 = vmatprep.subr.mxu0 0.0
    %6146 = vmatpush1.msra.mxu0 0.0
    %6147 = vmatprep.subr.mxu0 0.0
    %6148 = vmatpush1.msra.mxu0 0.0
    %6149 = vmatprep.subr.mxu0 0.0
    %6150 = vmatpush1.msra.mxu0 0.0
    %6151 = vmatprep.subr.mxu0 0.0
    %6152 = vmatpush1.msra.mxu0 0.0
    %6153 = vmatprep.subr.mxu0 0.0
    %6154 = vmatpush1.msra.mxu0 0.0
    %6155 = vmatprep.subr.mxu0 0.0
    %6156 = vmatpush1.msra.mxu0 0.0
    %6157 = vmatprep.subr.mxu0 0.0
    %6158 = vmatpush1.msra.mxu0 0.0
    %6159 = vmatprep.subr.mxu0 0.0
    %6160 = vmatpush1.msra.mxu0 0.0
    %6161 = vmatprep.subr.mxu0 0.0
    %6162 = vmatpush1.msra.mxu0 0.0
    %6163 = vmatprep.subr.mxu0 0.0
    %6164 = vmatpush1.msra.mxu0 0.0
    %6165 = vmatprep.subr.mxu0 0.0
    %6166 = vmatpush1.msra.mxu0 0.0
    %6167 = vmatprep.subr.mxu0 0.0
    %6168 = vmatpush1.msra.mxu0 0.0
    %6169 = vmatprep.subr.mxu0 0.0
    %6170 = vmatpush1.msra.mxu0 0.0
    %6171 = vmatprep.subr.mxu0 0.0
    %6172 = vmatpush1.msra.mxu0 0.0
    %6173 = vmatprep.subr.mxu0 0.0
    %6174 = vmatpush1.msra.mxu0 0.0
    %6175 = vmatprep.subr.mxu0 0.0
    %6176 = vmatpush1.msra.mxu0 0.0
    %6177 = vmatprep.subr.mxu0 0.0
    %6178 = vmatpush1.msra.mxu0 0.0
    %6179 = vmatprep.subr.mxu0 0.0
    %6180 = vmatpush1.msra.mxu0 0.0
    %6181 = vmatprep.subr.mxu0 0.0
    %6182 = vmatpush1.msra.mxu0 0.0
    %6183 = vmatprep.subr.mxu0 0.0
    %6184 = vmatpush1.msra.mxu0 0.0
    %6185 = vmatprep.subr.mxu0 0.0
    %6186 = vmatpush1.msra.mxu0 0.0
    %6187 = vmatprep.subr.mxu0 0.0
    %6188 = vmatpush1.msra.mxu0 0.0
    %6189 = vmatprep.mubr.f32.mxu0 0.0
    %6190 = vmatmul.mubr.f32.gmra.mrb[0].mxu0 %v6043
    %v6191 = vpop.f32.mrb[0].mxu0
    %v6192 = vadd.f32 0.0, %v6191
    %v6193 = vpop.f32.mrb[0].mxu0
    %v6194 = vadd.f32 0.0, %v6193
    %6195 = vmatprep.mubr.f32.mxu0 0.0
    %6196 = vmatmul.mubr.f32.gmra.mrb[0].mxu0 %v6046
    %v6197 = vpop.f32.mrb[0].mxu0
    %v6198 = vadd.f32 0.0, %v6197
    %v6199 = vpop.f32.mrb[0].mxu0
    %v6200 = vadd.f32 0.0, %v6199
    %6201 = vdwg.mxu0
    %6202 = vmatprep.subr.mxu0 %v323
    %6203 = vmatpush1.msra.mxu0 %v322
    %6204 = vmatprep.subr.mxu0 0.0
    %6205 = vmatpush1.msra.mxu0 0.0
    %6206 = vmatprep.subr.mxu0 0.0
    %6207 = vmatpush1.msra.mxu0 0.0
    %6208 = vmatprep.subr.mxu0 0.0
    %6209 = vmatpush1.msra.mxu0 0.0
    %6210 = vmatprep.subr.mxu0 0.0
    %6211 = vmatpush1.msra.mxu0 0.0
    %6212 = vmatprep.subr.mxu0 0.0
    %6213 = vmatpush1.msra.mxu0 0.0
    %6214 = vmatprep.subr.mxu0 0.0
    %6215 = vmatpush1.msra.mxu0 0.0
    %6216 = vmatprep.subr.mxu0 0.0
    %6217 = vmatpush1.msra.mxu0 0.0
    %6218 = vmatprep.subr.mxu0 0.0
    %6219 = vmatpush1.msra.mxu0 0.0
    %6220 = vmatprep.subr.mxu0 0.0
    %6221 = vmatpush1.msra.mxu0 0.0
    %6222 = vmatprep.subr.mxu0 0.0
    %6223 = vmatpush1.msra.mxu0 0.0
    %6224 = vmatprep.subr.mxu0 0.0
    %6225 = vmatpush1.msra.mxu0 0.0
    %6226 = vmatprep.subr.mxu0 0.0
    %6227 = vmatpush1.msra.mxu0 0.0
    %6228 = vmatprep.subr.mxu0 0.0
    %6229 = vmatpush1.msra.mxu0 0.0
    %6230 = vmatprep.subr.mxu0 0.0
    %6231 = vmatpush1.msra.mxu0 0.0
    %6232 = vmatprep.subr.mxu0 0.0
    %6233 = vmatpush1.msra.mxu0 0.0
    %6234 = vmatprep.subr.mxu0 0.0
    %6235 = vmatpush1.msra.mxu0 0.0
    %6236 = vmatprep.subr.mxu0 0.0
    %6237 = vmatpush1.msra.mxu0 0.0
    %6238 = vmatprep.subr.mxu0 0.0
    %6239 = vmatpush1.msra.mxu0 0.0
    %6240 = vmatprep.subr.mxu0 0.0
    %6241 = vmatpush1.msra.mxu0 0.0
    %6242 = vmatprep.subr.mxu0 0.0
    %6243 = vmatpush1.msra.mxu0 0.0
    %6244 = vmatprep.subr.mxu0 0.0
    %6245 = vmatpush1.msra.mxu0 0.0
    %6246 = vmatprep.subr.mxu0 0.0
    %6247 = vmatpush1.msra.mxu0 0.0
    %6248 = vmatprep.subr.mxu0 0.0
    %6249 = vmatpush1.msra.mxu0 0.0
    %6250 = vmatprep.subr.mxu0 0.0
    %6251 = vmatpush1.msra.mxu0 0.0
    %6252 = vmatprep.subr.mxu0 0.0
    %6253 = vmatpush1.msra.mxu0 0.0
    %6254 = vmatprep.subr.mxu0 0.0
    %6255 = vmatpush1.msra.mxu0 0.0
    %6256 = vmatprep.subr.mxu0 0.0
    %6257 = vmatpush1.msra.mxu0 0.0
    %6258 = vmatprep.subr.mxu0 0.0
    %6259 = vmatpush1.msra.mxu0 0.0
    %6260 = vmatprep.subr.mxu0 0.0
    %6261 = vmatpush1.msra.mxu0 0.0
    %6262 = vmatprep.subr.mxu0 0.0
    %6263 = vmatpush1.msra.mxu0 0.0
    %6264 = vmatprep.subr.mxu0 0.0
    %6265 = vmatpush1.msra.mxu0 0.0
    %6266 = vmatprep.mubr.f32.mxu0 0.0
    %6267 = vmatmul.mubr.f32.gmra.mrb[0].mxu0 %v6043
    %v6268 = vpop.f32.mrb[0].mxu0
    %v6269 = vadd.f32 0.0, %v6268
    %v6270 = vpop.f32.mrb[0].mxu0
    %v6271 = vadd.f32 0.0, %v6270
    %6272 = vmatprep.mubr.f32.mxu0 0.0
    %6273 = vmatmul.mubr.f32.gmra.mrb[0].mxu0 %v6046
    %v6274 = vpop.f32.mrb[0].mxu0
    %v6275 = vadd.f32 0.0, %v6274
    %v6276 = vpop.f32.mrb[0].mxu0
    %v6277 = vadd.f32 0.0, %v6276
    %6278 = vdwg.mxu0
    %6279 = vmatprep.subr.mxu0 %v325
    %6280 = vmatpush1.msra.mxu0 %v324
    %6281 = vmatprep.subr.mxu0 0.0
    %6282 = vmatpush1.msra.mxu0 0.0
    %6283 = vmatprep.subr.mxu0 0.0
    %6284 = vmatpush1.msra.mxu0 0.0
    %6285 = vmatprep.subr.mxu0 0.0
    %6286 = vmatpush1.msra.mxu0 0.0
    %6287 = vmatprep.subr.mxu0 0.0
    %6288 = vmatpush1.msra.mxu0 0.0
    %6289 = vmatprep.subr.mxu0 0.0
    %6290 = vmatpush1.msra.mxu0 0.0
    %6291 = vmatprep.subr.mxu0 0.0
    %6292 = vmatpush1.msra.mxu0 0.0
    %6293 = vmatprep.subr.mxu0 0.0
    %6294 = vmatpush1.msra.mxu0 0.0
    %6295 = vmatprep.subr.mxu0 0.0
    %6296 = vmatpush1.msra.mxu0 0.0
    %6297 = vmatprep.subr.mxu0 0.0
    %6298 = vmatpush1.msra.mxu0 0.0
    %6299 = vmatprep.subr.mxu0 0.0
    %6300 = vmatpush1.msra.mxu0 0.0
    %6301 = vmatprep.subr.mxu0 0.0
    %6302 = vmatpush1.msra.mxu0 0.0
    %6303 = vmatprep.subr.mxu0 0.0
    %6304 = vmatpush1.msra.mxu0 0.0
    %6305 = vmatprep.subr.mxu0 0.0
    %6306 = vmatpush1.msra.mxu0 0.0
    %6307 = vmatprep.subr.mxu0 0.0
    %6308 = vmatpush1.msra.mxu0 0.0
    %6309 = vmatprep.subr.mxu0 0.0
    %6310 = vmatpush1.msra.mxu0 0.0
    %6311 = vmatprep.subr.mxu0 0.0
    %6312 = vmatpush1.msra.mxu0 0.0
    %6313 = vmatprep.subr.mxu0 0.0
    %6314 = vmatpush1.msra.mxu0 0.0
    %6315 = vmatprep.subr.mxu0 0.0
    %6316 = vmatpush1.msra.mxu0 0.0
    %6317 = vmatprep.subr.mxu0 0.0
    %6318 = vmatpush1.msra.mxu0 0.0
    %6319 = vmatprep.subr.mxu0 0.0
    %6320 = vmatpush1.msra.mxu0 0.0
    %6321 = vmatprep.subr.mxu0 0.0
    %6322 = vmatpush1.msra.mxu0 0.0
    %6323 = vmatprep.subr.mxu0 0.0
    %6324 = vmatpush1.msra.mxu0 0.0
    %6325 = vmatprep.subr.mxu0 0.0
    %6326 = vmatpush1.msra.mxu0 0.0
    %6327 = vmatprep.subr.mxu0 0.0
    %6328 = vmatpush1.msra.mxu0 0.0
    %6329 = vmatprep.subr.mxu0 0.0
    %6330 = vmatpush1.msra.mxu0 0.0
    %6331 = vmatprep.subr.mxu0 0.0
    %6332 = vmatpush1.msra.mxu0 0.0
    %6333 = vmatprep.subr.mxu0 0.0
    %6334 = vmatpush1.msra.mxu0 0.0
    %6335 = vmatprep.subr.mxu0 0.0
    %6336 = vmatpush1.msra.mxu0 0.0
    %6337 = vmatprep.subr.mxu0 0.0
    %6338 = vmatpush1.msra.mxu0 0.0
    %6339 = vmatprep.subr.mxu0 0.0
    %6340 = vmatpush1.msra.mxu0 0.0
    %6341 = vmatprep.subr.mxu0 0.0
    %6342 = vmatpush1.msra.mxu0 0.0
    %6343 = vmatprep.mubr.f32.mxu0 0.0
    %6344 = vmatmul.mubr.f32.gmra.mrb[0].mxu0 %v6043
    %v6345 = vpop.f32.mrb[0].mxu0
    %v6346 = vadd.f32 0.0, %v6345
    %v6347 = vpop.f32.mrb[0].mxu0
    %v6348 = vadd.f32 0.0, %v6347
    %6349 = vmatprep.mubr.f32.mxu0 0.0
    %6350 = vmatmul.mubr.f32.gmra.mrb[0].mxu0 %v6046
    %v6351 = vpop.f32.mrb[0].mxu0
    %v6352 = vadd.f32 0.0, %v6351
    %v6353 = vpop.f32.mrb[0].mxu0
    %v6354 = vadd.f32 0.0, %v6353
    %6355 = vdwg.mxu0
    %6356 = vmatprep.subr.mxu0 %v327
    %6357 = vmatpush1.msra.mxu0 %v326
    %6358 = vmatprep.subr.mxu0 0.0
    %6359 = vmatpush1.msra.mxu0 0.0
    %6360 = vmatprep.subr.mxu0 0.0
    %6361 = vmatpush1.msra.mxu0 0.0
    %6362 = vmatprep.subr.mxu0 0.0
    %6363 = vmatpush1.msra.mxu0 0.0
    %6364 = vmatprep.subr.mxu0 0.0
    %6365 = vmatpush1.msra.mxu0 0.0
    %6366 = vmatprep.subr.mxu0 0.0
    %6367 = vmatpush1.msra.mxu0 0.0
    %6368 = vmatprep.subr.mxu0 0.0
    %6369 = vmatpush1.msra.mxu0 0.0
    %6370 = vmatprep.subr.mxu0 0.0
    %6371 = vmatpush1.msra.mxu0 0.0
    %6372 = vmatprep.subr.mxu0 0.0
    %6373 = vmatpush1.msra.mxu0 0.0
    %6374 = vmatprep.subr.mxu0 0.0
    %6375 = vmatpush1.msra.mxu0 0.0
    %6376 = vmatprep.subr.mxu0 0.0
    %6377 = vmatpush1.msra.mxu0 0.0
    %6378 = vmatprep.subr.mxu0 0.0
    %6379 = vmatpush1.msra.mxu0 0.0
    %6380 = vmatprep.subr.mxu0 0.0
    %6381 = vmatpush1.msra.mxu0 0.0
    %6382 = vmatprep.subr.mxu0 0.0
    %6383 = vmatpush1.msra.mxu0 0.0
    %6384 = vmatprep.subr.mxu0 0.0
    %6385 = vmatpush1.msra.mxu0 0.0
    %6386 = vmatprep.subr.mxu0 0.0
    %6387 = vmatpush1.msra.mxu0 0.0
    %6388 = vmatprep.subr.mxu0 0.0
    %6389 = vmatpush1.msra.mxu0 0.0
    %6390 = vmatprep.subr.mxu0 0.0
    %6391 = vmatpush1.msra.mxu0 0.0
    %6392 = vmatprep.subr.mxu0 0.0
    %6393 = vmatpush1.msra.mxu0 0.0
    %6394 = vmatprep.subr.mxu0 0.0
    %6395 = vmatpush1.msra.mxu0 0.0
    %6396 = vmatprep.subr.mxu0 0.0
    %6397 = vmatpush1.msra.mxu0 0.0
    %6398 = vmatprep.subr.mxu0 0.0
    %6399 = vmatpush1.msra.mxu0 0.0
    %6400 = vmatprep.subr.mxu0 0.0
    %6401 = vmatpush1.msra.mxu0 0.0
    %6402 = vmatprep.subr.mxu0 0.0
    %6403 = vmatpush1.msra.mxu0 0.0
    %6404 = vmatprep.subr.mxu0 0.0
    %6405 = vmatpush1.msra.mxu0 0.0
    %6406 = vmatprep.subr.mxu0 0.0
    %6407 = vmatpush1.msra.mxu0 0.0
    %6408 = vmatprep.subr.mxu0 0.0
    %6409 = vmatpush1.msra.mxu0 0.0
    %6410 = vmatprep.subr.mxu0 0.0
    %6411 = vmatpush1.msra.mxu0 0.0
    %6412 = vmatprep.subr.mxu0 0.0
    %6413 = vmatpush1.msra.mxu0 0.0
    %6414 = vmatprep.subr.mxu0 0.0
    %6415 = vmatpush1.msra.mxu0 0.0
    %6416 = vmatprep.subr.mxu0 0.0
    %6417 = vmatpush1.msra.mxu0 0.0
    %6418 = vmatprep.subr.mxu0 0.0
    %6419 = vmatpush1.msra.mxu0 0.0
    %6420 = vmatprep.mubr.f32.mxu0 0.0
    %6421 = vmatmul.mubr.f32.gmra.mrb[0].mxu0 %v6043
    %v6422 = vpop.f32.mrb[0].mxu0
    %v6423 = vadd.f32 0.0, %v6422
    %v6424 = vpop.f32.mrb[0].mxu0
    %v6425 = vadd.f32 0.0, %v6424
    %6426 = vmatprep.mubr.f32.mxu0 0.0
    %6427 = vmatmul.mubr.f32.gmra.mrb[0].mxu0 %v6046
    %v6428 = vpop.f32.mrb[0].mxu0
    %v6429 = vadd.f32 0.0, %v6428
    %v6430 = vpop.f32.mrb[0].mxu0
    %v6431 = vadd.f32 0.0, %v6430
    %6432 = vdwg.mxu0
    %6433 = vmatprep.subr.mxu0 %v329
    %6434 = vmatpush1.msra.mxu0 %v328
    %6435 = vmatprep.subr.mxu0 0.0
    %6436 = vmatpush1.msra.mxu0 0.0
    %6437 = vmatprep.subr.mxu0 0.0
    %6438 = vmatpush1.msra.mxu0 0.0
    %6439 = vmatprep.subr.mxu0 0.0
    %6440 = vmatpush1.msra.mxu0 0.0
    %6441 = vmatprep.subr.mxu0 0.0
    %6442 = vmatpush1.msra.mxu0 0.0
    %6443 = vmatprep.subr.mxu0 0.0
    %6444 = vmatpush1.msra.mxu0 0.0
    %6445 = vmatprep.subr.mxu0 0.0
    %6446 = vmatpush1.msra.mxu0 0.0
    %6447 = vmatprep.subr.mxu0 0.0
    %6448 = vmatpush1.msra.mxu0 0.0
    %6449 = vmatprep.subr.mxu0 0.0
    %6450 = vmatpush1.msra.mxu0 0.0
    %6451 = vmatprep.subr.mxu0 0.0
    %6452 = vmatpush1.msra.mxu0 0.0
    %6453 = vmatprep.subr.mxu0 0.0
    %6454 = vmatpush1.msra.mxu0 0.0
    %6455 = vmatprep.subr.mxu0 0.0
    %6456 = vmatpush1.msra.mxu0 0.0
    %6457 = vmatprep.subr.mxu0 0.0
    %6458 = vmatpush1.msra.mxu0 0.0
    %6459 = vmatprep.subr.mxu0 0.0
    %6460 = vmatpush1.msra.mxu0 0.0
    %6461 = vmatprep.subr.mxu0 0.0
    %6462 = vmatpush1.msra.mxu0 0.0
    %6463 = vmatprep.subr.mxu0 0.0
    %6464 = vmatpush1.msra.mxu0 0.0
    %6465 = vmatprep.subr.mxu0 0.0
    %6466 = vmatpush1.msra.mxu0 0.0
    %6467 = vmatprep.subr.mxu0 0.0
    %6468 = vmatpush1.msra.mxu0 0.0
    %6469 = vmatprep.subr.mxu0 0.0
    %6470 = vmatpush1.msra.mxu0 0.0
    %6471 = vmatprep.subr.mxu0 0.0
    %6472 = vmatpush1.msra.mxu0 0.0
    %6473 = vmatprep.subr.mxu0 0.0
    %6474 = vmatpush1.msra.mxu0 0.0
    %6475 = vmatprep.subr.mxu0 0.0
    %6476 = vmatpush1.msra.mxu0 0.0
    %6477 = vmatprep.subr.mxu0 0.0
    %6478 = vmatpush1.msra.mxu0 0.0
    %6479 = vmatprep.subr.mxu0 0.0
    %6480 = vmatpush1.msra.mxu0 0.0
    %6481 = vmatprep.subr.mxu0 0.0
    %6482 = vmatpush1.msra.mxu0 0.0
    %6483 = vmatprep.subr.mxu0 0.0
    %6484 = vmatpush1.msra.mxu0 0.0
    %6485 = vmatprep.subr.mxu0 0.0
    %6486 = vmatpush1.msra.mxu0 0.0
    %6487 = vmatprep.subr.mxu0 0.0
    %6488 = vmatpush1.msra.mxu0 0.0
    %6489 = vmatprep.subr.mxu0 0.0
    %6490 = vmatpush1.msra.mxu0 0.0
    %6491 = vmatprep.subr.mxu0 0.0
    %6492 = vmatpush1.msra.mxu0 0.0
    %6493 = vmatprep.subr.mxu0 0.0
    %6494 = vmatpush1.msra.mxu0 0.0
    %6495 = vmatprep.subr.mxu0 0.0
    %6496 = vmatpush1.msra.mxu0 0.0
    %6497 = vmatprep.mubr.f32.mxu0 0.0
    %6498 = vmatmul.mubr.f32.gmra.mrb[0].mxu0 %v6043
    %v6499 = vpop.f32.mrb[0].mxu0
    %v6500 = vadd.f32 0.0, %v6499
    %v6501 = vpop.f32.mrb[0].mxu0
    %v6502 = vadd.f32 0.0, %v6501
    %6503 = vmatprep.mubr.f32.mxu0 0.0
    %6504 = vmatmul.mubr.f32.gmra.mrb[0].mxu0 %v6046
    %v6505 = vpop.f32.mrb[0].mxu0
    %v6506 = vadd.f32 0.0, %v6505
    %v6507 = vpop.f32.mrb[0].mxu0
    %v6508 = vadd.f32 0.0, %v6507
    %6509 = vdwg.mxu0
    %6510 = vmatprep.subr.mxu0 %v331
    %6511 = vmatpush1.msra.mxu0 %v330
    %6512 = vmatprep.subr.mxu0 0.0
    %6513 = vmatpush1.msra.mxu0 0.0
    %6514 = vmatprep.subr.mxu0 0.0
    %6515 = vmatpush1.msra.mxu0 0.0
    %6516 = vmatprep.subr.mxu0 0.0
    %6517 = vmatpush1.msra.mxu0 0.0
    %6518 = vmatprep.subr.mxu0 0.0
    %6519 = vmatpush1.msra.mxu0 0.0
    %6520 = vmatprep.subr.mxu0 0.0
    %6521 = vmatpush1.msra.mxu0 0.0
    %6522 = vmatprep.subr.mxu0 0.0
    %6523 = vmatpush1.msra.mxu0 0.0
    %6524 = vmatprep.subr.mxu0 0.0
    %6525 = vmatpush1.msra.mxu0 0.0
    %6526 = vmatprep.subr.mxu0 0.0
    %6527 = vmatpush1.msra.mxu0 0.0
    %6528 = vmatprep.subr.mxu0 0.0
    %6529 = vmatpush1.msra.mxu0 0.0
    %6530 = vmatprep.subr.mxu0 0.0
    %6531 = vmatpush1.msra.mxu0 0.0
    %6532 = vmatprep.subr.mxu0 0.0
    %6533 = vmatpush1.msra.mxu0 0.0
    %6534 = vmatprep.subr.mxu0 0.0
    %6535 = vmatpush1.msra.mxu0 0.0
    %6536 = vmatprep.subr.mxu0 0.0
    %6537 = vmatpush1.msra.mxu0 0.0
    %6538 = vmatprep.subr.mxu0 0.0
    %6539 = vmatpush1.msra.mxu0 0.0
    %6540 = vmatprep.subr.mxu0 0.0
    %6541 = vmatpush1.msra.mxu0 0.0
    %6542 = vmatprep.subr.mxu0 0.0
    %6543 = vmatpush1.msra.mxu0 0.0
    %6544 = vmatprep.subr.mxu0 0.0
    %6545 = vmatpush1.msra.mxu0 0.0
    %6546 = vmatprep.subr.mxu0 0.0
    %6547 = vmatpush1.msra.mxu0 0.0
    %6548 = vmatprep.subr.mxu0 0.0
    %6549 = vmatpush1.msra.mxu0 0.0
    %6550 = vmatprep.subr.mxu0 0.0
    %6551 = vmatpush1.msra.mxu0 0.0
    %6552 = vmatprep.subr.mxu0 0.0
    %6553 = vmatpush1.msra.mxu0 0.0
    %6554 = vmatprep.subr.mxu0 0.0
    %6555 = vmatpush1.msra.mxu0 0.0
    %6556 = vmatprep.subr.mxu0 0.0
    %6557 = vmatpush1.msra.mxu0 0.0
    %6558 = vmatprep.subr.mxu0 0.0
    %6559 = vmatpush1.msra.mxu0 0.0
    %6560 = vmatprep.subr.mxu0 0.0
    %6561 = vmatpush1.msra.mxu0 0.0
    %6562 = vmatprep.subr.mxu0 0.0
    %6563 = vmatpush1.msra.mxu0 0.0
    %6564 = vmatprep.subr.mxu0 0.0
    %6565 = vmatpush1.msra.mxu0 0.0
    %6566 = vmatprep.subr.mxu0 0.0
    %6567 = vmatpush1.msra.mxu0 0.0
    %6568 = vmatprep.subr.mxu0 0.0
    %6569 = vmatpush1.msra.mxu0 0.0
    %6570 = vmatprep.subr.mxu0 0.0
    %6571 = vmatpush1.msra.mxu0 0.0
    %6572 = vmatprep.subr.mxu0 0.0
    %6573 = vmatpush1.msra.mxu0 0.0
    %6574 = vmatprep.mubr.f32.mxu0 0.0
    %6575 = vmatmul.mubr.f32.gmra.mrb[0].mxu0 %v6043
    %v6576 = vpop.f32.mrb[0].mxu0
    %v6577 = vadd.f32 0.0, %v6576
    %v6578 = vpop.f32.mrb[0].mxu0
    %v6579 = vadd.f32 0.0, %v6578
    %6580 = vmatprep.mubr.f32.mxu0 0.0
    %6581 = vmatmul.mubr.f32.gmra.mrb[0].mxu0 %v6046
    %v6582 = vpop.f32.mrb[0].mxu0
    %v6583 = vadd.f32 0.0, %v6582
    %v6584 = vpop.f32.mrb[0].mxu0
    %v6585 = vadd.f32 0.0, %v6584
    %6586 = vdwg.mxu0
    %6587 = vmatprep.subr.mxu0 %v333
    %6588 = vmatpush1.msra.mxu0 %v332
    %6589 = vmatprep.subr.mxu0 0.0
    %6590 = vmatpush1.msra.mxu0 0.0
    %6591 = vmatprep.subr.mxu0 0.0
    %6592 = vmatpush1.msra.mxu0 0.0
    %6593 = vmatprep.subr.mxu0 0.0
    %6594 = vmatpush1.msra.mxu0 0.0
    %6595 = vmatprep.subr.mxu0 0.0
    %6596 = vmatpush1.msra.mxu0 0.0
    %6597 = vmatprep.subr.mxu0 0.0
    %6598 = vmatpush1.msra.mxu0 0.0
    %6599 = vmatprep.subr.mxu0 0.0
    %6600 = vmatpush1.msra.mxu0 0.0
    %6601 = vmatprep.subr.mxu0 0.0
    %6602 = vmatpush1.msra.mxu0 0.0
    %6603 = vmatprep.subr.mxu0 0.0
    %6604 = vmatpush1.msra.mxu0 0.0
    %6605 = vmatprep.subr.mxu0 0.0
    %6606 = vmatpush1.msra.mxu0 0.0
    %6607 = vmatprep.subr.mxu0 0.0
    %6608 = vmatpush1.msra.mxu0 0.0
    %6609 = vmatprep.subr.mxu0 0.0
    %6610 = vmatpush1.msra.mxu0 0.0
    %6611 = vmatprep.subr.mxu0 0.0
    %6612 = vmatpush1.msra.mxu0 0.0
    %6613 = vmatprep.subr.mxu0 0.0
    %6614 = vmatpush1.msra.mxu0 0.0
    %6615 = vmatprep.subr.mxu0 0.0
    %6616 = vmatpush1.msra.mxu0 0.0
    %6617 = vmatprep.subr.mxu0 0.0
    %6618 = vmatpush1.msra.mxu0 0.0
    %6619 = vmatprep.subr.mxu0 0.0
    %6620 = vmatpush1.msra.mxu0 0.0
    %6621 = vmatprep.subr.mxu0 0.0
    %6622 = vmatpush1.msra.mxu0 0.0
    %6623 = vmatprep.subr.mxu0 0.0
    %6624 = vmatpush1.msra.mxu0 0.0
    %6625 = vmatprep.subr.mxu0 0.0
    %6626 = vmatpush1.msra.mxu0 0.0
    %6627 = vmatprep.subr.mxu0 0.0
    %6628 = vmatpush1.msra.mxu0 0.0
    %6629 = vmatprep.subr.mxu0 0.0
    %6630 = vmatpush1.msra.mxu0 0.0
    %6631 = vmatprep.subr.mxu0 0.0
    %6632 = vmatpush1.msra.mxu0 0.0
    %6633 = vmatprep.subr.mxu0 0.0
    %6634 = vmatpush1.msra.mxu0 0.0
    %6635 = vmatprep.subr.mxu0 0.0
    %6636 = vmatpush1.msra.mxu0 0.0
    %6637 = vmatprep.subr.mxu0 0.0
    %6638 = vmatpush1.msra.mxu0 0.0
    %6639 = vmatprep.subr.mxu0 0.0
    %6640 = vmatpush1.msra.mxu0 0.0
    %6641 = vmatprep.subr.mxu0 0.0
    %6642 = vmatpush1.msra.mxu0 0.0
    %6643 = vmatprep.subr.mxu0 0.0
    %6644 = vmatpush1.msra.mxu0 0.0
    %6645 = vmatprep.subr.mxu0 0.0
    %6646 = vmatpush1.msra.mxu0 0.0
    %6647 = vmatprep.subr.mxu0 0.0
    %6648 = vmatpush1.msra.mxu0 0.0
    %6649 = vmatprep.subr.mxu0 0.0
    %6650 = vmatpush1.msra.mxu0 0.0
    %6651 = vmatprep.mubr.f32.mxu0 0.0
    %6652 = vmatmul.mubr.f32.gmra.mrb[0].mxu0 %v6043
    %v6653 = vpop.f32.mrb[0].mxu0
    %v6654 = vadd.f32 0.0, %v6653
    %v6655 = vpop.f32.mrb[0].mxu0
    %v6656 = vadd.f32 0.0, %v6655
    %6657 = vmatprep.mubr.f32.mxu0 0.0
    %6658 = vmatmul.mubr.f32.gmra.mrb[0].mxu0 %v6046
    %v6659 = vpop.f32.mrb[0].mxu0
    %v6660 = vadd.f32 0.0, %v6659
    %v6661 = vpop.f32.mrb[0].mxu0
    %v6662 = vadd.f32 0.0, %v6661
    %6663 = vdwg.mxu0
    %v6665 = vsel %vm2348, %v6040, 0
    %v6668 = vsel %vm2348, %v6041, 0
    %6670 = vmatprep.subr.mxu0 %v319
    %6671 = vmatpush1.msra.mxu0 %v318
    %6672 = vmatprep.subr.mxu0 0.0
    %6673 = vmatpush1.msra.mxu0 0.0
    %6674 = vmatprep.subr.mxu0 0.0
    %6675 = vmatpush1.msra.mxu0 0.0
    %6676 = vmatprep.subr.mxu0 0.0
    %6677 = vmatpush1.msra.mxu0 0.0
    %6678 = vmatprep.subr.mxu0 0.0
    %6679 = vmatpush1.msra.mxu0 0.0
    %6680 = vmatprep.subr.mxu0 0.0
    %6681 = vmatpush1.msra.mxu0 0.0
    %6682 = vmatprep.subr.mxu0 0.0
    %6683 = vmatpush1.msra.mxu0 0.0
    %6684 = vmatprep.subr.mxu0 0.0
    %6685 = vmatpush1.msra.mxu0 0.0
    %6686 = vmatprep.subr.mxu0 0.0
    %6687 = vmatpush1.msra.mxu0 0.0
    %6688 = vmatprep.subr.mxu0 0.0
    %6689 = vmatpush1.msra.mxu0 0.0
    %6690 = vmatprep.subr.mxu0 0.0
    %6691 = vmatpush1.msra.mxu0 0.0
    %6692 = vmatprep.subr.mxu0 0.0
    %6693 = vmatpush1.msra.mxu0 0.0
    %6694 = vmatprep.subr.mxu0 0.0
    %6695 = vmatpush1.msra.mxu0 0.0
    %6696 = vmatprep.subr.mxu0 0.0
    %6697 = vmatpush1.msra.mxu0 0.0
    %6698 = vmatprep.subr.mxu0 0.0
    %6699 = vmatpush1.msra.mxu0 0.0
    %6700 = vmatprep.subr.mxu0 0.0
    %6701 = vmatpush1.msra.mxu0 0.0
    %6702 = vmatprep.subr.mxu0 0.0
    %6703 = vmatpush1.msra.mxu0 0.0
    %6704 = vmatprep.subr.mxu0 0.0
    %6705 = vmatpush1.msra.mxu0 0.0
    %6706 = vmatprep.subr.mxu0 0.0
    %6707 = vmatpush1.msra.mxu0 0.0
    %6708 = vmatprep.subr.mxu0 0.0
    %6709 = vmatpush1.msra.mxu0 0.0
    %6710 = vmatprep.subr.mxu0 0.0
    %6711 = vmatpush1.msra.mxu0 0.0
    %6712 = vmatprep.subr.mxu0 0.0
    %6713 = vmatpush1.msra.mxu0 0.0
    %6714 = vmatprep.subr.mxu0 0.0
    %6715 = vmatpush1.msra.mxu0 0.0
    %6716 = vmatprep.subr.mxu0 0.0
    %6717 = vmatpush1.msra.mxu0 0.0
    %6718 = vmatprep.subr.mxu0 0.0
    %6719 = vmatpush1.msra.mxu0 0.0
    %6720 = vmatprep.subr.mxu0 0.0
    %6721 = vmatpush1.msra.mxu0 0.0
    %6722 = vmatprep.subr.mxu0 0.0
    %6723 = vmatpush1.msra.mxu0 0.0
    %6724 = vmatprep.subr.mxu0 0.0
    %6725 = vmatpush1.msra.mxu0 0.0
    %6726 = vmatprep.subr.mxu0 0.0
    %6727 = vmatpush1.msra.mxu0 0.0
    %6728 = vmatprep.subr.mxu0 0.0
    %6729 = vmatpush1.msra.mxu0 0.0
    %6730 = vmatprep.subr.mxu0 0.0
    %6731 = vmatpush1.msra.mxu0 0.0
    %6732 = vmatprep.subr.mxu0 0.0
    %6733 = vmatpush1.msra.mxu0 0.0
    %6734 = vmatprep.mubr.f32.mxu0 0.0
    %6735 = vmatmul.mubr.f32.gmra.mrb[0].mxu0 %v6665
    %v6736 = vpop.f32.mrb[0].mxu0
    %v6737 = vadd.f32 0.0, %v6736
    %v6738 = vpop.f32.mrb[0].mxu0
    %v6739 = vadd.f32 0.0, %v6738
    %6740 = vmatprep.mubr.f32.mxu0 0.0
    %6741 = vmatmul.mubr.f32.gmra.mrb[0].mxu0 %v6668
    %v6742 = vpop.f32.mrb[0].mxu0
    %v6743 = vadd.f32 0.0, %v6742
    %v6744 = vpop.f32.mrb[0].mxu0
    %v6745 = vadd.f32 0.0, %v6744
    %6746 = vdwg.mxu0
    %6747 = vmatprep.subr.mxu0 %v321
    %6748 = vmatpush1.msra.mxu0 %v320
    %6749 = vmatprep.subr.mxu0 0.0
    %6750 = vmatpush1.msra.mxu0 0.0
    %6751 = vmatprep.subr.mxu0 0.0
    %6752 = vmatpush1.msra.mxu0 0.0
    %6753 = vmatprep.subr.mxu0 0.0
    %6754 = vmatpush1.msra.mxu0 0.0
    %6755 = vmatprep.subr.mxu0 0.0
    %6756 = vmatpush1.msra.mxu0 0.0
    %6757 = vmatprep.subr.mxu0 0.0
    %6758 = vmatpush1.msra.mxu0 0.0
    %6759 = vmatprep.subr.mxu0 0.0
    %6760 = vmatpush1.msra.mxu0 0.0
    %6761 = vmatprep.subr.mxu0 0.0
    %6762 = vmatpush1.msra.mxu0 0.0
    %6763 = vmatprep.subr.mxu0 0.0
    %6764 = vmatpush1.msra.mxu0 0.0
    %6765 = vmatprep.subr.mxu0 0.0
    %6766 = vmatpush1.msra.mxu0 0.0
    %6767 = vmatprep.subr.mxu0 0.0
    %6768 = vmatpush1.msra.mxu0 0.0
    %6769 = vmatprep.subr.mxu0 0.0
    %6770 = vmatpush1.msra.mxu0 0.0
    %6771 = vmatprep.subr.mxu0 0.0
    %6772 = vmatpush1.msra.mxu0 0.0
    %6773 = vmatprep.subr.mxu0 0.0
    %6774 = vmatpush1.msra.mxu0 0.0
    %6775 = vmatprep.subr.mxu0 0.0
    %6776 = vmatpush1.msra.mxu0 0.0
    %6777 = vmatprep.subr.mxu0 0.0
    %6778 = vmatpush1.msra.mxu0 0.0
    %6779 = vmatprep.subr.mxu0 0.0
    %6780 = vmatpush1.msra.mxu0 0.0
    %6781 = vmatprep.subr.mxu0 0.0
    %6782 = vmatpush1.msra.mxu0 0.0
    %6783 = vmatprep.subr.mxu0 0.0
    %6784 = vmatpush1.msra.mxu0 0.0
    %6785 = vmatprep.subr.mxu0 0.0
    %6786 = vmatpush1.msra.mxu0 0.0
    %6787 = vmatprep.subr.mxu0 0.0
    %6788 = vmatpush1.msra.mxu0 0.0
    %6789 = vmatprep.subr.mxu0 0.0
    %6790 = vmatpush1.msra.mxu0 0.0
    %6791 = vmatprep.subr.mxu0 0.0
    %6792 = vmatpush1.msra.mxu0 0.0
    %6793 = vmatprep.subr.mxu0 0.0
    %6794 = vmatpush1.msra.mxu0 0.0
    %6795 = vmatprep.subr.mxu0 0.0
    %6796 = vmatpush1.msra.mxu0 0.0
    %6797 = vmatprep.subr.mxu0 0.0
    %6798 = vmatpush1.msra.mxu0 0.0
    %6799 = vmatprep.subr.mxu0 0.0
    %6800 = vmatpush1.msra.mxu0 0.0
    %6801 = vmatprep.subr.mxu0 0.0
    %6802 = vmatpush1.msra.mxu0 0.0
    %6803 = vmatprep.subr.mxu0 0.0
    %6804 = vmatpush1.msra.mxu0 0.0
    %6805 = vmatprep.subr.mxu0 0.0
    %6806 = vmatpush1.msra.mxu0 0.0
    %6807 = vmatprep.subr.mxu0 0.0
    %6808 = vmatpush1.msra.mxu0 0.0
    %6809 = vmatprep.subr.mxu0 0.0
    %6810 = vmatpush1.msra.mxu0 0.0
    %6811 = vmatprep.mubr.f32.mxu0 0.0
    %6812 = vmatmul.mubr.f32.gmra.mrb[0].mxu0 %v6665
    %v6813 = vpop.f32.mrb[0].mxu0
    %v6814 = vadd.f32 0.0, %v6813
    %v6815 = vpop.f32.mrb[0].mxu0
    %v6816 = vadd.f32 0.0, %v6815
    %6817 = vmatprep.mubr.f32.mxu0 0.0
    %6818 = vmatmul.mubr.f32.gmra.mrb[0].mxu0 %v6668
    %v6819 = vpop.f32.mrb[0].mxu0
    %v6820 = vadd.f32 0.0, %v6819
    %v6821 = vpop.f32.mrb[0].mxu0
    %v6822 = vadd.f32 0.0, %v6821
    %6823 = vdwg.mxu0
    %6824 = vmatprep.subr.mxu0 %v323
    %6825 = vmatpush1.msra.mxu0 %v322
    %6826 = vmatprep.subr.mxu0 0.0
    %6827 = vmatpush1.msra.mxu0 0.0
    %6828 = vmatprep.subr.mxu0 0.0
    %6829 = vmatpush1.msra.mxu0 0.0
    %6830 = vmatprep.subr.mxu0 0.0
    %6831 = vmatpush1.msra.mxu0 0.0
    %6832 = vmatprep.subr.mxu0 0.0
    %6833 = vmatpush1.msra.mxu0 0.0
    %6834 = vmatprep.subr.mxu0 0.0
    %6835 = vmatpush1.msra.mxu0 0.0
    %6836 = vmatprep.subr.mxu0 0.0
    %6837 = vmatpush1.msra.mxu0 0.0
    %6838 = vmatprep.subr.mxu0 0.0
    %6839 = vmatpush1.msra.mxu0 0.0
    %6840 = vmatprep.subr.mxu0 0.0
    %6841 = vmatpush1.msra.mxu0 0.0
    %6842 = vmatprep.subr.mxu0 0.0
    %6843 = vmatpush1.msra.mxu0 0.0
    %6844 = vmatprep.subr.mxu0 0.0
    %6845 = vmatpush1.msra.mxu0 0.0
    %6846 = vmatprep.subr.mxu0 0.0
    %6847 = vmatpush1.msra.mxu0 0.0
    %6848 = vmatprep.subr.mxu0 0.0
    %6849 = vmatpush1.msra.mxu0 0.0
    %6850 = vmatprep.subr.mxu0 0.0
    %6851 = vmatpush1.msra.mxu0 0.0
    %6852 = vmatprep.subr.mxu0 0.0
    %6853 = vmatpush1.msra.mxu0 0.0
    %6854 = vmatprep.subr.mxu0 0.0
    %6855 = vmatpush1.msra.mxu0 0.0
    %6856 = vmatprep.subr.mxu0 0.0
    %6857 = vmatpush1.msra.mxu0 0.0
    %6858 = vmatprep.subr.mxu0 0.0
    %6859 = vmatpush1.msra.mxu0 0.0
    %6860 = vmatprep.subr.mxu0 0.0
    %6861 = vmatpush1.msra.mxu0 0.0
    %6862 = vmatprep.subr.mxu0 0.0
    %6863 = vmatpush1.msra.mxu0 0.0
    %6864 = vmatprep.subr.mxu0 0.0
    %6865 = vmatpush1.msra.mxu0 0.0
    %6866 = vmatprep.subr.mxu0 0.0
    %6867 = vmatpush1.msra.mxu0 0.0
    %6868 = vmatprep.subr.mxu0 0.0
    %6869 = vmatpush1.msra.mxu0 0.0
    %6870 = vmatprep.subr.mxu0 0.0
    %6871 = vmatpush1.msra.mxu0 0.0
    %6872 = vmatprep.subr.mxu0 0.0
    %6873 = vmatpush1.msra.mxu0 0.0
    %6874 = vmatprep.subr.mxu0 0.0
    %6875 = vmatpush1.msra.mxu0 0.0
    %6876 = vmatprep.subr.mxu0 0.0
    %6877 = vmatpush1.msra.mxu0 0.0
    %6878 = vmatprep.subr.mxu0 0.0
    %6879 = vmatpush1.msra.mxu0 0.0
    %6880 = vmatprep.subr.mxu0 0.0
    %6881 = vmatpush1.msra.mxu0 0.0
    %6882 = vmatprep.subr.mxu0 0.0
    %6883 = vmatpush1.msra.mxu0 0.0
    %6884 = vmatprep.subr.mxu0 0.0
    %6885 = vmatpush1.msra.mxu0 0.0
    %6886 = vmatprep.subr.mxu0 0.0
    %6887 = vmatpush1.msra.mxu0 0.0
    %6888 = vmatprep.mubr.f32.mxu0 0.0
    %6889 = vmatmul.mubr.f32.gmra.mrb[0].mxu0 %v6665
    %v6890 = vpop.f32.mrb[0].mxu0
    %v6891 = vadd.f32 0.0, %v6890
    %v6892 = vpop.f32.mrb[0].mxu0
    %v6893 = vadd.f32 0.0, %v6892
    %6894 = vmatprep.mubr.f32.mxu0 0.0
    %6895 = vmatmul.mubr.f32.gmra.mrb[0].mxu0 %v6668
    %v6896 = vpop.f32.mrb[0].mxu0
    %v6897 = vadd.f32 0.0, %v6896
    %v6898 = vpop.f32.mrb[0].mxu0
    %v6899 = vadd.f32 0.0, %v6898
    %6900 = vdwg.mxu0
    %6901 = vmatprep.subr.mxu0 %v325
    %6902 = vmatpush1.msra.mxu0 %v324
    %6903 = vmatprep.subr.mxu0 0.0
    %6904 = vmatpush1.msra.mxu0 0.0
    %6905 = vmatprep.subr.mxu0 0.0
    %6906 = vmatpush1.msra.mxu0 0.0
    %6907 = vmatprep.subr.mxu0 0.0
    %6908 = vmatpush1.msra.mxu0 0.0
    %6909 = vmatprep.subr.mxu0 0.0
    %6910 = vmatpush1.msra.mxu0 0.0
    %6911 = vmatprep.subr.mxu0 0.0
    %6912 = vmatpush1.msra.mxu0 0.0
    %6913 = vmatprep.subr.mxu0 0.0
    %6914 = vmatpush1.msra.mxu0 0.0
    %6915 = vmatprep.subr.mxu0 0.0
    %6916 = vmatpush1.msra.mxu0 0.0
    %6917 = vmatprep.subr.mxu0 0.0
    %6918 = vmatpush1.msra.mxu0 0.0
    %6919 = vmatprep.subr.mxu0 0.0
    %6920 = vmatpush1.msra.mxu0 0.0
    %6921 = vmatprep.subr.mxu0 0.0
    %6922 = vmatpush1.msra.mxu0 0.0
    %6923 = vmatprep.subr.mxu0 0.0
    %6924 = vmatpush1.msra.mxu0 0.0
    %6925 = vmatprep.subr.mxu0 0.0
    %6926 = vmatpush1.msra.mxu0 0.0
    %6927 = vmatprep.subr.mxu0 0.0
    %6928 = vmatpush1.msra.mxu0 0.0
    %6929 = vmatprep.subr.mxu0 0.0
    %6930 = vmatpush1.msra.mxu0 0.0
    %6931 = vmatprep.subr.mxu0 0.0
    %6932 = vmatpush1.msra.mxu0 0.0
    %6933 = vmatprep.subr.mxu0 0.0
    %6934 = vmatpush1.msra.mxu0 0.0
    %6935 = vmatprep.subr.mxu0 0.0
    %6936 = vmatpush1.msra.mxu0 0.0
    %6937 = vmatprep.subr.mxu0 0.0
    %6938 = vmatpush1.msra.mxu0 0.0
    %6939 = vmatprep.subr.mxu0 0.0
    %6940 = vmatpush1.msra.mxu0 0.0
    %6941 = vmatprep.subr.mxu0 0.0
    %6942 = vmatpush1.msra.mxu0 0.0
    %6943 = vmatprep.subr.mxu0 0.0
    %6944 = vmatpush1.msra.mxu0 0.0
    %6945 = vmatprep.subr.mxu0 0.0
    %6946 = vmatpush1.msra.mxu0 0.0
    %6947 = vmatprep.subr.mxu0 0.0
    %6948 = vmatpush1.msra.mxu0 0.0
    %6949 = vmatprep.subr.mxu0 0.0
    %6950 = vmatpush1.msra.mxu0 0.0
    %6951 = vmatprep.subr.mxu0 0.0
    %6952 = vmatpush1.msra.mxu0 0.0
    %6953 = vmatprep.subr.mxu0 0.0
    %6954 = vmatpush1.msra.mxu0 0.0
    %6955 = vmatprep.subr.mxu0 0.0
    %6956 = vmatpush1.msra.mxu0 0.0
    %6957 = vmatprep.subr.mxu0 0.0
    %6958 = vmatpush1.msra.mxu0 0.0
    %6959 = vmatprep.subr.mxu0 0.0
    %6960 = vmatpush1.msra.mxu0 0.0
    %6961 = vmatprep.subr.mxu0 0.0
    %6962 = vmatpush1.msra.mxu0 0.0
    %6963 = vmatprep.subr.mxu0 0.0
    %6964 = vmatpush1.msra.mxu0 0.0
    %6965 = vmatprep.mubr.f32.mxu0 0.0
    %6966 = vmatmul.mubr.f32.gmra.mrb[0].mxu0 %v6665
    %v6967 = vpop.f32.mrb[0].mxu0
    %v6968 = vadd.f32 0.0, %v6967
    %v6969 = vpop.f32.mrb[0].mxu0
    %v6970 = vadd.f32 0.0, %v6969
    %6971 = vmatprep.mubr.f32.mxu0 0.0
    %6972 = vmatmul.mubr.f32.gmra.mrb[0].mxu0 %v6668
    %v6973 = vpop.f32.mrb[0].mxu0
    %v6974 = vadd.f32 0.0, %v6973
    %v6975 = vpop.f32.mrb[0].mxu0
    %v6976 = vadd.f32 0.0, %v6975
    %6977 = vdwg.mxu0
    %6978 = vmatprep.subr.mxu0 %v327
    %6979 = vmatpush1.msra.mxu0 %v326
    %6980 = vmatprep.subr.mxu0 0.0
    %6981 = vmatpush1.msra.mxu0 0.0
    %6982 = vmatprep.subr.mxu0 0.0
    %6983 = vmatpush1.msra.mxu0 0.0
    %6984 = vmatprep.subr.mxu0 0.0
    %6985 = vmatpush1.msra.mxu0 0.0
    %6986 = vmatprep.subr.mxu0 0.0
    %6987 = vmatpush1.msra.mxu0 0.0
    %6988 = vmatprep.subr.mxu0 0.0
    %6989 = vmatpush1.msra.mxu0 0.0
    %6990 = vmatprep.subr.mxu0 0.0
    %6991 = vmatpush1.msra.mxu0 0.0
    %6992 = vmatprep.subr.mxu0 0.0
    %6993 = vmatpush1.msra.mxu0 0.0
    %6994 = vmatprep.subr.mxu0 0.0
    %6995 = vmatpush1.msra.mxu0 0.0
    %6996 = vmatprep.subr.mxu0 0.0
    %6997 = vmatpush1.msra.mxu0 0.0
    %6998 = vmatprep.subr.mxu0 0.0
    %6999 = vmatpush1.msra.mxu0 0.0
    %7000 = vmatprep.subr.mxu0 0.0
    %7001 = vmatpush1.msra.mxu0 0.0
    %7002 = vmatprep.subr.mxu0 0.0
    %7003 = vmatpush1.msra.mxu0 0.0
    %7004 = vmatprep.subr.mxu0 0.0
    %7005 = vmatpush1.msra.mxu0 0.0
    %7006 = vmatprep.subr.mxu0 0.0
    %7007 = vmatpush1.msra.mxu0 0.0
    %7008 = vmatprep.subr.mxu0 0.0
    %7009 = vmatpush1.msra.mxu0 0.0
    %7010 = vmatprep.subr.mxu0 0.0
    %7011 = vmatpush1.msra.mxu0 0.0
    %7012 = vmatprep.subr.mxu0 0.0
    %7013 = vmatpush1.msra.mxu0 0.0
    %7014 = vmatprep.subr.mxu0 0.0
    %7015 = vmatpush1.msra.mxu0 0.0
    %7016 = vmatprep.subr.mxu0 0.0
    %7017 = vmatpush1.msra.mxu0 0.0
    %7018 = vmatprep.subr.mxu0 0.0
    %7019 = vmatpush1.msra.mxu0 0.0
    %7020 = vmatprep.subr.mxu0 0.0
    %7021 = vmatpush1.msra.mxu0 0.0
    %7022 = vmatprep.subr.mxu0 0.0
    %7023 = vmatpush1.msra.mxu0 0.0
    %7024 = vmatprep.subr.mxu0 0.0
    %7025 = vmatpush1.msra.mxu0 0.0
    %7026 = vmatprep.subr.mxu0 0.0
    %7027 = vmatpush1.msra.mxu0 0.0
    %7028 = vmatprep.subr.mxu0 0.0
    %7029 = vmatpush1.msra.mxu0 0.0
    %7030 = vmatprep.subr.mxu0 0.0
    %7031 = vmatpush1.msra.mxu0 0.0
    %7032 = vmatprep.subr.mxu0 0.0
    %7033 = vmatpush1.msra.mxu0 0.0
    %7034 = vmatprep.subr.mxu0 0.0
    %7035 = vmatpush1.msra.mxu0 0.0
    %7036 = vmatprep.subr.mxu0 0.0
    %7037 = vmatpush1.msra.mxu0 0.0
    %7038 = vmatprep.subr.mxu0 0.0
    %7039 = vmatpush1.msra.mxu0 0.0
    %7040 = vmatprep.subr.mxu0 0.0
    %7041 = vmatpush1.msra.mxu0 0.0
    %7042 = vmatprep.mubr.f32.mxu0 0.0
    %7043 = vmatmul.mubr.f32.gmra.mrb[0].mxu0 %v6665
    %v7044 = vpop.f32.mrb[0].mxu0
    %v7045 = vadd.f32 0.0, %v7044
    %v7046 = vpop.f32.mrb[0].mxu0
    %v7047 = vadd.f32 0.0, %v7046
    %7048 = vmatprep.mubr.f32.mxu0 0.0
    %7049 = vmatmul.mubr.f32.gmra.mrb[0].mxu0 %v6668
    %v7050 = vpop.f32.mrb[0].mxu0
    %v7051 = vadd.f32 0.0, %v7050
    %v7052 = vpop.f32.mrb[0].mxu0
    %v7053 = vadd.f32 0.0, %v7052
    %7054 = vdwg.mxu0
    %7055 = vmatprep.subr.mxu0 %v329
    %7056 = vmatpush1.msra.mxu0 %v328
    %7057 = vmatprep.subr.mxu0 0.0
    %7058 = vmatpush1.msra.mxu0 0.0
    %7059 = vmatprep.subr.mxu0 0.0
    %7060 = vmatpush1.msra.mxu0 0.0
    %7061 = vmatprep.subr.mxu0 0.0
    %7062 = vmatpush1.msra.mxu0 0.0
    %7063 = vmatprep.subr.mxu0 0.0
    %7064 = vmatpush1.msra.mxu0 0.0
    %7065 = vmatprep.subr.mxu0 0.0
    %7066 = vmatpush1.msra.mxu0 0.0
    %7067 = vmatprep.subr.mxu0 0.0
    %7068 = vmatpush1.msra.mxu0 0.0
    %7069 = vmatprep.subr.mxu0 0.0
    %7070 = vmatpush1.msra.mxu0 0.0
    %7071 = vmatprep.subr.mxu0 0.0
    %7072 = vmatpush1.msra.mxu0 0.0
    %7073 = vmatprep.subr.mxu0 0.0
    %7074 = vmatpush1.msra.mxu0 0.0
    %7075 = vmatprep.subr.mxu0 0.0
    %7076 = vmatpush1.msra.mxu0 0.0
    %7077 = vmatprep.subr.mxu0 0.0
    %7078 = vmatpush1.msra.mxu0 0.0
    %7079 = vmatprep.subr.mxu0 0.0
    %7080 = vmatpush1.msra.mxu0 0.0
    %7081 = vmatprep.subr.mxu0 0.0
    %7082 = vmatpush1.msra.mxu0 0.0
    %7083 = vmatprep.subr.mxu0 0.0
    %7084 = vmatpush1.msra.mxu0 0.0
    %7085 = vmatprep.subr.mxu0 0.0
    %7086 = vmatpush1.msra.mxu0 0.0
    %7087 = vmatprep.subr.mxu0 0.0
    %7088 = vmatpush1.msra.mxu0 0.0
    %7089 = vmatprep.subr.mxu0 0.0
    %7090 = vmatpush1.msra.mxu0 0.0
    %7091 = vmatprep.subr.mxu0 0.0
    %7092 = vmatpush1.msra.mxu0 0.0
    %7093 = vmatprep.subr.mxu0 0.0
    %7094 = vmatpush1.msra.mxu0 0.0
    %7095 = vmatprep.subr.mxu0 0.0
    %7096 = vmatpush1.msra.mxu0 0.0
    %7097 = vmatprep.subr.mxu0 0.0
    %7098 = vmatpush1.msra.mxu0 0.0
    %7099 = vmatprep.subr.mxu0 0.0
    %7100 = vmatpush1.msra.mxu0 0.0
    %7101 = vmatprep.subr.mxu0 0.0
    %7102 = vmatpush1.msra.mxu0 0.0
    %7103 = vmatprep.subr.mxu0 0.0
    %7104 = vmatpush1.msra.mxu0 0.0
    %7105 = vmatprep.subr.mxu0 0.0
    %7106 = vmatpush1.msra.mxu0 0.0
    %7107 = vmatprep.subr.mxu0 0.0
    %7108 = vmatpush1.msra.mxu0 0.0
    %7109 = vmatprep.subr.mxu0 0.0
    %7110 = vmatpush1.msra.mxu0 0.0
    %7111 = vmatprep.subr.mxu0 0.0
    %7112 = vmatpush1.msra.mxu0 0.0
    %7113 = vmatprep.subr.mxu0 0.0
    %7114 = vmatpush1.msra.mxu0 0.0
    %7115 = vmatprep.subr.mxu0 0.0
    %7116 = vmatpush1.msra.mxu0 0.0
    %7117 = vmatprep.subr.mxu0 0.0
    %7118 = vmatpush1.msra.mxu0 0.0
    %7119 = vmatprep.mubr.f32.mxu0 0.0
    %7120 = vmatmul.mubr.f32.gmra.mrb[0].mxu0 %v6665
    %v7121 = vpop.f32.mrb[0].mxu0
    %v7122 = vadd.f32 0.0, %v7121
    %v7123 = vpop.f32.mrb[0].mxu0
    %v7124 = vadd.f32 0.0, %v7123
    %7125 = vmatprep.mubr.f32.mxu0 0.0
    %7126 = vmatmul.mubr.f32.gmra.mrb[0].mxu0 %v6668
    %v7127 = vpop.f32.mrb[0].mxu0
    %v7128 = vadd.f32 0.0, %v7127
    %v7129 = vpop.f32.mrb[0].mxu0
    %v7130 = vadd.f32 0.0, %v7129
    %7131 = vdwg.mxu0
    %7132 = vmatprep.subr.mxu0 %v331
    %7133 = vmatpush1.msra.mxu0 %v330
    %7134 = vmatprep.subr.mxu0 0.0
    %7135 = vmatpush1.msra.mxu0 0.0
    %7136 = vmatprep.subr.mxu0 0.0
    %7137 = vmatpush1.msra.mxu0 0.0
    %7138 = vmatprep.subr.mxu0 0.0
    %7139 = vmatpush1.msra.mxu0 0.0
    %7140 = vmatprep.subr.mxu0 0.0
    %7141 = vmatpush1.msra.mxu0 0.0
    %7142 = vmatprep.subr.mxu0 0.0
    %7143 = vmatpush1.msra.mxu0 0.0
    %7144 = vmatprep.subr.mxu0 0.0
    %7145 = vmatpush1.msra.mxu0 0.0
    %7146 = vmatprep.subr.mxu0 0.0
    %7147 = vmatpush1.msra.mxu0 0.0
    %7148 = vmatprep.subr.mxu0 0.0
    %7149 = vmatpush1.msra.mxu0 0.0
    %7150 = vmatprep.subr.mxu0 0.0
    %7151 = vmatpush1.msra.mxu0 0.0
    %7152 = vmatprep.subr.mxu0 0.0
    %7153 = vmatpush1.msra.mxu0 0.0
    %7154 = vmatprep.subr.mxu0 0.0
    %7155 = vmatpush1.msra.mxu0 0.0
    %7156 = vmatprep.subr.mxu0 0.0
    %7157 = vmatpush1.msra.mxu0 0.0
    %7158 = vmatprep.subr.mxu0 0.0
    %7159 = vmatpush1.msra.mxu0 0.0
    %7160 = vmatprep.subr.mxu0 0.0
    %7161 = vmatpush1.msra.mxu0 0.0
    %7162 = vmatprep.subr.mxu0 0.0
    %7163 = vmatpush1.msra.mxu0 0.0
    %7164 = vmatprep.subr.mxu0 0.0
    %7165 = vmatpush1.msra.mxu0 0.0
    %7166 = vmatprep.subr.mxu0 0.0
    %7167 = vmatpush1.msra.mxu0 0.0
    %7168 = vmatprep.subr.mxu0 0.0
    %7169 = vmatpush1.msra.mxu0 0.0
    %7170 = vmatprep.subr.mxu0 0.0
    %7171 = vmatpush1.msra.mxu0 0.0
    %7172 = vmatprep.subr.mxu0 0.0
    %7173 = vmatpush1.msra.mxu0 0.0
    %7174 = vmatprep.subr.mxu0 0.0
    %7175 = vmatpush1.msra.mxu0 0.0
    %7176 = vmatprep.subr.mxu0 0.0
    %7177 = vmatpush1.msra.mxu0 0.0
    %7178 = vmatprep.subr.mxu0 0.0
    %7179 = vmatpush1.msra.mxu0 0.0
    %7180 = vmatprep.subr.mxu0 0.0
    %7181 = vmatpush1.msra.mxu0 0.0
    %7182 = vmatprep.subr.mxu0 0.0
    %7183 = vmatpush1.msra.mxu0 0.0
    %7184 = vmatprep.subr.mxu0 0.0
    %7185 = vmatpush1.msra.mxu0 0.0
    %7186 = vmatprep.subr.mxu0 0.0
    %7187 = vmatpush1.msra.mxu0 0.0
    %7188 = vmatprep.subr.mxu0 0.0
    %7189 = vmatpush1.msra.mxu0 0.0
    %7190 = vmatprep.subr.mxu0 0.0
    %7191 = vmatpush1.msra.mxu0 0.0
    %7192 = vmatprep.subr.mxu0 0.0
    %7193 = vmatpush1.msra.mxu0 0.0
    %7194 = vmatprep.subr.mxu0 0.0
    %7195 = vmatpush1.msra.mxu0 0.0
    %7196 = vmatprep.mubr.f32.mxu0 0.0
    %7197 = vmatmul.mubr.f32.gmra.mrb[0].mxu0 %v6665
    %v7198 = vpop.f32.mrb[0].mxu0
    %v7199 = vadd.f32 0.0, %v7198
    %v7200 = vpop.f32.mrb[0].mxu0
    %v7201 = vadd.f32 0.0, %v7200
    %7202 = vmatprep.mubr.f32.mxu0 0.0
    %7203 = vmatmul.mubr.f32.gmra.mrb[0].mxu0 %v6668
    %v7204 = vpop.f32.mrb[0].mxu0
    %v7205 = vadd.f32 0.0, %v7204
    %v7206 = vpop.f32.mrb[0].mxu0
    %v7207 = vadd.f32 0.0, %v7206
    %7208 = vdwg.mxu0
    %7209 = vmatprep.subr.mxu0 %v333
    %7210 = vmatpush1.msra.mxu0 %v332
    %7211 = vmatprep.subr.mxu0 0.0
    %7212 = vmatpush1.msra.mxu0 0.0
    %7213 = vmatprep.subr.mxu0 0.0
    %7214 = vmatpush1.msra.mxu0 0.0
    %7215 = vmatprep.subr.mxu0 0.0
    %7216 = vmatpush1.msra.mxu0 0.0
    %7217 = vmatprep.subr.mxu0 0.0
    %7218 = vmatpush1.msra.mxu0 0.0
    %7219 = vmatprep.subr.mxu0 0.0
    %7220 = vmatpush1.msra.mxu0 0.0
    %7221 = vmatprep.subr.mxu0 0.0
    %7222 = vmatpush1.msra.mxu0 0.0
    %7223 = vmatprep.subr.mxu0 0.0
    %7224 = vmatpush1.msra.mxu0 0.0
    %7225 = vmatprep.subr.mxu0 0.0
    %7226 = vmatpush1.msra.mxu0 0.0
    %7227 = vmatprep.subr.mxu0 0.0
    %7228 = vmatpush1.msra.mxu0 0.0
    %7229 = vmatprep.subr.mxu0 0.0
    %7230 = vmatpush1.msra.mxu0 0.0
    %7231 = vmatprep.subr.mxu0 0.0
    %7232 = vmatpush1.msra.mxu0 0.0
    %7233 = vmatprep.subr.mxu0 0.0
    %7234 = vmatpush1.msra.mxu0 0.0
    %7235 = vmatprep.subr.mxu0 0.0
    %7236 = vmatpush1.msra.mxu0 0.0
    %7237 = vmatprep.subr.mxu0 0.0
    %7238 = vmatpush1.msra.mxu0 0.0
    %7239 = vmatprep.subr.mxu0 0.0
    %7240 = vmatpush1.msra.mxu0 0.0
    %7241 = vmatprep.subr.mxu0 0.0
    %7242 = vmatpush1.msra.mxu0 0.0
    %7243 = vmatprep.subr.mxu0 0.0
    %7244 = vmatpush1.msra.mxu0 0.0
    %7245 = vmatprep.subr.mxu0 0.0
    %7246 = vmatpush1.msra.mxu0 0.0
    %7247 = vmatprep.subr.mxu0 0.0
    %7248 = vmatpush1.msra.mxu0 0.0
    %7249 = vmatprep.subr.mxu0 0.0
    %7250 = vmatpush1.msra.mxu0 0.0
    %7251 = vmatprep.subr.mxu0 0.0
    %7252 = vmatpush1.msra.mxu0 0.0
    %7253 = vmatprep.subr.mxu0 0.0
    %7254 = vmatpush1.msra.mxu0 0.0
    %7255 = vmatprep.subr.mxu0 0.0
    %7256 = vmatpush1.msra.mxu0 0.0
    %7257 = vmatprep.subr.mxu0 0.0
    %7258 = vmatpush1.msra.mxu0 0.0
    %7259 = vmatprep.subr.mxu0 0.0
    %7260 = vmatpush1.msra.mxu0 0.0
    %7261 = vmatprep.subr.mxu0 0.0
    %7262 = vmatpush1.msra.mxu0 0.0
    %7263 = vmatprep.subr.mxu0 0.0
    %7264 = vmatpush1.msra.mxu0 0.0
    %7265 = vmatprep.subr.mxu0 0.0
    %7266 = vmatpush1.msra.mxu0 0.0
    %7267 = vmatprep.subr.mxu0 0.0
    %7268 = vmatpush1.msra.mxu0 0.0
    %7269 = vmatprep.subr.mxu0 0.0
    %7270 = vmatpush1.msra.mxu0 0.0
    %7271 = vmatprep.subr.mxu0 0.0
    %7272 = vmatpush1.msra.mxu0 0.0
    %7273 = vmatprep.mubr.f32.mxu0 0.0
    %7274 = vmatmul.mubr.f32.gmra.mrb[0].mxu0 %v6665
    %v7275 = vpop.f32.mrb[0].mxu0
    %v7276 = vadd.f32 0.0, %v7275
    %v7277 = vpop.f32.mrb[0].mxu0
    %v7278 = vadd.f32 0.0, %v7277
    %7279 = vmatprep.mubr.f32.mxu0 0.0
    %7280 = vmatmul.mubr.f32.gmra.mrb[0].mxu0 %v6668
    %v7281 = vpop.f32.mrb[0].mxu0
    %v7282 = vadd.f32 0.0, %v7281
    %v7283 = vpop.f32.mrb[0].mxu0
    %v7284 = vadd.f32 0.0, %v7283
    %7285 = vdwg.mxu0
    %v7286 = vmul.f32 %v3942, %v6115
    %v7287 = vmul.f32 %v3944, %v6117
    %v7288 = vmul.f32 %v4019, %v6192
    %v7289 = vmul.f32 %v4021, %v6194
    %v7290 = vmul.f32 %v4096, %v6269
    %v7291 = vmul.f32 %v4098, %v6271
    %v7292 = vmul.f32 %v4173, %v6346
    %v7293 = vmul.f32 %v4175, %v6348
    %v7294 = vmul.f32 %v4250, %v6423
    %v7295 = vmul.f32 %v4252, %v6425
    %v7296 = vmul.f32 %v4327, %v6500
    %v7297 = vmul.f32 %v4329, %v6502
    %v7298 = vmul.f32 %v4404, %v6577
    %v7299 = vmul.f32 %v4406, %v6579
    %v7300 = vmul.f32 %v4481, %v6654
    %v7301 = vmul.f32 %v4483, %v6656
    %v7302 = vmul.f32 %v3948, %v6121
    %v7303 = vmul.f32 %v3950, %v6123
    %v7304 = vmul.f32 %v4025, %v6198
    %v7305 = vmul.f32 %v4027, %v6200
    %v7306 = vmul.f32 %v4102, %v6275
    %v7307 = vmul.f32 %v4104, %v6277
    %v7308 = vmul.f32 %v4179, %v6352
    %v7309 = vmul.f32 %v4181, %v6354
    %v7310 = vmul.f32 %v4256, %v6429
    %v7311 = vmul.f32 %v4258, %v6431
    %v7312 = vmul.f32 %v4333, %v6506
    %v7313 = vmul.f32 %v4335, %v6508
    %v7314 = vmul.f32 %v4410, %v6583
    %v7315 = vmul.f32 %v4412, %v6585
    %v7316 = vmul.f32 %v4487, %v6660
    %v7317 = vmul.f32 %v4489, %v6662
    %v7318 = vadd.f32 %v7286, %v6737
    %v7319 = vadd.f32 %v7287, %v6739
    %v7320 = vadd.f32 %v7288, %v6814
    %v7321 = vadd.f32 %v7289, %v6816
    %v7322 = vadd.f32 %v7290, %v6891
    %v7323 = vadd.f32 %v7291, %v6893
    %v7324 = vadd.f32 %v7292, %v6968
    %v7325 = vadd.f32 %v7293, %v6970
    %v7326 = vadd.f32 %v7294, %v7045
    %v7327 = vadd.f32 %v7295, %v7047
    %v7328 = vadd.f32 %v7296, %v7122
    %v7329 = vadd.f32 %v7297, %v7124
    %v7330 = vadd.f32 %v7298, %v7199
    %v7331 = vadd.f32 %v7299, %v7201
    %v7332 = vadd.f32 %v7300, %v7276
    %v7333 = vadd.f32 %v7301, %v7278
    %v7334 = vadd.f32 %v7302, %v6743
    %v7335 = vadd.f32 %v7303, %v6745
    %v7336 = vadd.f32 %v7304, %v6820
    %v7337 = vadd.f32 %v7305, %v6822
    %v7338 = vadd.f32 %v7306, %v6897
    %v7339 = vadd.f32 %v7307, %v6899
    %v7340 = vadd.f32 %v7308, %v6974
    %v7341 = vadd.f32 %v7309, %v6976
    %v7342 = vadd.f32 %v7310, %v7051
    %v7343 = vadd.f32 %v7311, %v7053
    %v7344 = vadd.f32 %v7312, %v7128
    %v7345 = vadd.f32 %v7313, %v7130
    %v7346 = vadd.f32 %v7314, %v7205
    %v7347 = vadd.f32 %v7315, %v7207
    %v7348 = vadd.f32 %v7316, %v7282
    %v7349 = vadd.f32 %v7317, %v7284
    %v7350 = vadd.f32 %v7318, %v30
    %v7351 = vadd.f32 %v7319, %v31
    %v7352 = vadd.f32 %v7320, %v32
    %v7353 = vadd.f32 %v7321, %v33
    %v7354 = vadd.f32 %v7322, %v34
    %v7355 = vadd.f32 %v7323, %v35
    %v7356 = vadd.f32 %v7324, %v36
    %v7357 = vadd.f32 %v7325, %v37
    %v7358 = vadd.f32 %v7326, %v38
    %v7359 = vadd.f32 %v7327, %v39
    %v7360 = vadd.f32 %v7328, %v40
    %v7361 = vadd.f32 %v7329, %v41
    %v7362 = vadd.f32 %v7330, %v42
    %v7363 = vadd.f32 %v7331, %v43
    %v7364 = vadd.f32 %v7332, %v44
    %v7365 = vadd.f32 %v7333, %v45
    %v7366 = vadd.f32 %v7334, %v46
    %v7367 = vadd.f32 %v7335, %v47
    %v7368 = vadd.f32 %v7336, %v48
    %v7369 = vadd.f32 %v7337, %v49
    %v7370 = vadd.f32 %v7338, %v50
    %v7371 = vadd.f32 %v7339, %v51
    %v7372 = vadd.f32 %v7340, %v52
    %v7373 = vadd.f32 %v7341, %v53
    %v7374 = vadd.f32 %v7342, %v54
    %v7375 = vadd.f32 %v7343, %v55
    %v7376 = vadd.f32 %v7344, %v56
    %v7377 = vadd.f32 %v7345, %v57
    %v7378 = vadd.f32 %v7346, %v58
    %v7379 = vadd.f32 %v7347, %v59
    %v7380 = vadd.f32 %v7348, %v60
    %v7381 = vadd.f32 %v7349, %v61
    %v7382 = vmax.f32 %v7350, 0.0
    %v7383 = vmax.f32 %v7351, 0.0
    %v7384 = vmax.f32 %v7352, 0.0
    %v7385 = vmax.f32 %v7353, 0.0
    %v7386 = vmax.f32 %v7354, 0.0
    %v7387 = vmax.f32 %v7355, 0.0
    %v7388 = vmax.f32 %v7356, 0.0
    %v7389 = vmax.f32 %v7357, 0.0
    %v7390 = vmax.f32 %v7358, 0.0
    %v7391 = vmax.f32 %v7359, 0.0
    %v7392 = vmax.f32 %v7360, 0.0
    %v7393 = vmax.f32 %v7361, 0.0
    %v7394 = vmax.f32 %v7362, 0.0
    %v7395 = vmax.f32 %v7363, 0.0
    %v7396 = vmax.f32 %v7364, 0.0
    %v7397 = vmax.f32 %v7365, 0.0
    %v7398 = vmax.f32 %v7366, 0.0
    %v7399 = vmax.f32 %v7367, 0.0
    %v7400 = vmax.f32 %v7368, 0.0
    %v7401 = vmax.f32 %v7369, 0.0
    %v7402 = vmax.f32 %v7370, 0.0
    %v7403 = vmax.f32 %v7371, 0.0
    %v7404 = vmax.f32 %v7372, 0.0
    %v7405 = vmax.f32 %v7373, 0.0
    %v7406 = vmax.f32 %v7374, 0.0
    %v7407 = vmax.f32 %v7375, 0.0
    %v7408 = vmax.f32 %v7376, 0.0
    %v7409 = vmax.f32 %v7377, 0.0
    %v7410 = vmax.f32 %v7378, 0.0
    %v7411 = vmax.f32 %v7379, 0.0
    %v7412 = vmax.f32 %v7380, 0.0
    %v7413 = vmax.f32 %v7381, 0.0
    %7414 = vst [vmem:[#allocation2] sm:$0xff] %v7382
    %7415 = vst [vmem:[#allocation2 + $0x8] sm:$0xff] %v7383
    %7416 = vst [vmem:[#allocation2 + $0x10] sm:$0xff] %v7384
    %7417 = vst [vmem:[#allocation2 + $0x18] sm:$0xff] %v7385
    %7418 = vst [vmem:[#allocation2 + $0x20] sm:$0xff] %v7386
    %7419 = vst [vmem:[#allocation2 + $0x28] sm:$0xff] %v7387
    %7420 = vst [vmem:[#allocation2 + $0x30] sm:$0xff] %v7388
    %7421 = vst [vmem:[#allocation2 + $0x38] sm:$0xff] %v7389
    %7422 = vst [vmem:[#allocation2 + $0x40] sm:$0xff] %v7390
    %7423 = vst [vmem:[#allocation2 + $0x48] sm:$0xff] %v7391
    %7424 = vst [vmem:[#allocation2 + $0x50] sm:$0xff] %v7392
    %7425 = vst [vmem:[#allocation2 + $0x58] sm:$0xff] %v7393
    %7426 = vst [vmem:[#allocation2 + $0x60] sm:$0xff] %v7394
    %7427 = vst [vmem:[#allocation2 + $0x68] sm:$0xff] %v7395
    %7428 = vst [vmem:[#allocation2 + $0x70] sm:$0xff] %v7396
    %7429 = vst [vmem:[#allocation2 + $0x78] sm:$0xff] %v7397
    %7430 = vst [vmem:[#allocation2 + $0x80] sm:$0xff] %v7398
    %7431 = vst [vmem:[#allocation2 + $0x88] sm:$0xff] %v7399
    %7432 = vst [vmem:[#allocation2 + $0x90] sm:$0xff] %v7400
    %7433 = vst [vmem:[#allocation2 + $0x98] sm:$0xff] %v7401
    %7434 = vst [vmem:[#allocation2 + $0xa0] sm:$0xff] %v7402
    %7435 = vst [vmem:[#allocation2 + $0xa8] sm:$0xff] %v7403
    %7436 = vst [vmem:[#allocation2 + $0xb0] sm:$0xff] %v7404
    %7437 = vst [vmem:[#allocation2 + $0xb8] sm:$0xff] %v7405
    %7438 = vst [vmem:[#allocation2 + $0xc0] sm:$0xff] %v7406
    %7439 = vst [vmem:[#allocation2 + $0xc8] sm:$0xff] %v7407
    %7440 = vst [vmem:[#allocation2 + $0xd0] sm:$0xff] %v7408
    %7441 = vst [vmem:[#allocation2 + $0xd8] sm:$0xff] %v7409
    %7442 = vst [vmem:[#allocation2 + $0xe0] sm:$0xff] %v7410
    %7443 = vst [vmem:[#allocation2 + $0xe8] sm:$0xff] %v7411
    %7444 = vst [vmem:[#allocation2 + $0xf0] sm:$0xff] %v7412
    %7445 = vst [vmem:[#allocation2 + $0xf8] sm:$0xff] %v7413
    // Predicated region
    $region34: #{tpu_custom_call.1} parent=1 // pred_check
      _
    $region35: #{tpu_custom_call.1} parent=1 // pred_check_branch
      %7447 = sbr.rel (0) target = $region37
    $region36: #{tpu_custom_call.1} parent=1 // pred_region
      %s7449 = ssub.s32 4096, 4096
      %7450 = vsyncadd [#allocation3], %s7449
      %s7451 = sshll.u32 [#allocation2], 4
      %s7452 = int_to_ptr.vmem [resolvable:$true] %s7451
      %7457 = dma.vmem_to_hbm [thread:$0]  %s7452, 4096, %s8, [#allocation3], 2048, 2048, 128
    $region37: #{tpu_custom_call.1} parent=1 // pred_fallthru
      _
    // Predicated region
    $region38: #{tpu_custom_call.1} parent=1 // pred_check
      _
    $region39: #{tpu_custom_call.1} parent=1 // pred_check_branch
      %7459 = sbr.rel (0) target = $region41
    $region40: #{tpu_custom_call.1} parent=1 // pred_region
      %7460 = dma.done [#allocation3], 4096
    $region41: #{tpu_custom_call.1} parent=1 // pred_fallthru
      _
    %7461 = vsyncpa [#allocation3], 1

</llo_original>
